<compile_context>
chip_gen: v5e
topology: v5e:2x2
jax: 0.10.0
libtpu: 0.0.40
codegen_flags: <defaults>
</compile_context>

<pallas_src>
import functools
import math

import jax
import jax.numpy as jnp
from jax.experimental import pallas as pl
from jax.experimental.pallas import tpu as pltpu


# ----------------------------------------------------------------------------
# Fused decoder-layer kernel: grid = (batch, num_S_tiles)
# ----------------------------------------------------------------------------

def _decoder_layer_kernel(*refs, nhead, seq_len, needs_mask, ln_eps,
                          refine_eps, mxu_dtype, with_logits):
    (out_ref, mem_ref, refp_ref,
     wp1, bp1, wp2, bp2,
     wqk, bqk, wv, bv, wo, bo, g1, be1,
     wcq, bcq, wkv, bkv, wco, bco, g2, be2,
     wf1, bf1, wf2, bf2, g3, be3,
     wb1, bb1, wb2, bb2, wb3, bb3) = refs[:35]
    if with_logits:
        ws, bs = refs[35:37]
        new_out_ref, new_refp_ref, logits_ref = refs[37:40]
        out1_ref, cq_ref, m_ref, l_ref, acc_ref = refs[40:45]
    else:
        new_out_ref, new_refp_ref = refs[35:37]
        out1_ref, cq_ref, m_ref, l_ref, acc_ref = refs[37:42]

    C = out_ref.shape[-1]
    Q = out_ref.shape[-2]
    tile_s = mem_ref.shape[-2]
    Dh = C // nhead
    scale = 1.0 / math.sqrt(Dh)
    s_idx = pl.program_id(1)

    def mxu(a, w):
        # bf16 operands, f32 accumulation, native ((1,),(0,)) MXU contraction.
        return jax.lax.dot_general(
            a.astype(mxu_dtype), w.astype(mxu_dtype),
            dimension_numbers=(((1,), (0,)), ((), ())),
            preferred_element_type=jnp.float32)

    def proj(x, w_ref, b_ref):
        return mxu(x, w_ref[...]) + b_ref[...]

    def proj_f32(x, w_ref, b_ref):
        return jax.lax.dot_general(
            x, w_ref[...], dimension_numbers=(((1,), (0,)), ((), ())),
            preferred_element_type=jnp.float32) + b_ref[...]

    def layer_norm(x, g_ref, b_ref):
        mu = jnp.mean(x, axis=-1, keepdims=True)
        var = jnp.mean(jnp.square(x - mu), axis=-1, keepdims=True)
        return (x - mu) * jax.lax.rsqrt(var + ln_eps) * g_ref[...] + b_ref[...]

    # ---- prologue (first S tile): query-pos MLP, self-attn + LN1, cross-attn
    # query, flash-softmax state init -----------------------------------------
    @pl.when(s_idx == 0)
    def _prologue():
        out = out_ref[0].astype(jnp.float32)            # (Q, C)
        rp = refp_ref[0].astype(jnp.float32)            # (Q, 4)

        # query-pos MLP(4 -> 2C -> C): first matmul K=4 as 4 rank-1 VPU FMAs,
        # everything in f32 (positional embeds are precision-sensitive, tiny).
        w1 = wp1[...]                                   # (4, 2C)
        h1 = bp1[...]
        for k in range(4):
            h1 = h1 + rp[:, k:k + 1] * w1[k:k + 1, :]
        pos = proj_f32(jnp.maximum(h1, 0.0), wp2, bp2)  # (Q, C)

        # self-attention (q = k = out + pos, v = out), residual + LN1.
        qk = proj(out + pos, wqk, bqk)                  # (Q, 2C) packed [q | k]
        v = proj(out, wv, bv)                           # (Q, C)
        q_b = (qk[:, :C] * scale).astype(mxu_dtype)     # scale applied once
        kT = qk[:, C:].astype(mxu_dtype).T              # (C, Q): one transpose
        v_b = v.astype(mxu_dtype)
        heads = []
        for h in range(nhead):
            lo, hi = h * Dh, (h + 1) * Dh
            sc = jax.lax.dot_general(
                q_b[:, lo:hi], kT[lo:hi, :],
                dimension_numbers=(((1,), (0,)), ((), ())),
                preferred_element_type=jnp.float32)     # (Q, Q)
            p = jnp.exp(sc - jnp.max(sc, axis=-1, keepdims=True))
            p = p * pl.reciprocal(jnp.sum(p, axis=-1, keepdims=True), approx=True)
            heads.append(jax.lax.dot_general(
                p.astype(mxu_dtype), v_b[:, lo:hi],
                dimension_numbers=(((1,), (0,)), ((), ())),
                preferred_element_type=jnp.float32))    # (Q, Dh)
        # un-folded output projection: ONE (Q,C)@(C,C) matmul.
        sa = proj(jnp.concatenate(heads, axis=-1), wo, bo)
        out1_ref[...] = layer_norm(out + sa, g1, be1)

        # cross-attention query (scale folded once) + online-softmax init.
        cq_ref[...] = proj(out1_ref[...] + pos, wcq, bcq) * scale
        m_ref[...] = jnp.full_like(m_ref, -1e30)
        l_ref[...] = jnp.zeros_like(l_ref)
        acc_ref[...] = jnp.zeros_like(acc_ref)

    # ---- every S tile: project KV for this tile, flash-softmax update -------
    kv = proj(mem_ref[0], wkv, bkv)                     # (tile_s, 2C) f32, packed [k | v]
    kT = kv[:, :C].astype(mxu_dtype).T                  # (C, tile_s): one transpose per tile
    v_b = kv[:, C:].astype(mxu_dtype)                   # (tile_s, C)
    cq_b = cq_ref[...].astype(mxu_dtype)                # (Q, C), cast once per tile
    acc_prev = acc_ref[...]                             # (Q, C)
    if needs_mask:
        col = (jax.lax.broadcasted_iota(jnp.int32, (Q, tile_s), 1)
               + s_idx * tile_s)
        valid = col < seq_len
    new_acc = []
    for h in range(nhead):
        lo, hi = h * Dh, (h + 1) * Dh
        sc = jax.lax.dot_general(
            cq_b[:, lo:hi], kT[lo:hi, :],
            dimension_numbers=(((1,), (0,)), ((), ())),
            preferred_element_type=jnp.float32)         # (Q, tile_s)
        if needs_mask:
            sc = jnp.where(valid, sc, -1e30)
        m_prev = m_ref[h]                               # (Q, 1)
        m_new = jnp.maximum(m_prev, jnp.max(sc, axis=-1, keepdims=True))
        alpha = jnp.exp(m_prev - m_new)
        p = jnp.exp(sc - m_new)
        m_ref[h] = m_new
        l_ref[h] = alpha * l_ref[h] + jnp.sum(p, axis=-1, keepdims=True)
        pv = jax.lax.dot_general(
            p.astype(mxu_dtype), v_b[:, lo:hi],
            dimension_numbers=(((1,), (0,)), ((), ())),
            preferred_element_type=jnp.float32)         # (Q, Dh)
        new_acc.append(alpha * acc_prev[:, lo:hi] + pv)
    acc_ref[...] = jnp.concatenate(new_acc, axis=-1)

    # ---- epilogue (last S tile): cross-attn out proj + LN2, FFN + LN3,
    # bbox refine, score head, output stores ----------------------------------
    @pl.when(s_idx == pl.num_programs(1) - 1)
    def _epilogue():
        out1 = out1_ref[...]
        acc = acc_ref[...]
        o = jnp.concatenate(
            [acc[:, h * Dh:(h + 1) * Dh]
             * pl.reciprocal(l_ref[h], approx=True) for h in range(nhead)],
            axis=-1)                                    # (Q, C)
        out2 = layer_norm(out1 + proj(o, wco, bco), g2, be2)

        f = proj(jnp.maximum(proj(out2, wf1, bf1), 0.0), wf2, bf2)
        out3 = layer_norm(out2 + f, g3, be3)

        # bbox head MLP(C -> C -> C -> 4) + inverse-sigmoid refine.
        bh = jnp.maximum(proj(out3, wb1, bb1), 0.0)
        bh = jnp.maximum(proj(bh, wb2, bb2), 0.0)
        delta = proj_f32(bh, wb3, bb3)                  # keep final (C,4) in f32
        rp = jnp.clip(refp_ref[0].astype(jnp.float32), 0.0, 1.0)
        inv = (jnp.log(jnp.maximum(rp, refine_eps))
               - jnp.log(jnp.maximum(1.0 - rp, refine_eps)))
        new_refp_ref[0] = (1.0 / (1.0 + jnp.exp(-(delta + inv)))
                           ).astype(new_refp_ref.dtype)
        new_out_ref[0] = out3.astype(new_out_ref.dtype)
        if with_logits:
            logits_ref[0] = proj(out3, ws, bs).astype(logits_ref.dtype)


# ----------------------------------------------------------------------------
# Wrapper: one pallas_call per decoder layer
# ----------------------------------------------------------------------------

def _tpu_vmem_bytes():
    try:
        return int(pltpu.get_tpu_info().vmem_capacity_bytes)
    except Exception:
        return 64 * 1024 * 1024


def _round_up(x, m):
    return ((x + m - 1) // m) * m


def fused_decoder_layer(output, memory, ref_points, qpos_p, layer_p, bbox_p,
                        score_p, *, nhead, seq_len, tile_s, with_logits,
                        mxu_dtype, vmem_limit_bytes):
    B, Q, C = output.shape
    S_pad = memory.shape[1]
    assert C % nhead == 0 and S_pad % tile_s == 0
    n_s = S_pad // tile_s
    dff = layer_p["ffn1"]["w"].shape[1]
    NC = score_p["w"].shape[1]

    weights = [
        qpos_p["l1"]["w"], qpos_p["l1"]["b"], qpos_p["l2"]["w"], qpos_p["l2"]["b"],
        layer_p["sa_qk"]["w"], layer_p["sa_qk"]["b"],
        layer_p["sa_v"]["w"], layer_p["sa_v"]["b"],
        layer_p["sa_o"]["w"], layer_p["sa_o"]["b"],
        layer_p["norm1"]["g"], layer_p["norm1"]["b"],
        layer_p["ca_q"]["w"], layer_p["ca_q"]["b"],
        layer_p["ca_kv"]["w"], layer_p["ca_kv"]["b"],
        layer_p["ca_o"]["w"], layer_p["ca_o"]["b"],
        layer_p["norm2"]["g"], layer_p["norm2"]["b"],
        layer_p["ffn1"]["w"], layer_p["ffn1"]["b"],
        layer_p["ffn2"]["w"], layer_p["ffn2"]["b"],
        layer_p["norm3"]["g"], layer_p["norm3"]["b"],
        bbox_p[0]["w"], bbox_p[0]["b"], bbox_p[1]["w"], bbox_p[1]["b"],
        bbox_p[2]["w"], bbox_p[2]["b"],
    ]
    if with_logits:
        weights += [score_p["w"], score_p["b"]]

    in_specs = [
        pl.BlockSpec((1, Q, C), lambda b, s: (b, 0, 0)),        # output (resident)
        pl.BlockSpec((1, tile_s, C), lambda b, s: (b, s, 0)),   # memory (S-tiled)
        pl.BlockSpec((1, Q, 4), lambda b, s: (b, 0, 0)),        # ref points
    ] + [pl.BlockSpec(w.shape, lambda b, s: (0, 0)) for w in weights]

    out_shape = [jax.ShapeDtypeStruct((B, Q, C), output.dtype),
                 jax.ShapeDtypeStruct((B, Q, 4), ref_points.dtype)]
    out_specs = [pl.BlockSpec((1, Q, C), lambda b, s: (b, 0, 0)),
                 pl.BlockSpec((1, Q, 4), lambda b, s: (b, 0, 0))]
    if with_logits:
        out_shape.append(jax.ShapeDtypeStruct((B, Q, NC), output.dtype))
        out_specs.append(pl.BlockSpec((1, Q, NC), lambda b, s: (b, 0, 0)))

    scratch_shapes = [
        pltpu.VMEM((Q, C), jnp.float32),          # out after self-attn + LN1
        pltpu.VMEM((Q, C), jnp.float32),          # pre-scaled cross-attn query
        pltpu.VMEM((nhead, Q, 1), jnp.float32),   # online-softmax running max
        pltpu.VMEM((nhead, Q, 1), jnp.float32),   # online-softmax running sum
        pltpu.VMEM((Q, C), jnp.float32),          # per-head PV accumulators
    ]

    # Advisory cost estimate for XLA scheduling around the custom call.
    flops = 2 * B * (
        Q * 4 * 2 * C + Q * 2 * C * C                   # query-pos MLP
        + Q * C * 2 * C + Q * C * C + 2 * Q * Q * C + Q * C * C   # self-attn
        + Q * C * C + S_pad * C * 2 * C + 2 * Q * S_pad * C + Q * C * C  # cross-attn
        + 2 * Q * C * dff                               # FFN
        + 2 * Q * C * C + Q * C * 4                     # bbox head
        + (Q * C * NC if with_logits else 0))           # score head
    transcendentals = B * Q * (nhead * (Q + S_pad) + 64)
    bytes_accessed = int(
        output.size * output.dtype.itemsize
        + memory.size * memory.dtype.itemsize
        + ref_points.size * ref_points.dtype.itemsize
        + sum(int(w.size) * 4 for w in weights)
        + output.size * output.dtype.itemsize
        + ref_points.size * ref_points.dtype.itemsize
        + (B * Q * NC * 4 if with_logits else 0))

    kernel = functools.partial(
        _decoder_layer_kernel, nhead=nhead, seq_len=seq_len,
        needs_mask=(S_pad != seq_len), ln_eps=1e-5, refine_eps=1e-5,
        mxu_dtype=mxu_dtype, with_logits=with_logits)

    return pl.pallas_call(
        kernel,
        out_shape=tuple(out_shape),
        grid=(B, n_s),
        in_specs=in_specs,
        out_specs=tuple(out_specs),
        scratch_shapes=scratch_shapes,
        compiler_params=pltpu.CompilerParams(
            dimension_semantics=("parallel", "arbitrary"),
            vmem_limit_bytes=int(vmem_limit_bytes)),
        cost_estimate=pl.CostEstimate(flops=int(flops),
                                      transcendentals=int(transcendentals),
                                      bytes_accessed=bytes_accessed),
    )(output, memory, ref_points, *weights)


# ----------------------------------------------------------------------------
# Decoder forward (eval path)
# ----------------------------------------------------------------------------

def deco_plus_decoder_forward(params, tgt, ref_points_unact, memory, *,
                              num_layers, eval_idx=-1, nhead,
                              tile_s=None, mxu_dtype=jnp.bfloat16):
    eval_idx = eval_idx if eval_idx >= 0 else num_layers + eval_idx
    S = memory.shape[1]

    # Generation-aware S tiling + VMEM limit (v7x: 64 MiB/TC, v5e/v6e: 128 MiB).
    vmem_cap = _tpu_vmem_bytes()
    if tile_s is None:
        tile_s = 512 if vmem_cap <= 64 * 1024 * 1024 else 1024
    tile_s = _round_up(max(8, min(tile_s, _round_up(S, 8))), 8)
    s_pad = _round_up(S, tile_s)
    vmem_limit = min(int(vmem_cap * 0.85), 100 * 1024 * 1024)

    # memory is the dominant per-layer HBM read -> feed the kernel bf16 once.
    memory_b = memory.astype(jnp.bfloat16)
    if s_pad != S:
        memory_b = jnp.pad(memory_b, ((0, 0), (0, s_pad - S), (0, 0)))

    output = tgt
    ref_points = jax.nn.sigmoid(ref_points_unact)   # initial sigmoid (left to XLA)
    dec_out_bboxes = []
    dec_out_logits = []
    for i in range(num_layers):
        is_eval_layer = (i == eval_idx)
        res = fused_decoder_layer(
            output, memory_b, ref_points,
            params["query_pos_head"], params["layers"][i],
            params["bbox_head"][i], params["score_head"][i],
            nhead=nhead, seq_len=S, tile_s=tile_s, with_logits=is_eval_layer,
            mxu_dtype=mxu_dtype, vmem_limit_bytes=vmem_limit)
        if is_eval_layer:
            output, new_ref, logits = res
            dec_out_bboxes.append(new_ref)
            dec_out_logits.append(logits)
            break
        output, new_ref = res
        ref_points = new_ref
    return jnp.stack(dec_out_bboxes), jnp.stack(dec_out_logits)


# ----------------------------------------------------------------------------
# Deterministic parameter initialization (weights pre-transposed to (K, N))
# ----------------------------------------------------------------------------

def init_linear(key, in_dim, out_dim):
    kw, kb = jax.random.split(key)
    lim = 1.0 / math.sqrt(in_dim)
    return {
        "w": jax.random.uniform(kw, (in_dim, out_dim), jnp.float32, -lim, lim),
        "b": jax.random.uniform(kb, (1, out_dim), jnp.float32, -lim, lim),
    }


def init_ln(dim):
    return {"g": jnp.ones((1, dim), jnp.float32),
            "b": jnp.zeros((1, dim), jnp.float32)}


def init_decoder_layer(key, C, dff):
    ks = jax.random.split(key, 8)
    return {
        "sa_qk": init_linear(ks[0], C, 2 * C),   # packed [Wq | Wk]
        "sa_v":  init_linear(ks[1], C, C),
        "sa_o":  init_linear(ks[2], C, C),
        "norm1": init_ln(C),
        "ca_q":  init_linear(ks[3], C, C),
        "ca_kv": init_linear(ks[4], C, 2 * C),   # packed [Wk | Wv]
        "ca_o":  init_linear(ks[5], C, C),
        "norm2": init_ln(C),
        "ffn1":  init_linear(ks[6], C, dff),
        "ffn2":  init_linear(ks[7], dff, C),
        "norm3": init_ln(C),
    }


def make_params(key, hidden_dim, dim_ffn, num_classes, num_layers):
    C = hidden_dim
    kq, kl, kb, ks = jax.random.split(key, 4)
    kq1, kq2 = jax.random.split(kq)
    layer_keys = jax.random.split(kl, num_layers)
    bbox_keys = jax.random.split(kb, num_layers)
    score_keys = jax.random.split(ks, num_layers)
    bbox_dims = [(C, C), (C, C), (C, 4)]
    return {
        "query_pos_head": {"l1": init_linear(kq1, 4, 2 * C),
                           "l2": init_linear(kq2, 2 * C, C)},
        "layers": [init_decoder_layer(layer_keys[i], C, dim_ffn)
                   for i in range(num_layers)],
        "bbox_head": [
            [init_linear(k, di, do) for k, (di, do) in
             zip(jax.random.split(bbox_keys[i], 3), bbox_dims)]
            for i in range(num_layers)],
        "score_head": [init_linear(score_keys[i], C, num_classes)
                       for i in range(num_layers)],
    }


# ----------------------------------------------------------------------------

if __name__ == "__main__":
    B, Q, C, S = 2, 8, 32, 16          # batch, num queries, hidden_dim, memory length
    nhead, dim_ffn, num_classes = 4, 64, 5
    num_layers = 2

    key = jax.random.PRNGKey(0)
    k_tgt, k_ref, k_mem, k_par = jax.random.split(key, 4)
    tgt = jax.random.normal(k_tgt, (B, Q, C), jnp.float32)
    ref_points_unact = jax.random.normal(k_ref, (B, Q, 4), jnp.float32)
    memory = jax.random.normal(k_mem, (B, S, C), jnp.float32)

    params = make_params(k_par, C, dim_ffn, num_classes, num_layers)

    # tile_s=8 -> 2 memory tiles: exercises the flash-tiled cross-attention path.
    fwd = jax.jit(functools.partial(
        deco_plus_decoder_forward, num_layers=num_layers, eval_idx=-1,
        nhead=nhead, tile_s=8, mxu_dtype=jnp.bfloat16))
    dec_out_bboxes, dec_out_logits = fwd(params, tgt, ref_points_unact, memory)
    jax.block_until_ready((dec_out_bboxes, dec_out_logits))

    assert dec_out_bboxes.shape == (1, B, Q, 4)
    assert dec_out_logits.shape == (1, B, Q, num_classes)
    assert bool(jnp.all(jnp.isfinite(dec_out_bboxes)))
    assert bool(jnp.all(jnp.isfinite(dec_out_logits)))
    assert bool(jnp.all(dec_out_bboxes >= 0.0)) and bool(jnp.all(dec_out_bboxes <= 1.0))
    print("KERNEL_OK")
</pallas_src>

<mosaic_0001>
module attributes {stable_mosaic.version = 11 : i64} {
  func.func @_decoder_layer_kernel(%arg0: i32, %arg1: i32, %arg2: memref<1x8x32xf32, #tpu.memory_space<vmem>>, %arg3: memref<1x8x32xbf16, #tpu.memory_space<vmem>>, %arg4: memref<1x8x4xf32, #tpu.memory_space<vmem>>, %arg5: memref<4x64xf32, #tpu.memory_space<vmem>>, %arg6: memref<1x64xf32, #tpu.memory_space<vmem>>, %arg7: memref<64x32xf32, #tpu.memory_space<vmem>>, %arg8: memref<1x32xf32, #tpu.memory_space<vmem>>, %arg9: memref<32x64xf32, #tpu.memory_space<vmem>>, %arg10: memref<1x64xf32, #tpu.memory_space<vmem>>, %arg11: memref<32x32xf32, #tpu.memory_space<vmem>>, %arg12: memref<1x32xf32, #tpu.memory_space<vmem>>, %arg13: memref<32x32xf32, #tpu.memory_space<vmem>>, %arg14: memref<1x32xf32, #tpu.memory_space<vmem>>, %arg15: memref<1x32xf32, #tpu.memory_space<vmem>>, %arg16: memref<1x32xf32, #tpu.memory_space<vmem>>, %arg17: memref<32x32xf32, #tpu.memory_space<vmem>>, %arg18: memref<1x32xf32, #tpu.memory_space<vmem>>, %arg19: memref<32x64xf32, #tpu.memory_space<vmem>>, %arg20: memref<1x64xf32, #tpu.memory_space<vmem>>, %arg21: memref<32x32xf32, #tpu.memory_space<vmem>>, %arg22: memref<1x32xf32, #tpu.memory_space<vmem>>, %arg23: memref<1x32xf32, #tpu.memory_space<vmem>>, %arg24: memref<1x32xf32, #tpu.memory_space<vmem>>, %arg25: memref<32x64xf32, #tpu.memory_space<vmem>>, %arg26: memref<1x64xf32, #tpu.memory_space<vmem>>, %arg27: memref<64x32xf32, #tpu.memory_space<vmem>>, %arg28: memref<1x32xf32, #tpu.memory_space<vmem>>, %arg29: memref<1x32xf32, #tpu.memory_space<vmem>>, %arg30: memref<1x32xf32, #tpu.memory_space<vmem>>, %arg31: memref<32x32xf32, #tpu.memory_space<vmem>>, %arg32: memref<1x32xf32, #tpu.memory_space<vmem>>, %arg33: memref<32x32xf32, #tpu.memory_space<vmem>>, %arg34: memref<1x32xf32, #tpu.memory_space<vmem>>, %arg35: memref<32x4xf32, #tpu.memory_space<vmem>>, %arg36: memref<1x4xf32, #tpu.memory_space<vmem>>, %arg37: memref<32x5xf32, #tpu.memory_space<vmem>>, %arg38: memref<1x5xf32, #tpu.memory_space<vmem>>, %arg39: memref<1x8x32xf32, #tpu.memory_space<vmem>>, %arg40: memref<1x8x4xf32, #tpu.memory_space<vmem>>, %arg41: memref<1x8x5xf32, #tpu.memory_space<vmem>>, %arg42: memref<8x32xf32, #tpu.memory_space<vmem>>, %arg43: memref<8x32xf32, #tpu.memory_space<vmem>>, %arg44: memref<4x8x1xf32, #tpu.memory_space<vmem>>, %arg45: memref<4x8x1xf32, #tpu.memory_space<vmem>>, %arg46: memref<8x32xf32, #tpu.memory_space<vmem>>) attributes {dimension_semantics = [#tpu.dimension_semantics<parallel>, #tpu.dimension_semantics<arbitrary>], iteration_bounds = array<i64: 2, 2>, scalar_prefetch = 0 : i64, scratch_operands = 5 : i64, tpu.core_type = #tpu.core_type<tc>, window_params = [{transform_indices = @transform_0, window_bounds = array<i64: 1, 8, 32>}, {transform_indices = @transform_1, window_bounds = array<i64: 1, 8, 32>}, {transform_indices = @transform_2, window_bounds = array<i64: 1, 8, 4>}, {pipeline_mode = #tpu.pipeline_mode<synchronous>, transform_indices = @transform_3, window_bounds = array<i64: 4, 64>}, {pipeline_mode = #tpu.pipeline_mode<synchronous>, transform_indices = @transform_4, window_bounds = array<i64: 1, 64>}, {pipeline_mode = #tpu.pipeline_mode<synchronous>, transform_indices = @transform_5, window_bounds = array<i64: 64, 32>}, {pipeline_mode = #tpu.pipeline_mode<synchronous>, transform_indices = @transform_6, window_bounds = array<i64: 1, 32>}, {pipeline_mode = #tpu.pipeline_mode<synchronous>, transform_indices = @transform_7, window_bounds = array<i64: 32, 64>}, {pipeline_mode = #tpu.pipeline_mode<synchronous>, transform_indices = @transform_8, window_bounds = array<i64: 1, 64>}, {pipeline_mode = #tpu.pipeline_mode<synchronous>, transform_indices = @transform_9, window_bounds = array<i64: 32, 32>}, {pipeline_mode = #tpu.pipeline_mode<synchronous>, transform_indices = @transform_10, window_bounds = array<i64: 1, 32>}, {pipeline_mode = #tpu.pipeline_mode<synchronous>, transform_indices = @transform_11, window_bounds = array<i64: 32, 32>}, {pipeline_mode = #tpu.pipeline_mode<synchronous>, transform_indices = @transform_12, window_bounds = array<i64: 1, 32>}, {pipeline_mode = #tpu.pipeline_mode<synchronous>, transform_indices = @transform_13, window_bounds = array<i64: 1, 32>}, {pipeline_mode = #tpu.pipeline_mode<synchronous>, transform_indices = @transform_14, window_bounds = array<i64: 1, 32>}, {pipeline_mode = #tpu.pipeline_mode<synchronous>, transform_indices = @transform_15, window_bounds = array<i64: 32, 32>}, {pipeline_mode = #tpu.pipeline_mode<synchronous>, transform_indices = @transform_16, window_bounds = array<i64: 1, 32>}, {pipeline_mode = #tpu.pipeline_mode<synchronous>, transform_indices = @transform_17, window_bounds = array<i64: 32, 64>}, {pipeline_mode = #tpu.pipeline_mode<synchronous>, transform_indices = @transform_18, window_bounds = array<i64: 1, 64>}, {pipeline_mode = #tpu.pipeline_mode<synchronous>, transform_indices = @transform_19, window_bounds = array<i64: 32, 32>}, {pipeline_mode = #tpu.pipeline_mode<synchronous>, transform_indices = @transform_20, window_bounds = array<i64: 1, 32>}, {pipeline_mode = #tpu.pipeline_mode<synchronous>, transform_indices = @transform_21, window_bounds = array<i64: 1, 32>}, {pipeline_mode = #tpu.pipeline_mode<synchronous>, transform_indices = @transform_22, window_bounds = array<i64: 1, 32>}, {pipeline_mode = #tpu.pipeline_mode<synchronous>, transform_indices = @transform_23, window_bounds = array<i64: 32, 64>}, {pipeline_mode = #tpu.pipeline_mode<synchronous>, transform_indices = @transform_24, window_bounds = array<i64: 1, 64>}, {pipeline_mode = #tpu.pipeline_mode<synchronous>, transform_indices = @transform_25, window_bounds = array<i64: 64, 32>}, {pipeline_mode = #tpu.pipeline_mode<synchronous>, transform_indices = @transform_26, window_bounds = array<i64: 1, 32>}, {pipeline_mode = #tpu.pipeline_mode<synchronous>, transform_indices = @transform_27, window_bounds = array<i64: 1, 32>}, {pipeline_mode = #tpu.pipeline_mode<synchronous>, transform_indices = @transform_28, window_bounds = array<i64: 1, 32>}, {pipeline_mode = #tpu.pipeline_mode<synchronous>, transform_indices = @transform_29, window_bounds = array<i64: 32, 32>}, {pipeline_mode = #tpu.pipeline_mode<synchronous>, transform_indices = @transform_30, window_bounds = array<i64: 1, 32>}, {pipeline_mode = #tpu.pipeline_mode<synchronous>, transform_indices = @transform_31, window_bounds = array<i64: 32, 32>}, {pipeline_mode = #tpu.pipeline_mode<synchronous>, transform_indices = @transform_32, window_bounds = array<i64: 1, 32>}, {pipeline_mode = #tpu.pipeline_mode<synchronous>, transform_indices = @transform_33, window_bounds = array<i64: 32, 4>}, {pipeline_mode = #tpu.pipeline_mode<synchronous>, transform_indices = @transform_34, window_bounds = array<i64: 1, 4>}, {pipeline_mode = #tpu.pipeline_mode<synchronous>, transform_indices = @transform_35, window_bounds = array<i64: 32, 5>}, {pipeline_mode = #tpu.pipeline_mode<synchronous>, transform_indices = @transform_36, window_bounds = array<i64: 1, 5>}, {transform_indices = @transform_37, window_bounds = array<i64: 1, 8, 32>}, {transform_indices = @transform_38, window_bounds = array<i64: 1, 8, 4>}, {transform_indices = @transform_39, window_bounds = array<i64: 1, 8, 5>}]} {
    %c0_i32 = arith.constant 0 : i32
    %0 = arith.cmpi eq, %arg1, %c0_i32 : i32
    %1 = arith.extui %0 : i1 to i32
    %c0_i32_0 = arith.constant 0 : i32
    %2 = arith.cmpi ne, %1, %c0_i32_0 : i32
    scf.if %2 {
      %c0_75 = arith.constant 0 : index
      %c0_76 = arith.constant 0 : index
      %c0_77 = arith.constant 0 : index
      %152 = vector.load %arg2[%c0_75, %c0_76, %c0_77] : memref<1x8x32xf32, #tpu.memory_space<vmem>>, vector<1x8x32xf32>
      %153 = vector.shape_cast %152 : vector<1x8x32xf32> to vector<8x32xf32>
      %c0_78 = arith.constant 0 : index
      %c0_79 = arith.constant 0 : index
      %c0_80 = arith.constant 0 : index
      %154 = vector.load %arg4[%c0_78, %c0_79, %c0_80] : memref<1x8x4xf32, #tpu.memory_space<vmem>>, vector<1x8x4xf32>
      %155 = vector.shape_cast %154 : vector<1x8x4xf32> to vector<8x4xf32>
      %c0_81 = arith.constant 0 : index
      %c0_82 = arith.constant 0 : index
      %156 = vector.load %arg5[%c0_81, %c0_82] : memref<4x64xf32, #tpu.memory_space<vmem>>, vector<4x64xf32>
      %c0_83 = arith.constant 0 : index
      %c0_84 = arith.constant 0 : index
      %157 = vector.load %arg6[%c0_83, %c0_84] : memref<1x64xf32, #tpu.memory_space<vmem>>, vector<1x64xf32>
      %158 = vector.extract_strided_slice %155 {offsets = [0, 0], sizes = [8, 1], strides = [1, 1]} : vector<8x4xf32> to vector<8x1xf32>
      %159 = vector.extract_strided_slice %156 {offsets = [0, 0], sizes = [1, 64], strides = [1, 1]} : vector<4x64xf32> to vector<1x64xf32>
      %160 = vector.broadcast %158 : vector<8x1xf32> to vector<8x64xf32>
      %161 = vector.broadcast %159 : vector<1x64xf32> to vector<8x64xf32>
      %162 = arith.mulf %160, %161 : vector<8x64xf32>
      %163 = vector.broadcast %157 : vector<1x64xf32> to vector<8x64xf32>
      %164 = arith.addf %163, %162 : vector<8x64xf32>
      %165 = vector.extract_strided_slice %155 {offsets = [0, 1], sizes = [8, 1], strides = [1, 1]} : vector<8x4xf32> to vector<8x1xf32>
      %166 = vector.extract_strided_slice %156 {offsets = [1, 0], sizes = [1, 64], strides = [1, 1]} : vector<4x64xf32> to vector<1x64xf32>
      %167 = vector.broadcast %165 : vector<8x1xf32> to vector<8x64xf32>
      %168 = vector.broadcast %166 : vector<1x64xf32> to vector<8x64xf32>
      %169 = arith.mulf %167, %168 : vector<8x64xf32>
      %170 = arith.addf %164, %169 : vector<8x64xf32>
      %171 = vector.extract_strided_slice %155 {offsets = [0, 2], sizes = [8, 1], strides = [1, 1]} : vector<8x4xf32> to vector<8x1xf32>
      %172 = vector.extract_strided_slice %156 {offsets = [2, 0], sizes = [1, 64], strides = [1, 1]} : vector<4x64xf32> to vector<1x64xf32>
      %173 = vector.broadcast %171 : vector<8x1xf32> to vector<8x64xf32>
      %174 = vector.broadcast %172 : vector<1x64xf32> to vector<8x64xf32>
      %175 = arith.mulf %173, %174 : vector<8x64xf32>
      %176 = arith.addf %170, %175 : vector<8x64xf32>
      %177 = vector.extract_strided_slice %155 {offsets = [0, 3], sizes = [8, 1], strides = [1, 1]} : vector<8x4xf32> to vector<8x1xf32>
      %178 = vector.extract_strided_slice %156 {offsets = [3, 0], sizes = [1, 64], strides = [1, 1]} : vector<4x64xf32> to vector<1x64xf32>
      %179 = vector.broadcast %177 : vector<8x1xf32> to vector<8x64xf32>
      %180 = vector.broadcast %178 : vector<1x64xf32> to vector<8x64xf32>
      %181 = arith.mulf %179, %180 : vector<8x64xf32>
      %182 = arith.addf %176, %181 : vector<8x64xf32>
      %cst_85 = arith.constant 0.000000e+00 : f32
      %183 = vector.broadcast %cst_85 : f32 to vector<8x64xf32>
      %184 = arith.maximumf %182, %183 : vector<8x64xf32>
      %c0_86 = arith.constant 0 : index
      %c0_87 = arith.constant 0 : index
      %185 = vector.load %arg7[%c0_86, %c0_87] : memref<64x32xf32, #tpu.memory_space<vmem>>, vector<64x32xf32>
      %cst_88 = arith.constant dense<0.000000e+00> : vector<8x32xf32>
      %186 = tpu.matmul %184, %185, %cst_88 {dimension_numbers = #tpu.dot_dimension_numbers<[1], [0], [0], [1], [0, 0, 1, 1], [], []>} : vector<8x64xf32>, vector<64x32xf32>, vector<8x32xf32> -> vector<8x32xf32>
      %c0_89 = arith.constant 0 : index
      %c0_90 = arith.constant 0 : index
      %187 = vector.load %arg8[%c0_89, %c0_90] : memref<1x32xf32, #tpu.memory_space<vmem>>, vector<1x32xf32>
      %188 = vector.broadcast %187 : vector<1x32xf32> to vector<8x32xf32>
      %189 = arith.addf %186, %188 : vector<8x32xf32>
      %190 = arith.addf %153, %189 : vector<8x32xf32>
      %c0_91 = arith.constant 0 : index
      %c0_92 = arith.constant 0 : index
      %191 = vector.load %arg9[%c0_91, %c0_92] : memref<32x64xf32, #tpu.memory_space<vmem>>, vector<32x64xf32>
      %192 = arith.truncf %190 : vector<8x32xf32> to vector<8x32xbf16>
      %193 = arith.truncf %191 : vector<32x64xf32> to vector<32x64xbf16>
      %cst_93 = arith.constant dense<0.000000e+00> : vector<8x64xf32>
      %194 = tpu.matmul %192, %193, %cst_93 {dimension_numbers = #tpu.dot_dimension_numbers<[1], [0], [0], [1], [0, 0, 1, 1], [], []>} : vector<8x32xbf16>, vector<32x64xbf16>, vector<8x64xf32> -> vector<8x64xf32>
      %c0_94 = arith.constant 0 : index
      %c0_95 = arith.constant 0 : index
      %195 = vector.load %arg10[%c0_94, %c0_95] : memref<1x64xf32, #tpu.memory_space<vmem>>, vector<1x64xf32>
      %196 = vector.broadcast %195 : vector<1x64xf32> to vector<8x64xf32>
      %197 = arith.addf %194, %196 : vector<8x64xf32>
      %c0_96 = arith.constant 0 : index
      %c0_97 = arith.constant 0 : index
      %198 = vector.load %arg11[%c0_96, %c0_97] : memref<32x32xf32, #tpu.memory_space<vmem>>, vector<32x32xf32>
      %199 = arith.truncf %153 : vector<8x32xf32> to vector<8x32xbf16>
      %200 = arith.truncf %198 : vector<32x32xf32> to vector<32x32xbf16>
      %cst_98 = arith.constant dense<0.000000e+00> : vector<8x32xf32>
      %201 = tpu.matmul %199, %200, %cst_98 {dimension_numbers = #tpu.dot_dimension_numbers<[1], [0], [0], [1], [0, 0, 1, 1], [], []>} : vector<8x32xbf16>, vector<32x32xbf16>, vector<8x32xf32> -> vector<8x32xf32>
      %c0_99 = arith.constant 0 : index
      %c0_100 = arith.constant 0 : index
      %202 = vector.load %arg12[%c0_99, %c0_100] : memref<1x32xf32, #tpu.memory_space<vmem>>, vector<1x32xf32>
      %203 = vector.broadcast %202 : vector<1x32xf32> to vector<8x32xf32>
      %204 = arith.addf %201, %203 : vector<8x32xf32>
      %205 = vector.extract_strided_slice %197 {offsets = [0, 0], sizes = [8, 32], strides = [1, 1]} : vector<8x64xf32> to vector<8x32xf32>
      %cst_101 = arith.constant 0.353553385 : f32
      %206 = vector.broadcast %cst_101 : f32 to vector<8x32xf32>
      %207 = arith.mulf %205, %206 : vector<8x32xf32>
      %208 = arith.truncf %207 : vector<8x32xf32> to vector<8x32xbf16>
      %209 = vector.extract_strided_slice %197 {offsets = [0, 32], sizes = [8, 32], strides = [1, 1]} : vector<8x64xf32> to vector<8x32xf32>
      %210 = arith.truncf %209 : vector<8x32xf32> to vector<8x32xbf16>
      %211 = tpu.transpose %210, [1, 0] : vector<8x32xbf16> -> vector<32x8xbf16>
      %212 = arith.truncf %204 : vector<8x32xf32> to vector<8x32xbf16>
      %213 = vector.extract_strided_slice %208 {offsets = [0, 0], sizes = [8, 8], strides = [1, 1]} : vector<8x32xbf16> to vector<8x8xbf16>
      %214 = vector.extract_strided_slice %211 {offsets = [0, 0], sizes = [8, 8], strides = [1, 1]} : vector<32x8xbf16> to vector<8x8xbf16>
      %cst_102 = arith.constant dense<0.000000e+00> : vector<8x8xf32>
      %215 = tpu.matmul %213, %214, %cst_102 {dimension_numbers = #tpu.dot_dimension_numbers<[1], [0], [0], [1], [0, 0, 1, 1], [], []>} : vector<8x8xbf16>, vector<8x8xbf16>, vector<8x8xf32> -> vector<8x8xf32>
      %cst_103 = arith.constant dense<0xFF800000> : vector<8xf32>
      %216 = vector.multi_reduction <maximumf>, %215, %cst_103 [1] : vector<8x8xf32> to vector<8xf32>
      %217 = vector.shape_cast %216 : vector<8xf32> to vector<8x1xf32>
      %218 = vector.broadcast %217 : vector<8x1xf32> to vector<8x8xf32>
      %219 = arith.subf %215, %218 : vector<8x8xf32>
      %220 = math.exp %219 : vector<8x8xf32>
      %cst_104 = arith.constant dense<0.000000e+00> : vector<8xf32>
      %221 = vector.multi_reduction <add>, %220, %cst_104 [1] : vector<8x8xf32> to vector<8xf32>
      %222 = vector.shape_cast %221 : vector<8xf32> to vector<8x1xf32>
      %223 = tpu.reciprocal %222 {approx = true} : vector<8x1xf32> -> vector<8x1xf32>
      %224 = vector.broadcast %223 : vector<8x1xf32> to vector<8x8xf32>
      %225 = arith.mulf %220, %224 : vector<8x8xf32>
      %226 = arith.truncf %225 : vector<8x8xf32> to vector<8x8xbf16>
      %227 = vector.extract_strided_slice %212 {offsets = [0, 0], sizes = [8, 8], strides = [1, 1]} : vector<8x32xbf16> to vector<8x8xbf16>
      %cst_105 = arith.constant dense<0.000000e+00> : vector<8x8xf32>
      %228 = tpu.matmul %226, %227, %cst_105 {dimension_numbers = #tpu.dot_dimension_numbers<[1], [0], [0], [1], [0, 0, 1, 1], [], []>} : vector<8x8xbf16>, vector<8x8xbf16>, vector<8x8xf32> -> vector<8x8xf32>
      %229 = vector.extract_strided_slice %208 {offsets = [0, 8], sizes = [8, 8], strides = [1, 1]} : vector<8x32xbf16> to vector<8x8xbf16>
      %230 = vector.extract_strided_slice %211 {offsets = [8, 0], sizes = [8, 8], strides = [1, 1]} : vector<32x8xbf16> to vector<8x8xbf16>
      %cst_106 = arith.constant dense<0.000000e+00> : vector<8x8xf32>
      %231 = tpu.matmul %229, %230, %cst_106 {dimension_numbers = #tpu.dot_dimension_numbers<[1], [0], [0], [1], [0, 0, 1, 1], [], []>} : vector<8x8xbf16>, vector<8x8xbf16>, vector<8x8xf32> -> vector<8x8xf32>
      %cst_107 = arith.constant dense<0xFF800000> : vector<8xf32>
      %232 = vector.multi_reduction <maximumf>, %231, %cst_107 [1] : vector<8x8xf32> to vector<8xf32>
      %233 = vector.shape_cast %232 : vector<8xf32> to vector<8x1xf32>
      %234 = vector.broadcast %233 : vector<8x1xf32> to vector<8x8xf32>
      %235 = arith.subf %231, %234 : vector<8x8xf32>
      %236 = math.exp %235 : vector<8x8xf32>
      %cst_108 = arith.constant dense<0.000000e+00> : vector<8xf32>
      %237 = vector.multi_reduction <add>, %236, %cst_108 [1] : vector<8x8xf32> to vector<8xf32>
      %238 = vector.shape_cast %237 : vector<8xf32> to vector<8x1xf32>
      %239 = tpu.reciprocal %238 {approx = true} : vector<8x1xf32> -> vector<8x1xf32>
      %240 = vector.broadcast %239 : vector<8x1xf32> to vector<8x8xf32>
      %241 = arith.mulf %236, %240 : vector<8x8xf32>
      %242 = arith.truncf %241 : vector<8x8xf32> to vector<8x8xbf16>
      %243 = vector.extract_strided_slice %212 {offsets = [0, 8], sizes = [8, 8], strides = [1, 1]} : vector<8x32xbf16> to vector<8x8xbf16>
      %cst_109 = arith.constant dense<0.000000e+00> : vector<8x8xf32>
      %244 = tpu.matmul %242, %243, %cst_109 {dimension_numbers = #tpu.dot_dimension_numbers<[1], [0], [0], [1], [0, 0, 1, 1], [], []>} : vector<8x8xbf16>, vector<8x8xbf16>, vector<8x8xf32> -> vector<8x8xf32>
      %245 = vector.extract_strided_slice %208 {offsets = [0, 16], sizes = [8, 8], strides = [1, 1]} : vector<8x32xbf16> to vector<8x8xbf16>
      %246 = vector.extract_strided_slice %211 {offsets = [16, 0], sizes = [8, 8], strides = [1, 1]} : vector<32x8xbf16> to vector<8x8xbf16>
      %cst_110 = arith.constant dense<0.000000e+00> : vector<8x8xf32>
      %247 = tpu.matmul %245, %246, %cst_110 {dimension_numbers = #tpu.dot_dimension_numbers<[1], [0], [0], [1], [0, 0, 1, 1], [], []>} : vector<8x8xbf16>, vector<8x8xbf16>, vector<8x8xf32> -> vector<8x8xf32>
      %cst_111 = arith.constant dense<0xFF800000> : vector<8xf32>
      %248 = vector.multi_reduction <maximumf>, %247, %cst_111 [1] : vector<8x8xf32> to vector<8xf32>
      %249 = vector.shape_cast %248 : vector<8xf32> to vector<8x1xf32>
      %250 = vector.broadcast %249 : vector<8x1xf32> to vector<8x8xf32>
      %251 = arith.subf %247, %250 : vector<8x8xf32>
      %252 = math.exp %251 : vector<8x8xf32>
      %cst_112 = arith.constant dense<0.000000e+00> : vector<8xf32>
      %253 = vector.multi_reduction <add>, %252, %cst_112 [1] : vector<8x8xf32> to vector<8xf32>
      %254 = vector.shape_cast %253 : vector<8xf32> to vector<8x1xf32>
      %255 = tpu.reciprocal %254 {approx = true} : vector<8x1xf32> -> vector<8x1xf32>
      %256 = vector.broadcast %255 : vector<8x1xf32> to vector<8x8xf32>
      %257 = arith.mulf %252, %256 : vector<8x8xf32>
      %258 = arith.truncf %257 : vector<8x8xf32> to vector<8x8xbf16>
      %259 = vector.extract_strided_slice %212 {offsets = [0, 16], sizes = [8, 8], strides = [1, 1]} : vector<8x32xbf16> to vector<8x8xbf16>
      %cst_113 = arith.constant dense<0.000000e+00> : vector<8x8xf32>
      %260 = tpu.matmul %258, %259, %cst_113 {dimension_numbers = #tpu.dot_dimension_numbers<[1], [0], [0], [1], [0, 0, 1, 1], [], []>} : vector<8x8xbf16>, vector<8x8xbf16>, vector<8x8xf32> -> vector<8x8xf32>
      %261 = vector.extract_strided_slice %208 {offsets = [0, 24], sizes = [8, 8], strides = [1, 1]} : vector<8x32xbf16> to vector<8x8xbf16>
      %262 = vector.extract_strided_slice %211 {offsets = [24, 0], sizes = [8, 8], strides = [1, 1]} : vector<32x8xbf16> to vector<8x8xbf16>
      %cst_114 = arith.constant dense<0.000000e+00> : vector<8x8xf32>
      %263 = tpu.matmul %261, %262, %cst_114 {dimension_numbers = #tpu.dot_dimension_numbers<[1], [0], [0], [1], [0, 0, 1, 1], [], []>} : vector<8x8xbf16>, vector<8x8xbf16>, vector<8x8xf32> -> vector<8x8xf32>
      %cst_115 = arith.constant dense<0xFF800000> : vector<8xf32>
      %264 = vector.multi_reduction <maximumf>, %263, %cst_115 [1] : vector<8x8xf32> to vector<8xf32>
      %265 = vector.shape_cast %264 : vector<8xf32> to vector<8x1xf32>
      %266 = vector.broadcast %265 : vector<8x1xf32> to vector<8x8xf32>
      %267 = arith.subf %263, %266 : vector<8x8xf32>
      %268 = math.exp %267 : vector<8x8xf32>
      %cst_116 = arith.constant dense<0.000000e+00> : vector<8xf32>
      %269 = vector.multi_reduction <add>, %268, %cst_116 [1] : vector<8x8xf32> to vector<8xf32>
      %270 = vector.shape_cast %269 : vector<8xf32> to vector<8x1xf32>
      %271 = tpu.reciprocal %270 {approx = true} : vector<8x1xf32> -> vector<8x1xf32>
      %272 = vector.broadcast %271 : vector<8x1xf32> to vector<8x8xf32>
      %273 = arith.mulf %268, %272 : vector<8x8xf32>
      %274 = arith.truncf %273 : vector<8x8xf32> to vector<8x8xbf16>
      %275 = vector.extract_strided_slice %212 {offsets = [0, 24], sizes = [8, 8], strides = [1, 1]} : vector<8x32xbf16> to vector<8x8xbf16>
      %cst_117 = arith.constant dense<0.000000e+00> : vector<8x8xf32>
      %276 = tpu.matmul %274, %275, %cst_117 {dimension_numbers = #tpu.dot_dimension_numbers<[1], [0], [0], [1], [0, 0, 1, 1], [], []>} : vector<8x8xbf16>, vector<8x8xbf16>, vector<8x8xf32> -> vector<8x8xf32>
      %277 = tpu.concatenate %228, %244, %260, %276 in 1 : vector<8x8xf32>, vector<8x8xf32>, vector<8x8xf32>, vector<8x8xf32> -> vector<8x32xf32>
      %c0_118 = arith.constant 0 : index
      %c0_119 = arith.constant 0 : index
      %278 = vector.load %arg13[%c0_118, %c0_119] : memref<32x32xf32, #tpu.memory_space<vmem>>, vector<32x32xf32>
      %279 = arith.truncf %277 : vector<8x32xf32> to vector<8x32xbf16>
      %280 = arith.truncf %278 : vector<32x32xf32> to vector<32x32xbf16>
      %cst_120 = arith.constant dense<0.000000e+00> : vector<8x32xf32>
      %281 = tpu.matmul %279, %280, %cst_120 {dimension_numbers = #tpu.dot_dimension_numbers<[1], [0], [0], [1], [0, 0, 1, 1], [], []>} : vector<8x32xbf16>, vector<32x32xbf16>, vector<8x32xf32> -> vector<8x32xf32>
      %c0_121 = arith.constant 0 : index
      %c0_122 = arith.constant 0 : index
      %282 = vector.load %arg14[%c0_121, %c0_122] : memref<1x32xf32, #tpu.memory_space<vmem>>, vector<1x32xf32>
      %283 = vector.broadcast %282 : vector<1x32xf32> to vector<8x32xf32>
      %284 = arith.addf %281, %283 : vector<8x32xf32>
      %285 = arith.addf %153, %284 : vector<8x32xf32>
      %cst_123 = arith.constant dense<0.000000e+00> : vector<8xf32>
      %286 = vector.multi_reduction <add>, %285, %cst_123 [1] : vector<8x32xf32> to vector<8xf32>
      %287 = vector.shape_cast %286 : vector<8xf32> to vector<8x1xf32>
      %cst_124 = arith.constant 3.200000e+01 : f32
      %288 = vector.broadcast %cst_124 : f32 to vector<8x1xf32>
      %289 = arith.divf %287, %288 : vector<8x1xf32>
      %290 = vector.broadcast %289 : vector<8x1xf32> to vector<8x32xf32>
      %291 = arith.subf %285, %290 : vector<8x32xf32>
      %292 = arith.mulf %291, %291 : vector<8x32xf32>
      %cst_125 = arith.constant dense<0.000000e+00> : vector<8xf32>
      %293 = vector.multi_reduction <add>, %292, %cst_125 [1] : vector<8x32xf32> to vector<8xf32>
      %294 = vector.shape_cast %293 : vector<8xf32> to vector<8x1xf32>
      %cst_126 = arith.constant 3.200000e+01 : f32
      %295 = vector.broadcast %cst_126 : f32 to vector<8x1xf32>
      %296 = arith.divf %294, %295 : vector<8x1xf32>
      %297 = vector.broadcast %289 : vector<8x1xf32> to vector<8x32xf32>
      %298 = arith.subf %285, %297 : vector<8x32xf32>
      %cst_127 = arith.constant 9.99999974E-6 : f32
      %299 = vector.broadcast %cst_127 : f32 to vector<8x1xf32>
      %300 = arith.addf %296, %299 : vector<8x1xf32>
      %301 = math.rsqrt %300 : vector<8x1xf32>
      %302 = vector.broadcast %301 : vector<8x1xf32> to vector<8x32xf32>
      %303 = arith.mulf %298, %302 : vector<8x32xf32>
      %c0_128 = arith.constant 0 : index
      %c0_129 = arith.constant 0 : index
      %304 = vector.load %arg15[%c0_128, %c0_129] : memref<1x32xf32, #tpu.memory_space<vmem>>, vector<1x32xf32>
      %305 = vector.broadcast %304 : vector<1x32xf32> to vector<8x32xf32>
      %306 = arith.mulf %303, %305 : vector<8x32xf32>
      %c0_130 = arith.constant 0 : index
      %c0_131 = arith.constant 0 : index
      %307 = vector.load %arg16[%c0_130, %c0_131] : memref<1x32xf32, #tpu.memory_space<vmem>>, vector<1x32xf32>
      %308 = vector.broadcast %307 : vector<1x32xf32> to vector<8x32xf32>
      %309 = arith.addf %306, %308 : vector<8x32xf32>
      %c0_132 = arith.constant 0 : index
      %c0_133 = arith.constant 0 : index
      %310 = vector.load %arg42[%c0_132, %c0_133] : memref<8x32xf32, #tpu.memory_space<vmem>>, vector<8x32xf32>
      tpu.vector_store %arg42[%c0_132, %c0_133], %309 {strides = array<i32>} : memref<8x32xf32, #tpu.memory_space<vmem>>, vector<8x32xf32>,
      %c0_134 = arith.constant 0 : index
      %c0_135 = arith.constant 0 : index
      %311 = vector.load %arg42[%c0_134, %c0_135] : memref<8x32xf32, #tpu.memory_space<vmem>>, vector<8x32xf32>
      %312 = arith.addf %311, %189 : vector<8x32xf32>
      %c0_136 = arith.constant 0 : index
      %c0_137 = arith.constant 0 : index
      %313 = vector.load %arg17[%c0_136, %c0_137] : memref<32x32xf32, #tpu.memory_space<vmem>>, vector<32x32xf32>
      %314 = arith.truncf %312 : vector<8x32xf32> to vector<8x32xbf16>
      %315 = arith.truncf %313 : vector<32x32xf32> to vector<32x32xbf16>
      %cst_138 = arith.constant dense<0.000000e+00> : vector<8x32xf32>
      %316 = tpu.matmul %314, %315, %cst_138 {dimension_numbers = #tpu.dot_dimension_numbers<[1], [0], [0], [1], [0, 0, 1, 1], [], []>} : vector<8x32xbf16>, vector<32x32xbf16>, vector<8x32xf32> -> vector<8x32xf32>
      %c0_139 = arith.constant 0 : index
      %c0_140 = arith.constant 0 : index
      %317 = vector.load %arg18[%c0_139, %c0_140] : memref<1x32xf32, #tpu.memory_space<vmem>>, vector<1x32xf32>
      %318 = vector.broadcast %317 : vector<1x32xf32> to vector<8x32xf32>
      %319 = arith.addf %316, %318 : vector<8x32xf32>
      %cst_141 = arith.constant 0.353553385 : f32
      %320 = vector.broadcast %cst_141 : f32 to vector<8x32xf32>
      %321 = arith.mulf %319, %320 : vector<8x32xf32>
      %c0_142 = arith.constant 0 : index
      %c0_143 = arith.constant 0 : index
      %322 = vector.load %arg43[%c0_142, %c0_143] : memref<8x32xf32, #tpu.memory_space<vmem>>, vector<8x32xf32>
      tpu.vector_store %arg43[%c0_142, %c0_143], %321 {strides = array<i32>} : memref<8x32xf32, #tpu.memory_space<vmem>>, vector<8x32xf32>,
      %cst_144 = arith.constant -1.000000e+30 : f32
      %323 = vector.broadcast %cst_144 : f32 to vector<4x8x1xf32>
      %c0_145 = arith.constant 0 : index
      %c0_146 = arith.constant 0 : index
      %c0_147 = arith.constant 0 : index
      %324 = vector.load %arg44[%c0_145, %c0_146, %c0_147] : memref<4x8x1xf32, #tpu.memory_space<vmem>>, vector<4x8x1xf32>
      tpu.vector_store %arg44[%c0_145, %c0_146, %c0_147], %323 {strides = array<i32>} : memref<4x8x1xf32, #tpu.memory_space<vmem>>, vector<4x8x1xf32>,
      %cst_148 = arith.constant 0.000000e+00 : f32
      %325 = vector.broadcast %cst_148 : f32 to vector<4x8x1xf32>
      %c0_149 = arith.constant 0 : index
      %c0_150 = arith.constant 0 : index
      %c0_151 = arith.constant 0 : index
      %326 = vector.load %arg45[%c0_149, %c0_150, %c0_151] : memref<4x8x1xf32, #tpu.memory_space<vmem>>, vector<4x8x1xf32>
      tpu.vector_store %arg45[%c0_149, %c0_150, %c0_151], %325 {strides = array<i32>} : memref<4x8x1xf32, #tpu.memory_space<vmem>>, vector<4x8x1xf32>,
      %cst_152 = arith.constant 0.000000e+00 : f32
      %327 = vector.broadcast %cst_152 : f32 to vector<8x32xf32>
      %c0_153 = arith.constant 0 : index
      %c0_154 = arith.constant 0 : index
      %328 = vector.load %arg46[%c0_153, %c0_154] : memref<8x32xf32, #tpu.memory_space<vmem>>, vector<8x32xf32>
      tpu.vector_store %arg46[%c0_153, %c0_154], %327 {strides = array<i32>} : memref<8x32xf32, #tpu.memory_space<vmem>>, vector<8x32xf32>,
    } else {
    }
    %c0 = arith.constant 0 : index
    %c0_1 = arith.constant 0 : index
    %c0_2 = arith.constant 0 : index
    %3 = vector.load %arg3[%c0, %c0_1, %c0_2] : memref<1x8x32xbf16, #tpu.memory_space<vmem>>, vector<1x8x32xbf16>
    %4 = vector.shape_cast %3 : vector<1x8x32xbf16> to vector<8x32xbf16>
    %c0_3 = arith.constant 0 : index
    %c0_4 = arith.constant 0 : index
    %5 = vector.load %arg19[%c0_3, %c0_4] : memref<32x64xf32, #tpu.memory_space<vmem>>, vector<32x64xf32>
    %6 = arith.truncf %5 : vector<32x64xf32> to vector<32x64xbf16>
    %cst = arith.constant dense<0.000000e+00> : vector<8x64xf32>
    %7 = tpu.matmul %4, %6, %cst {dimension_numbers = #tpu.dot_dimension_numbers<[1], [0], [0], [1], [0, 0, 1, 1], [], []>} : vector<8x32xbf16>, vector<32x64xbf16>, vector<8x64xf32> -> vector<8x64xf32>
    %c0_5 = arith.constant 0 : index
    %c0_6 = arith.constant 0 : index
    %8 = vector.load %arg20[%c0_5, %c0_6] : memref<1x64xf32, #tpu.memory_space<vmem>>, vector<1x64xf32>
    %9 = vector.broadcast %8 : vector<1x64xf32> to vector<8x64xf32>
    %10 = arith.addf %7, %9 : vector<8x64xf32>
    %11 = vector.extract_strided_slice %10 {offsets = [0, 0], sizes = [8, 32], strides = [1, 1]} : vector<8x64xf32> to vector<8x32xf32>
    %12 = arith.truncf %11 : vector<8x32xf32> to vector<8x32xbf16>
    %13 = tpu.transpose %12, [1, 0] : vector<8x32xbf16> -> vector<32x8xbf16>
    %14 = vector.extract_strided_slice %10 {offsets = [0, 32], sizes = [8, 32], strides = [1, 1]} : vector<8x64xf32> to vector<8x32xf32>
    %15 = arith.truncf %14 : vector<8x32xf32> to vector<8x32xbf16>
    %c0_7 = arith.constant 0 : index
    %c0_8 = arith.constant 0 : index
    %16 = vector.load %arg43[%c0_7, %c0_8] : memref<8x32xf32, #tpu.memory_space<vmem>>, vector<8x32xf32>
    %17 = arith.truncf %16 : vector<8x32xf32> to vector<8x32xbf16>
    %c0_9 = arith.constant 0 : index
    %c0_10 = arith.constant 0 : index
    %18 = vector.load %arg46[%c0_9, %c0_10] : memref<8x32xf32, #tpu.memory_space<vmem>>, vector<8x32xf32>
    %19 = vector.extract_strided_slice %17 {offsets = [0, 0], sizes = [8, 8], strides = [1, 1]} : vector<8x32xbf16> to vector<8x8xbf16>
    %20 = vector.extract_strided_slice %13 {offsets = [0, 0], sizes = [8, 8], strides = [1, 1]} : vector<32x8xbf16> to vector<8x8xbf16>
    %cst_11 = arith.constant dense<0.000000e+00> : vector<8x8xf32>
    %21 = tpu.matmul %19, %20, %cst_11 {dimension_numbers = #tpu.dot_dimension_numbers<[1], [0], [0], [1], [0, 0, 1, 1], [], []>} : vector<8x8xbf16>, vector<8x8xbf16>, vector<8x8xf32> -> vector<8x8xf32>
    %c0_12 = arith.constant 0 : index
    %c0_13 = arith.constant 0 : index
    %c0_14 = arith.constant 0 : index
    %22 = vector.load %arg44[%c0_12, %c0_13, %c0_14] : memref<4x8x1xf32, #tpu.memory_space<vmem>>, vector<1x8x1xf32>
    %23 = vector.shape_cast %22 : vector<1x8x1xf32> to vector<8x1xf32>
    %cst_15 = arith.constant dense<0xFF800000> : vector<8xf32>
    %24 = vector.multi_reduction <maximumf>, %21, %cst_15 [1] : vector<8x8xf32> to vector<8xf32>
    %25 = vector.shape_cast %24 : vector<8xf32> to vector<8x1xf32>
    %26 = arith.maximumf %23, %25 : vector<8x1xf32>
    %27 = arith.subf %23, %26 : vector<8x1xf32>
    %28 = math.exp %27 : vector<8x1xf32>
    %29 = vector.broadcast %26 : vector<8x1xf32> to vector<8x8xf32>
    %30 = arith.subf %21, %29 : vector<8x8xf32>
    %31 = math.exp %30 : vector<8x8xf32>
    %c0_16 = arith.constant 0 : index
    %c0_17 = arith.constant 0 : index
    %c0_18 = arith.constant 0 : index
    %32 = vector.load %arg44[%c0_16, %c0_17, %c0_18] : memref<4x8x1xf32, #tpu.memory_space<vmem>>, vector<1x8x1xf32>
    %33 = vector.shape_cast %32 : vector<1x8x1xf32> to vector<8x1xf32>
    %34 = vector.shape_cast %26 : vector<8x1xf32> to vector<1x8x1xf32>
    tpu.vector_store %arg44[%c0_16, %c0_17, %c0_18], %34 {strides = array<i32>} : memref<4x8x1xf32, #tpu.memory_space<vmem>>, vector<1x8x1xf32>,
    %c0_19 = arith.constant 0 : index
    %c0_20 = arith.constant 0 : index
    %c0_21 = arith.constant 0 : index
    %35 = vector.load %arg45[%c0_19, %c0_20, %c0_21] : memref<4x8x1xf32, #tpu.memory_space<vmem>>, vector<1x8x1xf32>
    %36 = vector.shape_cast %35 : vector<1x8x1xf32> to vector<8x1xf32>
    %37 = arith.mulf %28, %36 : vector<8x1xf32>
    %cst_22 = arith.constant dense<0.000000e+00> : vector<8xf32>
    %38 = vector.multi_reduction <add>, %31, %cst_22 [1] : vector<8x8xf32> to vector<8xf32>
    %39 = vector.shape_cast %38 : vector<8xf32> to vector<8x1xf32>
    %40 = arith.addf %37, %39 : vector<8x1xf32>
    %c0_23 = arith.constant 0 : index
    %c0_24 = arith.constant 0 : index
    %c0_25 = arith.constant 0 : index
    %41 = vector.load %arg45[%c0_23, %c0_24, %c0_25] : memref<4x8x1xf32, #tpu.memory_space<vmem>>, vector<1x8x1xf32>
    %42 = vector.shape_cast %41 : vector<1x8x1xf32> to vector<8x1xf32>
    %43 = vector.shape_cast %40 : vector<8x1xf32> to vector<1x8x1xf32>
    tpu.vector_store %arg45[%c0_23, %c0_24, %c0_25], %43 {strides = array<i32>} : memref<4x8x1xf32, #tpu.memory_space<vmem>>, vector<1x8x1xf32>,
    %44 = arith.truncf %31 : vector<8x8xf32> to vector<8x8xbf16>
    %45 = vector.extract_strided_slice %15 {offsets = [0, 0], sizes = [8, 8], strides = [1, 1]} : vector<8x32xbf16> to vector<8x8xbf16>
    %cst_26 = arith.constant dense<0.000000e+00> : vector<8x8xf32>
    %46 = tpu.matmul %44, %45, %cst_26 {dimension_numbers = #tpu.dot_dimension_numbers<[1], [0], [0], [1], [0, 0, 1, 1], [], []>} : vector<8x8xbf16>, vector<8x8xbf16>, vector<8x8xf32> -> vector<8x8xf32>
    %47 = vector.extract_strided_slice %18 {offsets = [0, 0], sizes = [8, 8], strides = [1, 1]} : vector<8x32xf32> to vector<8x8xf32>
    %48 = vector.broadcast %28 : vector<8x1xf32> to vector<8x8xf32>
    %49 = arith.mulf %48, %47 : vector<8x8xf32>
    %50 = arith.addf %49, %46 : vector<8x8xf32>
    %51 = vector.extract_strided_slice %17 {offsets = [0, 8], sizes = [8, 8], strides = [1, 1]} : vector<8x32xbf16> to vector<8x8xbf16>
    %52 = vector.extract_strided_slice %13 {offsets = [8, 0], sizes = [8, 8], strides = [1, 1]} : vector<32x8xbf16> to vector<8x8xbf16>
    %cst_27 = arith.constant dense<0.000000e+00> : vector<8x8xf32>
    %53 = tpu.matmul %51, %52, %cst_27 {dimension_numbers = #tpu.dot_dimension_numbers<[1], [0], [0], [1], [0, 0, 1, 1], [], []>} : vector<8x8xbf16>, vector<8x8xbf16>, vector<8x8xf32> -> vector<8x8xf32>
    %c1 = arith.constant 1 : index
    %c0_28 = arith.constant 0 : index
    %c0_29 = arith.constant 0 : index
    %54 = vector.load %arg44[%c1, %c0_28, %c0_29] : memref<4x8x1xf32, #tpu.memory_space<vmem>>, vector<1x8x1xf32>
    %55 = vector.shape_cast %54 : vector<1x8x1xf32> to vector<8x1xf32>
    %cst_30 = arith.constant dense<0xFF800000> : vector<8xf32>
    %56 = vector.multi_reduction <maximumf>, %53, %cst_30 [1] : vector<8x8xf32> to vector<8xf32>
    %57 = vector.shape_cast %56 : vector<8xf32> to vector<8x1xf32>
    %58 = arith.maximumf %55, %57 : vector<8x1xf32>
    %59 = arith.subf %55, %58 : vector<8x1xf32>
    %60 = math.exp %59 : vector<8x1xf32>
    %61 = vector.broadcast %58 : vector<8x1xf32> to vector<8x8xf32>
    %62 = arith.subf %53, %61 : vector<8x8xf32>
    %63 = math.exp %62 : vector<8x8xf32>
    %c1_31 = arith.constant 1 : index
    %c0_32 = arith.constant 0 : index
    %c0_33 = arith.constant 0 : index
    %64 = vector.load %arg44[%c1_31, %c0_32, %c0_33] : memref<4x8x1xf32, #tpu.memory_space<vmem>>, vector<1x8x1xf32>
    %65 = vector.shape_cast %64 : vector<1x8x1xf32> to vector<8x1xf32>
    %66 = vector.shape_cast %58 : vector<8x1xf32> to vector<1x8x1xf32>
    tpu.vector_store %arg44[%c1_31, %c0_32, %c0_33], %66 {strides = array<i32>} : memref<4x8x1xf32, #tpu.memory_space<vmem>>, vector<1x8x1xf32>,
    %c1_34 = arith.constant 1 : index
    %c0_35 = arith.constant 0 : index
    %c0_36 = arith.constant 0 : index
    %67 = vector.load %arg45[%c1_34, %c0_35, %c0_36] : memref<4x8x1xf32, #tpu.memory_space<vmem>>, vector<1x8x1xf32>
    %68 = vector.shape_cast %67 : vector<1x8x1xf32> to vector<8x1xf32>
    %69 = arith.mulf %60, %68 : vector<8x1xf32>
    %cst_37 = arith.constant dense<0.000000e+00> : vector<8xf32>
    %70 = vector.multi_reduction <add>, %63, %cst_37 [1] : vector<8x8xf32> to vector<8xf32>
    %71 = vector.shape_cast %70 : vector<8xf32> to vector<8x1xf32>
    %72 = arith.addf %69, %71 : vector<8x1xf32>
    %c1_38 = arith.constant 1 : index
    %c0_39 = arith.constant 0 : index
    %c0_40 = arith.constant 0 : index
    %73 = vector.load %arg45[%c1_38, %c0_39, %c0_40] : memref<4x8x1xf32, #tpu.memory_space<vmem>>, vector<1x8x1xf32>
    %74 = vector.shape_cast %73 : vector<1x8x1xf32> to vector<8x1xf32>
    %75 = vector.shape_cast %72 : vector<8x1xf32> to vector<1x8x1xf32>
    tpu.vector_store %arg45[%c1_38, %c0_39, %c0_40], %75 {strides = array<i32>} : memref<4x8x1xf32, #tpu.memory_space<vmem>>, vector<1x8x1xf32>,
    %76 = arith.truncf %63 : vector<8x8xf32> to vector<8x8xbf16>
    %77 = vector.extract_strided_slice %15 {offsets = [0, 8], sizes = [8, 8], strides = [1, 1]} : vector<8x32xbf16> to vector<8x8xbf16>
    %cst_41 = arith.constant dense<0.000000e+00> : vector<8x8xf32>
    %78 = tpu.matmul %76, %77, %cst_41 {dimension_numbers = #tpu.dot_dimension_numbers<[1], [0], [0], [1], [0, 0, 1, 1], [], []>} : vector<8x8xbf16>, vector<8x8xbf16>, vector<8x8xf32> -> vector<8x8xf32>
    %79 = vector.extract_strided_slice %18 {offsets = [0, 8], sizes = [8, 8], strides = [1, 1]} : vector<8x32xf32> to vector<8x8xf32>
    %80 = vector.broadcast %60 : vector<8x1xf32> to vector<8x8xf32>
    %81 = arith.mulf %80, %79 : vector<8x8xf32>
    %82 = arith.addf %81, %78 : vector<8x8xf32>
    %83 = vector.extract_strided_slice %17 {offsets = [0, 16], sizes = [8, 8], strides = [1, 1]} : vector<8x32xbf16> to vector<8x8xbf16>
    %84 = vector.extract_strided_slice %13 {offsets = [16, 0], sizes = [8, 8], strides = [1, 1]} : vector<32x8xbf16> to vector<8x8xbf16>
    %cst_42 = arith.constant dense<0.000000e+00> : vector<8x8xf32>
    %85 = tpu.matmul %83, %84, %cst_42 {dimension_numbers = #tpu.dot_dimension_numbers<[1], [0], [0], [1], [0, 0, 1, 1], [], []>} : vector<8x8xbf16>, vector<8x8xbf16>, vector<8x8xf32> -> vector<8x8xf32>
    %c2 = arith.constant 2 : index
    %c0_43 = arith.constant 0 : index
    %c0_44 = arith.constant 0 : index
    %86 = vector.load %arg44[%c2, %c0_43, %c0_44] : memref<4x8x1xf32, #tpu.memory_space<vmem>>, vector<1x8x1xf32>
    %87 = vector.shape_cast %86 : vector<1x8x1xf32> to vector<8x1xf32>
    %cst_45 = arith.constant dense<0xFF800000> : vector<8xf32>
    %88 = vector.multi_reduction <maximumf>, %85, %cst_45 [1] : vector<8x8xf32> to vector<8xf32>
    %89 = vector.shape_cast %88 : vector<8xf32> to vector<8x1xf32>
    %90 = arith.maximumf %87, %89 : vector<8x1xf32>
    %91 = arith.subf %87, %90 : vector<8x1xf32>
    %92 = math.exp %91 : vector<8x1xf32>
    %93 = vector.broadcast %90 : vector<8x1xf32> to vector<8x8xf32>
    %94 = arith.subf %85, %93 : vector<8x8xf32>
    %95 = math.exp %94 : vector<8x8xf32>
    %c2_46 = arith.constant 2 : index
    %c0_47 = arith.constant 0 : index
    %c0_48 = arith.constant 0 : index
    %96 = vector.load %arg44[%c2_46, %c0_47, %c0_48] : memref<4x8x1xf32, #tpu.memory_space<vmem>>, vector<1x8x1xf32>
    %97 = vector.shape_cast %96 : vector<1x8x1xf32> to vector<8x1xf32>
    %98 = vector.shape_cast %90 : vector<8x1xf32> to vector<1x8x1xf32>
    tpu.vector_store %arg44[%c2_46, %c0_47, %c0_48], %98 {strides = array<i32>} : memref<4x8x1xf32, #tpu.memory_space<vmem>>, vector<1x8x1xf32>,
    %c2_49 = arith.constant 2 : index
    %c0_50 = arith.constant 0 : index
    %c0_51 = arith.constant 0 : index
    %99 = vector.load %arg45[%c2_49, %c0_50, %c0_51] : memref<4x8x1xf32, #tpu.memory_space<vmem>>, vector<1x8x1xf32>
    %100 = vector.shape_cast %99 : vector<1x8x1xf32> to vector<8x1xf32>
    %101 = arith.mulf %92, %100 : vector<8x1xf32>
    %cst_52 = arith.constant dense<0.000000e+00> : vector<8xf32>
    %102 = vector.multi_reduction <add>, %95, %cst_52 [1] : vector<8x8xf32> to vector<8xf32>
    %103 = vector.shape_cast %102 : vector<8xf32> to vector<8x1xf32>
    %104 = arith.addf %101, %103 : vector<8x1xf32>
    %c2_53 = arith.constant 2 : index
    %c0_54 = arith.constant 0 : index
    %c0_55 = arith.constant 0 : index
    %105 = vector.load %arg45[%c2_53, %c0_54, %c0_55] : memref<4x8x1xf32, #tpu.memory_space<vmem>>, vector<1x8x1xf32>
    %106 = vector.shape_cast %105 : vector<1x8x1xf32> to vector<8x1xf32>
    %107 = vector.shape_cast %104 : vector<8x1xf32> to vector<1x8x1xf32>
    tpu.vector_store %arg45[%c2_53, %c0_54, %c0_55], %107 {strides = array<i32>} : memref<4x8x1xf32, #tpu.memory_space<vmem>>, vector<1x8x1xf32>,
    %108 = arith.truncf %95 : vector<8x8xf32> to vector<8x8xbf16>
    %109 = vector.extract_strided_slice %15 {offsets = [0, 16], sizes = [8, 8], strides = [1, 1]} : vector<8x32xbf16> to vector<8x8xbf16>
    %cst_56 = arith.constant dense<0.000000e+00> : vector<8x8xf32>
    %110 = tpu.matmul %108, %109, %cst_56 {dimension_numbers = #tpu.dot_dimension_numbers<[1], [0], [0], [1], [0, 0, 1, 1], [], []>} : vector<8x8xbf16>, vector<8x8xbf16>, vector<8x8xf32> -> vector<8x8xf32>
    %111 = vector.extract_strided_slice %18 {offsets = [0, 16], sizes = [8, 8], strides = [1, 1]} : vector<8x32xf32> to vector<8x8xf32>
    %112 = vector.broadcast %92 : vector<8x1xf32> to vector<8x8xf32>
    %113 = arith.mulf %112, %111 : vector<8x8xf32>
    %114 = arith.addf %113, %110 : vector<8x8xf32>
    %115 = vector.extract_strided_slice %17 {offsets = [0, 24], sizes = [8, 8], strides = [1, 1]} : vector<8x32xbf16> to vector<8x8xbf16>
    %116 = vector.extract_strided_slice %13 {offsets = [24, 0], sizes = [8, 8], strides = [1, 1]} : vector<32x8xbf16> to vector<8x8xbf16>
    %cst_57 = arith.constant dense<0.000000e+00> : vector<8x8xf32>
    %117 = tpu.matmul %115, %116, %cst_57 {dimension_numbers = #tpu.dot_dimension_numbers<[1], [0], [0], [1], [0, 0, 1, 1], [], []>} : vector<8x8xbf16>, vector<8x8xbf16>, vector<8x8xf32> -> vector<8x8xf32>
    %c3 = arith.constant 3 : index
    %c0_58 = arith.constant 0 : index
    %c0_59 = arith.constant 0 : index
    %118 = vector.load %arg44[%c3, %c0_58, %c0_59] : memref<4x8x1xf32, #tpu.memory_space<vmem>>, vector<1x8x1xf32>
    %119 = vector.shape_cast %118 : vector<1x8x1xf32> to vector<8x1xf32>
    %cst_60 = arith.constant dense<0xFF800000> : vector<8xf32>
    %120 = vector.multi_reduction <maximumf>, %117, %cst_60 [1] : vector<8x8xf32> to vector<8xf32>
    %121 = vector.shape_cast %120 : vector<8xf32> to vector<8x1xf32>
    %122 = arith.maximumf %119, %121 : vector<8x1xf32>
    %123 = arith.subf %119, %122 : vector<8x1xf32>
    %124 = math.exp %123 : vector<8x1xf32>
    %125 = vector.broadcast %122 : vector<8x1xf32> to vector<8x8xf32>
    %126 = arith.subf %117, %125 : vector<8x8xf32>
    %127 = math.exp %126 : vector<8x8xf32>
    %c3_61 = arith.constant 3 : index
    %c0_62 = arith.constant 0 : index
    %c0_63 = arith.constant 0 : index
    %128 = vector.load %arg44[%c3_61, %c0_62, %c0_63] : memref<4x8x1xf32, #tpu.memory_space<vmem>>, vector<1x8x1xf32>
    %129 = vector.shape_cast %128 : vector<1x8x1xf32> to vector<8x1xf32>
    %130 = vector.shape_cast %122 : vector<8x1xf32> to vector<1x8x1xf32>
    tpu.vector_store %arg44[%c3_61, %c0_62, %c0_63], %130 {strides = array<i32>} : memref<4x8x1xf32, #tpu.memory_space<vmem>>, vector<1x8x1xf32>,
    %c3_64 = arith.constant 3 : index
    %c0_65 = arith.constant 0 : index
    %c0_66 = arith.constant 0 : index
    %131 = vector.load %arg45[%c3_64, %c0_65, %c0_66] : memref<4x8x1xf32, #tpu.memory_space<vmem>>, vector<1x8x1xf32>
    %132 = vector.shape_cast %131 : vector<1x8x1xf32> to vector<8x1xf32>
    %133 = arith.mulf %124, %132 : vector<8x1xf32>
    %cst_67 = arith.constant dense<0.000000e+00> : vector<8xf32>
    %134 = vector.multi_reduction <add>, %127, %cst_67 [1] : vector<8x8xf32> to vector<8xf32>
    %135 = vector.shape_cast %134 : vector<8xf32> to vector<8x1xf32>
    %136 = arith.addf %133, %135 : vector<8x1xf32>
    %c3_68 = arith.constant 3 : index
    %c0_69 = arith.constant 0 : index
    %c0_70 = arith.constant 0 : index
    %137 = vector.load %arg45[%c3_68, %c0_69, %c0_70] : memref<4x8x1xf32, #tpu.memory_space<vmem>>, vector<1x8x1xf32>
    %138 = vector.shape_cast %137 : vector<1x8x1xf32> to vector<8x1xf32>
    %139 = vector.shape_cast %136 : vector<8x1xf32> to vector<1x8x1xf32>
    tpu.vector_store %arg45[%c3_68, %c0_69, %c0_70], %139 {strides = array<i32>} : memref<4x8x1xf32, #tpu.memory_space<vmem>>, vector<1x8x1xf32>,
    %140 = arith.truncf %127 : vector<8x8xf32> to vector<8x8xbf16>
    %141 = vector.extract_strided_slice %15 {offsets = [0, 24], sizes = [8, 8], strides = [1, 1]} : vector<8x32xbf16> to vector<8x8xbf16>
    %cst_71 = arith.constant dense<0.000000e+00> : vector<8x8xf32>
    %142 = tpu.matmul %140, %141, %cst_71 {dimension_numbers = #tpu.dot_dimension_numbers<[1], [0], [0], [1], [0, 0, 1, 1], [], []>} : vector<8x8xbf16>, vector<8x8xbf16>, vector<8x8xf32> -> vector<8x8xf32>
    %143 = vector.extract_strided_slice %18 {offsets = [0, 24], sizes = [8, 8], strides = [1, 1]} : vector<8x32xf32> to vector<8x8xf32>
    %144 = vector.broadcast %124 : vector<8x1xf32> to vector<8x8xf32>
    %145 = arith.mulf %144, %143 : vector<8x8xf32>
    %146 = arith.addf %145, %142 : vector<8x8xf32>
    %147 = tpu.concatenate %50, %82, %114, %146 in 1 : vector<8x8xf32>, vector<8x8xf32>, vector<8x8xf32>, vector<8x8xf32> -> vector<8x32xf32>
    %c0_72 = arith.constant 0 : index
    %c0_73 = arith.constant 0 : index
    %148 = vector.load %arg46[%c0_72, %c0_73] : memref<8x32xf32, #tpu.memory_space<vmem>>, vector<8x32xf32>
    tpu.vector_store %arg46[%c0_72, %c0_73], %147 {strides = array<i32>} : memref<8x32xf32, #tpu.memory_space<vmem>>, vector<8x32xf32>,
    %c1_i32 = arith.constant 1 : i32
    %149 = arith.cmpi eq, %arg1, %c1_i32 : i32
    %150 = arith.extui %149 : i1 to i32
    %c0_i32_74 = arith.constant 0 : i32
    %151 = arith.cmpi ne, %150, %c0_i32_74 : i32
    scf.if %151 {
      %c0_75 = arith.constant 0 : index
      %c0_76 = arith.constant 0 : index
      %152 = vector.load %arg42[%c0_75, %c0_76] : memref<8x32xf32, #tpu.memory_space<vmem>>, vector<8x32xf32>
      %c0_77 = arith.constant 0 : index
      %c0_78 = arith.constant 0 : index
      %153 = vector.load %arg46[%c0_77, %c0_78] : memref<8x32xf32, #tpu.memory_space<vmem>>, vector<8x32xf32>
      %154 = vector.extract_strided_slice %153 {offsets = [0, 0], sizes = [8, 8], strides = [1, 1]} : vector<8x32xf32> to vector<8x8xf32>
      %c0_79 = arith.constant 0 : index
      %c0_80 = arith.constant 0 : index
      %c0_81 = arith.constant 0 : index
      %155 = vector.load %arg45[%c0_79, %c0_80, %c0_81] : memref<4x8x1xf32, #tpu.memory_space<vmem>>, vector<1x8x1xf32>
      %156 = vector.shape_cast %155 : vector<1x8x1xf32> to vector<8x1xf32>
      %157 = tpu.reciprocal %156 {approx = true} : vector<8x1xf32> -> vector<8x1xf32>
      %158 = vector.broadcast %157 : vector<8x1xf32> to vector<8x8xf32>
      %159 = arith.mulf %154, %158 : vector<8x8xf32>
      %160 = vector.extract_strided_slice %153 {offsets = [0, 8], sizes = [8, 8], strides = [1, 1]} : vector<8x32xf32> to vector<8x8xf32>
      %c1_82 = arith.constant 1 : index
      %c0_83 = arith.constant 0 : index
      %c0_84 = arith.constant 0 : index
      %161 = vector.load %arg45[%c1_82, %c0_83, %c0_84] : memref<4x8x1xf32, #tpu.memory_space<vmem>>, vector<1x8x1xf32>
      %162 = vector.shape_cast %161 : vector<1x8x1xf32> to vector<8x1xf32>
      %163 = tpu.reciprocal %162 {approx = true} : vector<8x1xf32> -> vector<8x1xf32>
      %164 = vector.broadcast %163 : vector<8x1xf32> to vector<8x8xf32>
      %165 = arith.mulf %160, %164 : vector<8x8xf32>
      %166 = vector.extract_strided_slice %153 {offsets = [0, 16], sizes = [8, 8], strides = [1, 1]} : vector<8x32xf32> to vector<8x8xf32>
      %c2_85 = arith.constant 2 : index
      %c0_86 = arith.constant 0 : index
      %c0_87 = arith.constant 0 : index
      %167 = vector.load %arg45[%c2_85, %c0_86, %c0_87] : memref<4x8x1xf32, #tpu.memory_space<vmem>>, vector<1x8x1xf32>
      %168 = vector.shape_cast %167 : vector<1x8x1xf32> to vector<8x1xf32>
      %169 = tpu.reciprocal %168 {approx = true} : vector<8x1xf32> -> vector<8x1xf32>
      %170 = vector.broadcast %169 : vector<8x1xf32> to vector<8x8xf32>
      %171 = arith.mulf %166, %170 : vector<8x8xf32>
      %172 = vector.extract_strided_slice %153 {offsets = [0, 24], sizes = [8, 8], strides = [1, 1]} : vector<8x32xf32> to vector<8x8xf32>
      %c3_88 = arith.constant 3 : index
      %c0_89 = arith.constant 0 : index
      %c0_90 = arith.constant 0 : index
      %173 = vector.load %arg45[%c3_88, %c0_89, %c0_90] : memref<4x8x1xf32, #tpu.memory_space<vmem>>, vector<1x8x1xf32>
      %174 = vector.shape_cast %173 : vector<1x8x1xf32> to vector<8x1xf32>
      %175 = tpu.reciprocal %174 {approx = true} : vector<8x1xf32> -> vector<8x1xf32>
      %176 = vector.broadcast %175 : vector<8x1xf32> to vector<8x8xf32>
      %177 = arith.mulf %172, %176 : vector<8x8xf32>
      %178 = tpu.concatenate %159, %165, %171, %177 in 1 : vector<8x8xf32>, vector<8x8xf32>, vector<8x8xf32>, vector<8x8xf32> -> vector<8x32xf32>
      %c0_91 = arith.constant 0 : index
      %c0_92 = arith.constant 0 : index
      %179 = vector.load %arg21[%c0_91, %c0_92] : memref<32x32xf32, #tpu.memory_space<vmem>>, vector<32x32xf32>
      %180 = arith.truncf %178 : vector<8x32xf32> to vector<8x32xbf16>
      %181 = arith.truncf %179 : vector<32x32xf32> to vector<32x32xbf16>
      %cst_93 = arith.constant dense<0.000000e+00> : vector<8x32xf32>
      %182 = tpu.matmul %180, %181, %cst_93 {dimension_numbers = #tpu.dot_dimension_numbers<[1], [0], [0], [1], [0, 0, 1, 1], [], []>} : vector<8x32xbf16>, vector<32x32xbf16>, vector<8x32xf32> -> vector<8x32xf32>
      %c0_94 = arith.constant 0 : index
      %c0_95 = arith.constant 0 : index
      %183 = vector.load %arg22[%c0_94, %c0_95] : memref<1x32xf32, #tpu.memory_space<vmem>>, vector<1x32xf32>
      %184 = vector.broadcast %183 : vector<1x32xf32> to vector<8x32xf32>
      %185 = arith.addf %182, %184 : vector<8x32xf32>
      %186 = arith.addf %152, %185 : vector<8x32xf32>
      %cst_96 = arith.constant dense<0.000000e+00> : vector<8xf32>
      %187 = vector.multi_reduction <add>, %186, %cst_96 [1] : vector<8x32xf32> to vector<8xf32>
      %188 = vector.shape_cast %187 : vector<8xf32> to vector<8x1xf32>
      %cst_97 = arith.constant 3.200000e+01 : f32
      %189 = vector.broadcast %cst_97 : f32 to vector<8x1xf32>
      %190 = arith.divf %188, %189 : vector<8x1xf32>
      %191 = vector.broadcast %190 : vector<8x1xf32> to vector<8x32xf32>
      %192 = arith.subf %186, %191 : vector<8x32xf32>
      %193 = arith.mulf %192, %192 : vector<8x32xf32>
      %cst_98 = arith.constant dense<0.000000e+00> : vector<8xf32>
      %194 = vector.multi_reduction <add>, %193, %cst_98 [1] : vector<8x32xf32> to vector<8xf32>
      %195 = vector.shape_cast %194 : vector<8xf32> to vector<8x1xf32>
      %cst_99 = arith.constant 3.200000e+01 : f32
      %196 = vector.broadcast %cst_99 : f32 to vector<8x1xf32>
      %197 = arith.divf %195, %196 : vector<8x1xf32>
      %198 = vector.broadcast %190 : vector<8x1xf32> to vector<8x32xf32>
      %199 = arith.subf %186, %198 : vector<8x32xf32>
      %cst_100 = arith.constant 9.99999974E-6 : f32
      %200 = vector.broadcast %cst_100 : f32 to vector<8x1xf32>
      %201 = arith.addf %197, %200 : vector<8x1xf32>
      %202 = math.rsqrt %201 : vector<8x1xf32>
      %203 = vector.broadcast %202 : vector<8x1xf32> to vector<8x32xf32>
      %204 = arith.mulf %199, %203 : vector<8x32xf32>
      %c0_101 = arith.constant 0 : index
      %c0_102 = arith.constant 0 : index
      %205 = vector.load %arg23[%c0_101, %c0_102] : memref<1x32xf32, #tpu.memory_space<vmem>>, vector<1x32xf32>
      %206 = vector.broadcast %205 : vector<1x32xf32> to vector<8x32xf32>
      %207 = arith.mulf %204, %206 : vector<8x32xf32>
      %c0_103 = arith.constant 0 : index
      %c0_104 = arith.constant 0 : index
      %208 = vector.load %arg24[%c0_103, %c0_104] : memref<1x32xf32, #tpu.memory_space<vmem>>, vector<1x32xf32>
      %209 = vector.broadcast %208 : vector<1x32xf32> to vector<8x32xf32>
      %210 = arith.addf %207, %209 : vector<8x32xf32>
      %c0_105 = arith.constant 0 : index
      %c0_106 = arith.constant 0 : index
      %211 = vector.load %arg25[%c0_105, %c0_106] : memref<32x64xf32, #tpu.memory_space<vmem>>, vector<32x64xf32>
      %212 = arith.truncf %210 : vector<8x32xf32> to vector<8x32xbf16>
      %213 = arith.truncf %211 : vector<32x64xf32> to vector<32x64xbf16>
      %cst_107 = arith.constant dense<0.000000e+00> : vector<8x64xf32>
      %214 = tpu.matmul %212, %213, %cst_107 {dimension_numbers = #tpu.dot_dimension_numbers<[1], [0], [0], [1], [0, 0, 1, 1], [], []>} : vector<8x32xbf16>, vector<32x64xbf16>, vector<8x64xf32> -> vector<8x64xf32>
      %c0_108 = arith.constant 0 : index
      %c0_109 = arith.constant 0 : index
      %215 = vector.load %arg26[%c0_108, %c0_109] : memref<1x64xf32, #tpu.memory_space<vmem>>, vector<1x64xf32>
      %216 = vector.broadcast %215 : vector<1x64xf32> to vector<8x64xf32>
      %217 = arith.addf %214, %216 : vector<8x64xf32>
      %cst_110 = arith.constant 0.000000e+00 : f32
      %218 = vector.broadcast %cst_110 : f32 to vector<8x64xf32>
      %219 = arith.maximumf %217, %218 : vector<8x64xf32>
      %c0_111 = arith.constant 0 : index
      %c0_112 = arith.constant 0 : index
      %220 = vector.load %arg27[%c0_111, %c0_112] : memref<64x32xf32, #tpu.memory_space<vmem>>, vector<64x32xf32>
      %221 = arith.truncf %219 : vector<8x64xf32> to vector<8x64xbf16>
      %222 = arith.truncf %220 : vector<64x32xf32> to vector<64x32xbf16>
      %cst_113 = arith.constant dense<0.000000e+00> : vector<8x32xf32>
      %223 = tpu.matmul %221, %222, %cst_113 {dimension_numbers = #tpu.dot_dimension_numbers<[1], [0], [0], [1], [0, 0, 1, 1], [], []>} : vector<8x64xbf16>, vector<64x32xbf16>, vector<8x32xf32> -> vector<8x32xf32>
      %c0_114 = arith.constant 0 : index
      %c0_115 = arith.constant 0 : index
      %224 = vector.load %arg28[%c0_114, %c0_115] : memref<1x32xf32, #tpu.memory_space<vmem>>, vector<1x32xf32>
      %225 = vector.broadcast %224 : vector<1x32xf32> to vector<8x32xf32>
      %226 = arith.addf %223, %225 : vector<8x32xf32>
      %227 = arith.addf %210, %226 : vector<8x32xf32>
      %cst_116 = arith.constant dense<0.000000e+00> : vector<8xf32>
      %228 = vector.multi_reduction <add>, %227, %cst_116 [1] : vector<8x32xf32> to vector<8xf32>
      %229 = vector.shape_cast %228 : vector<8xf32> to vector<8x1xf32>
      %cst_117 = arith.constant 3.200000e+01 : f32
      %230 = vector.broadcast %cst_117 : f32 to vector<8x1xf32>
      %231 = arith.divf %229, %230 : vector<8x1xf32>
      %232 = vector.broadcast %231 : vector<8x1xf32> to vector<8x32xf32>
      %233 = arith.subf %227, %232 : vector<8x32xf32>
      %234 = arith.mulf %233, %233 : vector<8x32xf32>
      %cst_118 = arith.constant dense<0.000000e+00> : vector<8xf32>
      %235 = vector.multi_reduction <add>, %234, %cst_118 [1] : vector<8x32xf32> to vector<8xf32>
      %236 = vector.shape_cast %235 : vector<8xf32> to vector<8x1xf32>
      %cst_119 = arith.constant 3.200000e+01 : f32
      %237 = vector.broadcast %cst_119 : f32 to vector<8x1xf32>
      %238 = arith.divf %236, %237 : vector<8x1xf32>
      %239 = vector.broadcast %231 : vector<8x1xf32> to vector<8x32xf32>
      %240 = arith.subf %227, %239 : vector<8x32xf32>
      %cst_120 = arith.constant 9.99999974E-6 : f32
      %241 = vector.broadcast %cst_120 : f32 to vector<8x1xf32>
      %242 = arith.addf %238, %241 : vector<8x1xf32>
      %243 = math.rsqrt %242 : vector<8x1xf32>
      %244 = vector.broadcast %243 : vector<8x1xf32> to vector<8x32xf32>
      %245 = arith.mulf %240, %244 : vector<8x32xf32>
      %c0_121 = arith.constant 0 : index
      %c0_122 = arith.constant 0 : index
      %246 = vector.load %arg29[%c0_121, %c0_122] : memref<1x32xf32, #tpu.memory_space<vmem>>, vector<1x32xf32>
      %247 = vector.broadcast %246 : vector<1x32xf32> to vector<8x32xf32>
      %248 = arith.mulf %245, %247 : vector<8x32xf32>
      %c0_123 = arith.constant 0 : index
      %c0_124 = arith.constant 0 : index
      %249 = vector.load %arg30[%c0_123, %c0_124] : memref<1x32xf32, #tpu.memory_space<vmem>>, vector<1x32xf32>
      %250 = vector.broadcast %249 : vector<1x32xf32> to vector<8x32xf32>
      %251 = arith.addf %248, %250 : vector<8x32xf32>
      %c0_125 = arith.constant 0 : index
      %c0_126 = arith.constant 0 : index
      %252 = vector.load %arg31[%c0_125, %c0_126] : memref<32x32xf32, #tpu.memory_space<vmem>>, vector<32x32xf32>
      %253 = arith.truncf %251 : vector<8x32xf32> to vector<8x32xbf16>
      %254 = arith.truncf %252 : vector<32x32xf32> to vector<32x32xbf16>
      %cst_127 = arith.constant dense<0.000000e+00> : vector<8x32xf32>
      %255 = tpu.matmul %253, %254, %cst_127 {dimension_numbers = #tpu.dot_dimension_numbers<[1], [0], [0], [1], [0, 0, 1, 1], [], []>} : vector<8x32xbf16>, vector<32x32xbf16>, vector<8x32xf32> -> vector<8x32xf32>
      %c0_128 = arith.constant 0 : index
      %c0_129 = arith.constant 0 : index
      %256 = vector.load %arg32[%c0_128, %c0_129] : memref<1x32xf32, #tpu.memory_space<vmem>>, vector<1x32xf32>
      %257 = vector.broadcast %256 : vector<1x32xf32> to vector<8x32xf32>
      %258 = arith.addf %255, %257 : vector<8x32xf32>
      %cst_130 = arith.constant 0.000000e+00 : f32
      %259 = vector.broadcast %cst_130 : f32 to vector<8x32xf32>
      %260 = arith.maximumf %258, %259 : vector<8x32xf32>
      %c0_131 = arith.constant 0 : index
      %c0_132 = arith.constant 0 : index
      %261 = vector.load %arg33[%c0_131, %c0_132] : memref<32x32xf32, #tpu.memory_space<vmem>>, vector<32x32xf32>
      %262 = arith.truncf %260 : vector<8x32xf32> to vector<8x32xbf16>
      %263 = arith.truncf %261 : vector<32x32xf32> to vector<32x32xbf16>
      %cst_133 = arith.constant dense<0.000000e+00> : vector<8x32xf32>
      %264 = tpu.matmul %262, %263, %cst_133 {dimension_numbers = #tpu.dot_dimension_numbers<[1], [0], [0], [1], [0, 0, 1, 1], [], []>} : vector<8x32xbf16>, vector<32x32xbf16>, vector<8x32xf32> -> vector<8x32xf32>
      %c0_134 = arith.constant 0 : index
      %c0_135 = arith.constant 0 : index
      %265 = vector.load %arg34[%c0_134, %c0_135] : memref<1x32xf32, #tpu.memory_space<vmem>>, vector<1x32xf32>
      %266 = vector.broadcast %265 : vector<1x32xf32> to vector<8x32xf32>
      %267 = arith.addf %264, %266 : vector<8x32xf32>
      %cst_136 = arith.constant 0.000000e+00 : f32
      %268 = vector.broadcast %cst_136 : f32 to vector<8x32xf32>
      %269 = arith.maximumf %267, %268 : vector<8x32xf32>
      %c0_137 = arith.constant 0 : index
      %c0_138 = arith.constant 0 : index
      %270 = vector.load %arg35[%c0_137, %c0_138] : memref<32x4xf32, #tpu.memory_space<vmem>>, vector<32x4xf32>
      %cst_139 = arith.constant dense<0.000000e+00> : vector<8x4xf32>
      %271 = tpu.matmul %269, %270, %cst_139 {dimension_numbers = #tpu.dot_dimension_numbers<[1], [0], [0], [1], [0, 0, 1, 1], [], []>} : vector<8x32xf32>, vector<32x4xf32>, vector<8x4xf32> -> vector<8x4xf32>
      %c0_140 = arith.constant 0 : index
      %c0_141 = arith.constant 0 : index
      %272 = vector.load %arg36[%c0_140, %c0_141] : memref<1x4xf32, #tpu.memory_space<vmem>>, vector<1x4xf32>
      %273 = vector.broadcast %272 : vector<1x4xf32> to vector<8x4xf32>
      %274 = arith.addf %271, %273 : vector<8x4xf32>
      %c0_142 = arith.constant 0 : index
      %c0_143 = arith.constant 0 : index
      %c0_144 = arith.constant 0 : index
      %275 = vector.load %arg4[%c0_142, %c0_143, %c0_144] : memref<1x8x4xf32, #tpu.memory_space<vmem>>, vector<1x8x4xf32>
      %276 = vector.shape_cast %275 : vector<1x8x4xf32> to vector<8x4xf32>
      %cst_145 = arith.constant 0.000000e+00 : f32
      %cst_146 = arith.constant 1.000000e+00 : f32
      %277 = vector.broadcast %cst_145 : f32 to vector<8x4xf32>
      %278 = arith.maximumf %277, %276 : vector<8x4xf32>
      %279 = vector.broadcast %cst_146 : f32 to vector<8x4xf32>
      %280 = arith.minimumf %279, %278 : vector<8x4xf32>
      %cst_147 = arith.constant 9.99999974E-6 : f32
      %281 = vector.broadcast %cst_147 : f32 to vector<8x4xf32>
      %282 = arith.maximumf %280, %281 : vector<8x4xf32>
      %283 = math.log %282 : vector<8x4xf32>
      %cst_148 = arith.constant 1.000000e+00 : f32
      %284 = vector.broadcast %cst_148 : f32 to vector<8x4xf32>
      %285 = arith.subf %284, %280 : vector<8x4xf32>
      %cst_149 = arith.constant 9.99999974E-6 : f32
      %286 = vector.broadcast %cst_149 : f32 to vector<8x4xf32>
      %287 = arith.maximumf %285, %286 : vector<8x4xf32>
      %288 = math.log %287 : vector<8x4xf32>
      %289 = arith.subf %283, %288 : vector<8x4xf32>
      %290 = arith.addf %274, %289 : vector<8x4xf32>
      %cst_150 = arith.constant 0.000000e+00 : f32
      %291 = vector.broadcast %cst_150 : f32 to vector<8x4xf32>
      %292 = arith.subf %291, %290 : vector<8x4xf32>
      %293 = math.exp %292 : vector<8x4xf32>
      %cst_151 = arith.constant 1.000000e+00 : f32
      %294 = vector.broadcast %cst_151 : f32 to vector<8x4xf32>
      %295 = arith.addf %294, %293 : vector<8x4xf32>
      %cst_152 = arith.constant 1.000000e+00 : f32
      %296 = vector.broadcast %cst_152 : f32 to vector<8x4xf32>
      %297 = arith.divf %296, %295 : vector<8x4xf32>
      %c0_153 = arith.constant 0 : index
      %c0_154 = arith.constant 0 : index
      %c0_155 = arith.constant 0 : index
      %298 = vector.load %arg40[%c0_153, %c0_154, %c0_155] : memref<1x8x4xf32, #tpu.memory_space<vmem>>, vector<1x8x4xf32>
      %299 = vector.shape_cast %298 : vector<1x8x4xf32> to vector<8x4xf32>
      %300 = vector.shape_cast %297 : vector<8x4xf32> to vector<1x8x4xf32>
      tpu.vector_store %arg40[%c0_153, %c0_154, %c0_155], %300 {strides = array<i32>} : memref<1x8x4xf32, #tpu.memory_space<vmem>>, vector<1x8x4xf32>,
      %c0_156 = arith.constant 0 : index
      %c0_157 = arith.constant 0 : index
      %c0_158 = arith.constant 0 : index
      %301 = vector.load %arg39[%c0_156, %c0_157, %c0_158] : memref<1x8x32xf32, #tpu.memory_space<vmem>>, vector<1x8x32xf32>
      %302 = vector.shape_cast %301 : vector<1x8x32xf32> to vector<8x32xf32>
      %303 = vector.shape_cast %251 : vector<8x32xf32> to vector<1x8x32xf32>
      tpu.vector_store %arg39[%c0_156, %c0_157, %c0_158], %303 {strides = array<i32>} : memref<1x8x32xf32, #tpu.memory_space<vmem>>, vector<1x8x32xf32>,
      %c0_159 = arith.constant 0 : index
      %c0_160 = arith.constant 0 : index
      %304 = vector.load %arg37[%c0_159, %c0_160] : memref<32x5xf32, #tpu.memory_space<vmem>>, vector<32x5xf32>
      %305 = arith.truncf %251 : vector<8x32xf32> to vector<8x32xbf16>
      %306 = arith.truncf %304 : vector<32x5xf32> to vector<32x5xbf16>
      %cst_161 = arith.constant dense<0.000000e+00> : vector<8x5xf32>
      %307 = tpu.matmul %305, %306, %cst_161 {dimension_numbers = #tpu.dot_dimension_numbers<[1], [0], [0], [1], [0, 0, 1, 1], [], []>} : vector<8x32xbf16>, vector<32x5xbf16>, vector<8x5xf32> -> vector<8x5xf32>
      %c0_162 = arith.constant 0 : index
      %c0_163 = arith.constant 0 : index
      %308 = vector.load %arg38[%c0_162, %c0_163] : memref<1x5xf32, #tpu.memory_space<vmem>>, vector<1x5xf32>
      %309 = vector.broadcast %308 : vector<1x5xf32> to vector<8x5xf32>
      %310 = arith.addf %307, %309 : vector<8x5xf32>
      %c0_164 = arith.constant 0 : index
      %c0_165 = arith.constant 0 : index
      %c0_166 = arith.constant 0 : index
      %311 = vector.load %arg41[%c0_164, %c0_165, %c0_166] : memref<1x8x5xf32, #tpu.memory_space<vmem>>, vector<1x8x5xf32>
      %312 = vector.shape_cast %311 : vector<1x8x5xf32> to vector<8x5xf32>
      %313 = vector.shape_cast %310 : vector<8x5xf32> to vector<1x8x5xf32>
      tpu.vector_store %arg41[%c0_164, %c0_165, %c0_166], %313 {strides = array<i32>} : memref<1x8x5xf32, #tpu.memory_space<vmem>>, vector<1x8x5xf32>,
    } else {
    }
    return
  }
  func.func @transform_0(%arg0: i32, %arg1: i32) -> (i32, i32, i32) {
    %c0_i32 = arith.constant 0 : i32
    %c0_i32_0 = arith.constant 0 : i32
    %c0_i32_1 = arith.constant 0 : i32
    return %arg0, %c0_i32, %c0_i32_0 : i32, i32, i32
  }
  func.func @transform_1(%arg0: i32, %arg1: i32) -> (i32, i32, i32) {
    %c0_i32 = arith.constant 0 : i32
    %c0_i32_0 = arith.constant 0 : i32
    return %arg0, %arg1, %c0_i32 : i32, i32, i32
  }
  func.func @transform_2(%arg0: i32, %arg1: i32) -> (i32, i32, i32) {
    %c0_i32 = arith.constant 0 : i32
    %c0_i32_0 = arith.constant 0 : i32
    %c0_i32_1 = arith.constant 0 : i32
    return %arg0, %c0_i32, %c0_i32_0 : i32, i32, i32
  }
  func.func @transform_3(%arg0: i32, %arg1: i32) -> (i32, i32) {
    %c0_i32 = arith.constant 0 : i32
    %c0_i32_0 = arith.constant 0 : i32
    %c0_i32_1 = arith.constant 0 : i32
    return %c0_i32, %c0_i32_0 : i32, i32
  }
  func.func @transform_4(%arg0: i32, %arg1: i32) -> (i32, i32) {
    %c0_i32 = arith.constant 0 : i32
    %c0_i32_0 = arith.constant 0 : i32
    %c0_i32_1 = arith.constant 0 : i32
    return %c0_i32, %c0_i32_0 : i32, i32
  }
  func.func @transform_5(%arg0: i32, %arg1: i32) -> (i32, i32) {
    %c0_i32 = arith.constant 0 : i32
    %c0_i32_0 = arith.constant 0 : i32
    %c0_i32_1 = arith.constant 0 : i32
    return %c0_i32, %c0_i32_0 : i32, i32
  }
  func.func @transform_6(%arg0: i32, %arg1: i32) -> (i32, i32) {
    %c0_i32 = arith.constant 0 : i32
    %c0_i32_0 = arith.constant 0 : i32
    %c0_i32_1 = arith.constant 0 : i32
    return %c0_i32, %c0_i32_0 : i32, i32
  }
  func.func @transform_7(%arg0: i32, %arg1: i32) -> (i32, i32) {
    %c0_i32 = arith.constant 0 : i32
    %c0_i32_0 = arith.constant 0 : i32
    %c0_i32_1 = arith.constant 0 : i32
    return %c0_i32, %c0_i32_0 : i32, i32
  }
  func.func @transform_8(%arg0: i32, %arg1: i32) -> (i32, i32) {
    %c0_i32 = arith.constant 0 : i32
    %c0_i32_0 = arith.constant 0 : i32
    %c0_i32_1 = arith.constant 0 : i32
    return %c0_i32, %c0_i32_0 : i32, i32
  }
  func.func @transform_9(%arg0: i32, %arg1: i32) -> (i32, i32) {
    %c0_i32 = arith.constant 0 : i32
    %c0_i32_0 = arith.constant 0 : i32
    %c0_i32_1 = arith.constant 0 : i32
    return %c0_i32, %c0_i32_0 : i32, i32
  }
  func.func @transform_10(%arg0: i32, %arg1: i32) -> (i32, i32) {
    %c0_i32 = arith.constant 0 : i32
    %c0_i32_0 = arith.constant 0 : i32
    %c0_i32_1 = arith.constant 0 : i32
    return %c0_i32, %c0_i32_0 : i32, i32
  }
  func.func @transform_11(%arg0: i32, %arg1: i32) -> (i32, i32) {
    %c0_i32 = arith.constant 0 : i32
    %c0_i32_0 = arith.constant 0 : i32
    %c0_i32_1 = arith.constant 0 : i32
    return %c0_i32, %c0_i32_0 : i32, i32
  }
  func.func @transform_12(%arg0: i32, %arg1: i32) -> (i32, i32) {
    %c0_i32 = arith.constant 0 : i32
    %c0_i32_0 = arith.constant 0 : i32
    %c0_i32_1 = arith.constant 0 : i32
    return %c0_i32, %c0_i32_0 : i32, i32
  }
  func.func @transform_13(%arg0: i32, %arg1: i32) -> (i32, i32) {
    %c0_i32 = arith.constant 0 : i32
    %c0_i32_0 = arith.constant 0 : i32
    %c0_i32_1 = arith.constant 0 : i32
    return %c0_i32, %c0_i32_0 : i32, i32
  }
  func.func @transform_14(%arg0: i32, %arg1: i32) -> (i32, i32) {
    %c0_i32 = arith.constant 0 : i32
    %c0_i32_0 = arith.constant 0 : i32
    %c0_i32_1 = arith.constant 0 : i32
    return %c0_i32, %c0_i32_0 : i32, i32
  }
  func.func @transform_15(%arg0: i32, %arg1: i32) -> (i32, i32) {
    %c0_i32 = arith.constant 0 : i32
    %c0_i32_0 = arith.constant 0 : i32
    %c0_i32_1 = arith.constant 0 : i32
    return %c0_i32, %c0_i32_0 : i32, i32
  }
  func.func @transform_16(%arg0: i32, %arg1: i32) -> (i32, i32) {
    %c0_i32 = arith.constant 0 : i32
    %c0_i32_0 = arith.constant 0 : i32
    %c0_i32_1 = arith.constant 0 : i32
    return %c0_i32, %c0_i32_0 : i32, i32
  }
  func.func @transform_17(%arg0: i32, %arg1: i32) -> (i32, i32) {
    %c0_i32 = arith.constant 0 : i32
    %c0_i32_0 = arith.constant 0 : i32
    %c0_i32_1 = arith.constant 0 : i32
    return %c0_i32, %c0_i32_0 : i32, i32
  }
  func.func @transform_18(%arg0: i32, %arg1: i32) -> (i32, i32) {
    %c0_i32 = arith.constant 0 : i32
    %c0_i32_0 = arith.constant 0 : i32
    %c0_i32_1 = arith.constant 0 : i32
    return %c0_i32, %c0_i32_0 : i32, i32
  }
  func.func @transform_19(%arg0: i32, %arg1: i32) -> (i32, i32) {
    %c0_i32 = arith.constant 0 : i32
    %c0_i32_0 = arith.constant 0 : i32
    %c0_i32_1 = arith.constant 0 : i32
    return %c0_i32, %c0_i32_0 : i32, i32
  }
  func.func @transform_20(%arg0: i32, %arg1: i32) -> (i32, i32) {
    %c0_i32 = arith.constant 0 : i32
    %c0_i32_0 = arith.constant 0 : i32
    %c0_i32_1 = arith.constant 0 : i32
    return %c0_i32, %c0_i32_0 : i32, i32
  }
  func.func @transform_21(%arg0: i32, %arg1: i32) -> (i32, i32) {
    %c0_i32 = arith.constant 0 : i32
    %c0_i32_0 = arith.constant 0 : i32
    %c0_i32_1 = arith.constant 0 : i32
    return %c0_i32, %c0_i32_0 : i32, i32
  }
  func.func @transform_22(%arg0: i32, %arg1: i32) -> (i32, i32) {
    %c0_i32 = arith.constant 0 : i32
    %c0_i32_0 = arith.constant 0 : i32
    %c0_i32_1 = arith.constant 0 : i32
    return %c0_i32, %c0_i32_0 : i32, i32
  }
  func.func @transform_23(%arg0: i32, %arg1: i32) -> (i32, i32) {
    %c0_i32 = arith.constant 0 : i32
    %c0_i32_0 = arith.constant 0 : i32
    %c0_i32_1 = arith.constant 0 : i32
    return %c0_i32, %c0_i32_0 : i32, i32
  }
  func.func @transform_24(%arg0: i32, %arg1: i32) -> (i32, i32) {
    %c0_i32 = arith.constant 0 : i32
    %c0_i32_0 = arith.constant 0 : i32
    %c0_i32_1 = arith.constant 0 : i32
    return %c0_i32, %c0_i32_0 : i32, i32
  }
  func.func @transform_25(%arg0: i32, %arg1: i32) -> (i32, i32) {
    %c0_i32 = arith.constant 0 : i32
    %c0_i32_0 = arith.constant 0 : i32
    %c0_i32_1 = arith.constant 0 : i32
    return %c0_i32, %c0_i32_0 : i32, i32
  }
  func.func @transform_26(%arg0: i32, %arg1: i32) -> (i32, i32) {
    %c0_i32 = arith.constant 0 : i32
    %c0_i32_0 = arith.constant 0 : i32
    %c0_i32_1 = arith.constant 0 : i32
    return %c0_i32, %c0_i32_0 : i32, i32
  }
  func.func @transform_27(%arg0: i32, %arg1: i32) -> (i32, i32) {
    %c0_i32 = arith.constant 0 : i32
    %c0_i32_0 = arith.constant 0 : i32
    %c0_i32_1 = arith.constant 0 : i32
    return %c0_i32, %c0_i32_0 : i32, i32
  }
  func.func @transform_28(%arg0: i32, %arg1: i32) -> (i32, i32) {
    %c0_i32 = arith.constant 0 : i32
    %c0_i32_0 = arith.constant 0 : i32
    %c0_i32_1 = arith.constant 0 : i32
    return %c0_i32, %c0_i32_0 : i32, i32
  }
  func.func @transform_29(%arg0: i32, %arg1: i32) -> (i32, i32) {
    %c0_i32 = arith.constant 0 : i32
    %c0_i32_0 = arith.constant 0 : i32
    %c0_i32_1 = arith.constant 0 : i32
    return %c0_i32, %c0_i32_0 : i32, i32
  }
  func.func @transform_30(%arg0: i32, %arg1: i32) -> (i32, i32) {
    %c0_i32 = arith.constant 0 : i32
    %c0_i32_0 = arith.constant 0 : i32
    %c0_i32_1 = arith.constant 0 : i32
    return %c0_i32, %c0_i32_0 : i32, i32
  }
  func.func @transform_31(%arg0: i32, %arg1: i32) -> (i32, i32) {
    %c0_i32 = arith.constant 0 : i32
    %c0_i32_0 = arith.constant 0 : i32
    %c0_i32_1 = arith.constant 0 : i32
    return %c0_i32, %c0_i32_0 : i32, i32
  }
  func.func @transform_32(%arg0: i32, %arg1: i32) -> (i32, i32) {
    %c0_i32 = arith.constant 0 : i32
    %c0_i32_0 = arith.constant 0 : i32
    %c0_i32_1 = arith.constant 0 : i32
    return %c0_i32, %c0_i32_0 : i32, i32
  }
  func.func @transform_33(%arg0: i32, %arg1: i32) -> (i32, i32) {
    %c0_i32 = arith.constant 0 : i32
    %c0_i32_0 = arith.constant 0 : i32
    %c0_i32_1 = arith.constant 0 : i32
    return %c0_i32, %c0_i32_0 : i32, i32
  }
  func.func @transform_34(%arg0: i32, %arg1: i32) -> (i32, i32) {
    %c0_i32 = arith.constant 0 : i32
    %c0_i32_0 = arith.constant 0 : i32
    %c0_i32_1 = arith.constant 0 : i32
    return %c0_i32, %c0_i32_0 : i32, i32
  }
  func.func @transform_35(%arg0: i32, %arg1: i32) -> (i32, i32) {
    %c0_i32 = arith.constant 0 : i32
    %c0_i32_0 = arith.constant 0 : i32
    %c0_i32_1 = arith.constant 0 : i32
    return %c0_i32, %c0_i32_0 : i32, i32
  }
  func.func @transform_36(%arg0: i32, %arg1: i32) -> (i32, i32) {
    %c0_i32 = arith.constant 0 : i32
    %c0_i32_0 = arith.constant 0 : i32
    %c0_i32_1 = arith.constant 0 : i32
    return %c0_i32, %c0_i32_0 : i32, i32
  }
  func.func @transform_37(%arg0: i32, %arg1: i32) -> (i32, i32, i32) {
    %c0_i32 = arith.constant 0 : i32
    %c0_i32_0 = arith.constant 0 : i32
    %c0_i32_1 = arith.constant 0 : i32
    return %arg0, %c0_i32, %c0_i32_0 : i32, i32, i32
  }
  func.func @transform_38(%arg0: i32, %arg1: i32) -> (i32, i32, i32) {
    %c0_i32 = arith.constant 0 : i32
    %c0_i32_0 = arith.constant 0 : i32
    %c0_i32_1 = arith.constant 0 : i32
    return %arg0, %c0_i32, %c0_i32_0 : i32, i32, i32
  }
  func.func @transform_39(%arg0: i32, %arg1: i32) -> (i32, i32, i32) {
    %c0_i32 = arith.constant 0 : i32
    %c0_i32_0 = arith.constant 0 : i32
    %c0_i32_1 = arith.constant 0 : i32
    return %arg0, %c0_i32, %c0_i32_0 : i32, i32, i32
  }
}

module attributes {stable_mosaic.version = 11 : i64} {
  func.func @_decoder_layer_kernel(%arg0: i32, %arg1: i32, %arg2: memref<1x8x32xf32, #tpu.memory_space<vmem>>, %arg3: memref<1x8x32xbf16, #tpu.memory_space<vmem>>, %arg4: memref<1x8x4xf32, #tpu.memory_space<vmem>>, %arg5: memref<4x64xf32, #tpu.memory_space<vmem>>, %arg6: memref<1x64xf32, #tpu.memory_space<vmem>>, %arg7: memref<64x32xf32, #tpu.memory_space<vmem>>, %arg8: memref<1x32xf32, #tpu.memory_space<vmem>>, %arg9: memref<32x64xf32, #tpu.memory_space<vmem>>, %arg10: memref<1x64xf32, #tpu.memory_space<vmem>>, %arg11: memref<32x32xf32, #tpu.memory_space<vmem>>, %arg12: memref<1x32xf32, #tpu.memory_space<vmem>>, %arg13: memref<32x32xf32, #tpu.memory_space<vmem>>, %arg14: memref<1x32xf32, #tpu.memory_space<vmem>>, %arg15: memref<1x32xf32, #tpu.memory_space<vmem>>, %arg16: memref<1x32xf32, #tpu.memory_space<vmem>>, %arg17: memref<32x32xf32, #tpu.memory_space<vmem>>, %arg18: memref<1x32xf32, #tpu.memory_space<vmem>>, %arg19: memref<32x64xf32, #tpu.memory_space<vmem>>, %arg20: memref<1x64xf32, #tpu.memory_space<vmem>>, %arg21: memref<32x32xf32, #tpu.memory_space<vmem>>, %arg22: memref<1x32xf32, #tpu.memory_space<vmem>>, %arg23: memref<1x32xf32, #tpu.memory_space<vmem>>, %arg24: memref<1x32xf32, #tpu.memory_space<vmem>>, %arg25: memref<32x64xf32, #tpu.memory_space<vmem>>, %arg26: memref<1x64xf32, #tpu.memory_space<vmem>>, %arg27: memref<64x32xf32, #tpu.memory_space<vmem>>, %arg28: memref<1x32xf32, #tpu.memory_space<vmem>>, %arg29: memref<1x32xf32, #tpu.memory_space<vmem>>, %arg30: memref<1x32xf32, #tpu.memory_space<vmem>>, %arg31: memref<32x32xf32, #tpu.memory_space<vmem>>, %arg32: memref<1x32xf32, #tpu.memory_space<vmem>>, %arg33: memref<32x32xf32, #tpu.memory_space<vmem>>, %arg34: memref<1x32xf32, #tpu.memory_space<vmem>>, %arg35: memref<32x4xf32, #tpu.memory_space<vmem>>, %arg36: memref<1x4xf32, #tpu.memory_space<vmem>>, %arg37: memref<1x8x32xf32, #tpu.memory_space<vmem>>, %arg38: memref<1x8x4xf32, #tpu.memory_space<vmem>>, %arg39: memref<8x32xf32, #tpu.memory_space<vmem>>, %arg40: memref<8x32xf32, #tpu.memory_space<vmem>>, %arg41: memref<4x8x1xf32, #tpu.memory_space<vmem>>, %arg42: memref<4x8x1xf32, #tpu.memory_space<vmem>>, %arg43: memref<8x32xf32, #tpu.memory_space<vmem>>) attributes {dimension_semantics = [#tpu.dimension_semantics<parallel>, #tpu.dimension_semantics<arbitrary>], iteration_bounds = array<i64: 2, 2>, scalar_prefetch = 0 : i64, scratch_operands = 5 : i64, tpu.core_type = #tpu.core_type<tc>, window_params = [{transform_indices = @transform_0, window_bounds = array<i64: 1, 8, 32>}, {transform_indices = @transform_1, window_bounds = array<i64: 1, 8, 32>}, {transform_indices = @transform_2, window_bounds = array<i64: 1, 8, 4>}, {pipeline_mode = #tpu.pipeline_mode<synchronous>, transform_indices = @transform_3, window_bounds = array<i64: 4, 64>}, {pipeline_mode = #tpu.pipeline_mode<synchronous>, transform_indices = @transform_4, window_bounds = array<i64: 1, 64>}, {pipeline_mode = #tpu.pipeline_mode<synchronous>, transform_indices = @transform_5, window_bounds = array<i64: 64, 32>}, {pipeline_mode = #tpu.pipeline_mode<synchronous>, transform_indices = @transform_6, window_bounds = array<i64: 1, 32>}, {pipeline_mode = #tpu.pipeline_mode<synchronous>, transform_indices = @transform_7, window_bounds = array<i64: 32, 64>}, {pipeline_mode = #tpu.pipeline_mode<synchronous>, transform_indices = @transform_8, window_bounds = array<i64: 1, 64>}, {pipeline_mode = #tpu.pipeline_mode<synchronous>, transform_indices = @transform_9, window_bounds = array<i64: 32, 32>}, {pipeline_mode = #tpu.pipeline_mode<synchronous>, transform_indices = @transform_10, window_bounds = array<i64: 1, 32>}, {pipeline_mode = #tpu.pipeline_mode<synchronous>, transform_indices = @transform_11, window_bounds = array<i64: 32, 32>}, {pipeline_mode = #tpu.pipeline_mode<synchronous>, transform_indices = @transform_12, window_bounds = array<i64: 1, 32>}, {pipeline_mode = #tpu.pipeline_mode<synchronous>, transform_indices = @transform_13, window_bounds = array<i64: 1, 32>}, {pipeline_mode = #tpu.pipeline_mode<synchronous>, transform_indices = @transform_14, window_bounds = array<i64: 1, 32>}, {pipeline_mode = #tpu.pipeline_mode<synchronous>, transform_indices = @transform_15, window_bounds = array<i64: 32, 32>}, {pipeline_mode = #tpu.pipeline_mode<synchronous>, transform_indices = @transform_16, window_bounds = array<i64: 1, 32>}, {pipeline_mode = #tpu.pipeline_mode<synchronous>, transform_indices = @transform_17, window_bounds = array<i64: 32, 64>}, {pipeline_mode = #tpu.pipeline_mode<synchronous>, transform_indices = @transform_18, window_bounds = array<i64: 1, 64>}, {pipeline_mode = #tpu.pipeline_mode<synchronous>, transform_indices = @transform_19, window_bounds = array<i64: 32, 32>}, {pipeline_mode = #tpu.pipeline_mode<synchronous>, transform_indices = @transform_20, window_bounds = array<i64: 1, 32>}, {pipeline_mode = #tpu.pipeline_mode<synchronous>, transform_indices = @transform_21, window_bounds = array<i64: 1, 32>}, {pipeline_mode = #tpu.pipeline_mode<synchronous>, transform_indices = @transform_22, window_bounds = array<i64: 1, 32>}, {pipeline_mode = #tpu.pipeline_mode<synchronous>, transform_indices = @transform_23, window_bounds = array<i64: 32, 64>}, {pipeline_mode = #tpu.pipeline_mode<synchronous>, transform_indices = @transform_24, window_bounds = array<i64: 1, 64>}, {pipeline_mode = #tpu.pipeline_mode<synchronous>, transform_indices = @transform_25, window_bounds = array<i64: 64, 32>}, {pipeline_mode = #tpu.pipeline_mode<synchronous>, transform_indices = @transform_26, window_bounds = array<i64: 1, 32>}, {pipeline_mode = #tpu.pipeline_mode<synchronous>, transform_indices = @transform_27, window_bounds = array<i64: 1, 32>}, {pipeline_mode = #tpu.pipeline_mode<synchronous>, transform_indices = @transform_28, window_bounds = array<i64: 1, 32>}, {pipeline_mode = #tpu.pipeline_mode<synchronous>, transform_indices = @transform_29, window_bounds = array<i64: 32, 32>}, {pipeline_mode = #tpu.pipeline_mode<synchronous>, transform_indices = @transform_30, window_bounds = array<i64: 1, 32>}, {pipeline_mode = #tpu.pipeline_mode<synchronous>, transform_indices = @transform_31, window_bounds = array<i64: 32, 32>}, {pipeline_mode = #tpu.pipeline_mode<synchronous>, transform_indices = @transform_32, window_bounds = array<i64: 1, 32>}, {pipeline_mode = #tpu.pipeline_mode<synchronous>, transform_indices = @transform_33, window_bounds = array<i64: 32, 4>}, {pipeline_mode = #tpu.pipeline_mode<synchronous>, transform_indices = @transform_34, window_bounds = array<i64: 1, 4>}, {transform_indices = @transform_35, window_bounds = array<i64: 1, 8, 32>}, {transform_indices = @transform_36, window_bounds = array<i64: 1, 8, 4>}]} {
    %c0_i32 = arith.constant 0 : i32
    %0 = arith.cmpi eq, %arg1, %c0_i32 : i32
    %1 = arith.extui %0 : i1 to i32
    %c0_i32_0 = arith.constant 0 : i32
    %2 = arith.cmpi ne, %1, %c0_i32_0 : i32
    scf.if %2 {
      %c0_75 = arith.constant 0 : index
      %c0_76 = arith.constant 0 : index
      %c0_77 = arith.constant 0 : index
      %152 = vector.load %arg2[%c0_75, %c0_76, %c0_77] : memref<1x8x32xf32, #tpu.memory_space<vmem>>, vector<1x8x32xf32>
      %153 = vector.shape_cast %152 : vector<1x8x32xf32> to vector<8x32xf32>
      %c0_78 = arith.constant 0 : index
      %c0_79 = arith.constant 0 : index
      %c0_80 = arith.constant 0 : index
      %154 = vector.load %arg4[%c0_78, %c0_79, %c0_80] : memref<1x8x4xf32, #tpu.memory_space<vmem>>, vector<1x8x4xf32>
      %155 = vector.shape_cast %154 : vector<1x8x4xf32> to vector<8x4xf32>
      %c0_81 = arith.constant 0 : index
      %c0_82 = arith.constant 0 : index
      %156 = vector.load %arg5[%c0_81, %c0_82] : memref<4x64xf32, #tpu.memory_space<vmem>>, vector<4x64xf32>
      %c0_83 = arith.constant 0 : index
      %c0_84 = arith.constant 0 : index
      %157 = vector.load %arg6[%c0_83, %c0_84] : memref<1x64xf32, #tpu.memory_space<vmem>>, vector<1x64xf32>
      %158 = vector.extract_strided_slice %155 {offsets = [0, 0], sizes = [8, 1], strides = [1, 1]} : vector<8x4xf32> to vector<8x1xf32>
      %159 = vector.extract_strided_slice %156 {offsets = [0, 0], sizes = [1, 64], strides = [1, 1]} : vector<4x64xf32> to vector<1x64xf32>
      %160 = vector.broadcast %158 : vector<8x1xf32> to vector<8x64xf32>
      %161 = vector.broadcast %159 : vector<1x64xf32> to vector<8x64xf32>
      %162 = arith.mulf %160, %161 : vector<8x64xf32>
      %163 = vector.broadcast %157 : vector<1x64xf32> to vector<8x64xf32>
      %164 = arith.addf %163, %162 : vector<8x64xf32>
      %165 = vector.extract_strided_slice %155 {offsets = [0, 1], sizes = [8, 1], strides = [1, 1]} : vector<8x4xf32> to vector<8x1xf32>
      %166 = vector.extract_strided_slice %156 {offsets = [1, 0], sizes = [1, 64], strides = [1, 1]} : vector<4x64xf32> to vector<1x64xf32>
      %167 = vector.broadcast %165 : vector<8x1xf32> to vector<8x64xf32>
      %168 = vector.broadcast %166 : vector<1x64xf32> to vector<8x64xf32>
      %169 = arith.mulf %167, %168 : vector<8x64xf32>
      %170 = arith.addf %164, %169 : vector<8x64xf32>
      %171 = vector.extract_strided_slice %155 {offsets = [0, 2], sizes = [8, 1], strides = [1, 1]} : vector<8x4xf32> to vector<8x1xf32>
      %172 = vector.extract_strided_slice %156 {offsets = [2, 0], sizes = [1, 64], strides = [1, 1]} : vector<4x64xf32> to vector<1x64xf32>
      %173 = vector.broadcast %171 : vector<8x1xf32> to vector<8x64xf32>
      %174 = vector.broadcast %172 : vector<1x64xf32> to vector<8x64xf32>
      %175 = arith.mulf %173, %174 : vector<8x64xf32>
      %176 = arith.addf %170, %175 : vector<8x64xf32>
      %177 = vector.extract_strided_slice %155 {offsets = [0, 3], sizes = [8, 1], strides = [1, 1]} : vector<8x4xf32> to vector<8x1xf32>
      %178 = vector.extract_strided_slice %156 {offsets = [3, 0], sizes = [1, 64], strides = [1, 1]} : vector<4x64xf32> to vector<1x64xf32>
      %179 = vector.broadcast %177 : vector<8x1xf32> to vector<8x64xf32>
      %180 = vector.broadcast %178 : vector<1x64xf32> to vector<8x64xf32>
      %181 = arith.mulf %179, %180 : vector<8x64xf32>
      %182 = arith.addf %176, %181 : vector<8x64xf32>
      %cst_85 = arith.constant 0.000000e+00 : f32
      %183 = vector.broadcast %cst_85 : f32 to vector<8x64xf32>
      %184 = arith.maximumf %182, %183 : vector<8x64xf32>
      %c0_86 = arith.constant 0 : index
      %c0_87 = arith.constant 0 : index
      %185 = vector.load %arg7[%c0_86, %c0_87] : memref<64x32xf32, #tpu.memory_space<vmem>>, vector<64x32xf32>
      %cst_88 = arith.constant dense<0.000000e+00> : vector<8x32xf32>
      %186 = tpu.matmul %184, %185, %cst_88 {dimension_numbers = #tpu.dot_dimension_numbers<[1], [0], [0], [1], [0, 0, 1, 1], [], []>} : vector<8x64xf32>, vector<64x32xf32>, vector<8x32xf32> -> vector<8x32xf32>
      %c0_89 = arith.constant 0 : index
      %c0_90 = arith.constant 0 : index
      %187 = vector.load %arg8[%c0_89, %c0_90] : memref<1x32xf32, #tpu.memory_space<vmem>>, vector<1x32xf32>
      %188 = vector.broadcast %187 : vector<1x32xf32> to vector<8x32xf32>
      %189 = arith.addf %186, %188 : vector<8x32xf32>
      %190 = arith.addf %153, %189 : vector<8x32xf32>
      %c0_91 = arith.constant 0 : index
      %c0_92 = arith.constant 0 : index
      %191 = vector.load %arg9[%c0_91, %c0_92] : memref<32x64xf32, #tpu.memory_space<vmem>>, vector<32x64xf32>
      %192 = arith.truncf %190 : vector<8x32xf32> to vector<8x32xbf16>
      %193 = arith.truncf %191 : vector<32x64xf32> to vector<32x64xbf16>
      %cst_93 = arith.constant dense<0.000000e+00> : vector<8x64xf32>
      %194 = tpu.matmul %192, %193, %cst_93 {dimension_numbers = #tpu.dot_dimension_numbers<[1], [0], [0], [1], [0, 0, 1, 1], [], []>} : vector<8x32xbf16>, vector<32x64xbf16>, vector<8x64xf32> -> vector<8x64xf32>
      %c0_94 = arith.constant 0 : index
      %c0_95 = arith.constant 0 : index
      %195 = vector.load %arg10[%c0_94, %c0_95] : memref<1x64xf32, #tpu.memory_space<vmem>>, vector<1x64xf32>
      %196 = vector.broadcast %195 : vector<1x64xf32> to vector<8x64xf32>
      %197 = arith.addf %194, %196 : vector<8x64xf32>
      %c0_96 = arith.constant 0 : index
      %c0_97 = arith.constant 0 : index
      %198 = vector.load %arg11[%c0_96, %c0_97] : memref<32x32xf32, #tpu.memory_space<vmem>>, vector<32x32xf32>
      %199 = arith.truncf %153 : vector<8x32xf32> to vector<8x32xbf16>
      %200 = arith.truncf %198 : vector<32x32xf32> to vector<32x32xbf16>
      %cst_98 = arith.constant dense<0.000000e+00> : vector<8x32xf32>
      %201 = tpu.matmul %199, %200, %cst_98 {dimension_numbers = #tpu.dot_dimension_numbers<[1], [0], [0], [1], [0, 0, 1, 1], [], []>} : vector<8x32xbf16>, vector<32x32xbf16>, vector<8x32xf32> -> vector<8x32xf32>
      %c0_99 = arith.constant 0 : index
      %c0_100 = arith.constant 0 : index
      %202 = vector.load %arg12[%c0_99, %c0_100] : memref<1x32xf32, #tpu.memory_space<vmem>>, vector<1x32xf32>
      %203 = vector.broadcast %202 : vector<1x32xf32> to vector<8x32xf32>
      %204 = arith.addf %201, %203 : vector<8x32xf32>
      %205 = vector.extract_strided_slice %197 {offsets = [0, 0], sizes = [8, 32], strides = [1, 1]} : vector<8x64xf32> to vector<8x32xf32>
      %cst_101 = arith.constant 0.353553385 : f32
      %206 = vector.broadcast %cst_101 : f32 to vector<8x32xf32>
      %207 = arith.mulf %205, %206 : vector<8x32xf32>
      %208 = arith.truncf %207 : vector<8x32xf32> to vector<8x32xbf16>
      %209 = vector.extract_strided_slice %197 {offsets = [0, 32], sizes = [8, 32], strides = [1, 1]} : vector<8x64xf32> to vector<8x32xf32>
      %210 = arith.truncf %209 : vector<8x32xf32> to vector<8x32xbf16>
      %211 = tpu.transpose %210, [1, 0] : vector<8x32xbf16> -> vector<32x8xbf16>
      %212 = arith.truncf %204 : vector<8x32xf32> to vector<8x32xbf16>
      %213 = vector.extract_strided_slice %208 {offsets = [0, 0], sizes = [8, 8], strides = [1, 1]} : vector<8x32xbf16> to vector<8x8xbf16>
      %214 = vector.extract_strided_slice %211 {offsets = [0, 0], sizes = [8, 8], strides = [1, 1]} : vector<32x8xbf16> to vector<8x8xbf16>
      %cst_102 = arith.constant dense<0.000000e+00> : vector<8x8xf32>
      %215 = tpu.matmul %213, %214, %cst_102 {dimension_numbers = #tpu.dot_dimension_numbers<[1], [0], [0], [1], [0, 0, 1, 1], [], []>} : vector<8x8xbf16>, vector<8x8xbf16>, vector<8x8xf32> -> vector<8x8xf32>
      %cst_103 = arith.constant dense<0xFF800000> : vector<8xf32>
      %216 = vector.multi_reduction <maximumf>, %215, %cst_103 [1] : vector<8x8xf32> to vector<8xf32>
      %217 = vector.shape_cast %216 : vector<8xf32> to vector<8x1xf32>
      %218 = vector.broadcast %217 : vector<8x1xf32> to vector<8x8xf32>
      %219 = arith.subf %215, %218 : vector<8x8xf32>
      %220 = math.exp %219 : vector<8x8xf32>
      %cst_104 = arith.constant dense<0.000000e+00> : vector<8xf32>
      %221 = vector.multi_reduction <add>, %220, %cst_104 [1] : vector<8x8xf32> to vector<8xf32>
      %222 = vector.shape_cast %221 : vector<8xf32> to vector<8x1xf32>
      %223 = tpu.reciprocal %222 {approx = true} : vector<8x1xf32> -> vector<8x1xf32>
      %224 = vector.broadcast %223 : vector<8x1xf32> to vector<8x8xf32>
      %225 = arith.mulf %220, %224 : vector<8x8xf32>
      %226 = arith.truncf %225 : vector<8x8xf32> to vector<8x8xbf16>
      %227 = vector.extract_strided_slice %212 {offsets = [0, 0], sizes = [8, 8], strides = [1, 1]} : vector<8x32xbf16> to vector<8x8xbf16>
      %cst_105 = arith.constant dense<0.000000e+00> : vector<8x8xf32>
      %228 = tpu.matmul %226, %227, %cst_105 {dimension_numbers = #tpu.dot_dimension_numbers<[1], [0], [0], [1], [0, 0, 1, 1], [], []>} : vector<8x8xbf16>, vector<8x8xbf16>, vector<8x8xf32> -> vector<8x8xf32>
      %229 = vector.extract_strided_slice %208 {offsets = [0, 8], sizes = [8, 8], strides = [1, 1]} : vector<8x32xbf16> to vector<8x8xbf16>
      %230 = vector.extract_strided_slice %211 {offsets = [8, 0], sizes = [8, 8], strides = [1, 1]} : vector<32x8xbf16> to vector<8x8xbf16>
      %cst_106 = arith.constant dense<0.000000e+00> : vector<8x8xf32>
      %231 = tpu.matmul %229, %230, %cst_106 {dimension_numbers = #tpu.dot_dimension_numbers<[1], [0], [0], [1], [0, 0, 1, 1], [], []>} : vector<8x8xbf16>, vector<8x8xbf16>, vector<8x8xf32> -> vector<8x8xf32>
      %cst_107 = arith.constant dense<0xFF800000> : vector<8xf32>
      %232 = vector.multi_reduction <maximumf>, %231, %cst_107 [1] : vector<8x8xf32> to vector<8xf32>
      %233 = vector.shape_cast %232 : vector<8xf32> to vector<8x1xf32>
      %234 = vector.broadcast %233 : vector<8x1xf32> to vector<8x8xf32>
      %235 = arith.subf %231, %234 : vector<8x8xf32>
      %236 = math.exp %235 : vector<8x8xf32>
      %cst_108 = arith.constant dense<0.000000e+00> : vector<8xf32>
      %237 = vector.multi_reduction <add>, %236, %cst_108 [1] : vector<8x8xf32> to vector<8xf32>
      %238 = vector.shape_cast %237 : vector<8xf32> to vector<8x1xf32>
      %239 = tpu.reciprocal %238 {approx = true} : vector<8x1xf32> -> vector<8x1xf32>
      %240 = vector.broadcast %239 : vector<8x1xf32> to vector<8x8xf32>
      %241 = arith.mulf %236, %240 : vector<8x8xf32>
      %242 = arith.truncf %241 : vector<8x8xf32> to vector<8x8xbf16>
      %243 = vector.extract_strided_slice %212 {offsets = [0, 8], sizes = [8, 8], strides = [1, 1]} : vector<8x32xbf16> to vector<8x8xbf16>
      %cst_109 = arith.constant dense<0.000000e+00> : vector<8x8xf32>
      %244 = tpu.matmul %242, %243, %cst_109 {dimension_numbers = #tpu.dot_dimension_numbers<[1], [0], [0], [1], [0, 0, 1, 1], [], []>} : vector<8x8xbf16>, vector<8x8xbf16>, vector<8x8xf32> -> vector<8x8xf32>
      %245 = vector.extract_strided_slice %208 {offsets = [0, 16], sizes = [8, 8], strides = [1, 1]} : vector<8x32xbf16> to vector<8x8xbf16>
      %246 = vector.extract_strided_slice %211 {offsets = [16, 0], sizes = [8, 8], strides = [1, 1]} : vector<32x8xbf16> to vector<8x8xbf16>
      %cst_110 = arith.constant dense<0.000000e+00> : vector<8x8xf32>
      %247 = tpu.matmul %245, %246, %cst_110 {dimension_numbers = #tpu.dot_dimension_numbers<[1], [0], [0], [1], [0, 0, 1, 1], [], []>} : vector<8x8xbf16>, vector<8x8xbf16>, vector<8x8xf32> -> vector<8x8xf32>
      %cst_111 = arith.constant dense<0xFF800000> : vector<8xf32>
      %248 = vector.multi_reduction <maximumf>, %247, %cst_111 [1] : vector<8x8xf32> to vector<8xf32>
      %249 = vector.shape_cast %248 : vector<8xf32> to vector<8x1xf32>
      %250 = vector.broadcast %249 : vector<8x1xf32> to vector<8x8xf32>
      %251 = arith.subf %247, %250 : vector<8x8xf32>
      %252 = math.exp %251 : vector<8x8xf32>
      %cst_112 = arith.constant dense<0.000000e+00> : vector<8xf32>
      %253 = vector.multi_reduction <add>, %252, %cst_112 [1] : vector<8x8xf32> to vector<8xf32>
      %254 = vector.shape_cast %253 : vector<8xf32> to vector<8x1xf32>
      %255 = tpu.reciprocal %254 {approx = true} : vector<8x1xf32> -> vector<8x1xf32>
      %256 = vector.broadcast %255 : vector<8x1xf32> to vector<8x8xf32>
      %257 = arith.mulf %252, %256 : vector<8x8xf32>
      %258 = arith.truncf %257 : vector<8x8xf32> to vector<8x8xbf16>
      %259 = vector.extract_strided_slice %212 {offsets = [0, 16], sizes = [8, 8], strides = [1, 1]} : vector<8x32xbf16> to vector<8x8xbf16>
      %cst_113 = arith.constant dense<0.000000e+00> : vector<8x8xf32>
      %260 = tpu.matmul %258, %259, %cst_113 {dimension_numbers = #tpu.dot_dimension_numbers<[1], [0], [0], [1], [0, 0, 1, 1], [], []>} : vector<8x8xbf16>, vector<8x8xbf16>, vector<8x8xf32> -> vector<8x8xf32>
      %261 = vector.extract_strided_slice %208 {offsets = [0, 24], sizes = [8, 8], strides = [1, 1]} : vector<8x32xbf16> to vector<8x8xbf16>
      %262 = vector.extract_strided_slice %211 {offsets = [24, 0], sizes = [8, 8], strides = [1, 1]} : vector<32x8xbf16> to vector<8x8xbf16>
      %cst_114 = arith.constant dense<0.000000e+00> : vector<8x8xf32>
      %263 = tpu.matmul %261, %262, %cst_114 {dimension_numbers = #tpu.dot_dimension_numbers<[1], [0], [0], [1], [0, 0, 1, 1], [], []>} : vector<8x8xbf16>, vector<8x8xbf16>, vector<8x8xf32> -> vector<8x8xf32>
      %cst_115 = arith.constant dense<0xFF800000> : vector<8xf32>
      %264 = vector.multi_reduction <maximumf>, %263, %cst_115 [1] : vector<8x8xf32> to vector<8xf32>
      %265 = vector.shape_cast %264 : vector<8xf32> to vector<8x1xf32>
      %266 = vector.broadcast %265 : vector<8x1xf32> to vector<8x8xf32>
      %267 = arith.subf %263, %266 : vector<8x8xf32>
      %268 = math.exp %267 : vector<8x8xf32>
      %cst_116 = arith.constant dense<0.000000e+00> : vector<8xf32>
      %269 = vector.multi_reduction <add>, %268, %cst_116 [1] : vector<8x8xf32> to vector<8xf32>
      %270 = vector.shape_cast %269 : vector<8xf32> to vector<8x1xf32>
      %271 = tpu.reciprocal %270 {approx = true} : vector<8x1xf32> -> vector<8x1xf32>
      %272 = vector.broadcast %271 : vector<8x1xf32> to vector<8x8xf32>
      %273 = arith.mulf %268, %272 : vector<8x8xf32>
      %274 = arith.truncf %273 : vector<8x8xf32> to vector<8x8xbf16>
      %275 = vector.extract_strided_slice %212 {offsets = [0, 24], sizes = [8, 8], strides = [1, 1]} : vector<8x32xbf16> to vector<8x8xbf16>
      %cst_117 = arith.constant dense<0.000000e+00> : vector<8x8xf32>
      %276 = tpu.matmul %274, %275, %cst_117 {dimension_numbers = #tpu.dot_dimension_numbers<[1], [0], [0], [1], [0, 0, 1, 1], [], []>} : vector<8x8xbf16>, vector<8x8xbf16>, vector<8x8xf32> -> vector<8x8xf32>
      %277 = tpu.concatenate %228, %244, %260, %276 in 1 : vector<8x8xf32>, vector<8x8xf32>, vector<8x8xf32>, vector<8x8xf32> -> vector<8x32xf32>
      %c0_118 = arith.constant 0 : index
      %c0_119 = arith.constant 0 : index
      %278 = vector.load %arg13[%c0_118, %c0_119] : memref<32x32xf32, #tpu.memory_space<vmem>>, vector<32x32xf32>
      %279 = arith.truncf %277 : vector<8x32xf32> to vector<8x32xbf16>
      %280 = arith.truncf %278 : vector<32x32xf32> to vector<32x32xbf16>
      %cst_120 = arith.constant dense<0.000000e+00> : vector<8x32xf32>
      %281 = tpu.matmul %279, %280, %cst_120 {dimension_numbers = #tpu.dot_dimension_numbers<[1], [0], [0], [1], [0, 0, 1, 1], [], []>} : vector<8x32xbf16>, vector<32x32xbf16>, vector<8x32xf32> -> vector<8x32xf32>
      %c0_121 = arith.constant 0 : index
      %c0_122 = arith.constant 0 : index
      %282 = vector.load %arg14[%c0_121, %c0_122] : memref<1x32xf32, #tpu.memory_space<vmem>>, vector<1x32xf32>
      %283 = vector.broadcast %282 : vector<1x32xf32> to vector<8x32xf32>
      %284 = arith.addf %281, %283 : vector<8x32xf32>
      %285 = arith.addf %153, %284 : vector<8x32xf32>
      %cst_123 = arith.constant dense<0.000000e+00> : vector<8xf32>
      %286 = vector.multi_reduction <add>, %285, %cst_123 [1] : vector<8x32xf32> to vector<8xf32>
      %287 = vector.shape_cast %286 : vector<8xf32> to vector<8x1xf32>
      %cst_124 = arith.constant 3.200000e+01 : f32
      %288 = vector.broadcast %cst_124 : f32 to vector<8x1xf32>
      %289 = arith.divf %287, %288 : vector<8x1xf32>
      %290 = vector.broadcast %289 : vector<8x1xf32> to vector<8x32xf32>
      %291 = arith.subf %285, %290 : vector<8x32xf32>
      %292 = arith.mulf %291, %291 : vector<8x32xf32>
      %cst_125 = arith.constant dense<0.000000e+00> : vector<8xf32>
      %293 = vector.multi_reduction <add>, %292, %cst_125 [1] : vector<8x32xf32> to vector<8xf32>
      %294 = vector.shape_cast %293 : vector<8xf32> to vector<8x1xf32>
      %cst_126 = arith.constant 3.200000e+01 : f32
      %295 = vector.broadcast %cst_126 : f32 to vector<8x1xf32>
      %296 = arith.divf %294, %295 : vector<8x1xf32>
      %297 = vector.broadcast %289 : vector<8x1xf32> to vector<8x32xf32>
      %298 = arith.subf %285, %297 : vector<8x32xf32>
      %cst_127 = arith.constant 9.99999974E-6 : f32
      %299 = vector.broadcast %cst_127 : f32 to vector<8x1xf32>
      %300 = arith.addf %296, %299 : vector<8x1xf32>
      %301 = math.rsqrt %300 : vector<8x1xf32>
      %302 = vector.broadcast %301 : vector<8x1xf32> to vector<8x32xf32>
      %303 = arith.mulf %298, %302 : vector<8x32xf32>
      %c0_128 = arith.constant 0 : index
      %c0_129 = arith.constant 0 : index
      %304 = vector.load %arg15[%c0_128, %c0_129] : memref<1x32xf32, #tpu.memory_space<vmem>>, vector<1x32xf32>
      %305 = vector.broadcast %304 : vector<1x32xf32> to vector<8x32xf32>
      %306 = arith.mulf %303, %305 : vector<8x32xf32>
      %c0_130 = arith.constant 0 : index
      %c0_131 = arith.constant 0 : index
      %307 = vector.load %arg16[%c0_130, %c0_131] : memref<1x32xf32, #tpu.memory_space<vmem>>, vector<1x32xf32>
      %308 = vector.broadcast %307 : vector<1x32xf32> to vector<8x32xf32>
      %309 = arith.addf %306, %308 : vector<8x32xf32>
      %c0_132 = arith.constant 0 : index
      %c0_133 = arith.constant 0 : index
      %310 = vector.load %arg39[%c0_132, %c0_133] : memref<8x32xf32, #tpu.memory_space<vmem>>, vector<8x32xf32>
      tpu.vector_store %arg39[%c0_132, %c0_133], %309 {strides = array<i32>} : memref<8x32xf32, #tpu.memory_space<vmem>>, vector<8x32xf32>,
      %c0_134 = arith.constant 0 : index
      %c0_135 = arith.constant 0 : index
      %311 = vector.load %arg39[%c0_134, %c0_135] : memref<8x32xf32, #tpu.memory_space<vmem>>, vector<8x32xf32>
      %312 = arith.addf %311, %189 : vector<8x32xf32>
      %c0_136 = arith.constant 0 : index
      %c0_137 = arith.constant 0 : index
      %313 = vector.load %arg17[%c0_136, %c0_137] : memref<32x32xf32, #tpu.memory_space<vmem>>, vector<32x32xf32>
      %314 = arith.truncf %312 : vector<8x32xf32> to vector<8x32xbf16>
      %315 = arith.truncf %313 : vector<32x32xf32> to vector<32x32xbf16>
      %cst_138 = arith.constant dense<0.000000e+00> : vector<8x32xf32>
      %316 = tpu.matmul %314, %315, %cst_138 {dimension_numbers = #tpu.dot_dimension_numbers<[1], [0], [0], [1], [0, 0, 1, 1], [], []>} : vector<8x32xbf16>, vector<32x32xbf16>, vector<8x32xf32> -> vector<8x32xf32>
      %c0_139 = arith.constant 0 : index
      %c0_140 = arith.constant 0 : index
      %317 = vector.load %arg18[%c0_139, %c0_140] : memref<1x32xf32, #tpu.memory_space<vmem>>, vector<1x32xf32>
      %318 = vector.broadcast %317 : vector<1x32xf32> to vector<8x32xf32>
      %319 = arith.addf %316, %318 : vector<8x32xf32>
      %cst_141 = arith.constant 0.353553385 : f32
      %320 = vector.broadcast %cst_141 : f32 to vector<8x32xf32>
      %321 = arith.mulf %319, %320 : vector<8x32xf32>
      %c0_142 = arith.constant 0 : index
      %c0_143 = arith.constant 0 : index
      %322 = vector.load %arg40[%c0_142, %c0_143] : memref<8x32xf32, #tpu.memory_space<vmem>>, vector<8x32xf32>
      tpu.vector_store %arg40[%c0_142, %c0_143], %321 {strides = array<i32>} : memref<8x32xf32, #tpu.memory_space<vmem>>, vector<8x32xf32>,
      %cst_144 = arith.constant -1.000000e+30 : f32
      %323 = vector.broadcast %cst_144 : f32 to vector<4x8x1xf32>
      %c0_145 = arith.constant 0 : index
      %c0_146 = arith.constant 0 : index
      %c0_147 = arith.constant 0 : index
      %324 = vector.load %arg41[%c0_145, %c0_146, %c0_147] : memref<4x8x1xf32, #tpu.memory_space<vmem>>, vector<4x8x1xf32>
      tpu.vector_store %arg41[%c0_145, %c0_146, %c0_147], %323 {strides = array<i32>} : memref<4x8x1xf32, #tpu.memory_space<vmem>>, vector<4x8x1xf32>,
      %cst_148 = arith.constant 0.000000e+00 : f32
      %325 = vector.broadcast %cst_148 : f32 to vector<4x8x1xf32>
      %c0_149 = arith.constant 0 : index
      %c0_150 = arith.constant 0 : index
      %c0_151 = arith.constant 0 : index
      %326 = vector.load %arg42[%c0_149, %c0_150, %c0_151] : memref<4x8x1xf32, #tpu.memory_space<vmem>>, vector<4x8x1xf32>
      tpu.vector_store %arg42[%c0_149, %c0_150, %c0_151], %325 {strides = array<i32>} : memref<4x8x1xf32, #tpu.memory_space<vmem>>, vector<4x8x1xf32>,
      %cst_152 = arith.constant 0.000000e+00 : f32
      %327 = vector.broadcast %cst_152 : f32 to vector<8x32xf32>
      %c0_153 = arith.constant 0 : index
      %c0_154 = arith.constant 0 : index
      %328 = vector.load %arg43[%c0_153, %c0_154] : memref<8x32xf32, #tpu.memory_space<vmem>>, vector<8x32xf32>
      tpu.vector_store %arg43[%c0_153, %c0_154], %327 {strides = array<i32>} : memref<8x32xf32, #tpu.memory_space<vmem>>, vector<8x32xf32>,
    } else {
    }
    %c0 = arith.constant 0 : index
    %c0_1 = arith.constant 0 : index
    %c0_2 = arith.constant 0 : index
    %3 = vector.load %arg3[%c0, %c0_1, %c0_2] : memref<1x8x32xbf16, #tpu.memory_space<vmem>>, vector<1x8x32xbf16>
    %4 = vector.shape_cast %3 : vector<1x8x32xbf16> to vector<8x32xbf16>
    %c0_3 = arith.constant 0 : index
    %c0_4 = arith.constant 0 : index
    %5 = vector.load %arg19[%c0_3, %c0_4] : memref<32x64xf32, #tpu.memory_space<vmem>>, vector<32x64xf32>
    %6 = arith.truncf %5 : vector<32x64xf32> to vector<32x64xbf16>
    %cst = arith.constant dense<0.000000e+00> : vector<8x64xf32>
    %7 = tpu.matmul %4, %6, %cst {dimension_numbers = #tpu.dot_dimension_numbers<[1], [0], [0], [1], [0, 0, 1, 1], [], []>} : vector<8x32xbf16>, vector<32x64xbf16>, vector<8x64xf32> -> vector<8x64xf32>
    %c0_5 = arith.constant 0 : index
    %c0_6 = arith.constant 0 : index
    %8 = vector.load %arg20[%c0_5, %c0_6] : memref<1x64xf32, #tpu.memory_space<vmem>>, vector<1x64xf32>
    %9 = vector.broadcast %8 : vector<1x64xf32> to vector<8x64xf32>
    %10 = arith.addf %7, %9 : vector<8x64xf32>
    %11 = vector.extract_strided_slice %10 {offsets = [0, 0], sizes = [8, 32], strides = [1, 1]} : vector<8x64xf32> to vector<8x32xf32>
    %12 = arith.truncf %11 : vector<8x32xf32> to vector<8x32xbf16>
    %13 = tpu.transpose %12, [1, 0] : vector<8x32xbf16> -> vector<32x8xbf16>
    %14 = vector.extract_strided_slice %10 {offsets = [0, 32], sizes = [8, 32], strides = [1, 1]} : vector<8x64xf32> to vector<8x32xf32>
    %15 = arith.truncf %14 : vector<8x32xf32> to vector<8x32xbf16>
    %c0_7 = arith.constant 0 : index
    %c0_8 = arith.constant 0 : index
    %16 = vector.load %arg40[%c0_7, %c0_8] : memref<8x32xf32, #tpu.memory_space<vmem>>, vector<8x32xf32>
    %17 = arith.truncf %16 : vector<8x32xf32> to vector<8x32xbf16>
    %c0_9 = arith.constant 0 : index
    %c0_10 = arith.constant 0 : index
    %18 = vector.load %arg43[%c0_9, %c0_10] : memref<8x32xf32, #tpu.memory_space<vmem>>, vector<8x32xf32>
    %19 = vector.extract_strided_slice %17 {offsets = [0, 0], sizes = [8, 8], strides = [1, 1]} : vector<8x32xbf16> to vector<8x8xbf16>
    %20 = vector.extract_strided_slice %13 {offsets = [0, 0], sizes = [8, 8], strides = [1, 1]} : vector<32x8xbf16> to vector<8x8xbf16>
    %cst_11 = arith.constant dense<0.000000e+00> : vector<8x8xf32>
    %21 = tpu.matmul %19, %20, %cst_11 {dimension_numbers = #tpu.dot_dimension_numbers<[1], [0], [0], [1], [0, 0, 1, 1], [], []>} : vector<8x8xbf16>, vector<8x8xbf16>, vector<8x8xf32> -> vector<8x8xf32>
    %c0_12 = arith.constant 0 : index
    %c0_13 = arith.constant 0 : index
    %c0_14 = arith.constant 0 : index
    %22 = vector.load %arg41[%c0_12, %c0_13, %c0_14] : memref<4x8x1xf32, #tpu.memory_space<vmem>>, vector<1x8x1xf32>
    %23 = vector.shape_cast %22 : vector<1x8x1xf32> to vector<8x1xf32>
    %cst_15 = arith.constant dense<0xFF800000> : vector<8xf32>
    %24 = vector.multi_reduction <maximumf>, %21, %cst_15 [1] : vector<8x8xf32> to vector<8xf32>
    %25 = vector.shape_cast %24 : vector<8xf32> to vector<8x1xf32>
    %26 = arith.maximumf %23, %25 : vector<8x1xf32>
    %27 = arith.subf %23, %26 : vector<8x1xf32>
    %28 = math.exp %27 : vector<8x1xf32>
    %29 = vector.broadcast %26 : vector<8x1xf32> to vector<8x8xf32>
    %30 = arith.subf %21, %29 : vector<8x8xf32>
    %31 = math.exp %30 : vector<8x8xf32>
    %c0_16 = arith.constant 0 : index
    %c0_17 = arith.constant 0 : index
    %c0_18 = arith.constant 0 : index
    %32 = vector.load %arg41[%c0_16, %c0_17, %c0_18] : memref<4x8x1xf32, #tpu.memory_space<vmem>>, vector<1x8x1xf32>
    %33 = vector.shape_cast %32 : vector<1x8x1xf32> to vector<8x1xf32>
    %34 = vector.shape_cast %26 : vector<8x1xf32> to vector<1x8x1xf32>
    tpu.vector_store %arg41[%c0_16, %c0_17, %c0_18], %34 {strides = array<i32>} : memref<4x8x1xf32, #tpu.memory_space<vmem>>, vector<1x8x1xf32>,
    %c0_19 = arith.constant 0 : index
    %c0_20 = arith.constant 0 : index
    %c0_21 = arith.constant 0 : index
    %35 = vector.load %arg42[%c0_19, %c0_20, %c0_21] : memref<4x8x1xf32, #tpu.memory_space<vmem>>, vector<1x8x1xf32>
    %36 = vector.shape_cast %35 : vector<1x8x1xf32> to vector<8x1xf32>
    %37 = arith.mulf %28, %36 : vector<8x1xf32>
    %cst_22 = arith.constant dense<0.000000e+00> : vector<8xf32>
    %38 = vector.multi_reduction <add>, %31, %cst_22 [1] : vector<8x8xf32> to vector<8xf32>
    %39 = vector.shape_cast %38 : vector<8xf32> to vector<8x1xf32>
    %40 = arith.addf %37, %39 : vector<8x1xf32>
    %c0_23 = arith.constant 0 : index
    %c0_24 = arith.constant 0 : index
    %c0_25 = arith.constant 0 : index
    %41 = vector.load %arg42[%c0_23, %c0_24, %c0_25] : memref<4x8x1xf32, #tpu.memory_space<vmem>>, vector<1x8x1xf32>
    %42 = vector.shape_cast %41 : vector<1x8x1xf32> to vector<8x1xf32>
    %43 = vector.shape_cast %40 : vector<8x1xf32> to vector<1x8x1xf32>
    tpu.vector_store %arg42[%c0_23, %c0_24, %c0_25], %43 {strides = array<i32>} : memref<4x8x1xf32, #tpu.memory_space<vmem>>, vector<1x8x1xf32>,
    %44 = arith.truncf %31 : vector<8x8xf32> to vector<8x8xbf16>
    %45 = vector.extract_strided_slice %15 {offsets = [0, 0], sizes = [8, 8], strides = [1, 1]} : vector<8x32xbf16> to vector<8x8xbf16>
    %cst_26 = arith.constant dense<0.000000e+00> : vector<8x8xf32>
    %46 = tpu.matmul %44, %45, %cst_26 {dimension_numbers = #tpu.dot_dimension_numbers<[1], [0], [0], [1], [0, 0, 1, 1], [], []>} : vector<8x8xbf16>, vector<8x8xbf16>, vector<8x8xf32> -> vector<8x8xf32>
    %47 = vector.extract_strided_slice %18 {offsets = [0, 0], sizes = [8, 8], strides = [1, 1]} : vector<8x32xf32> to vector<8x8xf32>
    %48 = vector.broadcast %28 : vector<8x1xf32> to vector<8x8xf32>
    %49 = arith.mulf %48, %47 : vector<8x8xf32>
    %50 = arith.addf %49, %46 : vector<8x8xf32>
    %51 = vector.extract_strided_slice %17 {offsets = [0, 8], sizes = [8, 8], strides = [1, 1]} : vector<8x32xbf16> to vector<8x8xbf16>
    %52 = vector.extract_strided_slice %13 {offsets = [8, 0], sizes = [8, 8], strides = [1, 1]} : vector<32x8xbf16> to vector<8x8xbf16>
    %cst_27 = arith.constant dense<0.000000e+00> : vector<8x8xf32>
    %53 = tpu.matmul %51, %52, %cst_27 {dimension_numbers = #tpu.dot_dimension_numbers<[1], [0], [0], [1], [0, 0, 1, 1], [], []>} : vector<8x8xbf16>, vector<8x8xbf16>, vector<8x8xf32> -> vector<8x8xf32>
    %c1 = arith.constant 1 : index
    %c0_28 = arith.constant 0 : index
    %c0_29 = arith.constant 0 : index
    %54 = vector.load %arg41[%c1, %c0_28, %c0_29] : memref<4x8x1xf32, #tpu.memory_space<vmem>>, vector<1x8x1xf32>
    %55 = vector.shape_cast %54 : vector<1x8x1xf32> to vector<8x1xf32>
    %cst_30 = arith.constant dense<0xFF800000> : vector<8xf32>
    %56 = vector.multi_reduction <maximumf>, %53, %cst_30 [1] : vector<8x8xf32> to vector<8xf32>
    %57 = vector.shape_cast %56 : vector<8xf32> to vector<8x1xf32>
    %58 = arith.maximumf %55, %57 : vector<8x1xf32>
    %59 = arith.subf %55, %58 : vector<8x1xf32>
    %60 = math.exp %59 : vector<8x1xf32>
    %61 = vector.broadcast %58 : vector<8x1xf32> to vector<8x8xf32>
    %62 = arith.subf %53, %61 : vector<8x8xf32>
    %63 = math.exp %62 : vector<8x8xf32>
    %c1_31 = arith.constant 1 : index
    %c0_32 = arith.constant 0 : index
    %c0_33 = arith.constant 0 : index
    %64 = vector.load %arg41[%c1_31, %c0_32, %c0_33] : memref<4x8x1xf32, #tpu.memory_space<vmem>>, vector<1x8x1xf32>
    %65 = vector.shape_cast %64 : vector<1x8x1xf32> to vector<8x1xf32>
    %66 = vector.shape_cast %58 : vector<8x1xf32> to vector<1x8x1xf32>
    tpu.vector_store %arg41[%c1_31, %c0_32, %c0_33], %66 {strides = array<i32>} : memref<4x8x1xf32, #tpu.memory_space<vmem>>, vector<1x8x1xf32>,
    %c1_34 = arith.constant 1 : index
    %c0_35 = arith.constant 0 : index
    %c0_36 = arith.constant 0 : index
    %67 = vector.load %arg42[%c1_34, %c0_35, %c0_36] : memref<4x8x1xf32, #tpu.memory_space<vmem>>, vector<1x8x1xf32>
    %68 = vector.shape_cast %67 : vector<1x8x1xf32> to vector<8x1xf32>
    %69 = arith.mulf %60, %68 : vector<8x1xf32>
    %cst_37 = arith.constant dense<0.000000e+00> : vector<8xf32>
    %70 = vector.multi_reduction <add>, %63, %cst_37 [1] : vector<8x8xf32> to vector<8xf32>
    %71 = vector.shape_cast %70 : vector<8xf32> to vector<8x1xf32>
    %72 = arith.addf %69, %71 : vector<8x1xf32>
    %c1_38 = arith.constant 1 : index
    %c0_39 = arith.constant 0 : index
    %c0_40 = arith.constant 0 : index
    %73 = vector.load %arg42[%c1_38, %c0_39, %c0_40] : memref<4x8x1xf32, #tpu.memory_space<vmem>>, vector<1x8x1xf32>
    %74 = vector.shape_cast %73 : vector<1x8x1xf32> to vector<8x1xf32>
    %75 = vector.shape_cast %72 : vector<8x1xf32> to vector<1x8x1xf32>
    tpu.vector_store %arg42[%c1_38, %c0_39, %c0_40], %75 {strides = array<i32>} : memref<4x8x1xf32, #tpu.memory_space<vmem>>, vector<1x8x1xf32>,
    %76 = arith.truncf %63 : vector<8x8xf32> to vector<8x8xbf16>
    %77 = vector.extract_strided_slice %15 {offsets = [0, 8], sizes = [8, 8], strides = [1, 1]} : vector<8x32xbf16> to vector<8x8xbf16>
    %cst_41 = arith.constant dense<0.000000e+00> : vector<8x8xf32>
    %78 = tpu.matmul %76, %77, %cst_41 {dimension_numbers = #tpu.dot_dimension_numbers<[1], [0], [0], [1], [0, 0, 1, 1], [], []>} : vector<8x8xbf16>, vector<8x8xbf16>, vector<8x8xf32> -> vector<8x8xf32>
    %79 = vector.extract_strided_slice %18 {offsets = [0, 8], sizes = [8, 8], strides = [1, 1]} : vector<8x32xf32> to vector<8x8xf32>
    %80 = vector.broadcast %60 : vector<8x1xf32> to vector<8x8xf32>
    %81 = arith.mulf %80, %79 : vector<8x8xf32>
    %82 = arith.addf %81, %78 : vector<8x8xf32>
    %83 = vector.extract_strided_slice %17 {offsets = [0, 16], sizes = [8, 8], strides = [1, 1]} : vector<8x32xbf16> to vector<8x8xbf16>
    %84 = vector.extract_strided_slice %13 {offsets = [16, 0], sizes = [8, 8], strides = [1, 1]} : vector<32x8xbf16> to vector<8x8xbf16>
    %cst_42 = arith.constant dense<0.000000e+00> : vector<8x8xf32>
    %85 = tpu.matmul %83, %84, %cst_42 {dimension_numbers = #tpu.dot_dimension_numbers<[1], [0], [0], [1], [0, 0, 1, 1], [], []>} : vector<8x8xbf16>, vector<8x8xbf16>, vector<8x8xf32> -> vector<8x8xf32>
    %c2 = arith.constant 2 : index
    %c0_43 = arith.constant 0 : index
    %c0_44 = arith.constant 0 : index
    %86 = vector.load %arg41[%c2, %c0_43, %c0_44] : memref<4x8x1xf32, #tpu.memory_space<vmem>>, vector<1x8x1xf32>
    %87 = vector.shape_cast %86 : vector<1x8x1xf32> to vector<8x1xf32>
    %cst_45 = arith.constant dense<0xFF800000> : vector<8xf32>
    %88 = vector.multi_reduction <maximumf>, %85, %cst_45 [1] : vector<8x8xf32> to vector<8xf32>
    %89 = vector.shape_cast %88 : vector<8xf32> to vector<8x1xf32>
    %90 = arith.maximumf %87, %89 : vector<8x1xf32>
    %91 = arith.subf %87, %90 : vector<8x1xf32>
    %92 = math.exp %91 : vector<8x1xf32>
    %93 = vector.broadcast %90 : vector<8x1xf32> to vector<8x8xf32>
    %94 = arith.subf %85, %93 : vector<8x8xf32>
    %95 = math.exp %94 : vector<8x8xf32>
    %c2_46 = arith.constant 2 : index
    %c0_47 = arith.constant 0 : index
    %c0_48 = arith.constant 0 : index
    %96 = vector.load %arg41[%c2_46, %c0_47, %c0_48] : memref<4x8x1xf32, #tpu.memory_space<vmem>>, vector<1x8x1xf32>
    %97 = vector.shape_cast %96 : vector<1x8x1xf32> to vector<8x1xf32>
    %98 = vector.shape_cast %90 : vector<8x1xf32> to vector<1x8x1xf32>
    tpu.vector_store %arg41[%c2_46, %c0_47, %c0_48], %98 {strides = array<i32>} : memref<4x8x1xf32, #tpu.memory_space<vmem>>, vector<1x8x1xf32>,
    %c2_49 = arith.constant 2 : index
    %c0_50 = arith.constant 0 : index
    %c0_51 = arith.constant 0 : index
    %99 = vector.load %arg42[%c2_49, %c0_50, %c0_51] : memref<4x8x1xf32, #tpu.memory_space<vmem>>, vector<1x8x1xf32>
    %100 = vector.shape_cast %99 : vector<1x8x1xf32> to vector<8x1xf32>
    %101 = arith.mulf %92, %100 : vector<8x1xf32>
    %cst_52 = arith.constant dense<0.000000e+00> : vector<8xf32>
    %102 = vector.multi_reduction <add>, %95, %cst_52 [1] : vector<8x8xf32> to vector<8xf32>
    %103 = vector.shape_cast %102 : vector<8xf32> to vector<8x1xf32>
    %104 = arith.addf %101, %103 : vector<8x1xf32>
    %c2_53 = arith.constant 2 : index
    %c0_54 = arith.constant 0 : index
    %c0_55 = arith.constant 0 : index
    %105 = vector.load %arg42[%c2_53, %c0_54, %c0_55] : memref<4x8x1xf32, #tpu.memory_space<vmem>>, vector<1x8x1xf32>
    %106 = vector.shape_cast %105 : vector<1x8x1xf32> to vector<8x1xf32>
    %107 = vector.shape_cast %104 : vector<8x1xf32> to vector<1x8x1xf32>
    tpu.vector_store %arg42[%c2_53, %c0_54, %c0_55], %107 {strides = array<i32>} : memref<4x8x1xf32, #tpu.memory_space<vmem>>, vector<1x8x1xf32>,
    %108 = arith.truncf %95 : vector<8x8xf32> to vector<8x8xbf16>
    %109 = vector.extract_strided_slice %15 {offsets = [0, 16], sizes = [8, 8], strides = [1, 1]} : vector<8x32xbf16> to vector<8x8xbf16>
    %cst_56 = arith.constant dense<0.000000e+00> : vector<8x8xf32>
    %110 = tpu.matmul %108, %109, %cst_56 {dimension_numbers = #tpu.dot_dimension_numbers<[1], [0], [0], [1], [0, 0, 1, 1], [], []>} : vector<8x8xbf16>, vector<8x8xbf16>, vector<8x8xf32> -> vector<8x8xf32>
    %111 = vector.extract_strided_slice %18 {offsets = [0, 16], sizes = [8, 8], strides = [1, 1]} : vector<8x32xf32> to vector<8x8xf32>
    %112 = vector.broadcast %92 : vector<8x1xf32> to vector<8x8xf32>
    %113 = arith.mulf %112, %111 : vector<8x8xf32>
    %114 = arith.addf %113, %110 : vector<8x8xf32>
    %115 = vector.extract_strided_slice %17 {offsets = [0, 24], sizes = [8, 8], strides = [1, 1]} : vector<8x32xbf16> to vector<8x8xbf16>
    %116 = vector.extract_strided_slice %13 {offsets = [24, 0], sizes = [8, 8], strides = [1, 1]} : vector<32x8xbf16> to vector<8x8xbf16>
    %cst_57 = arith.constant dense<0.000000e+00> : vector<8x8xf32>
    %117 = tpu.matmul %115, %116, %cst_57 {dimension_numbers = #tpu.dot_dimension_numbers<[1], [0], [0], [1], [0, 0, 1, 1], [], []>} : vector<8x8xbf16>, vector<8x8xbf16>, vector<8x8xf32> -> vector<8x8xf32>
    %c3 = arith.constant 3 : index
    %c0_58 = arith.constant 0 : index
    %c0_59 = arith.constant 0 : index
    %118 = vector.load %arg41[%c3, %c0_58, %c0_59] : memref<4x8x1xf32, #tpu.memory_space<vmem>>, vector<1x8x1xf32>
    %119 = vector.shape_cast %118 : vector<1x8x1xf32> to vector<8x1xf32>
    %cst_60 = arith.constant dense<0xFF800000> : vector<8xf32>
    %120 = vector.multi_reduction <maximumf>, %117, %cst_60 [1] : vector<8x8xf32> to vector<8xf32>
    %121 = vector.shape_cast %120 : vector<8xf32> to vector<8x1xf32>
    %122 = arith.maximumf %119, %121 : vector<8x1xf32>
    %123 = arith.subf %119, %122 : vector<8x1xf32>
    %124 = math.exp %123 : vector<8x1xf32>
    %125 = vector.broadcast %122 : vector<8x1xf32> to vector<8x8xf32>
    %126 = arith.subf %117, %125 : vector<8x8xf32>
    %127 = math.exp %126 : vector<8x8xf32>
    %c3_61 = arith.constant 3 : index
    %c0_62 = arith.constant 0 : index
    %c0_63 = arith.constant 0 : index
    %128 = vector.load %arg41[%c3_61, %c0_62, %c0_63] : memref<4x8x1xf32, #tpu.memory_space<vmem>>, vector<1x8x1xf32>
    %129 = vector.shape_cast %128 : vector<1x8x1xf32> to vector<8x1xf32>
    %130 = vector.shape_cast %122 : vector<8x1xf32> to vector<1x8x1xf32>
    tpu.vector_store %arg41[%c3_61, %c0_62, %c0_63], %130 {strides = array<i32>} : memref<4x8x1xf32, #tpu.memory_space<vmem>>, vector<1x8x1xf32>,
    %c3_64 = arith.constant 3 : index
    %c0_65 = arith.constant 0 : index
    %c0_66 = arith.constant 0 : index
    %131 = vector.load %arg42[%c3_64, %c0_65, %c0_66] : memref<4x8x1xf32, #tpu.memory_space<vmem>>, vector<1x8x1xf32>
    %132 = vector.shape_cast %131 : vector<1x8x1xf32> to vector<8x1xf32>
    %133 = arith.mulf %124, %132 : vector<8x1xf32>
    %cst_67 = arith.constant dense<0.000000e+00> : vector<8xf32>
    %134 = vector.multi_reduction <add>, %127, %cst_67 [1] : vector<8x8xf32> to vector<8xf32>
    %135 = vector.shape_cast %134 : vector<8xf32> to vector<8x1xf32>
    %136 = arith.addf %133, %135 : vector<8x1xf32>
    %c3_68 = arith.constant 3 : index
    %c0_69 = arith.constant 0 : index
    %c0_70 = arith.constant 0 : index
    %137 = vector.load %arg42[%c3_68, %c0_69, %c0_70] : memref<4x8x1xf32, #tpu.memory_space<vmem>>, vector<1x8x1xf32>
    %138 = vector.shape_cast %137 : vector<1x8x1xf32> to vector<8x1xf32>
    %139 = vector.shape_cast %136 : vector<8x1xf32> to vector<1x8x1xf32>
    tpu.vector_store %arg42[%c3_68, %c0_69, %c0_70], %139 {strides = array<i32>} : memref<4x8x1xf32, #tpu.memory_space<vmem>>, vector<1x8x1xf32>,
    %140 = arith.truncf %127 : vector<8x8xf32> to vector<8x8xbf16>
    %141 = vector.extract_strided_slice %15 {offsets = [0, 24], sizes = [8, 8], strides = [1, 1]} : vector<8x32xbf16> to vector<8x8xbf16>
    %cst_71 = arith.constant dense<0.000000e+00> : vector<8x8xf32>
    %142 = tpu.matmul %140, %141, %cst_71 {dimension_numbers = #tpu.dot_dimension_numbers<[1], [0], [0], [1], [0, 0, 1, 1], [], []>} : vector<8x8xbf16>, vector<8x8xbf16>, vector<8x8xf32> -> vector<8x8xf32>
    %143 = vector.extract_strided_slice %18 {offsets = [0, 24], sizes = [8, 8], strides = [1, 1]} : vector<8x32xf32> to vector<8x8xf32>
    %144 = vector.broadcast %124 : vector<8x1xf32> to vector<8x8xf32>
    %145 = arith.mulf %144, %143 : vector<8x8xf32>
    %146 = arith.addf %145, %142 : vector<8x8xf32>
    %147 = tpu.concatenate %50, %82, %114, %146 in 1 : vector<8x8xf32>, vector<8x8xf32>, vector<8x8xf32>, vector<8x8xf32> -> vector<8x32xf32>
    %c0_72 = arith.constant 0 : index
    %c0_73 = arith.constant 0 : index
    %148 = vector.load %arg43[%c0_72, %c0_73] : memref<8x32xf32, #tpu.memory_space<vmem>>, vector<8x32xf32>
    tpu.vector_store %arg43[%c0_72, %c0_73], %147 {strides = array<i32>} : memref<8x32xf32, #tpu.memory_space<vmem>>, vector<8x32xf32>,
    %c1_i32 = arith.constant 1 : i32
    %149 = arith.cmpi eq, %arg1, %c1_i32 : i32
    %150 = arith.extui %149 : i1 to i32
    %c0_i32_74 = arith.constant 0 : i32
    %151 = arith.cmpi ne, %150, %c0_i32_74 : i32
    scf.if %151 {
      %c0_75 = arith.constant 0 : index
      %c0_76 = arith.constant 0 : index
      %152 = vector.load %arg39[%c0_75, %c0_76] : memref<8x32xf32, #tpu.memory_space<vmem>>, vector<8x32xf32>
      %c0_77 = arith.constant 0 : index
      %c0_78 = arith.constant 0 : index
      %153 = vector.load %arg43[%c0_77, %c0_78] : memref<8x32xf32, #tpu.memory_space<vmem>>, vector<8x32xf32>
      %154 = vector.extract_strided_slice %153 {offsets = [0, 0], sizes = [8, 8], strides = [1, 1]} : vector<8x32xf32> to vector<8x8xf32>
      %c0_79 = arith.constant 0 : index
      %c0_80 = arith.constant 0 : index
      %c0_81 = arith.constant 0 : index
      %155 = vector.load %arg42[%c0_79, %c0_80, %c0_81] : memref<4x8x1xf32, #tpu.memory_space<vmem>>, vector<1x8x1xf32>
      %156 = vector.shape_cast %155 : vector<1x8x1xf32> to vector<8x1xf32>
      %157 = tpu.reciprocal %156 {approx = true} : vector<8x1xf32> -> vector<8x1xf32>
      %158 = vector.broadcast %157 : vector<8x1xf32> to vector<8x8xf32>
      %159 = arith.mulf %154, %158 : vector<8x8xf32>
      %160 = vector.extract_strided_slice %153 {offsets = [0, 8], sizes = [8, 8], strides = [1, 1]} : vector<8x32xf32> to vector<8x8xf32>
      %c1_82 = arith.constant 1 : index
      %c0_83 = arith.constant 0 : index
      %c0_84 = arith.constant 0 : index
      %161 = vector.load %arg42[%c1_82, %c0_83, %c0_84] : memref<4x8x1xf32, #tpu.memory_space<vmem>>, vector<1x8x1xf32>
      %162 = vector.shape_cast %161 : vector<1x8x1xf32> to vector<8x1xf32>
      %163 = tpu.reciprocal %162 {approx = true} : vector<8x1xf32> -> vector<8x1xf32>
      %164 = vector.broadcast %163 : vector<8x1xf32> to vector<8x8xf32>
      %165 = arith.mulf %160, %164 : vector<8x8xf32>
      %166 = vector.extract_strided_slice %153 {offsets = [0, 16], sizes = [8, 8], strides = [1, 1]} : vector<8x32xf32> to vector<8x8xf32>
      %c2_85 = arith.constant 2 : index
      %c0_86 = arith.constant 0 : index
      %c0_87 = arith.constant 0 : index
      %167 = vector.load %arg42[%c2_85, %c0_86, %c0_87] : memref<4x8x1xf32, #tpu.memory_space<vmem>>, vector<1x8x1xf32>
      %168 = vector.shape_cast %167 : vector<1x8x1xf32> to vector<8x1xf32>
      %169 = tpu.reciprocal %168 {approx = true} : vector<8x1xf32> -> vector<8x1xf32>
      %170 = vector.broadcast %169 : vector<8x1xf32> to vector<8x8xf32>
      %171 = arith.mulf %166, %170 : vector<8x8xf32>
      %172 = vector.extract_strided_slice %153 {offsets = [0, 24], sizes = [8, 8], strides = [1, 1]} : vector<8x32xf32> to vector<8x8xf32>
      %c3_88 = arith.constant 3 : index
      %c0_89 = arith.constant 0 : index
      %c0_90 = arith.constant 0 : index
      %173 = vector.load %arg42[%c3_88, %c0_89, %c0_90] : memref<4x8x1xf32, #tpu.memory_space<vmem>>, vector<1x8x1xf32>
      %174 = vector.shape_cast %173 : vector<1x8x1xf32> to vector<8x1xf32>
      %175 = tpu.reciprocal %174 {approx = true} : vector<8x1xf32> -> vector<8x1xf32>
      %176 = vector.broadcast %175 : vector<8x1xf32> to vector<8x8xf32>
      %177 = arith.mulf %172, %176 : vector<8x8xf32>
      %178 = tpu.concatenate %159, %165, %171, %177 in 1 : vector<8x8xf32>, vector<8x8xf32>, vector<8x8xf32>, vector<8x8xf32> -> vector<8x32xf32>
      %c0_91 = arith.constant 0 : index
      %c0_92 = arith.constant 0 : index
      %179 = vector.load %arg21[%c0_91, %c0_92] : memref<32x32xf32, #tpu.memory_space<vmem>>, vector<32x32xf32>
      %180 = arith.truncf %178 : vector<8x32xf32> to vector<8x32xbf16>
      %181 = arith.truncf %179 : vector<32x32xf32> to vector<32x32xbf16>
      %cst_93 = arith.constant dense<0.000000e+00> : vector<8x32xf32>
      %182 = tpu.matmul %180, %181, %cst_93 {dimension_numbers = #tpu.dot_dimension_numbers<[1], [0], [0], [1], [0, 0, 1, 1], [], []>} : vector<8x32xbf16>, vector<32x32xbf16>, vector<8x32xf32> -> vector<8x32xf32>
      %c0_94 = arith.constant 0 : index
      %c0_95 = arith.constant 0 : index
      %183 = vector.load %arg22[%c0_94, %c0_95] : memref<1x32xf32, #tpu.memory_space<vmem>>, vector<1x32xf32>
      %184 = vector.broadcast %183 : vector<1x32xf32> to vector<8x32xf32>
      %185 = arith.addf %182, %184 : vector<8x32xf32>
      %186 = arith.addf %152, %185 : vector<8x32xf32>
      %cst_96 = arith.constant dense<0.000000e+00> : vector<8xf32>
      %187 = vector.multi_reduction <add>, %186, %cst_96 [1] : vector<8x32xf32> to vector<8xf32>
      %188 = vector.shape_cast %187 : vector<8xf32> to vector<8x1xf32>
      %cst_97 = arith.constant 3.200000e+01 : f32
      %189 = vector.broadcast %cst_97 : f32 to vector<8x1xf32>
      %190 = arith.divf %188, %189 : vector<8x1xf32>
      %191 = vector.broadcast %190 : vector<8x1xf32> to vector<8x32xf32>
      %192 = arith.subf %186, %191 : vector<8x32xf32>
      %193 = arith.mulf %192, %192 : vector<8x32xf32>
      %cst_98 = arith.constant dense<0.000000e+00> : vector<8xf32>
      %194 = vector.multi_reduction <add>, %193, %cst_98 [1] : vector<8x32xf32> to vector<8xf32>
      %195 = vector.shape_cast %194 : vector<8xf32> to vector<8x1xf32>
      %cst_99 = arith.constant 3.200000e+01 : f32
      %196 = vector.broadcast %cst_99 : f32 to vector<8x1xf32>
      %197 = arith.divf %195, %196 : vector<8x1xf32>
      %198 = vector.broadcast %190 : vector<8x1xf32> to vector<8x32xf32>
      %199 = arith.subf %186, %198 : vector<8x32xf32>
      %cst_100 = arith.constant 9.99999974E-6 : f32
      %200 = vector.broadcast %cst_100 : f32 to vector<8x1xf32>
      %201 = arith.addf %197, %200 : vector<8x1xf32>
      %202 = math.rsqrt %201 : vector<8x1xf32>
      %203 = vector.broadcast %202 : vector<8x1xf32> to vector<8x32xf32>
      %204 = arith.mulf %199, %203 : vector<8x32xf32>
      %c0_101 = arith.constant 0 : index
      %c0_102 = arith.constant 0 : index
      %205 = vector.load %arg23[%c0_101, %c0_102] : memref<1x32xf32, #tpu.memory_space<vmem>>, vector<1x32xf32>
      %206 = vector.broadcast %205 : vector<1x32xf32> to vector<8x32xf32>
      %207 = arith.mulf %204, %206 : vector<8x32xf32>
      %c0_103 = arith.constant 0 : index
      %c0_104 = arith.constant 0 : index
      %208 = vector.load %arg24[%c0_103, %c0_104] : memref<1x32xf32, #tpu.memory_space<vmem>>, vector<1x32xf32>
      %209 = vector.broadcast %208 : vector<1x32xf32> to vector<8x32xf32>
      %210 = arith.addf %207, %209 : vector<8x32xf32>
      %c0_105 = arith.constant 0 : index
      %c0_106 = arith.constant 0 : index
      %211 = vector.load %arg25[%c0_105, %c0_106] : memref<32x64xf32, #tpu.memory_space<vmem>>, vector<32x64xf32>
      %212 = arith.truncf %210 : vector<8x32xf32> to vector<8x32xbf16>
      %213 = arith.truncf %211 : vector<32x64xf32> to vector<32x64xbf16>
      %cst_107 = arith.constant dense<0.000000e+00> : vector<8x64xf32>
      %214 = tpu.matmul %212, %213, %cst_107 {dimension_numbers = #tpu.dot_dimension_numbers<[1], [0], [0], [1], [0, 0, 1, 1], [], []>} : vector<8x32xbf16>, vector<32x64xbf16>, vector<8x64xf32> -> vector<8x64xf32>
      %c0_108 = arith.constant 0 : index
      %c0_109 = arith.constant 0 : index
      %215 = vector.load %arg26[%c0_108, %c0_109] : memref<1x64xf32, #tpu.memory_space<vmem>>, vector<1x64xf32>
      %216 = vector.broadcast %215 : vector<1x64xf32> to vector<8x64xf32>
      %217 = arith.addf %214, %216 : vector<8x64xf32>
      %cst_110 = arith.constant 0.000000e+00 : f32
      %218 = vector.broadcast %cst_110 : f32 to vector<8x64xf32>
      %219 = arith.maximumf %217, %218 : vector<8x64xf32>
      %c0_111 = arith.constant 0 : index
      %c0_112 = arith.constant 0 : index
      %220 = vector.load %arg27[%c0_111, %c0_112] : memref<64x32xf32, #tpu.memory_space<vmem>>, vector<64x32xf32>
      %221 = arith.truncf %219 : vector<8x64xf32> to vector<8x64xbf16>
      %222 = arith.truncf %220 : vector<64x32xf32> to vector<64x32xbf16>
      %cst_113 = arith.constant dense<0.000000e+00> : vector<8x32xf32>
      %223 = tpu.matmul %221, %222, %cst_113 {dimension_numbers = #tpu.dot_dimension_numbers<[1], [0], [0], [1], [0, 0, 1, 1], [], []>} : vector<8x64xbf16>, vector<64x32xbf16>, vector<8x32xf32> -> vector<8x32xf32>
      %c0_114 = arith.constant 0 : index
      %c0_115 = arith.constant 0 : index
      %224 = vector.load %arg28[%c0_114, %c0_115] : memref<1x32xf32, #tpu.memory_space<vmem>>, vector<1x32xf32>
      %225 = vector.broadcast %224 : vector<1x32xf32> to vector<8x32xf32>
      %226 = arith.addf %223, %225 : vector<8x32xf32>
      %227 = arith.addf %210, %226 : vector<8x32xf32>
      %cst_116 = arith.constant dense<0.000000e+00> : vector<8xf32>
      %228 = vector.multi_reduction <add>, %227, %cst_116 [1] : vector<8x32xf32> to vector<8xf32>
      %229 = vector.shape_cast %228 : vector<8xf32> to vector<8x1xf32>
      %cst_117 = arith.constant 3.200000e+01 : f32
      %230 = vector.broadcast %cst_117 : f32 to vector<8x1xf32>
      %231 = arith.divf %229, %230 : vector<8x1xf32>
      %232 = vector.broadcast %231 : vector<8x1xf32> to vector<8x32xf32>
      %233 = arith.subf %227, %232 : vector<8x32xf32>
      %234 = arith.mulf %233, %233 : vector<8x32xf32>
      %cst_118 = arith.constant dense<0.000000e+00> : vector<8xf32>
      %235 = vector.multi_reduction <add>, %234, %cst_118 [1] : vector<8x32xf32> to vector<8xf32>
      %236 = vector.shape_cast %235 : vector<8xf32> to vector<8x1xf32>
      %cst_119 = arith.constant 3.200000e+01 : f32
      %237 = vector.broadcast %cst_119 : f32 to vector<8x1xf32>
      %238 = arith.divf %236, %237 : vector<8x1xf32>
      %239 = vector.broadcast %231 : vector<8x1xf32> to vector<8x32xf32>
      %240 = arith.subf %227, %239 : vector<8x32xf32>
      %cst_120 = arith.constant 9.99999974E-6 : f32
      %241 = vector.broadcast %cst_120 : f32 to vector<8x1xf32>
      %242 = arith.addf %238, %241 : vector<8x1xf32>
      %243 = math.rsqrt %242 : vector<8x1xf32>
      %244 = vector.broadcast %243 : vector<8x1xf32> to vector<8x32xf32>
      %245 = arith.mulf %240, %244 : vector<8x32xf32>
      %c0_121 = arith.constant 0 : index
      %c0_122 = arith.constant 0 : index
      %246 = vector.load %arg29[%c0_121, %c0_122] : memref<1x32xf32, #tpu.memory_space<vmem>>, vector<1x32xf32>
      %247 = vector.broadcast %246 : vector<1x32xf32> to vector<8x32xf32>
      %248 = arith.mulf %245, %247 : vector<8x32xf32>
      %c0_123 = arith.constant 0 : index
      %c0_124 = arith.constant 0 : index
      %249 = vector.load %arg30[%c0_123, %c0_124] : memref<1x32xf32, #tpu.memory_space<vmem>>, vector<1x32xf32>
      %250 = vector.broadcast %249 : vector<1x32xf32> to vector<8x32xf32>
      %251 = arith.addf %248, %250 : vector<8x32xf32>
      %c0_125 = arith.constant 0 : index
      %c0_126 = arith.constant 0 : index
      %252 = vector.load %arg31[%c0_125, %c0_126] : memref<32x32xf32, #tpu.memory_space<vmem>>, vector<32x32xf32>
      %253 = arith.truncf %251 : vector<8x32xf32> to vector<8x32xbf16>
      %254 = arith.truncf %252 : vector<32x32xf32> to vector<32x32xbf16>
      %cst_127 = arith.constant dense<0.000000e+00> : vector<8x32xf32>
      %255 = tpu.matmul %253, %254, %cst_127 {dimension_numbers = #tpu.dot_dimension_numbers<[1], [0], [0], [1], [0, 0, 1, 1], [], []>} : vector<8x32xbf16>, vector<32x32xbf16>, vector<8x32xf32> -> vector<8x32xf32>
      %c0_128 = arith.constant 0 : index
      %c0_129 = arith.constant 0 : index
      %256 = vector.load %arg32[%c0_128, %c0_129] : memref<1x32xf32, #tpu.memory_space<vmem>>, vector<1x32xf32>
      %257 = vector.broadcast %256 : vector<1x32xf32> to vector<8x32xf32>
      %258 = arith.addf %255, %257 : vector<8x32xf32>
      %cst_130 = arith.constant 0.000000e+00 : f32
      %259 = vector.broadcast %cst_130 : f32 to vector<8x32xf32>
      %260 = arith.maximumf %258, %259 : vector<8x32xf32>
      %c0_131 = arith.constant 0 : index
      %c0_132 = arith.constant 0 : index
      %261 = vector.load %arg33[%c0_131, %c0_132] : memref<32x32xf32, #tpu.memory_space<vmem>>, vector<32x32xf32>
      %262 = arith.truncf %260 : vector<8x32xf32> to vector<8x32xbf16>
      %263 = arith.truncf %261 : vector<32x32xf32> to vector<32x32xbf16>
      %cst_133 = arith.constant dense<0.000000e+00> : vector<8x32xf32>
      %264 = tpu.matmul %262, %263, %cst_133 {dimension_numbers = #tpu.dot_dimension_numbers<[1], [0], [0], [1], [0, 0, 1, 1], [], []>} : vector<8x32xbf16>, vector<32x32xbf16>, vector<8x32xf32> -> vector<8x32xf32>
      %c0_134 = arith.constant 0 : index
      %c0_135 = arith.constant 0 : index
      %265 = vector.load %arg34[%c0_134, %c0_135] : memref<1x32xf32, #tpu.memory_space<vmem>>, vector<1x32xf32>
      %266 = vector.broadcast %265 : vector<1x32xf32> to vector<8x32xf32>
      %267 = arith.addf %264, %266 : vector<8x32xf32>
      %cst_136 = arith.constant 0.000000e+00 : f32
      %268 = vector.broadcast %cst_136 : f32 to vector<8x32xf32>
      %269 = arith.maximumf %267, %268 : vector<8x32xf32>
      %c0_137 = arith.constant 0 : index
      %c0_138 = arith.constant 0 : index
      %270 = vector.load %arg35[%c0_137, %c0_138] : memref<32x4xf32, #tpu.memory_space<vmem>>, vector<32x4xf32>
      %cst_139 = arith.constant dense<0.000000e+00> : vector<8x4xf32>
      %271 = tpu.matmul %269, %270, %cst_139 {dimension_numbers = #tpu.dot_dimension_numbers<[1], [0], [0], [1], [0, 0, 1, 1], [], []>} : vector<8x32xf32>, vector<32x4xf32>, vector<8x4xf32> -> vector<8x4xf32>
      %c0_140 = arith.constant 0 : index
      %c0_141 = arith.constant 0 : index
      %272 = vector.load %arg36[%c0_140, %c0_141] : memref<1x4xf32, #tpu.memory_space<vmem>>, vector<1x4xf32>
      %273 = vector.broadcast %272 : vector<1x4xf32> to vector<8x4xf32>
      %274 = arith.addf %271, %273 : vector<8x4xf32>
      %c0_142 = arith.constant 0 : index
      %c0_143 = arith.constant 0 : index
      %c0_144 = arith.constant 0 : index
      %275 = vector.load %arg4[%c0_142, %c0_143, %c0_144] : memref<1x8x4xf32, #tpu.memory_space<vmem>>, vector<1x8x4xf32>
      %276 = vector.shape_cast %275 : vector<1x8x4xf32> to vector<8x4xf32>
      %cst_145 = arith.constant 0.000000e+00 : f32
      %cst_146 = arith.constant 1.000000e+00 : f32
      %277 = vector.broadcast %cst_145 : f32 to vector<8x4xf32>
      %278 = arith.maximumf %277, %276 : vector<8x4xf32>
      %279 = vector.broadcast %cst_146 : f32 to vector<8x4xf32>
      %280 = arith.minimumf %279, %278 : vector<8x4xf32>
      %cst_147 = arith.constant 9.99999974E-6 : f32
      %281 = vector.broadcast %cst_147 : f32 to vector<8x4xf32>
      %282 = arith.maximumf %280, %281 : vector<8x4xf32>
      %283 = math.log %282 : vector<8x4xf32>
      %cst_148 = arith.constant 1.000000e+00 : f32
      %284 = vector.broadcast %cst_148 : f32 to vector<8x4xf32>
      %285 = arith.subf %284, %280 : vector<8x4xf32>
      %cst_149 = arith.constant 9.99999974E-6 : f32
      %286 = vector.broadcast %cst_149 : f32 to vector<8x4xf32>
      %287 = arith.maximumf %285, %286 : vector<8x4xf32>
      %288 = math.log %287 : vector<8x4xf32>
      %289 = arith.subf %283, %288 : vector<8x4xf32>
      %290 = arith.addf %274, %289 : vector<8x4xf32>
      %cst_150 = arith.constant 0.000000e+00 : f32
      %291 = vector.broadcast %cst_150 : f32 to vector<8x4xf32>
      %292 = arith.subf %291, %290 : vector<8x4xf32>
      %293 = math.exp %292 : vector<8x4xf32>
      %cst_151 = arith.constant 1.000000e+00 : f32
      %294 = vector.broadcast %cst_151 : f32 to vector<8x4xf32>
      %295 = arith.addf %294, %293 : vector<8x4xf32>
      %cst_152 = arith.constant 1.000000e+00 : f32
      %296 = vector.broadcast %cst_152 : f32 to vector<8x4xf32>
      %297 = arith.divf %296, %295 : vector<8x4xf32>
      %c0_153 = arith.constant 0 : index
      %c0_154 = arith.constant 0 : index
      %c0_155 = arith.constant 0 : index
      %298 = vector.load %arg38[%c0_153, %c0_154, %c0_155] : memref<1x8x4xf32, #tpu.memory_space<vmem>>, vector<1x8x4xf32>
      %299 = vector.shape_cast %298 : vector<1x8x4xf32> to vector<8x4xf32>
      %300 = vector.shape_cast %297 : vector<8x4xf32> to vector<1x8x4xf32>
      tpu.vector_store %arg38[%c0_153, %c0_154, %c0_155], %300 {strides = array<i32>} : memref<1x8x4xf32, #tpu.memory_space<vmem>>, vector<1x8x4xf32>,
      %c0_156 = arith.constant 0 : index
      %c0_157 = arith.constant 0 : index
      %c0_158 = arith.constant 0 : index
      %301 = vector.load %arg37[%c0_156, %c0_157, %c0_158] : memref<1x8x32xf32, #tpu.memory_space<vmem>>, vector<1x8x32xf32>
      %302 = vector.shape_cast %301 : vector<1x8x32xf32> to vector<8x32xf32>
      %303 = vector.shape_cast %251 : vector<8x32xf32> to vector<1x8x32xf32>
      tpu.vector_store %arg37[%c0_156, %c0_157, %c0_158], %303 {strides = array<i32>} : memref<1x8x32xf32, #tpu.memory_space<vmem>>, vector<1x8x32xf32>,
    } else {
    }
    return
  }
  func.func @transform_0(%arg0: i32, %arg1: i32) -> (i32, i32, i32) {
    %c0_i32 = arith.constant 0 : i32
    %c0_i32_0 = arith.constant 0 : i32
    %c0_i32_1 = arith.constant 0 : i32
    return %arg0, %c0_i32, %c0_i32_0 : i32, i32, i32
  }
  func.func @transform_1(%arg0: i32, %arg1: i32) -> (i32, i32, i32) {
    %c0_i32 = arith.constant 0 : i32
    %c0_i32_0 = arith.constant 0 : i32
    return %arg0, %arg1, %c0_i32 : i32, i32, i32
  }
  func.func @transform_2(%arg0: i32, %arg1: i32) -> (i32, i32, i32) {
    %c0_i32 = arith.constant 0 : i32
    %c0_i32_0 = arith.constant 0 : i32
    %c0_i32_1 = arith.constant 0 : i32
    return %arg0, %c0_i32, %c0_i32_0 : i32, i32, i32
  }
  func.func @transform_3(%arg0: i32, %arg1: i32) -> (i32, i32) {
    %c0_i32 = arith.constant 0 : i32
    %c0_i32_0 = arith.constant 0 : i32
    %c0_i32_1 = arith.constant 0 : i32
    return %c0_i32, %c0_i32_0 : i32, i32
  }
  func.func @transform_4(%arg0: i32, %arg1: i32) -> (i32, i32) {
    %c0_i32 = arith.constant 0 : i32
    %c0_i32_0 = arith.constant 0 : i32
    %c0_i32_1 = arith.constant 0 : i32
    return %c0_i32, %c0_i32_0 : i32, i32
  }
  func.func @transform_5(%arg0: i32, %arg1: i32) -> (i32, i32) {
    %c0_i32 = arith.constant 0 : i32
    %c0_i32_0 = arith.constant 0 : i32
    %c0_i32_1 = arith.constant 0 : i32
    return %c0_i32, %c0_i32_0 : i32, i32
  }
  func.func @transform_6(%arg0: i32, %arg1: i32) -> (i32, i32) {
    %c0_i32 = arith.constant 0 : i32
    %c0_i32_0 = arith.constant 0 : i32
    %c0_i32_1 = arith.constant 0 : i32
    return %c0_i32, %c0_i32_0 : i32, i32
  }
  func.func @transform_7(%arg0: i32, %arg1: i32) -> (i32, i32) {
    %c0_i32 = arith.constant 0 : i32
    %c0_i32_0 = arith.constant 0 : i32
    %c0_i32_1 = arith.constant 0 : i32
    return %c0_i32, %c0_i32_0 : i32, i32
  }
  func.func @transform_8(%arg0: i32, %arg1: i32) -> (i32, i32) {
    %c0_i32 = arith.constant 0 : i32
    %c0_i32_0 = arith.constant 0 : i32
    %c0_i32_1 = arith.constant 0 : i32
    return %c0_i32, %c0_i32_0 : i32, i32
  }
  func.func @transform_9(%arg0: i32, %arg1: i32) -> (i32, i32) {
    %c0_i32 = arith.constant 0 : i32
    %c0_i32_0 = arith.constant 0 : i32
    %c0_i32_1 = arith.constant 0 : i32
    return %c0_i32, %c0_i32_0 : i32, i32
  }
  func.func @transform_10(%arg0: i32, %arg1: i32) -> (i32, i32) {
    %c0_i32 = arith.constant 0 : i32
    %c0_i32_0 = arith.constant 0 : i32
    %c0_i32_1 = arith.constant 0 : i32
    return %c0_i32, %c0_i32_0 : i32, i32
  }
  func.func @transform_11(%arg0: i32, %arg1: i32) -> (i32, i32) {
    %c0_i32 = arith.constant 0 : i32
    %c0_i32_0 = arith.constant 0 : i32
    %c0_i32_1 = arith.constant 0 : i32
    return %c0_i32, %c0_i32_0 : i32, i32
  }
  func.func @transform_12(%arg0: i32, %arg1: i32) -> (i32, i32) {
    %c0_i32 = arith.constant 0 : i32
    %c0_i32_0 = arith.constant 0 : i32
    %c0_i32_1 = arith.constant 0 : i32
    return %c0_i32, %c0_i32_0 : i32, i32
  }
  func.func @transform_13(%arg0: i32, %arg1: i32) -> (i32, i32) {
    %c0_i32 = arith.constant 0 : i32
    %c0_i32_0 = arith.constant 0 : i32
    %c0_i32_1 = arith.constant 0 : i32
    return %c0_i32, %c0_i32_0 : i32, i32
  }
  func.func @transform_14(%arg0: i32, %arg1: i32) -> (i32, i32) {
    %c0_i32 = arith.constant 0 : i32
    %c0_i32_0 = arith.constant 0 : i32
    %c0_i32_1 = arith.constant 0 : i32
    return %c0_i32, %c0_i32_0 : i32, i32
  }
  func.func @transform_15(%arg0: i32, %arg1: i32) -> (i32, i32) {
    %c0_i32 = arith.constant 0 : i32
    %c0_i32_0 = arith.constant 0 : i32
    %c0_i32_1 = arith.constant 0 : i32
    return %c0_i32, %c0_i32_0 : i32, i32
  }
  func.func @transform_16(%arg0: i32, %arg1: i32) -> (i32, i32) {
    %c0_i32 = arith.constant 0 : i32
    %c0_i32_0 = arith.constant 0 : i32
    %c0_i32_1 = arith.constant 0 : i32
    return %c0_i32, %c0_i32_0 : i32, i32
  }
  func.func @transform_17(%arg0: i32, %arg1: i32) -> (i32, i32) {
    %c0_i32 = arith.constant 0 : i32
    %c0_i32_0 = arith.constant 0 : i32
    %c0_i32_1 = arith.constant 0 : i32
    return %c0_i32, %c0_i32_0 : i32, i32
  }
  func.func @transform_18(%arg0: i32, %arg1: i32) -> (i32, i32) {
    %c0_i32 = arith.constant 0 : i32
    %c0_i32_0 = arith.constant 0 : i32
    %c0_i32_1 = arith.constant 0 : i32
    return %c0_i32, %c0_i32_0 : i32, i32
  }
  func.func @transform_19(%arg0: i32, %arg1: i32) -> (i32, i32) {
    %c0_i32 = arith.constant 0 : i32
    %c0_i32_0 = arith.constant 0 : i32
    %c0_i32_1 = arith.constant 0 : i32
    return %c0_i32, %c0_i32_0 : i32, i32
  }
  func.func @transform_20(%arg0: i32, %arg1: i32) -> (i32, i32) {
    %c0_i32 = arith.constant 0 : i32
    %c0_i32_0 = arith.constant 0 : i32
    %c0_i32_1 = arith.constant 0 : i32
    return %c0_i32, %c0_i32_0 : i32, i32
  }
  func.func @transform_21(%arg0: i32, %arg1: i32) -> (i32, i32) {
    %c0_i32 = arith.constant 0 : i32
    %c0_i32_0 = arith.constant 0 : i32
    %c0_i32_1 = arith.constant 0 : i32
    return %c0_i32, %c0_i32_0 : i32, i32
  }
  func.func @transform_22(%arg0: i32, %arg1: i32) -> (i32, i32) {
    %c0_i32 = arith.constant 0 : i32
    %c0_i32_0 = arith.constant 0 : i32
    %c0_i32_1 = arith.constant 0 : i32
    return %c0_i32, %c0_i32_0 : i32, i32
  }
  func.func @transform_23(%arg0: i32, %arg1: i32) -> (i32, i32) {
    %c0_i32 = arith.constant 0 : i32
    %c0_i32_0 = arith.constant 0 : i32
    %c0_i32_1 = arith.constant 0 : i32
    return %c0_i32, %c0_i32_0 : i32, i32
  }
  func.func @transform_24(%arg0: i32, %arg1: i32) -> (i32, i32) {
    %c0_i32 = arith.constant 0 : i32
    %c0_i32_0 = arith.constant 0 : i32
    %c0_i32_1 = arith.constant 0 : i32
    return %c0_i32, %c0_i32_0 : i32, i32
  }
  func.func @transform_25(%arg0: i32, %arg1: i32) -> (i32, i32) {
    %c0_i32 = arith.constant 0 : i32
    %c0_i32_0 = arith.constant 0 : i32
    %c0_i32_1 = arith.constant 0 : i32
    return %c0_i32, %c0_i32_0 : i32, i32
  }
  func.func @transform_26(%arg0: i32, %arg1: i32) -> (i32, i32) {
    %c0_i32 = arith.constant 0 : i32
    %c0_i32_0 = arith.constant 0 : i32
    %c0_i32_1 = arith.constant 0 : i32
    return %c0_i32, %c0_i32_0 : i32, i32
  }
  func.func @transform_27(%arg0: i32, %arg1: i32) -> (i32, i32) {
    %c0_i32 = arith.constant 0 : i32
    %c0_i32_0 = arith.constant 0 : i32
    %c0_i32_1 = arith.constant 0 : i32
    return %c0_i32, %c0_i32_0 : i32, i32
  }
  func.func @transform_28(%arg0: i32, %arg1: i32) -> (i32, i32) {
    %c0_i32 = arith.constant 0 : i32
    %c0_i32_0 = arith.constant 0 : i32
    %c0_i32_1 = arith.constant 0 : i32
    return %c0_i32, %c0_i32_0 : i32, i32
  }
  func.func @transform_29(%arg0: i32, %arg1: i32) -> (i32, i32) {
    %c0_i32 = arith.constant 0 : i32
    %c0_i32_0 = arith.constant 0 : i32
    %c0_i32_1 = arith.constant 0 : i32
    return %c0_i32, %c0_i32_0 : i32, i32
  }
  func.func @transform_30(%arg0: i32, %arg1: i32) -> (i32, i32) {
    %c0_i32 = arith.constant 0 : i32
    %c0_i32_0 = arith.constant 0 : i32
    %c0_i32_1 = arith.constant 0 : i32
    return %c0_i32, %c0_i32_0 : i32, i32
  }
  func.func @transform_31(%arg0: i32, %arg1: i32) -> (i32, i32) {
    %c0_i32 = arith.constant 0 : i32
    %c0_i32_0 = arith.constant 0 : i32
    %c0_i32_1 = arith.constant 0 : i32
    return %c0_i32, %c0_i32_0 : i32, i32
  }
  func.func @transform_32(%arg0: i32, %arg1: i32) -> (i32, i32) {
    %c0_i32 = arith.constant 0 : i32
    %c0_i32_0 = arith.constant 0 : i32
    %c0_i32_1 = arith.constant 0 : i32
    return %c0_i32, %c0_i32_0 : i32, i32
  }
  func.func @transform_33(%arg0: i32, %arg1: i32) -> (i32, i32) {
    %c0_i32 = arith.constant 0 : i32
    %c0_i32_0 = arith.constant 0 : i32
    %c0_i32_1 = arith.constant 0 : i32
    return %c0_i32, %c0_i32_0 : i32, i32
  }
  func.func @transform_34(%arg0: i32, %arg1: i32) -> (i32, i32) {
    %c0_i32 = arith.constant 0 : i32
    %c0_i32_0 = arith.constant 0 : i32
    %c0_i32_1 = arith.constant 0 : i32
    return %c0_i32, %c0_i32_0 : i32, i32
  }
  func.func @transform_35(%arg0: i32, %arg1: i32) -> (i32, i32, i32) {
    %c0_i32 = arith.constant 0 : i32
    %c0_i32_0 = arith.constant 0 : i32
    %c0_i32_1 = arith.constant 0 : i32
    return %arg0, %c0_i32, %c0_i32_0 : i32, i32, i32
  }
  func.func @transform_36(%arg0: i32, %arg1: i32) -> (i32, i32, i32) {
    %c0_i32 = arith.constant 0 : i32
    %c0_i32_0 = arith.constant 0 : i32
    %c0_i32_1 = arith.constant 0 : i32
    return %arg0, %c0_i32, %c0_i32_0 : i32, i32, i32
  }
}

</mosaic_0001>

<llo_original>
// kernel: deco_plus_decoder_forward.3
$region0: #{deco_plus_decoder_forward.3}
  #allocation0 [shape = 'u32[]', space=smem, size = 0x4, offset = 0x4, fixed_abs, tag = 'smem constant byte address 0x4 - core index']
  #allocation1 [shape = 'u32[72,128]{1,0:T(1,128)}', space=vmem, size = 0x9000, scoped, tag = 'internal scratch']
  #allocation2 [shape = 'f32[8,32]{1,0:T(8,128)}', space=vmem, size = 0x1000, scoped, tag = 'scratch operand']
  #allocation3 [shape = 'f32[8,32]{1,0:T(8,128)}', space=vmem, size = 0x1000, scoped, tag = 'scratch operand']
  #allocation4 [shape = 'f32[4,8,1]{2,1,0:T(8,128)}', space=vmem, size = 0x4000, scoped, tag = 'scratch operand']
  #allocation5 [shape = 'f32[4,8,1]{2,1,0:T(8,128)}', space=vmem, size = 0x4000, scoped, tag = 'scratch operand']
  #allocation6 [shape = 'f32[8,32]{1,0:T(8,128)}', space=vmem, size = 0x1000, scoped, tag = 'scratch operand']
  %s0 = inlined_call_operand.smem [shape: u32[40], index: -1, kind: input, shape index: {}]
  %s1 = sld [smem:[%s0]]
  %s2 = scalar_lea.smem %s0, 1
  %s3 = sld [smem:[%s2]]
  %s4 = scalar_lea.smem %s0, 2
  %s5 = sld [smem:[%s4]]
  %s6 = scalar_lea.smem %s0, 3
  %s7 = sld [smem:[%s6]]
  %s8 = scalar_lea.smem %s0, 4
  %s9 = sld [smem:[%s8]]
  %s10 = scalar_lea.smem %s0, 5
  %s11 = sld [smem:[%s10]]
  %s12 = scalar_lea.smem %s0, 6
  %s13 = sld [smem:[%s12]]
  %s14 = scalar_lea.smem %s0, 7
  %s15 = sld [smem:[%s14]]
  %s16 = scalar_lea.smem %s0, 8
  %s17 = sld [smem:[%s16]]
  %s18 = scalar_lea.smem %s0, 9
  %s19 = sld [smem:[%s18]]
  %s20 = scalar_lea.smem %s0, 10
  %s21 = sld [smem:[%s20]]
  %s22 = scalar_lea.smem %s0, 11
  %s23 = sld [smem:[%s22]]
  %s24 = scalar_lea.smem %s0, 12
  %s25 = sld [smem:[%s24]]
  %s26 = scalar_lea.smem %s0, 13
  %s27 = sld [smem:[%s26]]
  %s28 = scalar_lea.smem %s0, 14
  %s29 = sld [smem:[%s28]]
  %s30 = scalar_lea.smem %s0, 15
  %s31 = sld [smem:[%s30]]
  %s32 = scalar_lea.smem %s0, 16
  %s33 = sld [smem:[%s32]]
  %s34 = scalar_lea.smem %s0, 17
  %s35 = sld [smem:[%s34]]
  %s36 = scalar_lea.smem %s0, 18
  %s37 = sld [smem:[%s36]]
  %s38 = scalar_lea.smem %s0, 19
  %s39 = sld [smem:[%s38]]
  %s40 = scalar_lea.smem %s0, 20
  %s41 = sld [smem:[%s40]]
  %s42 = scalar_lea.smem %s0, 21
  %s43 = sld [smem:[%s42]]
  %s44 = scalar_lea.smem %s0, 22
  %s45 = sld [smem:[%s44]]
  %s46 = scalar_lea.smem %s0, 23
  %s47 = sld [smem:[%s46]]
  %s48 = scalar_lea.smem %s0, 24
  %s49 = sld [smem:[%s48]]
  %s50 = scalar_lea.smem %s0, 25
  %s51 = sld [smem:[%s50]]
  %s52 = scalar_lea.smem %s0, 26
  %s53 = sld [smem:[%s52]]
  %s54 = scalar_lea.smem %s0, 27
  %s55 = sld [smem:[%s54]]
  %s56 = scalar_lea.smem %s0, 28
  %s57 = sld [smem:[%s56]]
  %s58 = scalar_lea.smem %s0, 29
  %s59 = sld [smem:[%s58]]
  %s60 = scalar_lea.smem %s0, 30
  %s61 = sld [smem:[%s60]]
  %s62 = scalar_lea.smem %s0, 31
  %s63 = sld [smem:[%s62]]
  %s64 = scalar_lea.smem %s0, 32
  %s65 = sld [smem:[%s64]]
  %s66 = scalar_lea.smem %s0, 33
  %s67 = sld [smem:[%s66]]
  %s68 = scalar_lea.smem %s0, 34
  %s69 = sld [smem:[%s68]]
  %s70 = scalar_lea.smem %s0, 35
  %s71 = sld [smem:[%s70]]
  %s72 = scalar_lea.smem %s0, 36
  %s73 = sld [smem:[%s72]]
  %s74 = scalar_lea.smem %s0, 37
  %s75 = sld [smem:[%s74]]
  %s76 = scalar_lea.smem %s0, 38
  %s77 = sld [smem:[%s76]]
  %s78 = scalar_lea.smem %s0, 39
  %s79 = sld [smem:[%s78]]
  %80 = xla_tuple %s75, %s77, %s79
  %s81 = sld [smem:[#allocation0]]
  $region213: #{deco_plus_decoder_forward.3} parent=0
    _
  %s83 = ssub.s32 1, %s81
  %s84 = scalar_select 0, %s83, %s81
  $region1: #{deco_plus_decoder_forward.3} parent=0
    #allocation7 [shape = 'u8[512]{0}', space=vmem, size = 0x400, scoped, tag = 'input window, operand 34, single buffered']
    #allocation8 [shape = 's32[2]{0}', space=sflag, size = 0x8, scoped, tag = 'scoped memory for deco_plus_decoder_forward.3']
    #allocation9 [shape = 's32[2]{0}', space=sflag, size = 0x8, scoped, tag = 'scoped memory for deco_plus_decoder_forward.3']
    #allocation10 [shape = 'u8[512]{0}', space=vmem, size = 0x400, scoped, tag = 'input window, operand 36, single buffered']
    #allocation11 [shape = 's32[1]{0}', space=sflag, size = 0x4, scoped, tag = 'scoped memory for deco_plus_decoder_forward.3']
    #allocation12 [shape = 'u8[8192]{0}', space=vmem, size = 0x2000, scoped, tag = 'output window, operand 0']
    %85 = vsyncpa [#allocation8], 0
    %86 = vsyncpa [#allocation11], 0
    %87 = vsyncpa [#allocation9], 0
    %s88 = scalar_lea.sflag [#allocation9], 1
    %89 = vsyncpa %s88, 0
    loop: start=0, step=1, limit=6
    $region2: #{deco_plus_decoder_forward.3} parent=1 // loop_pre_header
      _
    $region3: #{deco_plus_decoder_forward.3} parent=1 // loop_header
      %s91 = sphi 0, %s95
      %p92 = scmp.ge.s32.totalorder %s91, 6
      %s98 = sphi 0, %s110
      %s99 = sphi 0, %s106
      %s100 = sphi 0, %s98
      %s101 = sphi 0, %s99
      %s102 = sphi 0, %s100
      %s103 = sphi 0, %s101
      %s113 = sphi 0, %s115
      %s116 = sphi 0, %s113
      %s117 = sphi 0, %s116
      %s133 = sphi 0, %s117
      %s141 = sphi 0, %s143
      %s144 = sphi 0, %s141
      %s145 = sphi 0, %s144
      %s161 = sphi 0, %s145
      %s167 = sphi 0, %s169
      %s170 = sphi 0, %s167
      %s171 = sphi 0, %s170
      %s187 = sphi 0, %s171
      %s191 = sphi 0, %s191
      %s193 = sphi 0, %s191
      %s194 = sphi 0, %s193
      %s208 = sphi 0, %s194
      %s212 = sphi 0, %s212
      %s214 = sphi 0, %s212
      %s215 = sphi 0, %s214
      %s229 = sphi 0, %s215
      %s233 = sphi 0, %s233
      %s235 = sphi 0, %s233
      %s236 = sphi 0, %s235
      %s250 = sphi 0, %s236
      %s254 = sphi 0, %s254
      %s256 = sphi 0, %s254
      %s257 = sphi 0, %s256
      %s271 = sphi 0, %s257
      %s275 = sphi 0, %s275
      %s277 = sphi 0, %s275
      %s278 = sphi 0, %s277
      %s292 = sphi 0, %s278
      %s296 = sphi 0, %s296
      %s298 = sphi 0, %s296
      %s299 = sphi 0, %s298
      %s313 = sphi 0, %s299
      %s317 = sphi 0, %s317
      %s319 = sphi 0, %s317
      %s320 = sphi 0, %s319
      %s334 = sphi 0, %s320
      %s338 = sphi 0, %s338
      %s340 = sphi 0, %s338
      %s341 = sphi 0, %s340
      %s355 = sphi 0, %s341
      %s359 = sphi 0, %s359
      %s361 = sphi 0, %s359
      %s362 = sphi 0, %s361
      %s376 = sphi 0, %s362
      %s380 = sphi 0, %s380
      %s382 = sphi 0, %s380
      %s383 = sphi 0, %s382
      %s397 = sphi 0, %s383
      %s401 = sphi 0, %s401
      %s403 = sphi 0, %s401
      %s404 = sphi 0, %s403
      %s418 = sphi 0, %s404
      %s422 = sphi 0, %s422
      %s424 = sphi 0, %s422
      %s425 = sphi 0, %s424
      %s439 = sphi 0, %s425
      %s443 = sphi 0, %s443
      %s445 = sphi 0, %s443
      %s446 = sphi 0, %s445
      %s460 = sphi 0, %s446
      %s464 = sphi 0, %s464
      %s466 = sphi 0, %s464
      %s467 = sphi 0, %s466
      %s481 = sphi 0, %s467
      %s485 = sphi 0, %s485
      %s487 = sphi 0, %s485
      %s488 = sphi 0, %s487
      %s502 = sphi 0, %s488
      %s506 = sphi 0, %s506
      %s508 = sphi 0, %s506
      %s509 = sphi 0, %s508
      %s523 = sphi 0, %s509
      %s527 = sphi 0, %s527
      %s529 = sphi 0, %s527
      %s530 = sphi 0, %s529
      %s544 = sphi 0, %s530
      %s548 = sphi 0, %s548
      %s550 = sphi 0, %s548
      %s551 = sphi 0, %s550
      %s565 = sphi 0, %s551
      %s569 = sphi 0, %s569
      %s571 = sphi 0, %s569
      %s572 = sphi 0, %s571
      %s586 = sphi 0, %s572
      %s590 = sphi 0, %s590
      %s592 = sphi 0, %s590
      %s593 = sphi 0, %s592
      %s607 = sphi 0, %s593
      %s611 = sphi 0, %s611
      %s613 = sphi 0, %s611
      %s614 = sphi 0, %s613
      %s628 = sphi 0, %s614
      %s632 = sphi 0, %s632
      %s634 = sphi 0, %s632
      %s635 = sphi 0, %s634
      %s649 = sphi 0, %s635
      %s653 = sphi 0, %s653
      %s655 = sphi 0, %s653
      %s656 = sphi 0, %s655
      %s670 = sphi 0, %s656
      %s674 = sphi 0, %s674
      %s676 = sphi 0, %s674
      %s677 = sphi 0, %s676
      %s691 = sphi 0, %s677
      %s695 = sphi 0, %s695
      %s697 = sphi 0, %s695
      %s698 = sphi 0, %s697
      %s712 = sphi 0, %s698
      %s716 = sphi 0, %s716
      %s718 = sphi 0, %s716
      %s719 = sphi 0, %s718
      %s733 = sphi 0, %s719
      %s737 = sphi 0, %s737
      %s739 = sphi 0, %s737
      %s740 = sphi 0, %s739
      %s754 = sphi 0, %s740
      %s758 = sphi 0, %s758
      %s760 = sphi 0, %s758
      %s761 = sphi 0, %s760
      %s775 = sphi 0, %s761
      %s779 = sphi 0, %s779
      %s781 = sphi 0, %s779
      %s782 = sphi 0, %s781
      %s796 = sphi 0, %s782
      %s800 = sphi 0, %s800
      %s802 = sphi 0, %s800
      %s803 = sphi 0, %s802
      %s817 = sphi 0, %s803
      %s821 = sphi 0, %s821
      %s823 = sphi 0, %s821
      %s824 = sphi 0, %s823
      %s838 = sphi 0, %s824
      %s842 = sphi 0, %s842
      %s844 = sphi 0, %s842
      %s845 = sphi 0, %s844
      %s859 = sphi 0, %s845
      %s863 = sphi 0, %s863
      %s865 = sphi 0, %s863
      %s866 = sphi 0, %s865
      %s880 = sphi 0, %s866
      %s884 = sphi 0, %s884
      %s886 = sphi 0, %s884
      %s887 = sphi 0, %s886
      %s901 = sphi 0, %s887
      %s907 = sphi 0, %s909
      %s910 = sphi 0, %s907
      %s911 = sphi 0, %s910
      %s927 = sphi 0, %s911
      %s933 = sphi 0, %s935
      %s936 = sphi 0, %s933
      %s937 = sphi 0, %s936
      %s953 = sphi 0, %s937
      %s959 = sphi 0, %s961
      %s962 = sphi 0, %s959
      %s963 = sphi 0, %s962
      %s979 = sphi 0, %s963
    $region4: #{deco_plus_decoder_forward.3} parent=1 // loop_header_branch
      %94 = sbr.rel (%p92) target = $region8
    $region5: #{deco_plus_decoder_forward.3} parent=1 // loop_body
      %s96 = ssub.s32 %s91, 1
      %s97 = ssub.s32 %s91, 2
      %s104 = sadd.s32 1, %s99
      %p105 = scmp.ge.s32.totalorder %s104, 2
      %s106 = scalar_select %p105, 0, %s104
      %s107 = sadd.s32 1, %s98
      %s108 = scalar_select %p105, %s107, %s98
      %p109 = scmp.ge.s32.totalorder %s108, 2
      %s110 = scalar_select %p109, 0, %s108
      %s111 = ssub.s32 %s98, %s110
      %p112 = scmp.eq.s32.totalorder %s111, 0
      %s114 = sadd.s32 %s113, 1
      %s115 = scalar_select %p112, %s113, %s114
      %p118 = pneg %p112
      %p119 = scmp.eq.s32.totalorder %s91, 3
      %p120 = por %p118, %p119
      %p121 = scmp.ne.s32.totalorder %s113, %s116
      %p122 = scmp.eq.s32.totalorder %s91, 0
      %p123 = por %p121, %p122
      %p124 = scmp.ne.s32.totalorder %s113, %s116
      %p125 = scmp.eq.s32.totalorder %s96, 3
      %p126 = por %p124, %p125
      %p127 = scmp.ne.s32.totalorder %s116, %s117
      %p128 = scmp.eq.s32.totalorder %s96, 0
      %p129 = por %p127, %p128
      %p130 = scmp.ne.s32.totalorder %s116, %s117
      %p131 = scmp.eq.s32.totalorder %s97, 3
      %p132 = por %p130, %p131
      %p134 = scmp.ne.s32.totalorder %s117, %s133
      %p135 = scmp.eq.s32.totalorder %s97, 0
      %p136 = por %p134, %p135
      %s137 = ssub.s32 %s98, %s110
      %s138 = ssub.s32 %s99, %s106
      %s139 = sor.u32 %s137, %s138
      %p140 = scmp.eq.s32.totalorder %s139, 0
      %s142 = sadd.s32 %s141, 1
      %s143 = scalar_select %p140, %s141, %s142
      %p146 = pneg %p140
      %p147 = scmp.eq.s32.totalorder %s91, 3
      %p148 = por %p146, %p147
      %p149 = scmp.ne.s32.totalorder %s141, %s144
      %p150 = scmp.eq.s32.totalorder %s91, 0
      %p151 = por %p149, %p150
      %p152 = scmp.ne.s32.totalorder %s141, %s144
      %p153 = scmp.eq.s32.totalorder %s96, 3
      %p154 = por %p152, %p153
      %p155 = scmp.ne.s32.totalorder %s144, %s145
      %p156 = scmp.eq.s32.totalorder %s96, 0
      %p157 = por %p155, %p156
      %p158 = scmp.ne.s32.totalorder %s144, %s145
      %p159 = scmp.eq.s32.totalorder %s97, 3
      %p160 = por %p158, %p159
      %p162 = scmp.ne.s32.totalorder %s145, %s161
      %p163 = scmp.eq.s32.totalorder %s97, 0
      %p164 = por %p162, %p163
      %s165 = ssub.s32 %s98, %s110
      %p166 = scmp.eq.s32.totalorder %s165, 0
      %s168 = sadd.s32 %s167, 1
      %s169 = scalar_select %p166, %s167, %s168
      %p172 = pneg %p166
      %p173 = scmp.eq.s32.totalorder %s91, 3
      %p174 = por %p172, %p173
      %p175 = scmp.ne.s32.totalorder %s167, %s170
      %p176 = scmp.eq.s32.totalorder %s91, 0
      %p177 = por %p175, %p176
      %p178 = scmp.ne.s32.totalorder %s167, %s170
      %p179 = scmp.eq.s32.totalorder %s96, 3
      %p180 = por %p178, %p179
      %p181 = scmp.ne.s32.totalorder %s170, %s171
      %p182 = scmp.eq.s32.totalorder %s96, 0
      %p183 = por %p181, %p182
      %p184 = scmp.ne.s32.totalorder %s170, %s171
      %p185 = scmp.eq.s32.totalorder %s97, 3
      %p186 = por %p184, %p185
      %p188 = scmp.ne.s32.totalorder %s171, %s187
      %p189 = scmp.eq.s32.totalorder %s97, 0
      %p190 = por %p188, %p189
      %s192 = sadd.s32 %s191, 1
      %p195 = scmp.eq.s32.totalorder %s91, 3
      %p196 = scmp.ne.s32.totalorder %s191, %s193
      %p197 = scmp.eq.s32.totalorder %s91, 0
      %p198 = por %p196, %p197
      %p199 = scmp.ne.s32.totalorder %s191, %s193
      %p200 = scmp.eq.s32.totalorder %s96, 3
      %p201 = por %p199, %p200
      %p202 = scmp.ne.s32.totalorder %s193, %s194
      %p203 = scmp.eq.s32.totalorder %s96, 0
      %p204 = por %p202, %p203
      %p205 = scmp.ne.s32.totalorder %s193, %s194
      %p206 = scmp.eq.s32.totalorder %s97, 3
      %p207 = por %p205, %p206
      %p209 = scmp.ne.s32.totalorder %s194, %s208
      %p210 = scmp.eq.s32.totalorder %s97, 0
      %p211 = por %p209, %p210
      %s213 = sadd.s32 %s212, 1
      %p216 = scmp.eq.s32.totalorder %s91, 3
      %p217 = scmp.ne.s32.totalorder %s212, %s214
      %p218 = scmp.eq.s32.totalorder %s91, 0
      %p219 = por %p217, %p218
      %p220 = scmp.ne.s32.totalorder %s212, %s214
      %p221 = scmp.eq.s32.totalorder %s96, 3
      %p222 = por %p220, %p221
      %p223 = scmp.ne.s32.totalorder %s214, %s215
      %p224 = scmp.eq.s32.totalorder %s96, 0
      %p225 = por %p223, %p224
      %p226 = scmp.ne.s32.totalorder %s214, %s215
      %p227 = scmp.eq.s32.totalorder %s97, 3
      %p228 = por %p226, %p227
      %p230 = scmp.ne.s32.totalorder %s215, %s229
      %p231 = scmp.eq.s32.totalorder %s97, 0
      %p232 = por %p230, %p231
      %s234 = sadd.s32 %s233, 1
      %p237 = scmp.eq.s32.totalorder %s91, 3
      %p238 = scmp.ne.s32.totalorder %s233, %s235
      %p239 = scmp.eq.s32.totalorder %s91, 0
      %p240 = por %p238, %p239
      %p241 = scmp.ne.s32.totalorder %s233, %s235
      %p242 = scmp.eq.s32.totalorder %s96, 3
      %p243 = por %p241, %p242
      %p244 = scmp.ne.s32.totalorder %s235, %s236
      %p245 = scmp.eq.s32.totalorder %s96, 0
      %p246 = por %p244, %p245
      %p247 = scmp.ne.s32.totalorder %s235, %s236
      %p248 = scmp.eq.s32.totalorder %s97, 3
      %p249 = por %p247, %p248
      %p251 = scmp.ne.s32.totalorder %s236, %s250
      %p252 = scmp.eq.s32.totalorder %s97, 0
      %p253 = por %p251, %p252
      %s255 = sadd.s32 %s254, 1
      %p258 = scmp.eq.s32.totalorder %s91, 3
      %p259 = scmp.ne.s32.totalorder %s254, %s256
      %p260 = scmp.eq.s32.totalorder %s91, 0
      %p261 = por %p259, %p260
      %p262 = scmp.ne.s32.totalorder %s254, %s256
      %p263 = scmp.eq.s32.totalorder %s96, 3
      %p264 = por %p262, %p263
      %p265 = scmp.ne.s32.totalorder %s256, %s257
      %p266 = scmp.eq.s32.totalorder %s96, 0
      %p267 = por %p265, %p266
      %p268 = scmp.ne.s32.totalorder %s256, %s257
      %p269 = scmp.eq.s32.totalorder %s97, 3
      %p270 = por %p268, %p269
      %p272 = scmp.ne.s32.totalorder %s257, %s271
      %p273 = scmp.eq.s32.totalorder %s97, 0
      %p274 = por %p272, %p273
      %s276 = sadd.s32 %s275, 1
      %p279 = scmp.eq.s32.totalorder %s91, 3
      %p280 = scmp.ne.s32.totalorder %s275, %s277
      %p281 = scmp.eq.s32.totalorder %s91, 0
      %p282 = por %p280, %p281
      %p283 = scmp.ne.s32.totalorder %s275, %s277
      %p284 = scmp.eq.s32.totalorder %s96, 3
      %p285 = por %p283, %p284
      %p286 = scmp.ne.s32.totalorder %s277, %s278
      %p287 = scmp.eq.s32.totalorder %s96, 0
      %p288 = por %p286, %p287
      %p289 = scmp.ne.s32.totalorder %s277, %s278
      %p290 = scmp.eq.s32.totalorder %s97, 3
      %p291 = por %p289, %p290
      %p293 = scmp.ne.s32.totalorder %s278, %s292
      %p294 = scmp.eq.s32.totalorder %s97, 0
      %p295 = por %p293, %p294
      %s297 = sadd.s32 %s296, 1
      %p300 = scmp.eq.s32.totalorder %s91, 3
      %p301 = scmp.ne.s32.totalorder %s296, %s298
      %p302 = scmp.eq.s32.totalorder %s91, 0
      %p303 = por %p301, %p302
      %p304 = scmp.ne.s32.totalorder %s296, %s298
      %p305 = scmp.eq.s32.totalorder %s96, 3
      %p306 = por %p304, %p305
      %p307 = scmp.ne.s32.totalorder %s298, %s299
      %p308 = scmp.eq.s32.totalorder %s96, 0
      %p309 = por %p307, %p308
      %p310 = scmp.ne.s32.totalorder %s298, %s299
      %p311 = scmp.eq.s32.totalorder %s97, 3
      %p312 = por %p310, %p311
      %p314 = scmp.ne.s32.totalorder %s299, %s313
      %p315 = scmp.eq.s32.totalorder %s97, 0
      %p316 = por %p314, %p315
      %s318 = sadd.s32 %s317, 1
      %p321 = scmp.eq.s32.totalorder %s91, 3
      %p322 = scmp.ne.s32.totalorder %s317, %s319
      %p323 = scmp.eq.s32.totalorder %s91, 0
      %p324 = por %p322, %p323
      %p325 = scmp.ne.s32.totalorder %s317, %s319
      %p326 = scmp.eq.s32.totalorder %s96, 3
      %p327 = por %p325, %p326
      %p328 = scmp.ne.s32.totalorder %s319, %s320
      %p329 = scmp.eq.s32.totalorder %s96, 0
      %p330 = por %p328, %p329
      %p331 = scmp.ne.s32.totalorder %s319, %s320
      %p332 = scmp.eq.s32.totalorder %s97, 3
      %p333 = por %p331, %p332
      %p335 = scmp.ne.s32.totalorder %s320, %s334
      %p336 = scmp.eq.s32.totalorder %s97, 0
      %p337 = por %p335, %p336
      %s339 = sadd.s32 %s338, 1
      %p342 = scmp.eq.s32.totalorder %s91, 3
      %p343 = scmp.ne.s32.totalorder %s338, %s340
      %p344 = scmp.eq.s32.totalorder %s91, 0
      %p345 = por %p343, %p344
      %p346 = scmp.ne.s32.totalorder %s338, %s340
      %p347 = scmp.eq.s32.totalorder %s96, 3
      %p348 = por %p346, %p347
      %p349 = scmp.ne.s32.totalorder %s340, %s341
      %p350 = scmp.eq.s32.totalorder %s96, 0
      %p351 = por %p349, %p350
      %p352 = scmp.ne.s32.totalorder %s340, %s341
      %p353 = scmp.eq.s32.totalorder %s97, 3
      %p354 = por %p352, %p353
      %p356 = scmp.ne.s32.totalorder %s341, %s355
      %p357 = scmp.eq.s32.totalorder %s97, 0
      %p358 = por %p356, %p357
      %s360 = sadd.s32 %s359, 1
      %p363 = scmp.eq.s32.totalorder %s91, 3
      %p364 = scmp.ne.s32.totalorder %s359, %s361
      %p365 = scmp.eq.s32.totalorder %s91, 0
      %p366 = por %p364, %p365
      %p367 = scmp.ne.s32.totalorder %s359, %s361
      %p368 = scmp.eq.s32.totalorder %s96, 3
      %p369 = por %p367, %p368
      %p370 = scmp.ne.s32.totalorder %s361, %s362
      %p371 = scmp.eq.s32.totalorder %s96, 0
      %p372 = por %p370, %p371
      %p373 = scmp.ne.s32.totalorder %s361, %s362
      %p374 = scmp.eq.s32.totalorder %s97, 3
      %p375 = por %p373, %p374
      %p377 = scmp.ne.s32.totalorder %s362, %s376
      %p378 = scmp.eq.s32.totalorder %s97, 0
      %p379 = por %p377, %p378
      %s381 = sadd.s32 %s380, 1
      %p384 = scmp.eq.s32.totalorder %s91, 3
      %p385 = scmp.ne.s32.totalorder %s380, %s382
      %p386 = scmp.eq.s32.totalorder %s91, 0
      %p387 = por %p385, %p386
      %p388 = scmp.ne.s32.totalorder %s380, %s382
      %p389 = scmp.eq.s32.totalorder %s96, 3
      %p390 = por %p388, %p389
      %p391 = scmp.ne.s32.totalorder %s382, %s383
      %p392 = scmp.eq.s32.totalorder %s96, 0
      %p393 = por %p391, %p392
      %p394 = scmp.ne.s32.totalorder %s382, %s383
      %p395 = scmp.eq.s32.totalorder %s97, 3
      %p396 = por %p394, %p395
      %p398 = scmp.ne.s32.totalorder %s383, %s397
      %p399 = scmp.eq.s32.totalorder %s97, 0
      %p400 = por %p398, %p399
      %s402 = sadd.s32 %s401, 1
      %p405 = scmp.eq.s32.totalorder %s91, 3
      %p406 = scmp.ne.s32.totalorder %s401, %s403
      %p407 = scmp.eq.s32.totalorder %s91, 0
      %p408 = por %p406, %p407
      %p409 = scmp.ne.s32.totalorder %s401, %s403
      %p410 = scmp.eq.s32.totalorder %s96, 3
      %p411 = por %p409, %p410
      %p412 = scmp.ne.s32.totalorder %s403, %s404
      %p413 = scmp.eq.s32.totalorder %s96, 0
      %p414 = por %p412, %p413
      %p415 = scmp.ne.s32.totalorder %s403, %s404
      %p416 = scmp.eq.s32.totalorder %s97, 3
      %p417 = por %p415, %p416
      %p419 = scmp.ne.s32.totalorder %s404, %s418
      %p420 = scmp.eq.s32.totalorder %s97, 0
      %p421 = por %p419, %p420
      %s423 = sadd.s32 %s422, 1
      %p426 = scmp.eq.s32.totalorder %s91, 3
      %p427 = scmp.ne.s32.totalorder %s422, %s424
      %p428 = scmp.eq.s32.totalorder %s91, 0
      %p429 = por %p427, %p428
      %p430 = scmp.ne.s32.totalorder %s422, %s424
      %p431 = scmp.eq.s32.totalorder %s96, 3
      %p432 = por %p430, %p431
      %p433 = scmp.ne.s32.totalorder %s424, %s425
      %p434 = scmp.eq.s32.totalorder %s96, 0
      %p435 = por %p433, %p434
      %p436 = scmp.ne.s32.totalorder %s424, %s425
      %p437 = scmp.eq.s32.totalorder %s97, 3
      %p438 = por %p436, %p437
      %p440 = scmp.ne.s32.totalorder %s425, %s439
      %p441 = scmp.eq.s32.totalorder %s97, 0
      %p442 = por %p440, %p441
      %s444 = sadd.s32 %s443, 1
      %p447 = scmp.eq.s32.totalorder %s91, 3
      %p448 = scmp.ne.s32.totalorder %s443, %s445
      %p449 = scmp.eq.s32.totalorder %s91, 0
      %p450 = por %p448, %p449
      %p451 = scmp.ne.s32.totalorder %s443, %s445
      %p452 = scmp.eq.s32.totalorder %s96, 3
      %p453 = por %p451, %p452
      %p454 = scmp.ne.s32.totalorder %s445, %s446
      %p455 = scmp.eq.s32.totalorder %s96, 0
      %p456 = por %p454, %p455
      %p457 = scmp.ne.s32.totalorder %s445, %s446
      %p458 = scmp.eq.s32.totalorder %s97, 3
      %p459 = por %p457, %p458
      %p461 = scmp.ne.s32.totalorder %s446, %s460
      %p462 = scmp.eq.s32.totalorder %s97, 0
      %p463 = por %p461, %p462
      %s465 = sadd.s32 %s464, 1
      %p468 = scmp.eq.s32.totalorder %s91, 3
      %p469 = scmp.ne.s32.totalorder %s464, %s466
      %p470 = scmp.eq.s32.totalorder %s91, 0
      %p471 = por %p469, %p470
      %p472 = scmp.ne.s32.totalorder %s464, %s466
      %p473 = scmp.eq.s32.totalorder %s96, 3
      %p474 = por %p472, %p473
      %p475 = scmp.ne.s32.totalorder %s466, %s467
      %p476 = scmp.eq.s32.totalorder %s96, 0
      %p477 = por %p475, %p476
      %p478 = scmp.ne.s32.totalorder %s466, %s467
      %p479 = scmp.eq.s32.totalorder %s97, 3
      %p480 = por %p478, %p479
      %p482 = scmp.ne.s32.totalorder %s467, %s481
      %p483 = scmp.eq.s32.totalorder %s97, 0
      %p484 = por %p482, %p483
      %s486 = sadd.s32 %s485, 1
      %p489 = scmp.eq.s32.totalorder %s91, 3
      %p490 = scmp.ne.s32.totalorder %s485, %s487
      %p491 = scmp.eq.s32.totalorder %s91, 0
      %p492 = por %p490, %p491
      %p493 = scmp.ne.s32.totalorder %s485, %s487
      %p494 = scmp.eq.s32.totalorder %s96, 3
      %p495 = por %p493, %p494
      %p496 = scmp.ne.s32.totalorder %s487, %s488
      %p497 = scmp.eq.s32.totalorder %s96, 0
      %p498 = por %p496, %p497
      %p499 = scmp.ne.s32.totalorder %s487, %s488
      %p500 = scmp.eq.s32.totalorder %s97, 3
      %p501 = por %p499, %p500
      %p503 = scmp.ne.s32.totalorder %s488, %s502
      %p504 = scmp.eq.s32.totalorder %s97, 0
      %p505 = por %p503, %p504
      %s507 = sadd.s32 %s506, 1
      %p510 = scmp.eq.s32.totalorder %s91, 3
      %p511 = scmp.ne.s32.totalorder %s506, %s508
      %p512 = scmp.eq.s32.totalorder %s91, 0
      %p513 = por %p511, %p512
      %p514 = scmp.ne.s32.totalorder %s506, %s508
      %p515 = scmp.eq.s32.totalorder %s96, 3
      %p516 = por %p514, %p515
      %p517 = scmp.ne.s32.totalorder %s508, %s509
      %p518 = scmp.eq.s32.totalorder %s96, 0
      %p519 = por %p517, %p518
      %p520 = scmp.ne.s32.totalorder %s508, %s509
      %p521 = scmp.eq.s32.totalorder %s97, 3
      %p522 = por %p520, %p521
      %p524 = scmp.ne.s32.totalorder %s509, %s523
      %p525 = scmp.eq.s32.totalorder %s97, 0
      %p526 = por %p524, %p525
      %s528 = sadd.s32 %s527, 1
      %p531 = scmp.eq.s32.totalorder %s91, 3
      %p532 = scmp.ne.s32.totalorder %s527, %s529
      %p533 = scmp.eq.s32.totalorder %s91, 0
      %p534 = por %p532, %p533
      %p535 = scmp.ne.s32.totalorder %s527, %s529
      %p536 = scmp.eq.s32.totalorder %s96, 3
      %p537 = por %p535, %p536
      %p538 = scmp.ne.s32.totalorder %s529, %s530
      %p539 = scmp.eq.s32.totalorder %s96, 0
      %p540 = por %p538, %p539
      %p541 = scmp.ne.s32.totalorder %s529, %s530
      %p542 = scmp.eq.s32.totalorder %s97, 3
      %p543 = por %p541, %p542
      %p545 = scmp.ne.s32.totalorder %s530, %s544
      %p546 = scmp.eq.s32.totalorder %s97, 0
      %p547 = por %p545, %p546
      %s549 = sadd.s32 %s548, 1
      %p552 = scmp.eq.s32.totalorder %s91, 3
      %p553 = scmp.ne.s32.totalorder %s548, %s550
      %p554 = scmp.eq.s32.totalorder %s91, 0
      %p555 = por %p553, %p554
      %p556 = scmp.ne.s32.totalorder %s548, %s550
      %p557 = scmp.eq.s32.totalorder %s96, 3
      %p558 = por %p556, %p557
      %p559 = scmp.ne.s32.totalorder %s550, %s551
      %p560 = scmp.eq.s32.totalorder %s96, 0
      %p561 = por %p559, %p560
      %p562 = scmp.ne.s32.totalorder %s550, %s551
      %p563 = scmp.eq.s32.totalorder %s97, 3
      %p564 = por %p562, %p563
      %p566 = scmp.ne.s32.totalorder %s551, %s565
      %p567 = scmp.eq.s32.totalorder %s97, 0
      %p568 = por %p566, %p567
      %s570 = sadd.s32 %s569, 1
      %p573 = scmp.eq.s32.totalorder %s91, 3
      %p574 = scmp.ne.s32.totalorder %s569, %s571
      %p575 = scmp.eq.s32.totalorder %s91, 0
      %p576 = por %p574, %p575
      %p577 = scmp.ne.s32.totalorder %s569, %s571
      %p578 = scmp.eq.s32.totalorder %s96, 3
      %p579 = por %p577, %p578
      %p580 = scmp.ne.s32.totalorder %s571, %s572
      %p581 = scmp.eq.s32.totalorder %s96, 0
      %p582 = por %p580, %p581
      %p583 = scmp.ne.s32.totalorder %s571, %s572
      %p584 = scmp.eq.s32.totalorder %s97, 3
      %p585 = por %p583, %p584
      %p587 = scmp.ne.s32.totalorder %s572, %s586
      %p588 = scmp.eq.s32.totalorder %s97, 0
      %p589 = por %p587, %p588
      %s591 = sadd.s32 %s590, 1
      %p594 = scmp.eq.s32.totalorder %s91, 3
      %p595 = scmp.ne.s32.totalorder %s590, %s592
      %p596 = scmp.eq.s32.totalorder %s91, 0
      %p597 = por %p595, %p596
      %p598 = scmp.ne.s32.totalorder %s590, %s592
      %p599 = scmp.eq.s32.totalorder %s96, 3
      %p600 = por %p598, %p599
      %p601 = scmp.ne.s32.totalorder %s592, %s593
      %p602 = scmp.eq.s32.totalorder %s96, 0
      %p603 = por %p601, %p602
      %p604 = scmp.ne.s32.totalorder %s592, %s593
      %p605 = scmp.eq.s32.totalorder %s97, 3
      %p606 = por %p604, %p605
      %p608 = scmp.ne.s32.totalorder %s593, %s607
      %p609 = scmp.eq.s32.totalorder %s97, 0
      %p610 = por %p608, %p609
      %s612 = sadd.s32 %s611, 1
      %p615 = scmp.eq.s32.totalorder %s91, 3
      %p616 = scmp.ne.s32.totalorder %s611, %s613
      %p617 = scmp.eq.s32.totalorder %s91, 0
      %p618 = por %p616, %p617
      %p619 = scmp.ne.s32.totalorder %s611, %s613
      %p620 = scmp.eq.s32.totalorder %s96, 3
      %p621 = por %p619, %p620
      %p622 = scmp.ne.s32.totalorder %s613, %s614
      %p623 = scmp.eq.s32.totalorder %s96, 0
      %p624 = por %p622, %p623
      %p625 = scmp.ne.s32.totalorder %s613, %s614
      %p626 = scmp.eq.s32.totalorder %s97, 3
      %p627 = por %p625, %p626
      %p629 = scmp.ne.s32.totalorder %s614, %s628
      %p630 = scmp.eq.s32.totalorder %s97, 0
      %p631 = por %p629, %p630
      %s633 = sadd.s32 %s632, 1
      %p636 = scmp.eq.s32.totalorder %s91, 3
      %p637 = scmp.ne.s32.totalorder %s632, %s634
      %p638 = scmp.eq.s32.totalorder %s91, 0
      %p639 = por %p637, %p638
      %p640 = scmp.ne.s32.totalorder %s632, %s634
      %p641 = scmp.eq.s32.totalorder %s96, 3
      %p642 = por %p640, %p641
      %p643 = scmp.ne.s32.totalorder %s634, %s635
      %p644 = scmp.eq.s32.totalorder %s96, 0
      %p645 = por %p643, %p644
      %p646 = scmp.ne.s32.totalorder %s634, %s635
      %p647 = scmp.eq.s32.totalorder %s97, 3
      %p648 = por %p646, %p647
      %p650 = scmp.ne.s32.totalorder %s635, %s649
      %p651 = scmp.eq.s32.totalorder %s97, 0
      %p652 = por %p650, %p651
      %s654 = sadd.s32 %s653, 1
      %p657 = scmp.eq.s32.totalorder %s91, 3
      %p658 = scmp.ne.s32.totalorder %s653, %s655
      %p659 = scmp.eq.s32.totalorder %s91, 0
      %p660 = por %p658, %p659
      %p661 = scmp.ne.s32.totalorder %s653, %s655
      %p662 = scmp.eq.s32.totalorder %s96, 3
      %p663 = por %p661, %p662
      %p664 = scmp.ne.s32.totalorder %s655, %s656
      %p665 = scmp.eq.s32.totalorder %s96, 0
      %p666 = por %p664, %p665
      %p667 = scmp.ne.s32.totalorder %s655, %s656
      %p668 = scmp.eq.s32.totalorder %s97, 3
      %p669 = por %p667, %p668
      %p671 = scmp.ne.s32.totalorder %s656, %s670
      %p672 = scmp.eq.s32.totalorder %s97, 0
      %p673 = por %p671, %p672
      %s675 = sadd.s32 %s674, 1
      %p678 = scmp.eq.s32.totalorder %s91, 3
      %p679 = scmp.ne.s32.totalorder %s674, %s676
      %p680 = scmp.eq.s32.totalorder %s91, 0
      %p681 = por %p679, %p680
      %p682 = scmp.ne.s32.totalorder %s674, %s676
      %p683 = scmp.eq.s32.totalorder %s96, 3
      %p684 = por %p682, %p683
      %p685 = scmp.ne.s32.totalorder %s676, %s677
      %p686 = scmp.eq.s32.totalorder %s96, 0
      %p687 = por %p685, %p686
      %p688 = scmp.ne.s32.totalorder %s676, %s677
      %p689 = scmp.eq.s32.totalorder %s97, 3
      %p690 = por %p688, %p689
      %p692 = scmp.ne.s32.totalorder %s677, %s691
      %p693 = scmp.eq.s32.totalorder %s97, 0
      %p694 = por %p692, %p693
      %s696 = sadd.s32 %s695, 1
      %p699 = scmp.eq.s32.totalorder %s91, 3
      %p700 = scmp.ne.s32.totalorder %s695, %s697
      %p701 = scmp.eq.s32.totalorder %s91, 0
      %p702 = por %p700, %p701
      %p703 = scmp.ne.s32.totalorder %s695, %s697
      %p704 = scmp.eq.s32.totalorder %s96, 3
      %p705 = por %p703, %p704
      %p706 = scmp.ne.s32.totalorder %s697, %s698
      %p707 = scmp.eq.s32.totalorder %s96, 0
      %p708 = por %p706, %p707
      %p709 = scmp.ne.s32.totalorder %s697, %s698
      %p710 = scmp.eq.s32.totalorder %s97, 3
      %p711 = por %p709, %p710
      %p713 = scmp.ne.s32.totalorder %s698, %s712
      %p714 = scmp.eq.s32.totalorder %s97, 0
      %p715 = por %p713, %p714
      %s717 = sadd.s32 %s716, 1
      %p720 = scmp.eq.s32.totalorder %s91, 3
      %p721 = scmp.ne.s32.totalorder %s716, %s718
      %p722 = scmp.eq.s32.totalorder %s91, 0
      %p723 = por %p721, %p722
      %p724 = scmp.ne.s32.totalorder %s716, %s718
      %p725 = scmp.eq.s32.totalorder %s96, 3
      %p726 = por %p724, %p725
      %p727 = scmp.ne.s32.totalorder %s718, %s719
      %p728 = scmp.eq.s32.totalorder %s96, 0
      %p729 = por %p727, %p728
      %p730 = scmp.ne.s32.totalorder %s718, %s719
      %p731 = scmp.eq.s32.totalorder %s97, 3
      %p732 = por %p730, %p731
      %p734 = scmp.ne.s32.totalorder %s719, %s733
      %p735 = scmp.eq.s32.totalorder %s97, 0
      %p736 = por %p734, %p735
      %s738 = sadd.s32 %s737, 1
      %p741 = scmp.eq.s32.totalorder %s91, 3
      %p742 = scmp.ne.s32.totalorder %s737, %s739
      %p743 = scmp.eq.s32.totalorder %s91, 0
      %p744 = por %p742, %p743
      %p745 = scmp.ne.s32.totalorder %s737, %s739
      %p746 = scmp.eq.s32.totalorder %s96, 3
      %p747 = por %p745, %p746
      %p748 = scmp.ne.s32.totalorder %s739, %s740
      %p749 = scmp.eq.s32.totalorder %s96, 0
      %p750 = por %p748, %p749
      %p751 = scmp.ne.s32.totalorder %s739, %s740
      %p752 = scmp.eq.s32.totalorder %s97, 3
      %p753 = por %p751, %p752
      %p755 = scmp.ne.s32.totalorder %s740, %s754
      %p756 = scmp.eq.s32.totalorder %s97, 0
      %p757 = por %p755, %p756
      %s759 = sadd.s32 %s758, 1
      %p762 = scmp.eq.s32.totalorder %s91, 3
      %p763 = scmp.ne.s32.totalorder %s758, %s760
      %p764 = scmp.eq.s32.totalorder %s91, 0
      %p765 = por %p763, %p764
      %p766 = scmp.ne.s32.totalorder %s758, %s760
      %p767 = scmp.eq.s32.totalorder %s96, 3
      %p768 = por %p766, %p767
      %p769 = scmp.ne.s32.totalorder %s760, %s761
      %p770 = scmp.eq.s32.totalorder %s96, 0
      %p771 = por %p769, %p770
      %p772 = scmp.ne.s32.totalorder %s760, %s761
      %p773 = scmp.eq.s32.totalorder %s97, 3
      %p774 = por %p772, %p773
      %p776 = scmp.ne.s32.totalorder %s761, %s775
      %p777 = scmp.eq.s32.totalorder %s97, 0
      %p778 = por %p776, %p777
      %s780 = sadd.s32 %s779, 1
      %p783 = scmp.eq.s32.totalorder %s91, 3
      %p784 = scmp.ne.s32.totalorder %s779, %s781
      %p785 = scmp.eq.s32.totalorder %s91, 0
      %p786 = por %p784, %p785
      %p787 = scmp.ne.s32.totalorder %s779, %s781
      %p788 = scmp.eq.s32.totalorder %s96, 3
      %p789 = por %p787, %p788
      %p790 = scmp.ne.s32.totalorder %s781, %s782
      %p791 = scmp.eq.s32.totalorder %s96, 0
      %p792 = por %p790, %p791
      %p793 = scmp.ne.s32.totalorder %s781, %s782
      %p794 = scmp.eq.s32.totalorder %s97, 3
      %p795 = por %p793, %p794
      %p797 = scmp.ne.s32.totalorder %s782, %s796
      %p798 = scmp.eq.s32.totalorder %s97, 0
      %p799 = por %p797, %p798
      %s801 = sadd.s32 %s800, 1
      %p804 = scmp.eq.s32.totalorder %s91, 3
      %p805 = scmp.ne.s32.totalorder %s800, %s802
      %p806 = scmp.eq.s32.totalorder %s91, 0
      %p807 = por %p805, %p806
      %p808 = scmp.ne.s32.totalorder %s800, %s802
      %p809 = scmp.eq.s32.totalorder %s96, 3
      %p810 = por %p808, %p809
      %p811 = scmp.ne.s32.totalorder %s802, %s803
      %p812 = scmp.eq.s32.totalorder %s96, 0
      %p813 = por %p811, %p812
      %p814 = scmp.ne.s32.totalorder %s802, %s803
      %p815 = scmp.eq.s32.totalorder %s97, 3
      %p816 = por %p814, %p815
      %p818 = scmp.ne.s32.totalorder %s803, %s817
      %p819 = scmp.eq.s32.totalorder %s97, 0
      %p820 = por %p818, %p819
      %s822 = sadd.s32 %s821, 1
      %p825 = scmp.eq.s32.totalorder %s91, 3
      %p826 = scmp.ne.s32.totalorder %s821, %s823
      %p827 = scmp.eq.s32.totalorder %s91, 0
      %p828 = por %p826, %p827
      %p829 = scmp.ne.s32.totalorder %s821, %s823
      %p830 = scmp.eq.s32.totalorder %s96, 3
      %p831 = por %p829, %p830
      %p832 = scmp.ne.s32.totalorder %s823, %s824
      %p833 = scmp.eq.s32.totalorder %s96, 0
      %p834 = por %p832, %p833
      %p835 = scmp.ne.s32.totalorder %s823, %s824
      %p836 = scmp.eq.s32.totalorder %s97, 3
      %p837 = por %p835, %p836
      %p839 = scmp.ne.s32.totalorder %s824, %s838
      %p840 = scmp.eq.s32.totalorder %s97, 0
      %p841 = por %p839, %p840
      %s843 = sadd.s32 %s842, 1
      %p846 = scmp.eq.s32.totalorder %s91, 3
      %p847 = scmp.ne.s32.totalorder %s842, %s844
      %p848 = scmp.eq.s32.totalorder %s91, 0
      %p849 = por %p847, %p848
      %p850 = scmp.ne.s32.totalorder %s842, %s844
      %p851 = scmp.eq.s32.totalorder %s96, 3
      %p852 = por %p850, %p851
      %p853 = scmp.ne.s32.totalorder %s844, %s845
      %p854 = scmp.eq.s32.totalorder %s96, 0
      %p855 = por %p853, %p854
      %p856 = scmp.ne.s32.totalorder %s844, %s845
      %p857 = scmp.eq.s32.totalorder %s97, 3
      %p858 = por %p856, %p857
      %p860 = scmp.ne.s32.totalorder %s845, %s859
      %p861 = scmp.eq.s32.totalorder %s97, 0
      %p862 = por %p860, %p861
      %s864 = sadd.s32 %s863, 1
      %p867 = scmp.eq.s32.totalorder %s91, 3
      %p868 = scmp.ne.s32.totalorder %s863, %s865
      %p869 = scmp.eq.s32.totalorder %s91, 0
      %p870 = por %p868, %p869
      %p871 = scmp.ne.s32.totalorder %s863, %s865
      %p872 = scmp.eq.s32.totalorder %s96, 3
      %p873 = por %p871, %p872
      %p874 = scmp.ne.s32.totalorder %s865, %s866
      %p875 = scmp.eq.s32.totalorder %s96, 0
      %p876 = por %p874, %p875
      %p877 = scmp.ne.s32.totalorder %s865, %s866
      %p878 = scmp.eq.s32.totalorder %s97, 3
      %p879 = por %p877, %p878
      %p881 = scmp.ne.s32.totalorder %s866, %s880
      %p882 = scmp.eq.s32.totalorder %s97, 0
      %p883 = por %p881, %p882
      %s885 = sadd.s32 %s884, 1
      %p888 = scmp.eq.s32.totalorder %s91, 3
      %p889 = scmp.ne.s32.totalorder %s884, %s886
      %p890 = scmp.eq.s32.totalorder %s91, 0
      %p891 = por %p889, %p890
      %p892 = scmp.ne.s32.totalorder %s884, %s886
      %p893 = scmp.eq.s32.totalorder %s96, 3
      %p894 = por %p892, %p893
      %p895 = scmp.ne.s32.totalorder %s886, %s887
      %p896 = scmp.eq.s32.totalorder %s96, 0
      %p897 = por %p895, %p896
      %p898 = scmp.ne.s32.totalorder %s886, %s887
      %p899 = scmp.eq.s32.totalorder %s97, 3
      %p900 = por %p898, %p899
      %p902 = scmp.ne.s32.totalorder %s887, %s901
      %p903 = scmp.eq.s32.totalorder %s97, 0
      %p904 = por %p902, %p903
      %s905 = ssub.s32 %s98, %s110
      %p906 = scmp.eq.s32.totalorder %s905, 0
      %s908 = sadd.s32 %s907, 1
      %s909 = scalar_select %p906, %s907, %s908
      %p912 = pneg %p906
      %p913 = scmp.eq.s32.totalorder %s91, 3
      %p914 = por %p912, %p913
      %p915 = scmp.ne.s32.totalorder %s907, %s910
      %p916 = scmp.eq.s32.totalorder %s91, 0
      %p917 = por %p915, %p916
      %p918 = scmp.ne.s32.totalorder %s907, %s910
      %p919 = scmp.eq.s32.totalorder %s96, 3
      %p920 = por %p918, %p919
      %p921 = scmp.ne.s32.totalorder %s910, %s911
      %p922 = scmp.eq.s32.totalorder %s96, 0
      %p923 = por %p921, %p922
      %p924 = scmp.ne.s32.totalorder %s910, %s911
      %p925 = scmp.eq.s32.totalorder %s97, 3
      %p926 = por %p924, %p925
      %p928 = scmp.ne.s32.totalorder %s911, %s927
      %p929 = scmp.eq.s32.totalorder %s97, 0
      %p930 = por %p928, %p929
      %s931 = ssub.s32 %s98, %s110
      %p932 = scmp.eq.s32.totalorder %s931, 0
      %s934 = sadd.s32 %s933, 1
      %s935 = scalar_select %p932, %s933, %s934
      %p938 = pneg %p932
      %p939 = scmp.eq.s32.totalorder %s91, 3
      %p940 = por %p938, %p939
      %p941 = scmp.ne.s32.totalorder %s933, %s936
      %p942 = scmp.eq.s32.totalorder %s91, 0
      %p943 = por %p941, %p942
      %p944 = scmp.ne.s32.totalorder %s933, %s936
      %p945 = scmp.eq.s32.totalorder %s96, 3
      %p946 = por %p944, %p945
      %p947 = scmp.ne.s32.totalorder %s936, %s937
      %p948 = scmp.eq.s32.totalorder %s96, 0
      %p949 = por %p947, %p948
      %p950 = scmp.ne.s32.totalorder %s936, %s937
      %p951 = scmp.eq.s32.totalorder %s97, 3
      %p952 = por %p950, %p951
      %p954 = scmp.ne.s32.totalorder %s937, %s953
      %p955 = scmp.eq.s32.totalorder %s97, 0
      %p956 = por %p954, %p955
      %s957 = ssub.s32 %s98, %s110
      %p958 = scmp.eq.s32.totalorder %s957, 0
      %s960 = sadd.s32 %s959, 1
      %s961 = scalar_select %p958, %s959, %s960
      %p964 = pneg %p958
      %p965 = scmp.eq.s32.totalorder %s91, 3
      %p966 = por %p964, %p965
      %p967 = scmp.ne.s32.totalorder %s959, %s962
      %p968 = scmp.eq.s32.totalorder %s91, 0
      %p969 = por %p967, %p968
      %p970 = scmp.ne.s32.totalorder %s959, %s962
      %p971 = scmp.eq.s32.totalorder %s96, 3
      %p972 = por %p970, %p971
      %p973 = scmp.ne.s32.totalorder %s962, %s963
      %p974 = scmp.eq.s32.totalorder %s96, 0
      %p975 = por %p973, %p974
      %p976 = scmp.ne.s32.totalorder %s962, %s963
      %p977 = scmp.eq.s32.totalorder %s97, 3
      %p978 = por %p976, %p977
      %p980 = scmp.ne.s32.totalorder %s963, %s979
      %p981 = scmp.eq.s32.totalorder %s97, 0
      %p982 = por %p980, %p981
      %p983 = scmp.le.s32.totalorder 1, %s91
      %p984 = scmp.lt.s32.totalorder %s91, 5
      %p985 = pnand %p983, %p984
      %p986 = pneg %p985
      // Predicated region
      $region9: #{deco_plus_decoder_forward.3} parent=5 // pred_check
        _
      $region10: #{deco_plus_decoder_forward.3} parent=5 // pred_check_branch
        %988 = sbr.rel (%p985) target = $region12
      $region11: #{deco_plus_decoder_forward.3} parent=5 // pred_region
        %s989 = ssub.s32 %s91, 1
        // Predicated region
        $region13: #{deco_plus_decoder_forward.3} parent=11 // pred_check
          %p990 = pneg %p204
        $region14: #{deco_plus_decoder_forward.3} parent=11 // pred_check_branch
          %992 = sbr.rel (%p990) target = $region16
        $region15: #{deco_plus_decoder_forward.3} parent=11 // pred_region
          _
        $region16: #{deco_plus_decoder_forward.3} parent=11 // pred_fallthru
          _
        // Predicated region
        $region17: #{deco_plus_decoder_forward.3} parent=11 // pred_check
          %p993 = pneg %p225
        $region18: #{deco_plus_decoder_forward.3} parent=11 // pred_check_branch
          %995 = sbr.rel (%p993) target = $region20
        $region19: #{deco_plus_decoder_forward.3} parent=11 // pred_region
          _
        $region20: #{deco_plus_decoder_forward.3} parent=11 // pred_fallthru
          _
        // Predicated region
        $region21: #{deco_plus_decoder_forward.3} parent=11 // pred_check
          %p996 = pneg %p246
        $region22: #{deco_plus_decoder_forward.3} parent=11 // pred_check_branch
          %998 = sbr.rel (%p996) target = $region24
        $region23: #{deco_plus_decoder_forward.3} parent=11 // pred_region
          _
        $region24: #{deco_plus_decoder_forward.3} parent=11 // pred_fallthru
          _
        // Predicated region
        $region25: #{deco_plus_decoder_forward.3} parent=11 // pred_check
          %p999 = pneg %p267
        $region26: #{deco_plus_decoder_forward.3} parent=11 // pred_check_branch
          %1001 = sbr.rel (%p999) target = $region28
        $region27: #{deco_plus_decoder_forward.3} parent=11 // pred_region
          _
        $region28: #{deco_plus_decoder_forward.3} parent=11 // pred_fallthru
          _
        // Predicated region
        $region29: #{deco_plus_decoder_forward.3} parent=11 // pred_check
          %p1002 = pneg %p288
        $region30: #{deco_plus_decoder_forward.3} parent=11 // pred_check_branch
          %1004 = sbr.rel (%p1002) target = $region32
        $region31: #{deco_plus_decoder_forward.3} parent=11 // pred_region
          _
        $region32: #{deco_plus_decoder_forward.3} parent=11 // pred_fallthru
          _
        // Predicated region
        $region33: #{deco_plus_decoder_forward.3} parent=11 // pred_check
          %p1005 = pneg %p309
        $region34: #{deco_plus_decoder_forward.3} parent=11 // pred_check_branch
          %1007 = sbr.rel (%p1005) target = $region36
        $region35: #{deco_plus_decoder_forward.3} parent=11 // pred_region
          _
        $region36: #{deco_plus_decoder_forward.3} parent=11 // pred_fallthru
          _
        // Predicated region
        $region37: #{deco_plus_decoder_forward.3} parent=11 // pred_check
          %p1008 = pneg %p330
        $region38: #{deco_plus_decoder_forward.3} parent=11 // pred_check_branch
          %1010 = sbr.rel (%p1008) target = $region40
        $region39: #{deco_plus_decoder_forward.3} parent=11 // pred_region
          _
        $region40: #{deco_plus_decoder_forward.3} parent=11 // pred_fallthru
          _
        // Predicated region
        $region41: #{deco_plus_decoder_forward.3} parent=11 // pred_check
          %p1011 = pneg %p351
        $region42: #{deco_plus_decoder_forward.3} parent=11 // pred_check_branch
          %1013 = sbr.rel (%p1011) target = $region44
        $region43: #{deco_plus_decoder_forward.3} parent=11 // pred_region
          _
        $region44: #{deco_plus_decoder_forward.3} parent=11 // pred_fallthru
          _
        // Predicated region
        $region45: #{deco_plus_decoder_forward.3} parent=11 // pred_check
          %p1014 = pneg %p372
        $region46: #{deco_plus_decoder_forward.3} parent=11 // pred_check_branch
          %1016 = sbr.rel (%p1014) target = $region48
        $region47: #{deco_plus_decoder_forward.3} parent=11 // pred_region
          _
        $region48: #{deco_plus_decoder_forward.3} parent=11 // pred_fallthru
          _
        // Predicated region
        $region49: #{deco_plus_decoder_forward.3} parent=11 // pred_check
          %p1017 = pneg %p393
        $region50: #{deco_plus_decoder_forward.3} parent=11 // pred_check_branch
          %1019 = sbr.rel (%p1017) target = $region52
        $region51: #{deco_plus_decoder_forward.3} parent=11 // pred_region
          _
        $region52: #{deco_plus_decoder_forward.3} parent=11 // pred_fallthru
          _
        // Predicated region
        $region53: #{deco_plus_decoder_forward.3} parent=11 // pred_check
          %p1020 = pneg %p414
        $region54: #{deco_plus_decoder_forward.3} parent=11 // pred_check_branch
          %1022 = sbr.rel (%p1020) target = $region56
        $region55: #{deco_plus_decoder_forward.3} parent=11 // pred_region
          _
        $region56: #{deco_plus_decoder_forward.3} parent=11 // pred_fallthru
          _
        // Predicated region
        $region57: #{deco_plus_decoder_forward.3} parent=11 // pred_check
          %p1023 = pneg %p435
        $region58: #{deco_plus_decoder_forward.3} parent=11 // pred_check_branch
          %1025 = sbr.rel (%p1023) target = $region60
        $region59: #{deco_plus_decoder_forward.3} parent=11 // pred_region
          _
        $region60: #{deco_plus_decoder_forward.3} parent=11 // pred_fallthru
          _
        // Predicated region
        $region61: #{deco_plus_decoder_forward.3} parent=11 // pred_check
          %p1026 = pneg %p456
        $region62: #{deco_plus_decoder_forward.3} parent=11 // pred_check_branch
          %1028 = sbr.rel (%p1026) target = $region64
        $region63: #{deco_plus_decoder_forward.3} parent=11 // pred_region
          _
        $region64: #{deco_plus_decoder_forward.3} parent=11 // pred_fallthru
          _
        // Predicated region
        $region65: #{deco_plus_decoder_forward.3} parent=11 // pred_check
          %p1029 = pneg %p477
        $region66: #{deco_plus_decoder_forward.3} parent=11 // pred_check_branch
          %1031 = sbr.rel (%p1029) target = $region68
        $region67: #{deco_plus_decoder_forward.3} parent=11 // pred_region
          _
        $region68: #{deco_plus_decoder_forward.3} parent=11 // pred_fallthru
          _
        // Predicated region
        $region69: #{deco_plus_decoder_forward.3} parent=11 // pred_check
          %p1032 = pneg %p498
        $region70: #{deco_plus_decoder_forward.3} parent=11 // pred_check_branch
          %1034 = sbr.rel (%p1032) target = $region72
        $region71: #{deco_plus_decoder_forward.3} parent=11 // pred_region
          _
        $region72: #{deco_plus_decoder_forward.3} parent=11 // pred_fallthru
          _
        // Predicated region
        $region73: #{deco_plus_decoder_forward.3} parent=11 // pred_check
          %p1035 = pneg %p519
        $region74: #{deco_plus_decoder_forward.3} parent=11 // pred_check_branch
          %1037 = sbr.rel (%p1035) target = $region76
        $region75: #{deco_plus_decoder_forward.3} parent=11 // pred_region
          _
        $region76: #{deco_plus_decoder_forward.3} parent=11 // pred_fallthru
          _
        // Predicated region
        $region77: #{deco_plus_decoder_forward.3} parent=11 // pred_check
          %p1038 = pneg %p540
        $region78: #{deco_plus_decoder_forward.3} parent=11 // pred_check_branch
          %1040 = sbr.rel (%p1038) target = $region80
        $region79: #{deco_plus_decoder_forward.3} parent=11 // pred_region
          _
        $region80: #{deco_plus_decoder_forward.3} parent=11 // pred_fallthru
          _
        // Predicated region
        $region81: #{deco_plus_decoder_forward.3} parent=11 // pred_check
          %p1041 = pneg %p561
        $region82: #{deco_plus_decoder_forward.3} parent=11 // pred_check_branch
          %1043 = sbr.rel (%p1041) target = $region84
        $region83: #{deco_plus_decoder_forward.3} parent=11 // pred_region
          _
        $region84: #{deco_plus_decoder_forward.3} parent=11 // pred_fallthru
          _
        // Predicated region
        $region85: #{deco_plus_decoder_forward.3} parent=11 // pred_check
          %p1044 = pneg %p582
        $region86: #{deco_plus_decoder_forward.3} parent=11 // pred_check_branch
          %1046 = sbr.rel (%p1044) target = $region88
        $region87: #{deco_plus_decoder_forward.3} parent=11 // pred_region
          _
        $region88: #{deco_plus_decoder_forward.3} parent=11 // pred_fallthru
          _
        // Predicated region
        $region89: #{deco_plus_decoder_forward.3} parent=11 // pred_check
          %p1047 = pneg %p603
        $region90: #{deco_plus_decoder_forward.3} parent=11 // pred_check_branch
          %1049 = sbr.rel (%p1047) target = $region92
        $region91: #{deco_plus_decoder_forward.3} parent=11 // pred_region
          _
        $region92: #{deco_plus_decoder_forward.3} parent=11 // pred_fallthru
          _
        // Predicated region
        $region93: #{deco_plus_decoder_forward.3} parent=11 // pred_check
          %p1050 = pneg %p624
        $region94: #{deco_plus_decoder_forward.3} parent=11 // pred_check_branch
          %1052 = sbr.rel (%p1050) target = $region96
        $region95: #{deco_plus_decoder_forward.3} parent=11 // pred_region
          _
        $region96: #{deco_plus_decoder_forward.3} parent=11 // pred_fallthru
          _
        // Predicated region
        $region97: #{deco_plus_decoder_forward.3} parent=11 // pred_check
          %p1053 = pneg %p645
        $region98: #{deco_plus_decoder_forward.3} parent=11 // pred_check_branch
          %1055 = sbr.rel (%p1053) target = $region100
        $region99: #{deco_plus_decoder_forward.3} parent=11 // pred_region
          _
        $region100: #{deco_plus_decoder_forward.3} parent=11 // pred_fallthru
          _
        // Predicated region
        $region101: #{deco_plus_decoder_forward.3} parent=11 // pred_check
          %p1056 = pneg %p666
        $region102: #{deco_plus_decoder_forward.3} parent=11 // pred_check_branch
          %1058 = sbr.rel (%p1056) target = $region104
        $region103: #{deco_plus_decoder_forward.3} parent=11 // pred_region
          _
        $region104: #{deco_plus_decoder_forward.3} parent=11 // pred_fallthru
          _
        // Predicated region
        $region105: #{deco_plus_decoder_forward.3} parent=11 // pred_check
          %p1059 = pneg %p687
        $region106: #{deco_plus_decoder_forward.3} parent=11 // pred_check_branch
          %1061 = sbr.rel (%p1059) target = $region108
        $region107: #{deco_plus_decoder_forward.3} parent=11 // pred_region
          _
        $region108: #{deco_plus_decoder_forward.3} parent=11 // pred_fallthru
          _
        // Predicated region
        $region109: #{deco_plus_decoder_forward.3} parent=11 // pred_check
          %p1062 = pneg %p708
        $region110: #{deco_plus_decoder_forward.3} parent=11 // pred_check_branch
          %1064 = sbr.rel (%p1062) target = $region112
        $region111: #{deco_plus_decoder_forward.3} parent=11 // pred_region
          _
        $region112: #{deco_plus_decoder_forward.3} parent=11 // pred_fallthru
          _
        // Predicated region
        $region113: #{deco_plus_decoder_forward.3} parent=11 // pred_check
          %p1065 = pneg %p729
        $region114: #{deco_plus_decoder_forward.3} parent=11 // pred_check_branch
          %1067 = sbr.rel (%p1065) target = $region116
        $region115: #{deco_plus_decoder_forward.3} parent=11 // pred_region
          _
        $region116: #{deco_plus_decoder_forward.3} parent=11 // pred_fallthru
          _
        // Predicated region
        $region117: #{deco_plus_decoder_forward.3} parent=11 // pred_check
          %p1068 = pneg %p750
        $region118: #{deco_plus_decoder_forward.3} parent=11 // pred_check_branch
          %1070 = sbr.rel (%p1068) target = $region120
        $region119: #{deco_plus_decoder_forward.3} parent=11 // pred_region
          _
        $region120: #{deco_plus_decoder_forward.3} parent=11 // pred_fallthru
          _
        // Predicated region
        $region121: #{deco_plus_decoder_forward.3} parent=11 // pred_check
          %p1071 = pneg %p771
        $region122: #{deco_plus_decoder_forward.3} parent=11 // pred_check_branch
          %1073 = sbr.rel (%p1071) target = $region124
        $region123: #{deco_plus_decoder_forward.3} parent=11 // pred_region
          _
        $region124: #{deco_plus_decoder_forward.3} parent=11 // pred_fallthru
          _
        // Predicated region
        $region125: #{deco_plus_decoder_forward.3} parent=11 // pred_check
          %p1074 = pneg %p792
        $region126: #{deco_plus_decoder_forward.3} parent=11 // pred_check_branch
          %1076 = sbr.rel (%p1074) target = $region128
        $region127: #{deco_plus_decoder_forward.3} parent=11 // pred_region
          _
        $region128: #{deco_plus_decoder_forward.3} parent=11 // pred_fallthru
          _
        // Predicated region
        $region129: #{deco_plus_decoder_forward.3} parent=11 // pred_check
          %p1077 = pneg %p813
        $region130: #{deco_plus_decoder_forward.3} parent=11 // pred_check_branch
          %1079 = sbr.rel (%p1077) target = $region132
        $region131: #{deco_plus_decoder_forward.3} parent=11 // pred_region
          _
        $region132: #{deco_plus_decoder_forward.3} parent=11 // pred_fallthru
          _
        // Predicated region
        $region133: #{deco_plus_decoder_forward.3} parent=11 // pred_check
          %p1080 = pneg %p834
        $region134: #{deco_plus_decoder_forward.3} parent=11 // pred_check_branch
          %1082 = sbr.rel (%p1080) target = $region136
        $region135: #{deco_plus_decoder_forward.3} parent=11 // pred_region
          _
        $region136: #{deco_plus_decoder_forward.3} parent=11 // pred_fallthru
          _
        // Predicated region
        $region137: #{deco_plus_decoder_forward.3} parent=11 // pred_check
          %p1083 = pneg %p855
        $region138: #{deco_plus_decoder_forward.3} parent=11 // pred_check_branch
          %1085 = sbr.rel (%p1083) target = $region140
        $region139: #{deco_plus_decoder_forward.3} parent=11 // pred_region
          %1087 = vsyncadd [#allocation8], 0
          %s1089 = sshll.u32 %s69, 4
          %s1090 = int_to_ptr.hbm [resolvable:$true] %s1089
          %s1091 = sshll.u32 [#allocation7], 4
          %s1092 = int_to_ptr.vmem [resolvable:$true] %s1091
          %1094 = dma.hbm_to_vmem [thread:$0]  %s1090, 16, %s1092, [#allocation8]
        $region140: #{deco_plus_decoder_forward.3} parent=11 // pred_fallthru
          _
        // Predicated region
        $region141: #{deco_plus_decoder_forward.3} parent=11 // pred_check
          %p1095 = pneg %p876
        $region142: #{deco_plus_decoder_forward.3} parent=11 // pred_check_branch
          %1097 = sbr.rel (%p1095) target = $region144
        $region143: #{deco_plus_decoder_forward.3} parent=11 // pred_region
          _
        $region144: #{deco_plus_decoder_forward.3} parent=11 // pred_fallthru
          _
        // Predicated region
        $region145: #{deco_plus_decoder_forward.3} parent=11 // pred_check
          %p1098 = pneg %p897
        $region146: #{deco_plus_decoder_forward.3} parent=11 // pred_check_branch
          %1100 = sbr.rel (%p1098) target = $region148
        $region147: #{deco_plus_decoder_forward.3} parent=11 // pred_region
          %1102 = vsyncadd [#allocation11], 0
          %s1104 = sshll.u32 %s73, 4
          %s1105 = int_to_ptr.hbm [resolvable:$true] %s1104
          %s1106 = sshll.u32 [#allocation10], 4
          %s1107 = int_to_ptr.vmem [resolvable:$true] %s1106
          %1109 = dma.hbm_to_vmem [thread:$0]  %s1105, 16, %s1107, [#allocation11]
        $region148: #{deco_plus_decoder_forward.3} parent=11 // pred_fallthru
          _
      $region12: #{deco_plus_decoder_forward.3} parent=5 // pred_fallthru
        _
      %p1110 = scmp.lt.s32.totalorder %s91, 4
      // Predicated region
      $region149: #{deco_plus_decoder_forward.3} parent=5 // pred_check
        %p1111 = pneg %p1110
      $region150: #{deco_plus_decoder_forward.3} parent=5 // pred_check_branch
        %1113 = sbr.rel (%p1111) target = $region152
      $region151: #{deco_plus_decoder_forward.3} parent=5 // pred_region
        // Predicated region
        $region153: #{deco_plus_decoder_forward.3} parent=151 // pred_check
          %p1114 = pneg %p123
        $region154: #{deco_plus_decoder_forward.3} parent=151 // pred_check_branch
          %1116 = sbr.rel (%p1114) target = $region156
        $region155: #{deco_plus_decoder_forward.3} parent=151 // pred_region
          %p1117 = scmp.lt.s32.totalorder %s98, 1
          %s1118 = scalar_select %p1117, %s98, 1
          %s1119 = smul.addr %s1118, 8
          %s1120 = scalar_lea.vmem %s1, %s1119
        $region156: #{deco_plus_decoder_forward.3} parent=151 // pred_fallthru
          _
        // Predicated region
        $region157: #{deco_plus_decoder_forward.3} parent=151 // pred_check
          %p1121 = pneg %p151
        $region158: #{deco_plus_decoder_forward.3} parent=151 // pred_check_branch
          %1123 = sbr.rel (%p1121) target = $region160
        $region159: #{deco_plus_decoder_forward.3} parent=151 // pred_region
          %p1124 = scmp.lt.s32.totalorder %s98, 1
          %s1125 = scalar_select %p1124, %s98, 1
          %p1126 = scmp.lt.s32.totalorder %s99, 1
          %s1127 = scalar_select %p1126, %s99, 1
          %s1128 = smul.addr %s1125, 2
          %s1129 = sadd.s32 %s1127, %s1128
          %s1130 = smul.addr %s1129, 4
          %s1131 = scalar_lea.vmem %s3, %s1130
        $region160: #{deco_plus_decoder_forward.3} parent=151 // pred_fallthru
          _
        // Predicated region
        $region161: #{deco_plus_decoder_forward.3} parent=151 // pred_check
          %p1132 = pneg %p177
        $region162: #{deco_plus_decoder_forward.3} parent=151 // pred_check_branch
          %1134 = sbr.rel (%p1132) target = $region164
        $region163: #{deco_plus_decoder_forward.3} parent=151 // pred_region
          %p1135 = scmp.lt.s32.totalorder %s98, 1
          %s1136 = scalar_select %p1135, %s98, 1
          %s1137 = smul.addr %s1136, 8
          %s1138 = scalar_lea.vmem %s5, %s1137
        $region164: #{deco_plus_decoder_forward.3} parent=151 // pred_fallthru
          _
      $region152: #{deco_plus_decoder_forward.3} parent=5 // pred_fallthru
        _
      %p1139 = scmp.le.s32.totalorder 1, %s91
      %p1140 = scmp.lt.s32.totalorder %s91, 5
      %p1141 = pnand %p1139, %p1140
      %p1142 = pneg %p1141
      // Predicated region
      $region165: #{deco_plus_decoder_forward.3} parent=5 // pred_check
        _
      $region166: #{deco_plus_decoder_forward.3} parent=5 // pred_check_branch
        %1144 = sbr.rel (%p1141) target = $region168
      $region167: #{deco_plus_decoder_forward.3} parent=5 // pred_region
        %s1145 = ssub.s32 %s91, 1
        // Predicated region
        $region169: #{deco_plus_decoder_forward.3} parent=167 // pred_check
          %p1146 = pneg %p855
        $region170: #{deco_plus_decoder_forward.3} parent=167 // pred_check_branch
          %1148 = sbr.rel (%p1146) target = $region172
        $region171: #{deco_plus_decoder_forward.3} parent=167 // pred_region
          %1150 = dma.done [#allocation8], 16
        $region172: #{deco_plus_decoder_forward.3} parent=167 // pred_fallthru
          _
        // Predicated region
        $region173: #{deco_plus_decoder_forward.3} parent=167 // pred_check
          %p1151 = pneg %p897
        $region174: #{deco_plus_decoder_forward.3} parent=167 // pred_check_branch
          %1153 = sbr.rel (%p1151) target = $region176
        $region175: #{deco_plus_decoder_forward.3} parent=167 // pred_region
          %1155 = dma.done [#allocation11], 16
        $region176: #{deco_plus_decoder_forward.3} parent=167 // pred_fallthru
          _
        %p1156 = scmp.lt.s32.totalorder %s100, 1
        %s1157 = scalar_select %p1156, %s100, 1
        %s1158 = smul.addr %s1157, 8
        %s1159 = scalar_lea.vmem %s1, %s1158
        %p1160 = pneg %p129
        %p1161 = pneg %p126
        %p1162 = scmp.lt.s32.totalorder %s100, 1
        %s1163 = scalar_select %p1162, %s100, 1
        %p1164 = scmp.lt.s32.totalorder %s101, 1
        %s1165 = scalar_select %p1164, %s101, 1
        %s1166 = smul.addr %s1163, 2
        %s1167 = sadd.s32 %s1165, %s1166
        %s1168 = smul.addr %s1167, 4
        %s1169 = scalar_lea.vmem %s3, %s1168
        %p1170 = pneg %p157
        %p1171 = pneg %p154
        %p1172 = scmp.lt.s32.totalorder %s100, 1
        %s1173 = scalar_select %p1172, %s100, 1
        %s1174 = smul.addr %s1173, 8
        %s1175 = scalar_lea.vmem %s5, %s1174
        %p1176 = pneg %p183
        %p1177 = pneg %p180
        %p1178 = pneg %p204
        %p1179 = pneg %p201
        %p1180 = pneg %p225
        %p1181 = pneg %p222
        %p1182 = pneg %p246
        %p1183 = pneg %p243
        %p1184 = pneg %p267
        %p1185 = pneg %p264
        %p1186 = pneg %p288
        %p1187 = pneg %p285
        %p1188 = pneg %p309
        %p1189 = pneg %p306
        %p1190 = pneg %p330
        %p1191 = pneg %p327
        %p1192 = pneg %p351
        %p1193 = pneg %p348
        %p1194 = pneg %p372
        %p1195 = pneg %p369
        %p1196 = pneg %p393
        %p1197 = pneg %p390
        %p1198 = pneg %p414
        %p1199 = pneg %p411
        %p1200 = pneg %p435
        %p1201 = pneg %p432
        %p1202 = pneg %p456
        %p1203 = pneg %p453
        %p1204 = pneg %p477
        %p1205 = pneg %p474
        %p1206 = pneg %p498
        %p1207 = pneg %p495
        %p1208 = pneg %p519
        %p1209 = pneg %p516
        %p1210 = pneg %p540
        %p1211 = pneg %p537
        %p1212 = pneg %p561
        %p1213 = pneg %p558
        %p1214 = pneg %p582
        %p1215 = pneg %p579
        %p1216 = pneg %p603
        %p1217 = pneg %p600
        %p1218 = pneg %p624
        %p1219 = pneg %p621
        %p1220 = pneg %p645
        %p1221 = pneg %p642
        %p1222 = pneg %p666
        %p1223 = pneg %p663
        %p1224 = pneg %p687
        %p1225 = pneg %p684
        %p1226 = pneg %p708
        %p1227 = pneg %p705
        %p1228 = pneg %p729
        %p1229 = pneg %p726
        %p1230 = pneg %p750
        %p1231 = pneg %p747
        %p1232 = pneg %p771
        %p1233 = pneg %p768
        %p1234 = pneg %p792
        %p1235 = pneg %p789
        %p1236 = pneg %p813
        %p1237 = pneg %p810
        %p1238 = pneg %p834
        %p1239 = pneg %p831
        %p1240 = pneg %p855
        %p1241 = pneg %p852
        %p1242 = pneg %p876
        %p1243 = pneg %p873
        %p1244 = pneg %p897
        %p1245 = pneg %p894
        %p1246 = pneg %p923
        %p1247 = pneg %p920
        %s1248 = sand.u32 %s910, 1
        %s1249 = scalar_lea.sflag [#allocation9], %s1248
        %s1250 = sand.u32 %s910, 1
        %s1251 = smul.addr %s1250, 8
        %s1252 = scalar_lea.vmem [#allocation12], %s1251
        %p1253 = pneg %p949
        %p1254 = pneg %p946
        %p1255 = scmp.lt.s32.totalorder %s100, 1
        %s1256 = scalar_select %p1255, %s100, 1
        %s1257 = smul.addr %s1256, 8
        %s1258 = scalar_lea.vmem %s77, %s1257
        %p1259 = pneg %p975
        %p1260 = pneg %p972
        %p1261 = scmp.lt.s32.totalorder %s100, 1
        %s1262 = scalar_select %p1261, %s100, 1
        %s1263 = smul.addr %s1262, 8
        %s1264 = scalar_lea.vmem %s79, %s1263
        %p1265 = scmp.lt.s32.totalorder %s100, 1
        %s1266 = scalar_select %p1265, %s100, 1
        %s1267 = smul.addr %s1266, 8
        %s1268 = scalar_lea.vmem %s1, %s1267
        %p1269 = scmp.lt.s32.totalorder %s100, 1
        %s1270 = scalar_select %p1269, %s100, 1
        %p1271 = scmp.lt.s32.totalorder %s101, 1
        %s1272 = scalar_select %p1271, %s101, 1
        %s1273 = smul.addr %s1270, 2
        %s1274 = sadd.s32 %s1272, %s1273
        %s1275 = smul.addr %s1274, 4
        %s1276 = scalar_lea.vmem %s3, %s1275
        %p1277 = scmp.lt.s32.totalorder %s100, 1
        %s1278 = scalar_select %p1277, %s100, 1
        %s1279 = smul.addr %s1278, 8
        %s1280 = scalar_lea.vmem %s5, %s1279
        %p1281 = scmp.lt.s32.totalorder %s100, 1
        %s1282 = scalar_select %p1281, %s100, 1
        %s1283 = smul.addr %s1282, 8
        %s1284 = scalar_lea.vmem %s77, %s1283
        %p1285 = scmp.lt.s32.totalorder %s100, 1
        %s1286 = scalar_select %p1285, %s100, 1
        %s1287 = smul.addr %s1286, 8
        %s1288 = scalar_lea.vmem %s79, %s1287
        %p1290 = scmp.eq.s32.totalorder %s101, 0
        // Predicated region
        $region177: #{deco_plus_decoder_forward.3} parent=167 // pred_check
          %p1291 = pneg %p1290
        $region178: #{deco_plus_decoder_forward.3} parent=167 // pred_check_branch
          %1293 = sbr.rel (%p1291) target = $region180
        $region179: #{deco_plus_decoder_forward.3} parent=167 // pred_region
          %v1294 = vld [vmem:[%s1268] sm:$0xff]
          %v1295 = vld [vmem:[%s1280] sm:$0xff]
          %v1296 = vld [vmem:[%s7] sm:$0xf]
          %v1297 = vld [vmem:[%s9] sm:$0x1]
          %1299 = vset.pattern.permute.xlu0 0
          %1300 = vperm.xlu0 %1299, %v1295
          %v1301 = vpop.permute.xlu0 %1300
          %v1303 = vperm.slane %v1296, 0
          %v1304 = vmul.f32 %v1301, %v1303
          %v1306 = vperm.slane %v1297, 0
          %v1308 = vadd.f32 %v1306, %v1304
          %1309 = vset.pattern.permute.xlu0 1
          %1310 = vperm.xlu0 %1309, %v1295
          %v1311 = vpop.permute.xlu0 %1310
          %v1313 = vperm.slane %v1296, 1
          %v1314 = vmul.f32 %v1311, %v1313
          %v1315 = vadd.f32 %v1308, %v1314
          %1316 = vset.pattern.permute.xlu0 2
          %1317 = vperm.xlu0 %1316, %v1295
          %v1318 = vpop.permute.xlu0 %1317
          %v1320 = vperm.slane %v1296, 2
          %v1321 = vmul.f32 %v1318, %v1320
          %v1322 = vadd.f32 %v1315, %v1321
          %1323 = vset.pattern.permute.xlu0 3
          %1324 = vperm.xlu0 %1323, %v1295
          %v1325 = vpop.permute.xlu0 %1324
          %v1327 = vperm.slane %v1296, 3
          %v1328 = vmul.f32 %v1325, %v1327
          %v1329 = vadd.f32 %v1322, %v1328
          %v1330 = vmax.f32 %v1329, 0.0
          %v1331 = vld [vmem:[%s11] sm:$0xff]
          %v1332 = vld [vmem:[%s11 + $0x8] sm:$0xff]
          %v1333 = vld [vmem:[%s11 + $0x10] sm:$0xff]
          %v1334 = vld [vmem:[%s11 + $0x18] sm:$0xff]
          %v1335 = vld [vmem:[%s11 + $0x20] sm:$0xff]
          %v1336 = vld [vmem:[%s11 + $0x28] sm:$0xff]
          %v1337 = vld [vmem:[%s11 + $0x30] sm:$0xff]
          %v1338 = vld [vmem:[%s11 + $0x38] sm:$0xff]
          %v1339 = vld [vmem:[%s13] sm:$0x1]
          %v1341 = vperm.slane %v1339, 0
          %vm1343 = vcmask 523264
          %v1345 = vsel %vm1343, %v1330, 0
          %1347 = vmatpush.msra.mxu0 0.0
          %1348 = vmatpush.msra.mxu0 0.0
          %1349 = vmatpush.msra.mxu0 0.0
          %1350 = vmatpush.msra.mxu0 0.0
          %1351 = vmatpush.msra.mxu0 0.0
          %1352 = vmatpush.msra.mxu0 0.0
          %1353 = vmatpush.msra.mxu0 0.0
          %1354 = vmatpush.msra.mxu0 0.0
          %1355 = vmatpush.msra.mxu0 %v1338
          %1356 = vmatpush.msra.mxu0 %v1337
          %1357 = vmatpush.msra.mxu0 %v1336
          %1358 = vmatpush.msra.mxu0 %v1335
          %1359 = vmatpush.msra.mxu0 %v1334
          %1360 = vmatpush.msra.mxu0 %v1333
          %1361 = vmatpush.msra.mxu0 %v1332
          %1362 = vmatpush.msra.mxu0 %v1331
          %1363 = vmatmul.f32.gmra.mxu0 %v1345
          %v1364 = vpop.f32.mrf.mxu0
          %v1365 = vadd.f32 %v1341, %v1364
          %1366 = vdwg.mxu0
          %v1367 = vadd.f32 %v1294, %v1365
          %v1368 = vld [vmem:[%s15] sm:$0xff]
          %v1369 = vld [vmem:[%s15 + $0x8] sm:$0xff]
          %v1370 = vld [vmem:[%s15 + $0x10] sm:$0xff]
          %v1371 = vld [vmem:[%s15 + $0x18] sm:$0xff]
          %v1372 = vpack.c.bf16 %v1367, %v1367
          %v1373 = vpack.c.bf16 %v1369, %v1368
          %v1374 = vpack.c.bf16 %v1371, %v1370
          %v1375 = vld [vmem:[%s17] sm:$0x1]
          %v1377 = vperm.slane %v1375, 0
          %vm1379 = vcmask 261120
          %v1381 = vsel %vm1379, %v1372, 0
          %1383 = vmatpush.bf16.msra.mxu0 0
          %1384 = vmatpush.bf16.msra.mxu0 0
          %1385 = vmatpush.bf16.msra.mxu0 0
          %1386 = vmatpush.bf16.msra.mxu0 0
          %1387 = vmatpush.bf16.msra.mxu0 0
          %1388 = vmatpush.bf16.msra.mxu0 0
          %1389 = vmatpush.bf16.msra.mxu0 %v1374
          %1390 = vmatpush.bf16.msra.mxu0 %v1373
          %1391 = vmatmul.bf16.gmra.mxu0 %v1381
          %v1392 = vpop.f32.mrf.mxu0
          %v1393 = vadd.f32 %v1377, %v1392
          %v1394 = vpop.f32.mrf.mxu0
          %1395 = vdwg.mxu0
          %v1396 = vld [vmem:[%s19] sm:$0xff]
          %v1397 = vld [vmem:[%s19 + $0x8] sm:$0xff]
          %v1398 = vld [vmem:[%s19 + $0x10] sm:$0xff]
          %v1399 = vld [vmem:[%s19 + $0x18] sm:$0xff]
          %v1400 = vpack.c.bf16 %v1294, %v1294
          %v1401 = vpack.c.bf16 %v1397, %v1396
          %v1402 = vpack.c.bf16 %v1399, %v1398
          %v1403 = vld [vmem:[%s21] sm:$0x1]
          %v1405 = vperm.slane %v1403, 0
          %v1408 = vsel %vm1379, %v1400, 0
          %1410 = vmatpush.bf16.msra.mxu0 0
          %1411 = vmatpush.bf16.msra.mxu0 0
          %1412 = vmatpush.bf16.msra.mxu0 0
          %1413 = vmatpush.bf16.msra.mxu0 0
          %1414 = vmatpush.bf16.msra.mxu0 0
          %1415 = vmatpush.bf16.msra.mxu0 0
          %1416 = vmatpush.bf16.msra.mxu0 %v1402
          %1417 = vmatpush.bf16.msra.mxu0 %v1401
          %1418 = vmatmul.bf16.gmra.mxu0 %v1408
          %v1419 = vpop.f32.mrf.mxu0
          %v1420 = vadd.f32 %v1405, %v1419
          %v1421 = vpop.f32.mrf.mxu0
          %1422 = vdwg.mxu0
          %v1423 = vmul.f32 %v1393, 0.35355338
          %v1424 = vpack.c.bf16 %v1423, %v1423
          %v1425 = vpack.c.bf16 %v1393, %v1393
          %v1426 = vpack.c.bf16 %v1420, %v1420
          %v1428 = vunpack.c.l.b16 %v1425
          %v1429 = vpack.c.b16 %v1428, %v1428
          %1430 = vrot.lane.b32.xlu0 %v1429, 96
          %v1431 = vpop.permute.xlu0 %1430
          %vm1432 = vcmask 64512
          %v1434 = vsel %vm1432, %v1424, 0
          %v1437 = vsel %vm1432, %v1431, 0
          %1439 = vmatpush.bf16.xpose.msra.mxu0 0
          %1440 = vmatpush.bf16.xpose.msra.mxu0 0
          %1441 = vmatpush.bf16.xpose.msra.mxu0 0
          %1442 = vmatpush.bf16.xpose.msra.mxu0 0
          %1443 = vmatpush.bf16.xpose.msra.mxu0 0
          %1444 = vmatpush.bf16.xpose.msra.mxu0 0
          %1445 = vmatpush.bf16.xpose.msra.mxu0 0
          %1446 = vmatpush.bf16.xpose.msra.mxu0 %v1437
          %1447 = vmatmul.bf16.gmra.mxu0 %v1434
          %v1448 = vpop.f32.mrf.mxu0
          %v1449 = vadd.f32 0.0, %v1448
          %v1450 = vpop.f32.mrf.mxu0
          %1451 = vdwg.mxu0
          %v1452 = vsel %vm1432, %v1449, -inf
          %1453 = vmax.xlane.f32.xlu0 %v1452
          %v1454 = vpop.xlane.xlu0 %1453
          %v1455 = vsub.f32 %v1449, %v1454
          %v1456 = vmul.f32 %v1455, 1.442695
          %v1457 = vpow.pop %v1456
          %v1458 = vsel %vm1432, %v1457, 0.0
          %1459 = vadd.xlane.f32.xlu0 %v1458
          %v1460 = vpop.xlane.xlu0 %1459
          %v1461 = vrcp.pop %v1460
          %v1462 = vmul.f32 %v1457, %v1461
          %v1463 = vpack.c.bf16 %v1462, %v1462
          %v1465 = vsel %vm1432, %v1463, 0
          %vm1467 = vcmask 1043456
          %v1469 = vsel %vm1467, %v1426, 0
          %1471 = vmatpush.bf16.msra.mxu0 0
          %1472 = vmatpush.bf16.msra.mxu0 0
          %1473 = vmatpush.bf16.msra.mxu0 0
          %1474 = vmatpush.bf16.msra.mxu0 0
          %1475 = vmatpush.bf16.msra.mxu0 0
          %1476 = vmatpush.bf16.msra.mxu0 0
          %1477 = vmatpush.bf16.msra.mxu0 0
          %1478 = vmatpush.bf16.msra.mxu0 %v1469
          %1479 = vmatmul.bf16.gmra.mxu0 %v1465
          %v1480 = vpop.f32.mrf.mxu0
          %v1481 = vadd.f32 0.0, %v1480
          %v1482 = vpop.f32.mrf.mxu0
          %1483 = vdwg.mxu0
          %v1485 = vunpack.c.l.b16 %v1424
          %v1486 = vpack.c.b16 %v1485, %v1485
          %1487 = vrot.lane.b32.xlu0 %v1486, 120
          %v1488 = vpop.permute.xlu0 %1487
          %1489 = vrot.lane.b32.xlu0 %v1429, 88
          %v1490 = vpop.permute.xlu0 %1489
          %v1492 = vsel %vm1432, %v1488, 0
          %v1495 = vsel %vm1432, %v1490, 0
          %1497 = vmatpush.bf16.xpose.msra.mxu0 0
          %1498 = vmatpush.bf16.xpose.msra.mxu0 0
          %1499 = vmatpush.bf16.xpose.msra.mxu0 0
          %1500 = vmatpush.bf16.xpose.msra.mxu0 0
          %1501 = vmatpush.bf16.xpose.msra.mxu0 0
          %1502 = vmatpush.bf16.xpose.msra.mxu0 0
          %1503 = vmatpush.bf16.xpose.msra.mxu0 0
          %1504 = vmatpush.bf16.xpose.msra.mxu0 %v1495
          %1505 = vmatmul.bf16.gmra.mxu0 %v1492
          %v1506 = vpop.f32.mrf.mxu0
          %v1507 = vadd.f32 0.0, %v1506
          %v1508 = vpop.f32.mrf.mxu0
          %1509 = vdwg.mxu0
          %v1510 = vsel %vm1432, %v1507, -inf
          %1511 = vmax.xlane.f32.xlu0 %v1510
          %v1512 = vpop.xlane.xlu0 %1511
          %v1513 = vsub.f32 %v1507, %v1512
          %v1514 = vmul.f32 %v1513, 1.442695
          %v1515 = vpow.pop %v1514
          %v1516 = vsel %vm1432, %v1515, 0.0
          %1517 = vadd.xlane.f32.xlu0 %v1516
          %v1518 = vpop.xlane.xlu0 %1517
          %v1519 = vrcp.pop %v1518
          %v1520 = vmul.f32 %v1515, %v1519
          %v1521 = vpack.c.bf16 %v1520, %v1520
          %v1523 = vunpack.c.l.b16 %v1426
          %v1524 = vpack.c.b16 %v1523, %v1523
          %1525 = vrot.lane.b32.xlu0 %v1524, 120
          %v1526 = vpop.permute.xlu0 %1525
          %v1528 = vsel %vm1432, %v1521, 0
          %v1531 = vsel %vm1467, %v1526, 0
          %1533 = vmatpush.bf16.msra.mxu0 0
          %1534 = vmatpush.bf16.msra.mxu0 0
          %1535 = vmatpush.bf16.msra.mxu0 0
          %1536 = vmatpush.bf16.msra.mxu0 0
          %1537 = vmatpush.bf16.msra.mxu0 0
          %1538 = vmatpush.bf16.msra.mxu0 0
          %1539 = vmatpush.bf16.msra.mxu0 0
          %1540 = vmatpush.bf16.msra.mxu0 %v1531
          %1541 = vmatmul.bf16.gmra.mxu0 %v1528
          %v1542 = vpop.f32.mrf.mxu0
          %v1543 = vadd.f32 0.0, %v1542
          %v1544 = vpop.f32.mrf.mxu0
          %1545 = vdwg.mxu0
          %1546 = vrot.lane.b32.xlu0 %v1486, 112
          %v1547 = vpop.permute.xlu0 %1546
          %1548 = vrot.lane.b32.xlu0 %v1429, 80
          %v1549 = vpop.permute.xlu0 %1548
          %v1551 = vsel %vm1432, %v1547, 0
          %v1554 = vsel %vm1432, %v1549, 0
          %1556 = vmatpush.bf16.xpose.msra.mxu0 0
          %1557 = vmatpush.bf16.xpose.msra.mxu0 0
          %1558 = vmatpush.bf16.xpose.msra.mxu0 0
          %1559 = vmatpush.bf16.xpose.msra.mxu0 0
          %1560 = vmatpush.bf16.xpose.msra.mxu0 0
          %1561 = vmatpush.bf16.xpose.msra.mxu0 0
          %1562 = vmatpush.bf16.xpose.msra.mxu0 0
          %1563 = vmatpush.bf16.xpose.msra.mxu0 %v1554
          %1564 = vmatmul.bf16.gmra.mxu0 %v1551
          %v1565 = vpop.f32.mrf.mxu0
          %v1566 = vadd.f32 0.0, %v1565
          %v1567 = vpop.f32.mrf.mxu0
          %1568 = vdwg.mxu0
          %v1569 = vsel %vm1432, %v1566, -inf
          %1570 = vmax.xlane.f32.xlu0 %v1569
          %v1571 = vpop.xlane.xlu0 %1570
          %v1572 = vsub.f32 %v1566, %v1571
          %v1573 = vmul.f32 %v1572, 1.442695
          %v1574 = vpow.pop %v1573
          %v1575 = vsel %vm1432, %v1574, 0.0
          %1576 = vadd.xlane.f32.xlu0 %v1575
          %v1577 = vpop.xlane.xlu0 %1576
          %v1578 = vrcp.pop %v1577
          %v1579 = vmul.f32 %v1574, %v1578
          %v1580 = vpack.c.bf16 %v1579, %v1579
          %1581 = vrot.lane.b32.xlu0 %v1524, 112
          %v1582 = vpop.permute.xlu0 %1581
          %v1584 = vsel %vm1432, %v1580, 0
          %v1587 = vsel %vm1467, %v1582, 0
          %1589 = vmatpush.bf16.msra.mxu0 0
          %1590 = vmatpush.bf16.msra.mxu0 0
          %1591 = vmatpush.bf16.msra.mxu0 0
          %1592 = vmatpush.bf16.msra.mxu0 0
          %1593 = vmatpush.bf16.msra.mxu0 0
          %1594 = vmatpush.bf16.msra.mxu0 0
          %1595 = vmatpush.bf16.msra.mxu0 0
          %1596 = vmatpush.bf16.msra.mxu0 %v1587
          %1597 = vmatmul.bf16.gmra.mxu0 %v1584
          %v1598 = vpop.f32.mrf.mxu0
          %v1599 = vadd.f32 0.0, %v1598
          %v1600 = vpop.f32.mrf.mxu0
          %1601 = vdwg.mxu0
          %1602 = vrot.lane.b32.xlu0 %v1486, 104
          %v1603 = vpop.permute.xlu0 %1602
          %1604 = vrot.lane.b32.xlu0 %v1429, 72
          %v1605 = vpop.permute.xlu0 %1604
          %v1607 = vsel %vm1432, %v1603, 0
          %v1610 = vsel %vm1432, %v1605, 0
          %1612 = vmatpush.bf16.xpose.msra.mxu0 0
          %1613 = vmatpush.bf16.xpose.msra.mxu0 0
          %1614 = vmatpush.bf16.xpose.msra.mxu0 0
          %1615 = vmatpush.bf16.xpose.msra.mxu0 0
          %1616 = vmatpush.bf16.xpose.msra.mxu0 0
          %1617 = vmatpush.bf16.xpose.msra.mxu0 0
          %1618 = vmatpush.bf16.xpose.msra.mxu0 0
          %1619 = vmatpush.bf16.xpose.msra.mxu0 %v1610
          %1620 = vmatmul.bf16.gmra.mxu0 %v1607
          %v1621 = vpop.f32.mrf.mxu0
          %v1622 = vadd.f32 0.0, %v1621
          %v1623 = vpop.f32.mrf.mxu0
          %1624 = vdwg.mxu0
          %v1625 = vsel %vm1432, %v1622, -inf
          %1626 = vmax.xlane.f32.xlu0 %v1625
          %v1627 = vpop.xlane.xlu0 %1626
          %v1628 = vsub.f32 %v1622, %v1627
          %v1629 = vmul.f32 %v1628, 1.442695
          %v1630 = vpow.pop %v1629
          %v1631 = vsel %vm1432, %v1630, 0.0
          %1632 = vadd.xlane.f32.xlu0 %v1631
          %v1633 = vpop.xlane.xlu0 %1632
          %v1634 = vrcp.pop %v1633
          %v1635 = vmul.f32 %v1630, %v1634
          %v1636 = vpack.c.bf16 %v1635, %v1635
          %1637 = vrot.lane.b32.xlu0 %v1524, 104
          %v1638 = vpop.permute.xlu0 %1637
          %v1640 = vsel %vm1432, %v1636, 0
          %v1643 = vsel %vm1467, %v1638, 0
          %1645 = vmatpush.bf16.msra.mxu0 0
          %1646 = vmatpush.bf16.msra.mxu0 0
          %1647 = vmatpush.bf16.msra.mxu0 0
          %1648 = vmatpush.bf16.msra.mxu0 0
          %1649 = vmatpush.bf16.msra.mxu0 0
          %1650 = vmatpush.bf16.msra.mxu0 0
          %1651 = vmatpush.bf16.msra.mxu0 0
          %1652 = vmatpush.bf16.msra.mxu0 %v1643
          %1653 = vmatmul.bf16.gmra.mxu0 %v1640
          %v1654 = vpop.f32.mrf.mxu0
          %v1655 = vadd.f32 0.0, %v1654
          %v1656 = vpop.f32.mrf.mxu0
          %1657 = vdwg.mxu0
          %1659 = vrot.lane.b32.xlu0 %v1543, 8
          %v1660 = vpop.permute.xlu0 %1659
          %1663 = vrot.lane.b32.xlu0 %v1599, 16
          %v1664 = vpop.permute.xlu0 %1663
          %1667 = vrot.lane.b32.xlu0 %v1655, 24
          %v1668 = vpop.permute.xlu0 %1667
          %v1670 = vsel %vm1432, %v1481, %v1660
          %vm1671 = vcmask 130048
          %v1672 = vsel %vm1671, %v1670, %v1664
          %vm1673 = vcmask 195584
          %v1674 = vsel %vm1673, %v1672, %v1668
          %v1675 = vld [vmem:[%s23] sm:$0xff]
          %v1676 = vld [vmem:[%s23 + $0x8] sm:$0xff]
          %v1677 = vld [vmem:[%s23 + $0x10] sm:$0xff]
          %v1678 = vld [vmem:[%s23 + $0x18] sm:$0xff]
          %v1679 = vpack.c.bf16 %v1674, %v1674
          %v1680 = vpack.c.bf16 %v1676, %v1675
          %v1681 = vpack.c.bf16 %v1678, %v1677
          %v1682 = vld [vmem:[%s25] sm:$0x1]
          %v1684 = vperm.slane %v1682, 0
          %v1687 = vsel %vm1379, %v1679, 0
          %1689 = vmatpush.bf16.msra.mxu0 0
          %1690 = vmatpush.bf16.msra.mxu0 0
          %1691 = vmatpush.bf16.msra.mxu0 0
          %1692 = vmatpush.bf16.msra.mxu0 0
          %1693 = vmatpush.bf16.msra.mxu0 0
          %1694 = vmatpush.bf16.msra.mxu0 0
          %1695 = vmatpush.bf16.msra.mxu0 %v1681
          %1696 = vmatpush.bf16.msra.mxu0 %v1680
          %1697 = vmatmul.bf16.gmra.mxu0 %v1687
          %v1698 = vpop.f32.mrf.mxu0
          %v1699 = vadd.f32 %v1684, %v1698
          %v1700 = vpop.f32.mrf.mxu0
          %1701 = vdwg.mxu0
          %v1702 = vadd.f32 %v1294, %v1699
          %v1703 = vsel %vm1379, %v1702, 0.0
          %1704 = vadd.xlane.f32.xlu0 %v1703
          %v1705 = vpop.xlane.xlu0 %1704
          %v1706 = vrcp.pop 32.0
          %v1707 = vmul.f32 32.0, %v1706
          %v1708 = vsub.f32 1.0, %v1707
          %v1709 = vmul.f32 %v1706, %v1708
          %v1710 = vadd.f32 %v1706, %v1709
          %vm1711 = vweird.f32 %v1706
          %v1712 = vsel %vm1711, %v1706, %v1710
          %v1713 = vmul.f32 %v1705, %v1712
          %v1714 = vsub.f32 %v1702, %v1713
          %v1715 = vmul.f32 %v1714, %v1714
          %v1716 = vsel %vm1379, %v1715, 0.0
          %1717 = vadd.xlane.f32.xlu0 %v1716
          %v1718 = vpop.xlane.xlu0 %1717
          %v1719 = vmul.f32 %v1718, %v1712
          %v1720 = vadd.f32 %v1719, 1e-05
          %v1721 = vrsqrt.pop %v1720
          %v1722 = vmul.f32 %v1721, %v1720
          %v1723 = vmul.f32 %v1722, %v1721
          %v1724 = vmul.f32 0.5, %v1723
          %v1725 = vsub.f32 1.5, %v1724
          %v1726 = vmul.f32 %v1721, %v1725
          %vm1727 = vweird.f32 %v1720
          %vm1728 = vweird.f32 %v1721
          %vm1729 = vmor %vm1727, %vm1728
          %v1730 = vsel %vm1729, %v1721, %v1726
          %v1731 = vmul.f32 %v1714, %v1730
          %v1732 = vld [vmem:[%s27] sm:$0x1]
          %v1734 = vperm.slane %v1732, 0
          %v1736 = vmul.f32 %v1731, %v1734
          %v1737 = vld [vmem:[%s29] sm:$0x1]
          %v1739 = vperm.slane %v1737, 0
          %v1741 = vadd.f32 %v1736, %v1739
          %1742 = vst.msk [vmem:[#allocation2] sm:$0xff] %vm1379, %v1741
          %v1743 = vld [vmem:[#allocation2] sm:$0xff]
          %v1744 = vadd.f32 %v1743, %v1365
          %v1745 = vld [vmem:[%s31] sm:$0xff]
          %v1746 = vld [vmem:[%s31 + $0x8] sm:$0xff]
          %v1747 = vld [vmem:[%s31 + $0x10] sm:$0xff]
          %v1748 = vld [vmem:[%s31 + $0x18] sm:$0xff]
          %v1749 = vpack.c.bf16 %v1744, %v1744
          %v1750 = vpack.c.bf16 %v1746, %v1745
          %v1751 = vpack.c.bf16 %v1748, %v1747
          %v1752 = vld [vmem:[%s33] sm:$0x1]
          %v1754 = vperm.slane %v1752, 0
          %v1757 = vsel %vm1379, %v1749, 0
          %1759 = vmatpush.bf16.msra.mxu0 0
          %1760 = vmatpush.bf16.msra.mxu0 0
          %1761 = vmatpush.bf16.msra.mxu0 0
          %1762 = vmatpush.bf16.msra.mxu0 0
          %1763 = vmatpush.bf16.msra.mxu0 0
          %1764 = vmatpush.bf16.msra.mxu0 0
          %1765 = vmatpush.bf16.msra.mxu0 %v1751
          %1766 = vmatpush.bf16.msra.mxu0 %v1750
          %1767 = vmatmul.bf16.gmra.mxu0 %v1757
          %v1768 = vpop.f32.mrf.mxu0
          %v1769 = vadd.f32 %v1754, %v1768
          %v1770 = vpop.f32.mrf.mxu0
          %1771 = vdwg.mxu0
          %v1772 = vmul.f32 %v1769, 0.35355338
          %1773 = vst.msk [vmem:[#allocation3] sm:$0xff] %vm1379, %v1772
          %vm1774 = vcmask 7168
          %1775 = vst.msk [vmem:[#allocation4] sm:$0xff] %vm1774, -1e+30
          %1776 = vst.msk [vmem:[#allocation4 + $0x8] sm:$0xff] %vm1774, -1e+30
          %1777 = vst.msk [vmem:[#allocation4 + $0x10] sm:$0xff] %vm1774, -1e+30
          %1778 = vst.msk [vmem:[#allocation4 + $0x18] sm:$0xff] %vm1774, -1e+30
          %1779 = vst.msk [vmem:[#allocation5] sm:$0xff] %vm1774, 0.0
          %1780 = vst.msk [vmem:[#allocation5 + $0x8] sm:$0xff] %vm1774, 0.0
          %1781 = vst.msk [vmem:[#allocation5 + $0x10] sm:$0xff] %vm1774, 0.0
          %1782 = vst.msk [vmem:[#allocation5 + $0x18] sm:$0xff] %vm1774, 0.0
          %1783 = vst.msk [vmem:[#allocation6] sm:$0xff] %vm1379, 0.0
        $region180: #{deco_plus_decoder_forward.3} parent=167 // pred_fallthru
          _
        %v1784 = vld [vmem:[%s1276] sm:$0xf]
        %v1785 = vld [vmem:[%s35] sm:$0xff]
        %v1786 = vld [vmem:[%s35 + $0x8] sm:$0xff]
        %v1787 = vld [vmem:[%s35 + $0x10] sm:$0xff]
        %v1788 = vld [vmem:[%s35 + $0x18] sm:$0xff]
        %v1789 = vpack.c.bf16 %v1786, %v1785
        %v1790 = vpack.c.bf16 %v1788, %v1787
        %v1791 = vld [vmem:[%s37] sm:$0x1]
        %v1793 = vperm.slane %v1791, 0
        %vm1795 = vcmask 261120
        %v1797 = vsel %vm1795, %v1784, 0
        %1799 = vmatpush.bf16.msra.mxu0 0
        %1800 = vmatpush.bf16.msra.mxu0 0
        %1801 = vmatpush.bf16.msra.mxu0 0
        %1802 = vmatpush.bf16.msra.mxu0 0
        %1803 = vmatpush.bf16.msra.mxu0 0
        %1804 = vmatpush.bf16.msra.mxu0 0
        %1805 = vmatpush.bf16.msra.mxu0 %v1790
        %1806 = vmatpush.bf16.msra.mxu0 %v1789
        %1807 = vmatmul.bf16.gmra.mxu0 %v1797
        %v1808 = vpop.f32.mrf.mxu0
        %v1809 = vadd.f32 %v1793, %v1808
        %v1810 = vpop.f32.mrf.mxu0
        %1811 = vdwg.mxu0
        %v1812 = vpack.c.bf16 %v1809, %v1809
        %v1813 = vld [vmem:[#allocation3] sm:$0xff]
        %v1814 = vpack.c.bf16 %v1813, %v1813
        %v1815 = vld [vmem:[#allocation6] sm:$0xff]
        %vm1816 = vcmask 64512
        %v1818 = vsel %vm1816, %v1814, 0
        %v1821 = vsel %vm1816, %v1812, 0
        %1823 = vmatpush.bf16.xpose.msra.mxu0 0
        %1824 = vmatpush.bf16.xpose.msra.mxu0 0
        %1825 = vmatpush.bf16.xpose.msra.mxu0 0
        %1826 = vmatpush.bf16.xpose.msra.mxu0 0
        %1827 = vmatpush.bf16.xpose.msra.mxu0 0
        %1828 = vmatpush.bf16.xpose.msra.mxu0 0
        %1829 = vmatpush.bf16.xpose.msra.mxu0 0
        %1830 = vmatpush.bf16.xpose.msra.mxu0 %v1821
        %1831 = vmatmul.bf16.gmra.mxu0 %v1818
        %v1832 = vpop.f32.mrf.mxu0
        %v1833 = vadd.f32 0.0, %v1832
        %v1834 = vpop.f32.mrf.mxu0
        %1835 = vdwg.mxu0
        %v1836 = vld [vmem:[#allocation4] sm:$0xff]
        %v1837 = vsel %vm1816, %v1833, -inf
        %1838 = vmax.xlane.f32.xlu0 %v1837
        %v1839 = vpop.xlane.xlu0 %1838
        %v1840 = vmax.f32 %v1836, %v1839
        %v1841 = vsub.f32 %v1836, %v1840
        %v1842 = vmul.f32 %v1841, 1.442695
        %v1843 = vpow.pop %v1842
        %1845 = vset.pattern.permute.xlu0 0
        %1846 = vperm.xlu0 %1845, %v1840
        %v1847 = vpop.permute.xlu0 %1846
        %v1849 = vsub.f32 %v1833, %v1847
        %v1850 = vmul.f32 %v1849, 1.442695
        %v1851 = vpow.pop %v1850
        %vm1852 = vcmask 7168
        %1853 = vst.msk [vmem:[#allocation4] sm:$0xff] %vm1852, %v1840
        %v1854 = vld [vmem:[#allocation5] sm:$0xff]
        %v1855 = vmul.f32 %v1843, %v1854
        %v1856 = vsel %vm1816, %v1851, 0.0
        %1857 = vadd.xlane.f32.xlu0 %v1856
        %v1858 = vpop.xlane.xlu0 %1857
        %v1859 = vadd.f32 %v1855, %v1858
        %1860 = vst.msk [vmem:[#allocation5] sm:$0xff] %vm1852, %v1859
        %v1861 = vpack.c.bf16 %v1851, %v1851
        %v1863 = vunpack.c.l.b16 %v1812
        %v1864 = vpack.c.b16 %v1863, %v1863
        %1865 = vrot.lane.b32.xlu0 %v1864, 96
        %v1866 = vpop.permute.xlu0 %1865
        %v1868 = vsel %vm1816, %v1861, 0
        %vm1870 = vcmask 1043456
        %v1872 = vsel %vm1870, %v1866, 0
        %1874 = vmatpush.bf16.msra.mxu0 0
        %1875 = vmatpush.bf16.msra.mxu0 0
        %1876 = vmatpush.bf16.msra.mxu0 0
        %1877 = vmatpush.bf16.msra.mxu0 0
        %1878 = vmatpush.bf16.msra.mxu0 0
        %1879 = vmatpush.bf16.msra.mxu0 0
        %1880 = vmatpush.bf16.msra.mxu0 0
        %1881 = vmatpush.bf16.msra.mxu0 %v1872
        %1882 = vmatmul.bf16.gmra.mxu0 %v1868
        %v1883 = vpop.f32.mrf.mxu0
        %v1884 = vadd.f32 0.0, %v1883
        %v1885 = vpop.f32.mrf.mxu0
        %1886 = vdwg.mxu0
        %1888 = vset.pattern.permute.xlu0 0
        %1889 = vperm.xlu0 %1888, %v1843
        %v1890 = vpop.permute.xlu0 %1889
        %v1892 = vmul.f32 %v1890, %v1815
        %v1893 = vadd.f32 %v1892, %v1884
        %v1895 = vunpack.c.l.b16 %v1814
        %v1896 = vpack.c.b16 %v1895, %v1895
        %1897 = vrot.lane.b32.xlu0 %v1896, 120
        %v1898 = vpop.permute.xlu0 %1897
        %1899 = vrot.lane.b32.xlu0 %v1864, 120
        %v1900 = vpop.permute.xlu0 %1899
        %v1902 = vsel %vm1816, %v1898, 0
        %v1905 = vsel %vm1816, %v1900, 0
        %1907 = vmatpush.bf16.xpose.msra.mxu0 0
        %1908 = vmatpush.bf16.xpose.msra.mxu0 0
        %1909 = vmatpush.bf16.xpose.msra.mxu0 0
        %1910 = vmatpush.bf16.xpose.msra.mxu0 0
        %1911 = vmatpush.bf16.xpose.msra.mxu0 0
        %1912 = vmatpush.bf16.xpose.msra.mxu0 0
        %1913 = vmatpush.bf16.xpose.msra.mxu0 0
        %1914 = vmatpush.bf16.xpose.msra.mxu0 %v1905
        %1915 = vmatmul.bf16.gmra.mxu0 %v1902
        %v1916 = vpop.f32.mrf.mxu0
        %v1917 = vadd.f32 0.0, %v1916
        %v1918 = vpop.f32.mrf.mxu0
        %1919 = vdwg.mxu0
        %s1920 = scalar_lea.vmem [#allocation4], 8
        %v1921 = vld [vmem:[%s1920] sm:$0xff]
        %v1922 = vsel %vm1816, %v1917, -inf
        %1923 = vmax.xlane.f32.xlu0 %v1922
        %v1924 = vpop.xlane.xlu0 %1923
        %v1925 = vmax.f32 %v1921, %v1924
        %v1926 = vsub.f32 %v1921, %v1925
        %v1927 = vmul.f32 %v1926, 1.442695
        %v1928 = vpow.pop %v1927
        %1930 = vset.pattern.permute.xlu0 0
        %1931 = vperm.xlu0 %1930, %v1925
        %v1932 = vpop.permute.xlu0 %1931
        %v1934 = vsub.f32 %v1917, %v1932
        %v1935 = vmul.f32 %v1934, 1.442695
        %v1936 = vpow.pop %v1935
        %1937 = vst.msk [vmem:[%s1920] sm:$0xff] %vm1852, %v1925
        %s1938 = scalar_lea.vmem [#allocation5], 8
        %v1939 = vld [vmem:[%s1938] sm:$0xff]
        %v1940 = vmul.f32 %v1928, %v1939
        %v1941 = vsel %vm1816, %v1936, 0.0
        %1942 = vadd.xlane.f32.xlu0 %v1941
        %v1943 = vpop.xlane.xlu0 %1942
        %v1944 = vadd.f32 %v1940, %v1943
        %1945 = vst.msk [vmem:[%s1938] sm:$0xff] %vm1852, %v1944
        %v1946 = vpack.c.bf16 %v1936, %v1936
        %1947 = vrot.lane.b32.xlu0 %v1864, 88
        %v1948 = vpop.permute.xlu0 %1947
        %v1950 = vsel %vm1816, %v1946, 0
        %v1953 = vsel %vm1870, %v1948, 0
        %1955 = vmatpush.bf16.msra.mxu0 0
        %1956 = vmatpush.bf16.msra.mxu0 0
        %1957 = vmatpush.bf16.msra.mxu0 0
        %1958 = vmatpush.bf16.msra.mxu0 0
        %1959 = vmatpush.bf16.msra.mxu0 0
        %1960 = vmatpush.bf16.msra.mxu0 0
        %1961 = vmatpush.bf16.msra.mxu0 0
        %1962 = vmatpush.bf16.msra.mxu0 %v1953
        %1963 = vmatmul.bf16.gmra.mxu0 %v1950
        %v1964 = vpop.f32.mrf.mxu0
        %v1965 = vadd.f32 0.0, %v1964
        %v1966 = vpop.f32.mrf.mxu0
        %1967 = vdwg.mxu0
        %1969 = vset.pattern.permute.xlu0 0
        %1970 = vperm.xlu0 %1969, %v1928
        %v1971 = vpop.permute.xlu0 %1970
        %v1973 = vmul.f32 %v1971, %v1815
        %1975 = vrot.lane.b32.xlu0 %v1965, 8
        %v1976 = vpop.permute.xlu0 %1975
        %v1978 = vadd.f32 %v1973, %v1976
        %1979 = vrot.lane.b32.xlu0 %v1896, 112
        %v1980 = vpop.permute.xlu0 %1979
        %1981 = vrot.lane.b32.xlu0 %v1864, 112
        %v1982 = vpop.permute.xlu0 %1981
        %v1984 = vsel %vm1816, %v1980, 0
        %v1987 = vsel %vm1816, %v1982, 0
        %1989 = vmatpush.bf16.xpose.msra.mxu0 0
        %1990 = vmatpush.bf16.xpose.msra.mxu0 0
        %1991 = vmatpush.bf16.xpose.msra.mxu0 0
        %1992 = vmatpush.bf16.xpose.msra.mxu0 0
        %1993 = vmatpush.bf16.xpose.msra.mxu0 0
        %1994 = vmatpush.bf16.xpose.msra.mxu0 0
        %1995 = vmatpush.bf16.xpose.msra.mxu0 0
        %1996 = vmatpush.bf16.xpose.msra.mxu0 %v1987
        %1997 = vmatmul.bf16.gmra.mxu0 %v1984
        %v1998 = vpop.f32.mrf.mxu0
        %v1999 = vadd.f32 0.0, %v1998
        %v2000 = vpop.f32.mrf.mxu0
        %2001 = vdwg.mxu0
        %s2002 = scalar_lea.vmem [#allocation4], 16
        %v2003 = vld [vmem:[%s2002] sm:$0xff]
        %v2004 = vsel %vm1816, %v1999, -inf
        %2005 = vmax.xlane.f32.xlu0 %v2004
        %v2006 = vpop.xlane.xlu0 %2005
        %v2007 = vmax.f32 %v2003, %v2006
        %v2008 = vsub.f32 %v2003, %v2007
        %v2009 = vmul.f32 %v2008, 1.442695
        %v2010 = vpow.pop %v2009
        %2012 = vset.pattern.permute.xlu0 0
        %2013 = vperm.xlu0 %2012, %v2007
        %v2014 = vpop.permute.xlu0 %2013
        %v2016 = vsub.f32 %v1999, %v2014
        %v2017 = vmul.f32 %v2016, 1.442695
        %v2018 = vpow.pop %v2017
        %2019 = vst.msk [vmem:[%s2002] sm:$0xff] %vm1852, %v2007
        %s2020 = scalar_lea.vmem [#allocation5], 16
        %v2021 = vld [vmem:[%s2020] sm:$0xff]
        %v2022 = vmul.f32 %v2010, %v2021
        %v2023 = vsel %vm1816, %v2018, 0.0
        %2024 = vadd.xlane.f32.xlu0 %v2023
        %v2025 = vpop.xlane.xlu0 %2024
        %v2026 = vadd.f32 %v2022, %v2025
        %2027 = vst.msk [vmem:[%s2020] sm:$0xff] %vm1852, %v2026
        %v2028 = vpack.c.bf16 %v2018, %v2018
        %2029 = vrot.lane.b32.xlu0 %v1864, 80
        %v2030 = vpop.permute.xlu0 %2029
        %v2032 = vsel %vm1816, %v2028, 0
        %v2035 = vsel %vm1870, %v2030, 0
        %2037 = vmatpush.bf16.msra.mxu0 0
        %2038 = vmatpush.bf16.msra.mxu0 0
        %2039 = vmatpush.bf16.msra.mxu0 0
        %2040 = vmatpush.bf16.msra.mxu0 0
        %2041 = vmatpush.bf16.msra.mxu0 0
        %2042 = vmatpush.bf16.msra.mxu0 0
        %2043 = vmatpush.bf16.msra.mxu0 0
        %2044 = vmatpush.bf16.msra.mxu0 %v2035
        %2045 = vmatmul.bf16.gmra.mxu0 %v2032
        %v2046 = vpop.f32.mrf.mxu0
        %v2047 = vadd.f32 0.0, %v2046
        %v2048 = vpop.f32.mrf.mxu0
        %2049 = vdwg.mxu0
        %2051 = vset.pattern.permute.xlu0 0
        %2052 = vperm.xlu0 %2051, %v2010
        %v2053 = vpop.permute.xlu0 %2052
        %v2055 = vmul.f32 %v2053, %v1815
        %2057 = vrot.lane.b32.xlu0 %v2047, 16
        %v2058 = vpop.permute.xlu0 %2057
        %v2060 = vadd.f32 %v2055, %v2058
        %2061 = vrot.lane.b32.xlu0 %v1896, 104
        %v2062 = vpop.permute.xlu0 %2061
        %2063 = vrot.lane.b32.xlu0 %v1864, 104
        %v2064 = vpop.permute.xlu0 %2063
        %v2066 = vsel %vm1816, %v2062, 0
        %v2069 = vsel %vm1816, %v2064, 0
        %2071 = vmatpush.bf16.xpose.msra.mxu0 0
        %2072 = vmatpush.bf16.xpose.msra.mxu0 0
        %2073 = vmatpush.bf16.xpose.msra.mxu0 0
        %2074 = vmatpush.bf16.xpose.msra.mxu0 0
        %2075 = vmatpush.bf16.xpose.msra.mxu0 0
        %2076 = vmatpush.bf16.xpose.msra.mxu0 0
        %2077 = vmatpush.bf16.xpose.msra.mxu0 0
        %2078 = vmatpush.bf16.xpose.msra.mxu0 %v2069
        %2079 = vmatmul.bf16.gmra.mxu0 %v2066
        %v2080 = vpop.f32.mrf.mxu0
        %v2081 = vadd.f32 0.0, %v2080
        %v2082 = vpop.f32.mrf.mxu0
        %2083 = vdwg.mxu0
        %s2084 = scalar_lea.vmem [#allocation4], 24
        %v2085 = vld [vmem:[%s2084] sm:$0xff]
        %v2086 = vsel %vm1816, %v2081, -inf
        %2087 = vmax.xlane.f32.xlu0 %v2086
        %v2088 = vpop.xlane.xlu0 %2087
        %v2089 = vmax.f32 %v2085, %v2088
        %v2090 = vsub.f32 %v2085, %v2089
        %v2091 = vmul.f32 %v2090, 1.442695
        %v2092 = vpow.pop %v2091
        %2094 = vset.pattern.permute.xlu0 0
        %2095 = vperm.xlu0 %2094, %v2089
        %v2096 = vpop.permute.xlu0 %2095
        %v2098 = vsub.f32 %v2081, %v2096
        %v2099 = vmul.f32 %v2098, 1.442695
        %v2100 = vpow.pop %v2099
        %2101 = vst.msk [vmem:[%s2084] sm:$0xff] %vm1852, %v2089
        %s2102 = scalar_lea.vmem [#allocation5], 24
        %v2103 = vld [vmem:[%s2102] sm:$0xff]
        %v2104 = vmul.f32 %v2092, %v2103
        %v2105 = vsel %vm1816, %v2100, 0.0
        %2106 = vadd.xlane.f32.xlu0 %v2105
        %v2107 = vpop.xlane.xlu0 %2106
        %v2108 = vadd.f32 %v2104, %v2107
        %2109 = vst.msk [vmem:[%s2102] sm:$0xff] %vm1852, %v2108
        %v2110 = vpack.c.bf16 %v2100, %v2100
        %2111 = vrot.lane.b32.xlu0 %v1864, 72
        %v2112 = vpop.permute.xlu0 %2111
        %v2114 = vsel %vm1816, %v2110, 0
        %v2117 = vsel %vm1870, %v2112, 0
        %2119 = vmatpush.bf16.msra.mxu0 0
        %2120 = vmatpush.bf16.msra.mxu0 0
        %2121 = vmatpush.bf16.msra.mxu0 0
        %2122 = vmatpush.bf16.msra.mxu0 0
        %2123 = vmatpush.bf16.msra.mxu0 0
        %2124 = vmatpush.bf16.msra.mxu0 0
        %2125 = vmatpush.bf16.msra.mxu0 0
        %2126 = vmatpush.bf16.msra.mxu0 %v2117
        %2127 = vmatmul.bf16.gmra.mxu0 %v2114
        %v2128 = vpop.f32.mrf.mxu0
        %v2129 = vadd.f32 0.0, %v2128
        %v2130 = vpop.f32.mrf.mxu0
        %2131 = vdwg.mxu0
        %2133 = vset.pattern.permute.xlu0 0
        %2134 = vperm.xlu0 %2133, %v2092
        %v2135 = vpop.permute.xlu0 %2134
        %v2137 = vmul.f32 %v2135, %v1815
        %2139 = vrot.lane.b32.xlu0 %v2129, 24
        %v2140 = vpop.permute.xlu0 %2139
        %v2142 = vadd.f32 %v2137, %v2140
        %v2143 = vsel %vm1816, %v1893, %v1978
        %vm2144 = vcmask 130048
        %v2145 = vsel %vm2144, %v2143, %v2060
        %vm2146 = vcmask 195584
        %v2147 = vsel %vm2146, %v2145, %v2142
        %2148 = vst.msk [vmem:[#allocation6] sm:$0xff] %vm1795, %v2147
        %p2149 = scmp.eq.s32.totalorder %s101, 1
        // Predicated region
        $region181: #{deco_plus_decoder_forward.3} parent=167 // pred_check
          %p2150 = pneg %p2149
        $region182: #{deco_plus_decoder_forward.3} parent=167 // pred_check_branch
          %2152 = sbr.rel (%p2150) target = $region184
        $region183: #{deco_plus_decoder_forward.3} parent=167 // pred_region
          %v2153 = vld [vmem:[#allocation2] sm:$0xff]
          %v2154 = vld [vmem:[#allocation6] sm:$0xff]
          %v2155 = vld [vmem:[#allocation5] sm:$0xff]
          %v2156 = vrcp.pop %v2155
          %2158 = vset.pattern.permute.xlu0 0
          %2159 = vperm.xlu0 %2158, %v2156
          %v2160 = vpop.permute.xlu0 %2159
          %v2162 = vmul.f32 %v2154, %v2160
          %v2163 = vld [vmem:[%s1938] sm:$0xff]
          %v2164 = vrcp.pop %v2163
          %2166 = vset.pattern.permute.xlu0 0
          %2167 = vperm.xlu0 %2166, %v2164
          %v2168 = vpop.permute.xlu0 %2167
          %v2170 = vmul.f32 %v2154, %v2168
          %v2171 = vld [vmem:[%s2020] sm:$0xff]
          %v2172 = vrcp.pop %v2171
          %2174 = vset.pattern.permute.xlu0 0
          %2175 = vperm.xlu0 %2174, %v2172
          %v2176 = vpop.permute.xlu0 %2175
          %v2178 = vmul.f32 %v2154, %v2176
          %v2179 = vld [vmem:[%s2102] sm:$0xff]
          %v2180 = vrcp.pop %v2179
          %2182 = vset.pattern.permute.xlu0 0
          %2183 = vperm.xlu0 %2182, %v2180
          %v2184 = vpop.permute.xlu0 %2183
          %v2186 = vmul.f32 %v2154, %v2184
          %v2187 = vsel %vm1816, %v2162, %v2170
          %v2188 = vsel %vm2144, %v2187, %v2178
          %v2189 = vsel %vm2146, %v2188, %v2186
          %v2190 = vld [vmem:[%s39] sm:$0xff]
          %v2191 = vld [vmem:[%s39 + $0x8] sm:$0xff]
          %v2192 = vld [vmem:[%s39 + $0x10] sm:$0xff]
          %v2193 = vld [vmem:[%s39 + $0x18] sm:$0xff]
          %v2194 = vpack.c.bf16 %v2189, %v2189
          %v2195 = vpack.c.bf16 %v2191, %v2190
          %v2196 = vpack.c.bf16 %v2193, %v2192
          %v2197 = vld [vmem:[%s41] sm:$0x1]
          %v2199 = vperm.slane %v2197, 0
          %v2202 = vsel %vm1795, %v2194, 0
          %2204 = vmatpush.bf16.msra.mxu0 0
          %2205 = vmatpush.bf16.msra.mxu0 0
          %2206 = vmatpush.bf16.msra.mxu0 0
          %2207 = vmatpush.bf16.msra.mxu0 0
          %2208 = vmatpush.bf16.msra.mxu0 0
          %2209 = vmatpush.bf16.msra.mxu0 0
          %2210 = vmatpush.bf16.msra.mxu0 %v2196
          %2211 = vmatpush.bf16.msra.mxu0 %v2195
          %2212 = vmatmul.bf16.gmra.mxu0 %v2202
          %v2213 = vpop.f32.mrf.mxu0
          %v2214 = vadd.f32 %v2199, %v2213
          %v2215 = vpop.f32.mrf.mxu0
          %2216 = vdwg.mxu0
          %v2217 = vadd.f32 %v2153, %v2214
          %v2218 = vsel %vm1795, %v2217, 0.0
          %2219 = vadd.xlane.f32.xlu0 %v2218
          %v2220 = vpop.xlane.xlu0 %2219
          %v2221 = vrcp.pop 32.0
          %v2222 = vmul.f32 32.0, %v2221
          %v2223 = vsub.f32 1.0, %v2222
          %v2224 = vmul.f32 %v2221, %v2223
          %v2225 = vadd.f32 %v2221, %v2224
          %vm2226 = vweird.f32 %v2221
          %v2227 = vsel %vm2226, %v2221, %v2225
          %v2228 = vmul.f32 %v2220, %v2227
          %v2229 = vsub.f32 %v2217, %v2228
          %v2230 = vmul.f32 %v2229, %v2229
          %v2231 = vsel %vm1795, %v2230, 0.0
          %2232 = vadd.xlane.f32.xlu0 %v2231
          %v2233 = vpop.xlane.xlu0 %2232
          %v2234 = vmul.f32 %v2233, %v2227
          %v2235 = vadd.f32 %v2234, 1e-05
          %v2236 = vrsqrt.pop %v2235
          %v2237 = vmul.f32 %v2236, %v2235
          %v2238 = vmul.f32 %v2237, %v2236
          %v2239 = vmul.f32 0.5, %v2238
          %v2240 = vsub.f32 1.5, %v2239
          %v2241 = vmul.f32 %v2236, %v2240
          %vm2242 = vweird.f32 %v2235
          %vm2243 = vweird.f32 %v2236
          %vm2244 = vmor %vm2242, %vm2243
          %v2245 = vsel %vm2244, %v2236, %v2241
          %v2246 = vmul.f32 %v2229, %v2245
          %v2247 = vld [vmem:[%s43] sm:$0x1]
          %v2249 = vperm.slane %v2247, 0
          %v2251 = vmul.f32 %v2246, %v2249
          %v2252 = vld [vmem:[%s45] sm:$0x1]
          %v2254 = vperm.slane %v2252, 0
          %v2256 = vadd.f32 %v2251, %v2254
          %v2257 = vld [vmem:[%s47] sm:$0xff]
          %v2258 = vld [vmem:[%s47 + $0x8] sm:$0xff]
          %v2259 = vld [vmem:[%s47 + $0x10] sm:$0xff]
          %v2260 = vld [vmem:[%s47 + $0x18] sm:$0xff]
          %v2261 = vpack.c.bf16 %v2256, %v2256
          %v2262 = vpack.c.bf16 %v2258, %v2257
          %v2263 = vpack.c.bf16 %v2260, %v2259
          %v2264 = vld [vmem:[%s49] sm:$0x1]
          %v2266 = vperm.slane %v2264, 0
          %v2269 = vsel %vm1795, %v2261, 0
          %2271 = vmatpush.bf16.msra.mxu0 0
          %2272 = vmatpush.bf16.msra.mxu0 0
          %2273 = vmatpush.bf16.msra.mxu0 0
          %2274 = vmatpush.bf16.msra.mxu0 0
          %2275 = vmatpush.bf16.msra.mxu0 0
          %2276 = vmatpush.bf16.msra.mxu0 0
          %2277 = vmatpush.bf16.msra.mxu0 %v2263
          %2278 = vmatpush.bf16.msra.mxu0 %v2262
          %2279 = vmatmul.bf16.gmra.mxu0 %v2269
          %v2280 = vpop.f32.mrf.mxu0
          %v2281 = vadd.f32 %v2266, %v2280
          %v2282 = vpop.f32.mrf.mxu0
          %2283 = vdwg.mxu0
          %v2284 = vmax.f32 %v2281, 0.0
          %v2285 = vld [vmem:[%s51] sm:$0xff]
          %v2286 = vld [vmem:[%s51 + $0x8] sm:$0xff]
          %v2287 = vld [vmem:[%s51 + $0x10] sm:$0xff]
          %v2288 = vld [vmem:[%s51 + $0x18] sm:$0xff]
          %v2289 = vld [vmem:[%s51 + $0x20] sm:$0xff]
          %v2290 = vld [vmem:[%s51 + $0x28] sm:$0xff]
          %v2291 = vld [vmem:[%s51 + $0x30] sm:$0xff]
          %v2292 = vld [vmem:[%s51 + $0x38] sm:$0xff]
          %v2293 = vpack.c.bf16 %v2284, %v2284
          %v2294 = vpack.c.bf16 %v2286, %v2285
          %v2295 = vpack.c.bf16 %v2288, %v2287
          %v2296 = vpack.c.bf16 %v2290, %v2289
          %v2297 = vpack.c.bf16 %v2292, %v2291
          %v2298 = vld [vmem:[%s53] sm:$0x1]
          %v2300 = vperm.slane %v2298, 0
          %vm2302 = vcmask 523264
          %v2304 = vsel %vm2302, %v2293, 0
          %2306 = vmatpush.bf16.msra.mxu0 0
          %2307 = vmatpush.bf16.msra.mxu0 0
          %2308 = vmatpush.bf16.msra.mxu0 0
          %2309 = vmatpush.bf16.msra.mxu0 0
          %2310 = vmatpush.bf16.msra.mxu0 %v2297
          %2311 = vmatpush.bf16.msra.mxu0 %v2296
          %2312 = vmatpush.bf16.msra.mxu0 %v2295
          %2313 = vmatpush.bf16.msra.mxu0 %v2294
          %2314 = vmatmul.bf16.gmra.mxu0 %v2304
          %v2315 = vpop.f32.mrf.mxu0
          %v2316 = vadd.f32 %v2300, %v2315
          %v2317 = vpop.f32.mrf.mxu0
          %2318 = vdwg.mxu0
          %v2319 = vadd.f32 %v2256, %v2316
          %v2320 = vsel %vm1795, %v2319, 0.0
          %2321 = vadd.xlane.f32.xlu0 %v2320
          %v2322 = vpop.xlane.xlu0 %2321
          %v2323 = vmul.f32 %v2322, %v2227
          %v2324 = vsub.f32 %v2319, %v2323
          %v2325 = vmul.f32 %v2324, %v2324
          %v2326 = vsel %vm1795, %v2325, 0.0
          %2327 = vadd.xlane.f32.xlu0 %v2326
          %v2328 = vpop.xlane.xlu0 %2327
          %v2329 = vmul.f32 %v2328, %v2227
          %v2330 = vadd.f32 %v2329, 1e-05
          %v2331 = vrsqrt.pop %v2330
          %v2332 = vmul.f32 %v2331, %v2330
          %v2333 = vmul.f32 %v2332, %v2331
          %v2334 = vmul.f32 0.5, %v2333
          %v2335 = vsub.f32 1.5, %v2334
          %v2336 = vmul.f32 %v2331, %v2335
          %vm2337 = vweird.f32 %v2330
          %vm2338 = vweird.f32 %v2331
          %vm2339 = vmor %vm2337, %vm2338
          %v2340 = vsel %vm2339, %v2331, %v2336
          %v2341 = vmul.f32 %v2324, %v2340
          %v2342 = vld [vmem:[%s55] sm:$0x1]
          %v2344 = vperm.slane %v2342, 0
          %v2346 = vmul.f32 %v2341, %v2344
          %v2347 = vld [vmem:[%s57] sm:$0x1]
          %v2349 = vperm.slane %v2347, 0
          %v2351 = vadd.f32 %v2346, %v2349
          %v2352 = vld [vmem:[%s59] sm:$0xff]
          %v2353 = vld [vmem:[%s59 + $0x8] sm:$0xff]
          %v2354 = vld [vmem:[%s59 + $0x10] sm:$0xff]
          %v2355 = vld [vmem:[%s59 + $0x18] sm:$0xff]
          %v2356 = vpack.c.bf16 %v2351, %v2351
          %v2357 = vpack.c.bf16 %v2353, %v2352
          %v2358 = vpack.c.bf16 %v2355, %v2354
          %v2359 = vld [vmem:[%s61] sm:$0x1]
          %v2361 = vperm.slane %v2359, 0
          %v2364 = vsel %vm1795, %v2356, 0
          %2366 = vmatpush.bf16.msra.mxu0 0
          %2367 = vmatpush.bf16.msra.mxu0 0
          %2368 = vmatpush.bf16.msra.mxu0 0
          %2369 = vmatpush.bf16.msra.mxu0 0
          %2370 = vmatpush.bf16.msra.mxu0 0
          %2371 = vmatpush.bf16.msra.mxu0 0
          %2372 = vmatpush.bf16.msra.mxu0 %v2358
          %2373 = vmatpush.bf16.msra.mxu0 %v2357
          %2374 = vmatmul.bf16.gmra.mxu0 %v2364
          %v2375 = vpop.f32.mrf.mxu0
          %v2376 = vadd.f32 %v2361, %v2375
          %v2377 = vpop.f32.mrf.mxu0
          %2378 = vdwg.mxu0
          %v2379 = vmax.f32 %v2376, 0.0
          %v2380 = vld [vmem:[%s63] sm:$0xff]
          %v2381 = vld [vmem:[%s63 + $0x8] sm:$0xff]
          %v2382 = vld [vmem:[%s63 + $0x10] sm:$0xff]
          %v2383 = vld [vmem:[%s63 + $0x18] sm:$0xff]
          %v2384 = vpack.c.bf16 %v2379, %v2379
          %v2385 = vpack.c.bf16 %v2381, %v2380
          %v2386 = vpack.c.bf16 %v2383, %v2382
          %v2387 = vld [vmem:[%s65] sm:$0x1]
          %v2389 = vperm.slane %v2387, 0
          %v2392 = vsel %vm1795, %v2384, 0
          %2394 = vmatpush.bf16.msra.mxu0 0
          %2395 = vmatpush.bf16.msra.mxu0 0
          %2396 = vmatpush.bf16.msra.mxu0 0
          %2397 = vmatpush.bf16.msra.mxu0 0
          %2398 = vmatpush.bf16.msra.mxu0 0
          %2399 = vmatpush.bf16.msra.mxu0 0
          %2400 = vmatpush.bf16.msra.mxu0 %v2386
          %2401 = vmatpush.bf16.msra.mxu0 %v2385
          %2402 = vmatmul.bf16.gmra.mxu0 %v2392
          %v2403 = vpop.f32.mrf.mxu0
          %v2404 = vadd.f32 %v2389, %v2403
          %v2405 = vpop.f32.mrf.mxu0
          %2406 = vdwg.mxu0
          %v2407 = vmax.f32 %v2404, 0.0
          %v2408 = vld [vmem:[%s67] sm:$0xff]
          %v2409 = vld [vmem:[%s67 + $0x8] sm:$0xff]
          %v2410 = vld [vmem:[%s67 + $0x10] sm:$0xff]
          %v2411 = vld [vmem:[%s67 + $0x18] sm:$0xff]
          %v2412 = vld [vmem:[#allocation7] sm:$0x1]
          %v2414 = vperm.slane %v2412, 0
          %v2417 = vsel %vm1795, %v2407, 0
          %2419 = vmatpush.msra.mxu0 0.0
          %2420 = vmatpush.msra.mxu0 0.0
          %2421 = vmatpush.msra.mxu0 0.0
          %2422 = vmatpush.msra.mxu0 0.0
          %2423 = vmatpush.msra.mxu0 0.0
          %2424 = vmatpush.msra.mxu0 0.0
          %2425 = vmatpush.msra.mxu0 0.0
          %2426 = vmatpush.msra.mxu0 0.0
          %2427 = vmatpush.msra.mxu0 0.0
          %2428 = vmatpush.msra.mxu0 0.0
          %2429 = vmatpush.msra.mxu0 0.0
          %2430 = vmatpush.msra.mxu0 0.0
          %2431 = vmatpush.msra.mxu0 %v2411
          %2432 = vmatpush.msra.mxu0 %v2410
          %2433 = vmatpush.msra.mxu0 %v2409
          %2434 = vmatpush.msra.mxu0 %v2408
          %2435 = vmatmul.f32.gmra.mxu0 %v2417
          %v2436 = vpop.f32.mrf.mxu0
          %v2437 = vadd.f32 %v2414, %v2436
          %2438 = vdwg.mxu0
          %v2439 = vld [vmem:[%s1280] sm:$0xff]
          %v2440 = vmax.f32 %v2439, 0.0
          %v2441 = vmin.f32 %v2440, 1.0
          %v2442 = vmax.f32 %v2441, 1e-05
          %v2443 = vlog2.pop %v2442
          %v2444 = vmul.f32 %v2443, 0.6931472
          %v2445 = vsub.f32 1.0, %v2441
          %v2446 = vmax.f32 %v2445, 1e-05
          %v2447 = vlog2.pop %v2446
          %v2448 = vmul.f32 %v2447, 0.6931472
          %v2449 = vsub.f32 %v2444, %v2448
          %v2450 = vadd.f32 %v2437, %v2449
          %v2451 = vsub.f32 0.0, %v2450
          %v2452 = vmul.f32 %v2451, 1.442695
          %v2453 = vpow.pop %v2452
          %v2454 = vadd.f32 %v2453, 1.0
          %v2455 = vrcp.pop %v2454
          %v2456 = vmul.f32 %v2454, %v2455
          %v2457 = vsub.f32 1.0, %v2456
          %v2458 = vmul.f32 %v2455, %v2457
          %v2459 = vadd.f32 %v2455, %v2458
          %vm2460 = vweird.f32 %v2454
          %vm2461 = vweird.f32 %v2455
          %vm2462 = vmor %vm2460, %vm2461
          %v2463 = vsel %vm2462, %v2455, %v2459
          %v2464 = vand.u32 2147483647, %v2454
          %vm2465 = vcmp.eq.f32.partialorder %v2464, 8.507059e+37
          %v2466 = vand.u32 %v2454, 2147483648
          %v2467 = vor.u32 1.1754944e-38, %v2466
          %v2468 = vsel %vm2465, %v2467, %v2463
          %v2469 = vmul.f32 1.0, %v2468
          %vm2470 = vcmask 31744
          %2471 = vst.msk [vmem:[%s1284] sm:$0xff] %vm2470, %v2469
          %2472 = vst.msk [vmem:[%s1252] sm:$0xff] %vm1795, %v2351
          %v2473 = vld [vmem:[%s71] sm:$0xff]
          %v2474 = vld [vmem:[%s71 + $0x8] sm:$0xff]
          %v2475 = vld [vmem:[%s71 + $0x10] sm:$0xff]
          %v2476 = vld [vmem:[%s71 + $0x18] sm:$0xff]
          %v2477 = vpack.c.bf16 %v2474, %v2473
          %v2478 = vpack.c.bf16 %v2476, %v2475
          %v2479 = vld [vmem:[#allocation10] sm:$0x1]
          %v2481 = vperm.slane %v2479, 0
          %2483 = vmatpush.bf16.msra.mxu0 0
          %2484 = vmatpush.bf16.msra.mxu0 0
          %2485 = vmatpush.bf16.msra.mxu0 0
          %2486 = vmatpush.bf16.msra.mxu0 0
          %2487 = vmatpush.bf16.msra.mxu0 0
          %2488 = vmatpush.bf16.msra.mxu0 0
          %2489 = vmatpush.bf16.msra.mxu0 %v2478
          %2490 = vmatpush.bf16.msra.mxu0 %v2477
          %2491 = vmatmul.bf16.gmra.mxu0 %v2364
          %v2492 = vpop.f32.mrf.mxu0
          %v2493 = vadd.f32 %v2481, %v2492
          %v2494 = vpop.f32.mrf.mxu0
          %2495 = vdwg.mxu0
          %vm2496 = vcmask 39936
          %2497 = vst.msk [vmem:[%s1288] sm:$0xff] %vm2496, %v2493
        $region184: #{deco_plus_decoder_forward.3} parent=167 // pred_fallthru
          _
        %s2498 = sand.u32 %s910, 1
        %s2499 = scalar_lea.sflag [#allocation9], %s2498
        %s2500 = sand.u32 %s910, 1
        %s2501 = smul.addr %s2500, 8
        %s2502 = scalar_lea.vmem [#allocation12], %s2501
        %p2503 = scmp.lt.s32.totalorder %s100, 1
        %s2504 = scalar_select %p2503, %s100, 1
        %s2505 = smul.addr %s2504, 8
        %s2506 = scalar_lea.vmem %s77, %s2505
        %p2507 = scmp.lt.s32.totalorder %s100, 1
        %s2508 = scalar_select %p2507, %s100, 1
        %s2509 = smul.addr %s2508, 8
        %s2510 = scalar_lea.vmem %s79, %s2509
        // Predicated region
        $region185: #{deco_plus_decoder_forward.3} parent=167 // pred_check
          %p2511 = pneg %p920
        $region186: #{deco_plus_decoder_forward.3} parent=167 // pred_check_branch
          %2513 = sbr.rel (%p2511) target = $region188
        $region187: #{deco_plus_decoder_forward.3} parent=167 // pred_region
          %2515 = vsyncadd %s2499, 0
          %s2516 = smul.addr %s100, 8
          %s2517 = scalar_lea.hbm %s75, %s2516
          %s2519 = sshll.u32 %s2502, 4
          %s2520 = int_to_ptr.vmem [resolvable:$true] %s2519
          %s2521 = sshll.u32 %s2517, 4
          %s2522 = int_to_ptr.hbm [resolvable:$true] %s2521
          %2524 = dma.vmem_to_hbm [thread:$0]  %s2520, 128, %s2522, %s2499
        $region188: #{deco_plus_decoder_forward.3} parent=167 // pred_fallthru
          _
        // Predicated region
        $region189: #{deco_plus_decoder_forward.3} parent=167 // pred_check
          %p2525 = pneg %p946
        $region190: #{deco_plus_decoder_forward.3} parent=167 // pred_check_branch
          %2527 = sbr.rel (%p2525) target = $region192
        $region191: #{deco_plus_decoder_forward.3} parent=167 // pred_region
          _
        $region192: #{deco_plus_decoder_forward.3} parent=167 // pred_fallthru
          _
        // Predicated region
        $region193: #{deco_plus_decoder_forward.3} parent=167 // pred_check
          %p2528 = pneg %p972
        $region194: #{deco_plus_decoder_forward.3} parent=167 // pred_check_branch
          %2530 = sbr.rel (%p2528) target = $region196
        $region195: #{deco_plus_decoder_forward.3} parent=167 // pred_region
          _
        $region196: #{deco_plus_decoder_forward.3} parent=167 // pred_fallthru
          _
      $region168: #{deco_plus_decoder_forward.3} parent=5 // pred_fallthru
        _
      %p2531 = scmp.le.s32.totalorder 2, %s91
      // Predicated region
      $region197: #{deco_plus_decoder_forward.3} parent=5 // pred_check
        %p2532 = pneg %p2531
      $region198: #{deco_plus_decoder_forward.3} parent=5 // pred_check_branch
        %2534 = sbr.rel (%p2532) target = $region200
      $region199: #{deco_plus_decoder_forward.3} parent=5 // pred_region
        %s2535 = ssub.s32 %s91, 2
        // Predicated region
        $region201: #{deco_plus_decoder_forward.3} parent=199 // pred_check
          %p2536 = pneg %p926
        $region202: #{deco_plus_decoder_forward.3} parent=199 // pred_check_branch
          %2538 = sbr.rel (%p2536) target = $region204
        $region203: #{deco_plus_decoder_forward.3} parent=199 // pred_region
          %s2539 = sand.u32 %s911, 1
          %s2540 = scalar_lea.sflag [#allocation9], %s2539
          %s2541 = sand.u32 %s911, 1
          %s2542 = smul.addr %s2541, 8
          %s2543 = scalar_lea.vmem [#allocation12], %s2542
          %2545 = dma.done %s2540, 128
        $region204: #{deco_plus_decoder_forward.3} parent=199 // pred_fallthru
          _
        // Predicated region
        $region205: #{deco_plus_decoder_forward.3} parent=199 // pred_check
          %p2546 = pneg %p952
        $region206: #{deco_plus_decoder_forward.3} parent=199 // pred_check_branch
          %2548 = sbr.rel (%p2546) target = $region208
        $region207: #{deco_plus_decoder_forward.3} parent=199 // pred_region
          %p2549 = scmp.lt.s32.totalorder %s102, 1
          %s2550 = scalar_select %p2549, %s102, 1
          %s2551 = smul.addr %s2550, 8
          %s2552 = scalar_lea.vmem %s77, %s2551
        $region208: #{deco_plus_decoder_forward.3} parent=199 // pred_fallthru
          _
        // Predicated region
        $region209: #{deco_plus_decoder_forward.3} parent=199 // pred_check
          %p2553 = pneg %p978
        $region210: #{deco_plus_decoder_forward.3} parent=199 // pred_check_branch
          %2555 = sbr.rel (%p2553) target = $region212
        $region211: #{deco_plus_decoder_forward.3} parent=199 // pred_region
          %p2556 = scmp.lt.s32.totalorder %s102, 1
          %s2557 = scalar_select %p2556, %s102, 1
          %s2558 = smul.addr %s2557, 8
          %s2559 = scalar_lea.vmem %s79, %s2558
        $region212: #{deco_plus_decoder_forward.3} parent=199 // pred_fallthru
          _
      $region200: #{deco_plus_decoder_forward.3} parent=5 // pred_fallthru
        _
    $region6: #{deco_plus_decoder_forward.3} parent=1 // loop_footer
      %s95 = sadd.s32 1, %s91
    $region7: #{deco_plus_decoder_forward.3} parent=1 // loop_footer_branch
      %90 = sbr.rel target = $region3
    $region8: #{deco_plus_decoder_forward.3} parent=1 // loop_exit
      _
    %2560 = vsyncpa [#allocation8], 1
    %s2561 = scalar_lea.sflag [#allocation8], 1
    %2562 = vsyncpa %s2561, 1
    %2563 = vsyncpa [#allocation11], 1
    %2564 = vsyncpa [#allocation9], 1
    %s2565 = scalar_lea.sflag [#allocation9], 1
    %2566 = vsyncpa %s2565, 1

// kernel: deco_plus_decoder_forward.2
$region0: #{deco_plus_decoder_forward.2}
  #allocation0 [shape = 'u32[]', space=smem, size = 0x4, offset = 0x4, fixed_abs, tag = 'smem constant byte address 0x4 - core index']
  #allocation1 [shape = 'u32[72,128]{1,0:T(1,128)}', space=vmem, size = 0x9000, scoped, tag = 'internal scratch']
  #allocation2 [shape = 'f32[8,32]{1,0:T(8,128)}', space=vmem, size = 0x1000, scoped, tag = 'scratch operand']
  #allocation3 [shape = 'f32[8,32]{1,0:T(8,128)}', space=vmem, size = 0x1000, scoped, tag = 'scratch operand']
  #allocation4 [shape = 'f32[4,8,1]{2,1,0:T(8,128)}', space=vmem, size = 0x4000, scoped, tag = 'scratch operand']
  #allocation5 [shape = 'f32[4,8,1]{2,1,0:T(8,128)}', space=vmem, size = 0x4000, scoped, tag = 'scratch operand']
  #allocation6 [shape = 'f32[8,32]{1,0:T(8,128)}', space=vmem, size = 0x1000, scoped, tag = 'scratch operand']
  %s0 = inlined_call_operand.smem [shape: u32[37], index: -1, kind: input, shape index: {}]
  %s1 = sld [smem:[%s0]]
  %s2 = scalar_lea.smem %s0, 1
  %s3 = sld [smem:[%s2]]
  %s4 = scalar_lea.smem %s0, 2
  %s5 = sld [smem:[%s4]]
  %s6 = scalar_lea.smem %s0, 3
  %s7 = sld [smem:[%s6]]
  %s8 = scalar_lea.smem %s0, 4
  %s9 = sld [smem:[%s8]]
  %s10 = scalar_lea.smem %s0, 5
  %s11 = sld [smem:[%s10]]
  %s12 = scalar_lea.smem %s0, 6
  %s13 = sld [smem:[%s12]]
  %s14 = scalar_lea.smem %s0, 7
  %s15 = sld [smem:[%s14]]
  %s16 = scalar_lea.smem %s0, 8
  %s17 = sld [smem:[%s16]]
  %s18 = scalar_lea.smem %s0, 9
  %s19 = sld [smem:[%s18]]
  %s20 = scalar_lea.smem %s0, 10
  %s21 = sld [smem:[%s20]]
  %s22 = scalar_lea.smem %s0, 11
  %s23 = sld [smem:[%s22]]
  %s24 = scalar_lea.smem %s0, 12
  %s25 = sld [smem:[%s24]]
  %s26 = scalar_lea.smem %s0, 13
  %s27 = sld [smem:[%s26]]
  %s28 = scalar_lea.smem %s0, 14
  %s29 = sld [smem:[%s28]]
  %s30 = scalar_lea.smem %s0, 15
  %s31 = sld [smem:[%s30]]
  %s32 = scalar_lea.smem %s0, 16
  %s33 = sld [smem:[%s32]]
  %s34 = scalar_lea.smem %s0, 17
  %s35 = sld [smem:[%s34]]
  %s36 = scalar_lea.smem %s0, 18
  %s37 = sld [smem:[%s36]]
  %s38 = scalar_lea.smem %s0, 19
  %s39 = sld [smem:[%s38]]
  %s40 = scalar_lea.smem %s0, 20
  %s41 = sld [smem:[%s40]]
  %s42 = scalar_lea.smem %s0, 21
  %s43 = sld [smem:[%s42]]
  %s44 = scalar_lea.smem %s0, 22
  %s45 = sld [smem:[%s44]]
  %s46 = scalar_lea.smem %s0, 23
  %s47 = sld [smem:[%s46]]
  %s48 = scalar_lea.smem %s0, 24
  %s49 = sld [smem:[%s48]]
  %s50 = scalar_lea.smem %s0, 25
  %s51 = sld [smem:[%s50]]
  %s52 = scalar_lea.smem %s0, 26
  %s53 = sld [smem:[%s52]]
  %s54 = scalar_lea.smem %s0, 27
  %s55 = sld [smem:[%s54]]
  %s56 = scalar_lea.smem %s0, 28
  %s57 = sld [smem:[%s56]]
  %s58 = scalar_lea.smem %s0, 29
  %s59 = sld [smem:[%s58]]
  %s60 = scalar_lea.smem %s0, 30
  %s61 = sld [smem:[%s60]]
  %s62 = scalar_lea.smem %s0, 31
  %s63 = sld [smem:[%s62]]
  %s64 = scalar_lea.smem %s0, 32
  %s65 = sld [smem:[%s64]]
  %s66 = scalar_lea.smem %s0, 33
  %s67 = sld [smem:[%s66]]
  %s68 = scalar_lea.smem %s0, 34
  %s69 = sld [smem:[%s68]]
  %s70 = scalar_lea.smem %s0, 35
  %s71 = sld [smem:[%s70]]
  %s72 = scalar_lea.smem %s0, 36
  %s73 = sld [smem:[%s72]]
  %74 = xla_tuple %s71, %s73
  %s75 = sld [smem:[#allocation0]]
  $region253: #{deco_plus_decoder_forward.2} parent=0
    _
  %s77 = ssub.s32 1, %s75
  %s78 = scalar_select 0, %s77, %s75
  $region1: #{deco_plus_decoder_forward.2} parent=0
    #allocation7 [shape = 'u8[8192]{0}', space=vmem, size = 0x2000, scoped, tag = 'input window, operand 0']
    #allocation8 [shape = 's32[2]{0}', space=sflag, size = 0x8, scoped, tag = 'scoped memory for deco_plus_decoder_forward.2']
    #allocation9 [shape = 'u8[512]{0}', space=vmem, size = 0x400, scoped, tag = 'input window, operand 12, single buffered']
    #allocation10 [shape = 's32[1]{0}', space=sflag, size = 0x4, scoped, tag = 'scoped memory for deco_plus_decoder_forward.2']
    #allocation11 [shape = 'u8[512]{0}', space=vmem, size = 0x400, scoped, tag = 'input window, operand 13, single buffered']
    #allocation12 [shape = 'u8[512]{0}', space=vmem, size = 0x400, scoped, tag = 'input window, operand 14, single buffered']
    #allocation13 [shape = 's32[1]{0}', space=sflag, size = 0x4, scoped, tag = 'scoped memory for deco_plus_decoder_forward.2']
    #allocation14 [shape = 'u8[512]{0}', space=vmem, size = 0x400, scoped, tag = 'input window, operand 16, single buffered']
    #allocation15 [shape = 'u8[512]{0}', space=vmem, size = 0x400, scoped, tag = 'input window, operand 18, single buffered']
    #allocation16 [shape = 's32[1]{0}', space=sflag, size = 0x4, scoped, tag = 'scoped memory for deco_plus_decoder_forward.2']
    #allocation17 [shape = 'u8[512]{0}', space=vmem, size = 0x400, scoped, tag = 'input window, operand 20, single buffered']
    #allocation18 [shape = 'u8[512]{0}', space=vmem, size = 0x400, scoped, tag = 'input window, operand 21, single buffered']
    #allocation19 [shape = 's32[1]{0}', space=sflag, size = 0x4, scoped, tag = 'scoped memory for deco_plus_decoder_forward.2']
    #allocation20 [shape = 'u8[512]{0}', space=vmem, size = 0x400, scoped, tag = 'input window, operand 22, single buffered']
    #allocation21 [shape = 'u8[512]{0}', space=vmem, size = 0x400, scoped, tag = 'input window, operand 24, single buffered']
    #allocation22 [shape = 's32[1]{0}', space=sflag, size = 0x4, scoped, tag = 'scoped memory for deco_plus_decoder_forward.2']
    #allocation23 [shape = 'u8[512]{0}', space=vmem, size = 0x400, scoped, tag = 'input window, operand 26, single buffered']
    #allocation24 [shape = 'u8[512]{0}', space=vmem, size = 0x400, scoped, tag = 'input window, operand 27, single buffered']
    #allocation25 [shape = 's32[1]{0}', space=sflag, size = 0x4, scoped, tag = 'scoped memory for deco_plus_decoder_forward.2']
    #allocation26 [shape = 'u8[512]{0}', space=vmem, size = 0x400, scoped, tag = 'input window, operand 28, single buffered']
    #allocation27 [shape = 'u8[512]{0}', space=vmem, size = 0x400, scoped, tag = 'input window, operand 30, single buffered']
    #allocation28 [shape = 's32[1]{0}', space=sflag, size = 0x4, scoped, tag = 'scoped memory for deco_plus_decoder_forward.2']
    #allocation29 [shape = 'u8[512]{0}', space=vmem, size = 0x400, scoped, tag = 'input window, operand 32, single buffered']
    #allocation30 [shape = 'u8[512]{0}', space=vmem, size = 0x400, scoped, tag = 'input window, operand 34, single buffered']
    #allocation31 [shape = 's32[1]{0}', space=sflag, size = 0x4, scoped, tag = 'scoped memory for deco_plus_decoder_forward.2']
    %79 = vsyncpa [#allocation8], 0
    %s80 = scalar_lea.sflag [#allocation8], 1
    %81 = vsyncpa %s80, 0
    %82 = vsyncpa [#allocation10], 0
    %83 = vsyncpa [#allocation13], 0
    %84 = vsyncpa [#allocation16], 0
    %85 = vsyncpa [#allocation19], 0
    %86 = vsyncpa [#allocation22], 0
    %87 = vsyncpa [#allocation25], 0
    %88 = vsyncpa [#allocation28], 0
    %89 = vsyncpa [#allocation31], 0
    loop: start=0, step=1, limit=6
    $region2: #{deco_plus_decoder_forward.2} parent=1 // loop_pre_header
      _
    $region3: #{deco_plus_decoder_forward.2} parent=1 // loop_header
      %s91 = sphi 0, %s95
      %p92 = scmp.ge.s32.totalorder %s91, 6
      %s98 = sphi 0, %s110
      %s99 = sphi 0, %s106
      %s100 = sphi 0, %s98
      %s101 = sphi 0, %s99
      %s102 = sphi 0, %s100
      %s103 = sphi 0, %s101
      %s113 = sphi 0, %s115
      %s116 = sphi 0, %s113
      %s117 = sphi 0, %s116
      %s133 = sphi 0, %s117
      %s141 = sphi 0, %s143
      %s144 = sphi 0, %s141
      %s145 = sphi 0, %s144
      %s161 = sphi 0, %s145
      %s167 = sphi 0, %s169
      %s170 = sphi 0, %s167
      %s171 = sphi 0, %s170
      %s187 = sphi 0, %s171
      %s191 = sphi 0, %s191
      %s193 = sphi 0, %s191
      %s194 = sphi 0, %s193
      %s208 = sphi 0, %s194
      %s212 = sphi 0, %s212
      %s214 = sphi 0, %s212
      %s215 = sphi 0, %s214
      %s229 = sphi 0, %s215
      %s233 = sphi 0, %s233
      %s235 = sphi 0, %s233
      %s236 = sphi 0, %s235
      %s250 = sphi 0, %s236
      %s254 = sphi 0, %s254
      %s256 = sphi 0, %s254
      %s257 = sphi 0, %s256
      %s271 = sphi 0, %s257
      %s275 = sphi 0, %s275
      %s277 = sphi 0, %s275
      %s278 = sphi 0, %s277
      %s292 = sphi 0, %s278
      %s296 = sphi 0, %s296
      %s298 = sphi 0, %s296
      %s299 = sphi 0, %s298
      %s313 = sphi 0, %s299
      %s317 = sphi 0, %s317
      %s319 = sphi 0, %s317
      %s320 = sphi 0, %s319
      %s334 = sphi 0, %s320
      %s338 = sphi 0, %s338
      %s340 = sphi 0, %s338
      %s341 = sphi 0, %s340
      %s355 = sphi 0, %s341
      %s359 = sphi 0, %s359
      %s361 = sphi 0, %s359
      %s362 = sphi 0, %s361
      %s376 = sphi 0, %s362
      %s380 = sphi 0, %s380
      %s382 = sphi 0, %s380
      %s383 = sphi 0, %s382
      %s397 = sphi 0, %s383
      %s401 = sphi 0, %s401
      %s403 = sphi 0, %s401
      %s404 = sphi 0, %s403
      %s418 = sphi 0, %s404
      %s422 = sphi 0, %s422
      %s424 = sphi 0, %s422
      %s425 = sphi 0, %s424
      %s439 = sphi 0, %s425
      %s443 = sphi 0, %s443
      %s445 = sphi 0, %s443
      %s446 = sphi 0, %s445
      %s460 = sphi 0, %s446
      %s464 = sphi 0, %s464
      %s466 = sphi 0, %s464
      %s467 = sphi 0, %s466
      %s481 = sphi 0, %s467
      %s485 = sphi 0, %s485
      %s487 = sphi 0, %s485
      %s488 = sphi 0, %s487
      %s502 = sphi 0, %s488
      %s506 = sphi 0, %s506
      %s508 = sphi 0, %s506
      %s509 = sphi 0, %s508
      %s523 = sphi 0, %s509
      %s527 = sphi 0, %s527
      %s529 = sphi 0, %s527
      %s530 = sphi 0, %s529
      %s544 = sphi 0, %s530
      %s548 = sphi 0, %s548
      %s550 = sphi 0, %s548
      %s551 = sphi 0, %s550
      %s565 = sphi 0, %s551
      %s569 = sphi 0, %s569
      %s571 = sphi 0, %s569
      %s572 = sphi 0, %s571
      %s586 = sphi 0, %s572
      %s590 = sphi 0, %s590
      %s592 = sphi 0, %s590
      %s593 = sphi 0, %s592
      %s607 = sphi 0, %s593
      %s611 = sphi 0, %s611
      %s613 = sphi 0, %s611
      %s614 = sphi 0, %s613
      %s628 = sphi 0, %s614
      %s632 = sphi 0, %s632
      %s634 = sphi 0, %s632
      %s635 = sphi 0, %s634
      %s649 = sphi 0, %s635
      %s653 = sphi 0, %s653
      %s655 = sphi 0, %s653
      %s656 = sphi 0, %s655
      %s670 = sphi 0, %s656
      %s674 = sphi 0, %s674
      %s676 = sphi 0, %s674
      %s677 = sphi 0, %s676
      %s691 = sphi 0, %s677
      %s695 = sphi 0, %s695
      %s697 = sphi 0, %s695
      %s698 = sphi 0, %s697
      %s712 = sphi 0, %s698
      %s716 = sphi 0, %s716
      %s718 = sphi 0, %s716
      %s719 = sphi 0, %s718
      %s733 = sphi 0, %s719
      %s737 = sphi 0, %s737
      %s739 = sphi 0, %s737
      %s740 = sphi 0, %s739
      %s754 = sphi 0, %s740
      %s758 = sphi 0, %s758
      %s760 = sphi 0, %s758
      %s761 = sphi 0, %s760
      %s775 = sphi 0, %s761
      %s779 = sphi 0, %s779
      %s781 = sphi 0, %s779
      %s782 = sphi 0, %s781
      %s796 = sphi 0, %s782
      %s800 = sphi 0, %s800
      %s802 = sphi 0, %s800
      %s803 = sphi 0, %s802
      %s817 = sphi 0, %s803
      %s821 = sphi 0, %s821
      %s823 = sphi 0, %s821
      %s824 = sphi 0, %s823
      %s838 = sphi 0, %s824
      %s842 = sphi 0, %s842
      %s844 = sphi 0, %s842
      %s845 = sphi 0, %s844
      %s859 = sphi 0, %s845
      %s865 = sphi 0, %s867
      %s868 = sphi 0, %s865
      %s869 = sphi 0, %s868
      %s885 = sphi 0, %s869
      %s891 = sphi 0, %s893
      %s894 = sphi 0, %s891
      %s895 = sphi 0, %s894
      %s911 = sphi 0, %s895
    $region4: #{deco_plus_decoder_forward.2} parent=1 // loop_header_branch
      %94 = sbr.rel (%p92) target = $region8
    $region5: #{deco_plus_decoder_forward.2} parent=1 // loop_body
      %s96 = ssub.s32 %s91, 1
      %s97 = ssub.s32 %s91, 2
      %s104 = sadd.s32 1, %s99
      %p105 = scmp.ge.s32.totalorder %s104, 2
      %s106 = scalar_select %p105, 0, %s104
      %s107 = sadd.s32 1, %s98
      %s108 = scalar_select %p105, %s107, %s98
      %p109 = scmp.ge.s32.totalorder %s108, 2
      %s110 = scalar_select %p109, 0, %s108
      %s111 = ssub.s32 %s98, %s110
      %p112 = scmp.eq.s32.totalorder %s111, 0
      %s114 = sadd.s32 %s113, 1
      %s115 = scalar_select %p112, %s113, %s114
      %p118 = pneg %p112
      %p119 = scmp.eq.s32.totalorder %s91, 3
      %p120 = por %p118, %p119
      %p121 = scmp.ne.s32.totalorder %s113, %s116
      %p122 = scmp.eq.s32.totalorder %s91, 0
      %p123 = por %p121, %p122
      %p124 = scmp.ne.s32.totalorder %s113, %s116
      %p125 = scmp.eq.s32.totalorder %s96, 3
      %p126 = por %p124, %p125
      %p127 = scmp.ne.s32.totalorder %s116, %s117
      %p128 = scmp.eq.s32.totalorder %s96, 0
      %p129 = por %p127, %p128
      %p130 = scmp.ne.s32.totalorder %s116, %s117
      %p131 = scmp.eq.s32.totalorder %s97, 3
      %p132 = por %p130, %p131
      %p134 = scmp.ne.s32.totalorder %s117, %s133
      %p135 = scmp.eq.s32.totalorder %s97, 0
      %p136 = por %p134, %p135
      %s137 = ssub.s32 %s98, %s110
      %s138 = ssub.s32 %s99, %s106
      %s139 = sor.u32 %s137, %s138
      %p140 = scmp.eq.s32.totalorder %s139, 0
      %s142 = sadd.s32 %s141, 1
      %s143 = scalar_select %p140, %s141, %s142
      %p146 = pneg %p140
      %p147 = scmp.eq.s32.totalorder %s91, 3
      %p148 = por %p146, %p147
      %p149 = scmp.ne.s32.totalorder %s141, %s144
      %p150 = scmp.eq.s32.totalorder %s91, 0
      %p151 = por %p149, %p150
      %p152 = scmp.ne.s32.totalorder %s141, %s144
      %p153 = scmp.eq.s32.totalorder %s96, 3
      %p154 = por %p152, %p153
      %p155 = scmp.ne.s32.totalorder %s144, %s145
      %p156 = scmp.eq.s32.totalorder %s96, 0
      %p157 = por %p155, %p156
      %p158 = scmp.ne.s32.totalorder %s144, %s145
      %p159 = scmp.eq.s32.totalorder %s97, 3
      %p160 = por %p158, %p159
      %p162 = scmp.ne.s32.totalorder %s145, %s161
      %p163 = scmp.eq.s32.totalorder %s97, 0
      %p164 = por %p162, %p163
      %s165 = ssub.s32 %s98, %s110
      %p166 = scmp.eq.s32.totalorder %s165, 0
      %s168 = sadd.s32 %s167, 1
      %s169 = scalar_select %p166, %s167, %s168
      %p172 = pneg %p166
      %p173 = scmp.eq.s32.totalorder %s91, 3
      %p174 = por %p172, %p173
      %p175 = scmp.ne.s32.totalorder %s167, %s170
      %p176 = scmp.eq.s32.totalorder %s91, 0
      %p177 = por %p175, %p176
      %p178 = scmp.ne.s32.totalorder %s167, %s170
      %p179 = scmp.eq.s32.totalorder %s96, 3
      %p180 = por %p178, %p179
      %p181 = scmp.ne.s32.totalorder %s170, %s171
      %p182 = scmp.eq.s32.totalorder %s96, 0
      %p183 = por %p181, %p182
      %p184 = scmp.ne.s32.totalorder %s170, %s171
      %p185 = scmp.eq.s32.totalorder %s97, 3
      %p186 = por %p184, %p185
      %p188 = scmp.ne.s32.totalorder %s171, %s187
      %p189 = scmp.eq.s32.totalorder %s97, 0
      %p190 = por %p188, %p189
      %s192 = sadd.s32 %s191, 1
      %p195 = scmp.eq.s32.totalorder %s91, 3
      %p196 = scmp.ne.s32.totalorder %s191, %s193
      %p197 = scmp.eq.s32.totalorder %s91, 0
      %p198 = por %p196, %p197
      %p199 = scmp.ne.s32.totalorder %s191, %s193
      %p200 = scmp.eq.s32.totalorder %s96, 3
      %p201 = por %p199, %p200
      %p202 = scmp.ne.s32.totalorder %s193, %s194
      %p203 = scmp.eq.s32.totalorder %s96, 0
      %p204 = por %p202, %p203
      %p205 = scmp.ne.s32.totalorder %s193, %s194
      %p206 = scmp.eq.s32.totalorder %s97, 3
      %p207 = por %p205, %p206
      %p209 = scmp.ne.s32.totalorder %s194, %s208
      %p210 = scmp.eq.s32.totalorder %s97, 0
      %p211 = por %p209, %p210
      %s213 = sadd.s32 %s212, 1
      %p216 = scmp.eq.s32.totalorder %s91, 3
      %p217 = scmp.ne.s32.totalorder %s212, %s214
      %p218 = scmp.eq.s32.totalorder %s91, 0
      %p219 = por %p217, %p218
      %p220 = scmp.ne.s32.totalorder %s212, %s214
      %p221 = scmp.eq.s32.totalorder %s96, 3
      %p222 = por %p220, %p221
      %p223 = scmp.ne.s32.totalorder %s214, %s215
      %p224 = scmp.eq.s32.totalorder %s96, 0
      %p225 = por %p223, %p224
      %p226 = scmp.ne.s32.totalorder %s214, %s215
      %p227 = scmp.eq.s32.totalorder %s97, 3
      %p228 = por %p226, %p227
      %p230 = scmp.ne.s32.totalorder %s215, %s229
      %p231 = scmp.eq.s32.totalorder %s97, 0
      %p232 = por %p230, %p231
      %s234 = sadd.s32 %s233, 1
      %p237 = scmp.eq.s32.totalorder %s91, 3
      %p238 = scmp.ne.s32.totalorder %s233, %s235
      %p239 = scmp.eq.s32.totalorder %s91, 0
      %p240 = por %p238, %p239
      %p241 = scmp.ne.s32.totalorder %s233, %s235
      %p242 = scmp.eq.s32.totalorder %s96, 3
      %p243 = por %p241, %p242
      %p244 = scmp.ne.s32.totalorder %s235, %s236
      %p245 = scmp.eq.s32.totalorder %s96, 0
      %p246 = por %p244, %p245
      %p247 = scmp.ne.s32.totalorder %s235, %s236
      %p248 = scmp.eq.s32.totalorder %s97, 3
      %p249 = por %p247, %p248
      %p251 = scmp.ne.s32.totalorder %s236, %s250
      %p252 = scmp.eq.s32.totalorder %s97, 0
      %p253 = por %p251, %p252
      %s255 = sadd.s32 %s254, 1
      %p258 = scmp.eq.s32.totalorder %s91, 3
      %p259 = scmp.ne.s32.totalorder %s254, %s256
      %p260 = scmp.eq.s32.totalorder %s91, 0
      %p261 = por %p259, %p260
      %p262 = scmp.ne.s32.totalorder %s254, %s256
      %p263 = scmp.eq.s32.totalorder %s96, 3
      %p264 = por %p262, %p263
      %p265 = scmp.ne.s32.totalorder %s256, %s257
      %p266 = scmp.eq.s32.totalorder %s96, 0
      %p267 = por %p265, %p266
      %p268 = scmp.ne.s32.totalorder %s256, %s257
      %p269 = scmp.eq.s32.totalorder %s97, 3
      %p270 = por %p268, %p269
      %p272 = scmp.ne.s32.totalorder %s257, %s271
      %p273 = scmp.eq.s32.totalorder %s97, 0
      %p274 = por %p272, %p273
      %s276 = sadd.s32 %s275, 1
      %p279 = scmp.eq.s32.totalorder %s91, 3
      %p280 = scmp.ne.s32.totalorder %s275, %s277
      %p281 = scmp.eq.s32.totalorder %s91, 0
      %p282 = por %p280, %p281
      %p283 = scmp.ne.s32.totalorder %s275, %s277
      %p284 = scmp.eq.s32.totalorder %s96, 3
      %p285 = por %p283, %p284
      %p286 = scmp.ne.s32.totalorder %s277, %s278
      %p287 = scmp.eq.s32.totalorder %s96, 0
      %p288 = por %p286, %p287
      %p289 = scmp.ne.s32.totalorder %s277, %s278
      %p290 = scmp.eq.s32.totalorder %s97, 3
      %p291 = por %p289, %p290
      %p293 = scmp.ne.s32.totalorder %s278, %s292
      %p294 = scmp.eq.s32.totalorder %s97, 0
      %p295 = por %p293, %p294
      %s297 = sadd.s32 %s296, 1
      %p300 = scmp.eq.s32.totalorder %s91, 3
      %p301 = scmp.ne.s32.totalorder %s296, %s298
      %p302 = scmp.eq.s32.totalorder %s91, 0
      %p303 = por %p301, %p302
      %p304 = scmp.ne.s32.totalorder %s296, %s298
      %p305 = scmp.eq.s32.totalorder %s96, 3
      %p306 = por %p304, %p305
      %p307 = scmp.ne.s32.totalorder %s298, %s299
      %p308 = scmp.eq.s32.totalorder %s96, 0
      %p309 = por %p307, %p308
      %p310 = scmp.ne.s32.totalorder %s298, %s299
      %p311 = scmp.eq.s32.totalorder %s97, 3
      %p312 = por %p310, %p311
      %p314 = scmp.ne.s32.totalorder %s299, %s313
      %p315 = scmp.eq.s32.totalorder %s97, 0
      %p316 = por %p314, %p315
      %s318 = sadd.s32 %s317, 1
      %p321 = scmp.eq.s32.totalorder %s91, 3
      %p322 = scmp.ne.s32.totalorder %s317, %s319
      %p323 = scmp.eq.s32.totalorder %s91, 0
      %p324 = por %p322, %p323
      %p325 = scmp.ne.s32.totalorder %s317, %s319
      %p326 = scmp.eq.s32.totalorder %s96, 3
      %p327 = por %p325, %p326
      %p328 = scmp.ne.s32.totalorder %s319, %s320
      %p329 = scmp.eq.s32.totalorder %s96, 0
      %p330 = por %p328, %p329
      %p331 = scmp.ne.s32.totalorder %s319, %s320
      %p332 = scmp.eq.s32.totalorder %s97, 3
      %p333 = por %p331, %p332
      %p335 = scmp.ne.s32.totalorder %s320, %s334
      %p336 = scmp.eq.s32.totalorder %s97, 0
      %p337 = por %p335, %p336
      %s339 = sadd.s32 %s338, 1
      %p342 = scmp.eq.s32.totalorder %s91, 3
      %p343 = scmp.ne.s32.totalorder %s338, %s340
      %p344 = scmp.eq.s32.totalorder %s91, 0
      %p345 = por %p343, %p344
      %p346 = scmp.ne.s32.totalorder %s338, %s340
      %p347 = scmp.eq.s32.totalorder %s96, 3
      %p348 = por %p346, %p347
      %p349 = scmp.ne.s32.totalorder %s340, %s341
      %p350 = scmp.eq.s32.totalorder %s96, 0
      %p351 = por %p349, %p350
      %p352 = scmp.ne.s32.totalorder %s340, %s341
      %p353 = scmp.eq.s32.totalorder %s97, 3
      %p354 = por %p352, %p353
      %p356 = scmp.ne.s32.totalorder %s341, %s355
      %p357 = scmp.eq.s32.totalorder %s97, 0
      %p358 = por %p356, %p357
      %s360 = sadd.s32 %s359, 1
      %p363 = scmp.eq.s32.totalorder %s91, 3
      %p364 = scmp.ne.s32.totalorder %s359, %s361
      %p365 = scmp.eq.s32.totalorder %s91, 0
      %p366 = por %p364, %p365
      %p367 = scmp.ne.s32.totalorder %s359, %s361
      %p368 = scmp.eq.s32.totalorder %s96, 3
      %p369 = por %p367, %p368
      %p370 = scmp.ne.s32.totalorder %s361, %s362
      %p371 = scmp.eq.s32.totalorder %s96, 0
      %p372 = por %p370, %p371
      %p373 = scmp.ne.s32.totalorder %s361, %s362
      %p374 = scmp.eq.s32.totalorder %s97, 3
      %p375 = por %p373, %p374
      %p377 = scmp.ne.s32.totalorder %s362, %s376
      %p378 = scmp.eq.s32.totalorder %s97, 0
      %p379 = por %p377, %p378
      %s381 = sadd.s32 %s380, 1
      %p384 = scmp.eq.s32.totalorder %s91, 3
      %p385 = scmp.ne.s32.totalorder %s380, %s382
      %p386 = scmp.eq.s32.totalorder %s91, 0
      %p387 = por %p385, %p386
      %p388 = scmp.ne.s32.totalorder %s380, %s382
      %p389 = scmp.eq.s32.totalorder %s96, 3
      %p390 = por %p388, %p389
      %p391 = scmp.ne.s32.totalorder %s382, %s383
      %p392 = scmp.eq.s32.totalorder %s96, 0
      %p393 = por %p391, %p392
      %p394 = scmp.ne.s32.totalorder %s382, %s383
      %p395 = scmp.eq.s32.totalorder %s97, 3
      %p396 = por %p394, %p395
      %p398 = scmp.ne.s32.totalorder %s383, %s397
      %p399 = scmp.eq.s32.totalorder %s97, 0
      %p400 = por %p398, %p399
      %s402 = sadd.s32 %s401, 1
      %p405 = scmp.eq.s32.totalorder %s91, 3
      %p406 = scmp.ne.s32.totalorder %s401, %s403
      %p407 = scmp.eq.s32.totalorder %s91, 0
      %p408 = por %p406, %p407
      %p409 = scmp.ne.s32.totalorder %s401, %s403
      %p410 = scmp.eq.s32.totalorder %s96, 3
      %p411 = por %p409, %p410
      %p412 = scmp.ne.s32.totalorder %s403, %s404
      %p413 = scmp.eq.s32.totalorder %s96, 0
      %p414 = por %p412, %p413
      %p415 = scmp.ne.s32.totalorder %s403, %s404
      %p416 = scmp.eq.s32.totalorder %s97, 3
      %p417 = por %p415, %p416
      %p419 = scmp.ne.s32.totalorder %s404, %s418
      %p420 = scmp.eq.s32.totalorder %s97, 0
      %p421 = por %p419, %p420
      %s423 = sadd.s32 %s422, 1
      %p426 = scmp.eq.s32.totalorder %s91, 3
      %p427 = scmp.ne.s32.totalorder %s422, %s424
      %p428 = scmp.eq.s32.totalorder %s91, 0
      %p429 = por %p427, %p428
      %p430 = scmp.ne.s32.totalorder %s422, %s424
      %p431 = scmp.eq.s32.totalorder %s96, 3
      %p432 = por %p430, %p431
      %p433 = scmp.ne.s32.totalorder %s424, %s425
      %p434 = scmp.eq.s32.totalorder %s96, 0
      %p435 = por %p433, %p434
      %p436 = scmp.ne.s32.totalorder %s424, %s425
      %p437 = scmp.eq.s32.totalorder %s97, 3
      %p438 = por %p436, %p437
      %p440 = scmp.ne.s32.totalorder %s425, %s439
      %p441 = scmp.eq.s32.totalorder %s97, 0
      %p442 = por %p440, %p441
      %s444 = sadd.s32 %s443, 1
      %p447 = scmp.eq.s32.totalorder %s91, 3
      %p448 = scmp.ne.s32.totalorder %s443, %s445
      %p449 = scmp.eq.s32.totalorder %s91, 0
      %p450 = por %p448, %p449
      %p451 = scmp.ne.s32.totalorder %s443, %s445
      %p452 = scmp.eq.s32.totalorder %s96, 3
      %p453 = por %p451, %p452
      %p454 = scmp.ne.s32.totalorder %s445, %s446
      %p455 = scmp.eq.s32.totalorder %s96, 0
      %p456 = por %p454, %p455
      %p457 = scmp.ne.s32.totalorder %s445, %s446
      %p458 = scmp.eq.s32.totalorder %s97, 3
      %p459 = por %p457, %p458
      %p461 = scmp.ne.s32.totalorder %s446, %s460
      %p462 = scmp.eq.s32.totalorder %s97, 0
      %p463 = por %p461, %p462
      %s465 = sadd.s32 %s464, 1
      %p468 = scmp.eq.s32.totalorder %s91, 3
      %p469 = scmp.ne.s32.totalorder %s464, %s466
      %p470 = scmp.eq.s32.totalorder %s91, 0
      %p471 = por %p469, %p470
      %p472 = scmp.ne.s32.totalorder %s464, %s466
      %p473 = scmp.eq.s32.totalorder %s96, 3
      %p474 = por %p472, %p473
      %p475 = scmp.ne.s32.totalorder %s466, %s467
      %p476 = scmp.eq.s32.totalorder %s96, 0
      %p477 = por %p475, %p476
      %p478 = scmp.ne.s32.totalorder %s466, %s467
      %p479 = scmp.eq.s32.totalorder %s97, 3
      %p480 = por %p478, %p479
      %p482 = scmp.ne.s32.totalorder %s467, %s481
      %p483 = scmp.eq.s32.totalorder %s97, 0
      %p484 = por %p482, %p483
      %s486 = sadd.s32 %s485, 1
      %p489 = scmp.eq.s32.totalorder %s91, 3
      %p490 = scmp.ne.s32.totalorder %s485, %s487
      %p491 = scmp.eq.s32.totalorder %s91, 0
      %p492 = por %p490, %p491
      %p493 = scmp.ne.s32.totalorder %s485, %s487
      %p494 = scmp.eq.s32.totalorder %s96, 3
      %p495 = por %p493, %p494
      %p496 = scmp.ne.s32.totalorder %s487, %s488
      %p497 = scmp.eq.s32.totalorder %s96, 0
      %p498 = por %p496, %p497
      %p499 = scmp.ne.s32.totalorder %s487, %s488
      %p500 = scmp.eq.s32.totalorder %s97, 3
      %p501 = por %p499, %p500
      %p503 = scmp.ne.s32.totalorder %s488, %s502
      %p504 = scmp.eq.s32.totalorder %s97, 0
      %p505 = por %p503, %p504
      %s507 = sadd.s32 %s506, 1
      %p510 = scmp.eq.s32.totalorder %s91, 3
      %p511 = scmp.ne.s32.totalorder %s506, %s508
      %p512 = scmp.eq.s32.totalorder %s91, 0
      %p513 = por %p511, %p512
      %p514 = scmp.ne.s32.totalorder %s506, %s508
      %p515 = scmp.eq.s32.totalorder %s96, 3
      %p516 = por %p514, %p515
      %p517 = scmp.ne.s32.totalorder %s508, %s509
      %p518 = scmp.eq.s32.totalorder %s96, 0
      %p519 = por %p517, %p518
      %p520 = scmp.ne.s32.totalorder %s508, %s509
      %p521 = scmp.eq.s32.totalorder %s97, 3
      %p522 = por %p520, %p521
      %p524 = scmp.ne.s32.totalorder %s509, %s523
      %p525 = scmp.eq.s32.totalorder %s97, 0
      %p526 = por %p524, %p525
      %s528 = sadd.s32 %s527, 1
      %p531 = scmp.eq.s32.totalorder %s91, 3
      %p532 = scmp.ne.s32.totalorder %s527, %s529
      %p533 = scmp.eq.s32.totalorder %s91, 0
      %p534 = por %p532, %p533
      %p535 = scmp.ne.s32.totalorder %s527, %s529
      %p536 = scmp.eq.s32.totalorder %s96, 3
      %p537 = por %p535, %p536
      %p538 = scmp.ne.s32.totalorder %s529, %s530
      %p539 = scmp.eq.s32.totalorder %s96, 0
      %p540 = por %p538, %p539
      %p541 = scmp.ne.s32.totalorder %s529, %s530
      %p542 = scmp.eq.s32.totalorder %s97, 3
      %p543 = por %p541, %p542
      %p545 = scmp.ne.s32.totalorder %s530, %s544
      %p546 = scmp.eq.s32.totalorder %s97, 0
      %p547 = por %p545, %p546
      %s549 = sadd.s32 %s548, 1
      %p552 = scmp.eq.s32.totalorder %s91, 3
      %p553 = scmp.ne.s32.totalorder %s548, %s550
      %p554 = scmp.eq.s32.totalorder %s91, 0
      %p555 = por %p553, %p554
      %p556 = scmp.ne.s32.totalorder %s548, %s550
      %p557 = scmp.eq.s32.totalorder %s96, 3
      %p558 = por %p556, %p557
      %p559 = scmp.ne.s32.totalorder %s550, %s551
      %p560 = scmp.eq.s32.totalorder %s96, 0
      %p561 = por %p559, %p560
      %p562 = scmp.ne.s32.totalorder %s550, %s551
      %p563 = scmp.eq.s32.totalorder %s97, 3
      %p564 = por %p562, %p563
      %p566 = scmp.ne.s32.totalorder %s551, %s565
      %p567 = scmp.eq.s32.totalorder %s97, 0
      %p568 = por %p566, %p567
      %s570 = sadd.s32 %s569, 1
      %p573 = scmp.eq.s32.totalorder %s91, 3
      %p574 = scmp.ne.s32.totalorder %s569, %s571
      %p575 = scmp.eq.s32.totalorder %s91, 0
      %p576 = por %p574, %p575
      %p577 = scmp.ne.s32.totalorder %s569, %s571
      %p578 = scmp.eq.s32.totalorder %s96, 3
      %p579 = por %p577, %p578
      %p580 = scmp.ne.s32.totalorder %s571, %s572
      %p581 = scmp.eq.s32.totalorder %s96, 0
      %p582 = por %p580, %p581
      %p583 = scmp.ne.s32.totalorder %s571, %s572
      %p584 = scmp.eq.s32.totalorder %s97, 3
      %p585 = por %p583, %p584
      %p587 = scmp.ne.s32.totalorder %s572, %s586
      %p588 = scmp.eq.s32.totalorder %s97, 0
      %p589 = por %p587, %p588
      %s591 = sadd.s32 %s590, 1
      %p594 = scmp.eq.s32.totalorder %s91, 3
      %p595 = scmp.ne.s32.totalorder %s590, %s592
      %p596 = scmp.eq.s32.totalorder %s91, 0
      %p597 = por %p595, %p596
      %p598 = scmp.ne.s32.totalorder %s590, %s592
      %p599 = scmp.eq.s32.totalorder %s96, 3
      %p600 = por %p598, %p599
      %p601 = scmp.ne.s32.totalorder %s592, %s593
      %p602 = scmp.eq.s32.totalorder %s96, 0
      %p603 = por %p601, %p602
      %p604 = scmp.ne.s32.totalorder %s592, %s593
      %p605 = scmp.eq.s32.totalorder %s97, 3
      %p606 = por %p604, %p605
      %p608 = scmp.ne.s32.totalorder %s593, %s607
      %p609 = scmp.eq.s32.totalorder %s97, 0
      %p610 = por %p608, %p609
      %s612 = sadd.s32 %s611, 1
      %p615 = scmp.eq.s32.totalorder %s91, 3
      %p616 = scmp.ne.s32.totalorder %s611, %s613
      %p617 = scmp.eq.s32.totalorder %s91, 0
      %p618 = por %p616, %p617
      %p619 = scmp.ne.s32.totalorder %s611, %s613
      %p620 = scmp.eq.s32.totalorder %s96, 3
      %p621 = por %p619, %p620
      %p622 = scmp.ne.s32.totalorder %s613, %s614
      %p623 = scmp.eq.s32.totalorder %s96, 0
      %p624 = por %p622, %p623
      %p625 = scmp.ne.s32.totalorder %s613, %s614
      %p626 = scmp.eq.s32.totalorder %s97, 3
      %p627 = por %p625, %p626
      %p629 = scmp.ne.s32.totalorder %s614, %s628
      %p630 = scmp.eq.s32.totalorder %s97, 0
      %p631 = por %p629, %p630
      %s633 = sadd.s32 %s632, 1
      %p636 = scmp.eq.s32.totalorder %s91, 3
      %p637 = scmp.ne.s32.totalorder %s632, %s634
      %p638 = scmp.eq.s32.totalorder %s91, 0
      %p639 = por %p637, %p638
      %p640 = scmp.ne.s32.totalorder %s632, %s634
      %p641 = scmp.eq.s32.totalorder %s96, 3
      %p642 = por %p640, %p641
      %p643 = scmp.ne.s32.totalorder %s634, %s635
      %p644 = scmp.eq.s32.totalorder %s96, 0
      %p645 = por %p643, %p644
      %p646 = scmp.ne.s32.totalorder %s634, %s635
      %p647 = scmp.eq.s32.totalorder %s97, 3
      %p648 = por %p646, %p647
      %p650 = scmp.ne.s32.totalorder %s635, %s649
      %p651 = scmp.eq.s32.totalorder %s97, 0
      %p652 = por %p650, %p651
      %s654 = sadd.s32 %s653, 1
      %p657 = scmp.eq.s32.totalorder %s91, 3
      %p658 = scmp.ne.s32.totalorder %s653, %s655
      %p659 = scmp.eq.s32.totalorder %s91, 0
      %p660 = por %p658, %p659
      %p661 = scmp.ne.s32.totalorder %s653, %s655
      %p662 = scmp.eq.s32.totalorder %s96, 3
      %p663 = por %p661, %p662
      %p664 = scmp.ne.s32.totalorder %s655, %s656
      %p665 = scmp.eq.s32.totalorder %s96, 0
      %p666 = por %p664, %p665
      %p667 = scmp.ne.s32.totalorder %s655, %s656
      %p668 = scmp.eq.s32.totalorder %s97, 3
      %p669 = por %p667, %p668
      %p671 = scmp.ne.s32.totalorder %s656, %s670
      %p672 = scmp.eq.s32.totalorder %s97, 0
      %p673 = por %p671, %p672
      %s675 = sadd.s32 %s674, 1
      %p678 = scmp.eq.s32.totalorder %s91, 3
      %p679 = scmp.ne.s32.totalorder %s674, %s676
      %p680 = scmp.eq.s32.totalorder %s91, 0
      %p681 = por %p679, %p680
      %p682 = scmp.ne.s32.totalorder %s674, %s676
      %p683 = scmp.eq.s32.totalorder %s96, 3
      %p684 = por %p682, %p683
      %p685 = scmp.ne.s32.totalorder %s676, %s677
      %p686 = scmp.eq.s32.totalorder %s96, 0
      %p687 = por %p685, %p686
      %p688 = scmp.ne.s32.totalorder %s676, %s677
      %p689 = scmp.eq.s32.totalorder %s97, 3
      %p690 = por %p688, %p689
      %p692 = scmp.ne.s32.totalorder %s677, %s691
      %p693 = scmp.eq.s32.totalorder %s97, 0
      %p694 = por %p692, %p693
      %s696 = sadd.s32 %s695, 1
      %p699 = scmp.eq.s32.totalorder %s91, 3
      %p700 = scmp.ne.s32.totalorder %s695, %s697
      %p701 = scmp.eq.s32.totalorder %s91, 0
      %p702 = por %p700, %p701
      %p703 = scmp.ne.s32.totalorder %s695, %s697
      %p704 = scmp.eq.s32.totalorder %s96, 3
      %p705 = por %p703, %p704
      %p706 = scmp.ne.s32.totalorder %s697, %s698
      %p707 = scmp.eq.s32.totalorder %s96, 0
      %p708 = por %p706, %p707
      %p709 = scmp.ne.s32.totalorder %s697, %s698
      %p710 = scmp.eq.s32.totalorder %s97, 3
      %p711 = por %p709, %p710
      %p713 = scmp.ne.s32.totalorder %s698, %s712
      %p714 = scmp.eq.s32.totalorder %s97, 0
      %p715 = por %p713, %p714
      %s717 = sadd.s32 %s716, 1
      %p720 = scmp.eq.s32.totalorder %s91, 3
      %p721 = scmp.ne.s32.totalorder %s716, %s718
      %p722 = scmp.eq.s32.totalorder %s91, 0
      %p723 = por %p721, %p722
      %p724 = scmp.ne.s32.totalorder %s716, %s718
      %p725 = scmp.eq.s32.totalorder %s96, 3
      %p726 = por %p724, %p725
      %p727 = scmp.ne.s32.totalorder %s718, %s719
      %p728 = scmp.eq.s32.totalorder %s96, 0
      %p729 = por %p727, %p728
      %p730 = scmp.ne.s32.totalorder %s718, %s719
      %p731 = scmp.eq.s32.totalorder %s97, 3
      %p732 = por %p730, %p731
      %p734 = scmp.ne.s32.totalorder %s719, %s733
      %p735 = scmp.eq.s32.totalorder %s97, 0
      %p736 = por %p734, %p735
      %s738 = sadd.s32 %s737, 1
      %p741 = scmp.eq.s32.totalorder %s91, 3
      %p742 = scmp.ne.s32.totalorder %s737, %s739
      %p743 = scmp.eq.s32.totalorder %s91, 0
      %p744 = por %p742, %p743
      %p745 = scmp.ne.s32.totalorder %s737, %s739
      %p746 = scmp.eq.s32.totalorder %s96, 3
      %p747 = por %p745, %p746
      %p748 = scmp.ne.s32.totalorder %s739, %s740
      %p749 = scmp.eq.s32.totalorder %s96, 0
      %p750 = por %p748, %p749
      %p751 = scmp.ne.s32.totalorder %s739, %s740
      %p752 = scmp.eq.s32.totalorder %s97, 3
      %p753 = por %p751, %p752
      %p755 = scmp.ne.s32.totalorder %s740, %s754
      %p756 = scmp.eq.s32.totalorder %s97, 0
      %p757 = por %p755, %p756
      %s759 = sadd.s32 %s758, 1
      %p762 = scmp.eq.s32.totalorder %s91, 3
      %p763 = scmp.ne.s32.totalorder %s758, %s760
      %p764 = scmp.eq.s32.totalorder %s91, 0
      %p765 = por %p763, %p764
      %p766 = scmp.ne.s32.totalorder %s758, %s760
      %p767 = scmp.eq.s32.totalorder %s96, 3
      %p768 = por %p766, %p767
      %p769 = scmp.ne.s32.totalorder %s760, %s761
      %p770 = scmp.eq.s32.totalorder %s96, 0
      %p771 = por %p769, %p770
      %p772 = scmp.ne.s32.totalorder %s760, %s761
      %p773 = scmp.eq.s32.totalorder %s97, 3
      %p774 = por %p772, %p773
      %p776 = scmp.ne.s32.totalorder %s761, %s775
      %p777 = scmp.eq.s32.totalorder %s97, 0
      %p778 = por %p776, %p777
      %s780 = sadd.s32 %s779, 1
      %p783 = scmp.eq.s32.totalorder %s91, 3
      %p784 = scmp.ne.s32.totalorder %s779, %s781
      %p785 = scmp.eq.s32.totalorder %s91, 0
      %p786 = por %p784, %p785
      %p787 = scmp.ne.s32.totalorder %s779, %s781
      %p788 = scmp.eq.s32.totalorder %s96, 3
      %p789 = por %p787, %p788
      %p790 = scmp.ne.s32.totalorder %s781, %s782
      %p791 = scmp.eq.s32.totalorder %s96, 0
      %p792 = por %p790, %p791
      %p793 = scmp.ne.s32.totalorder %s781, %s782
      %p794 = scmp.eq.s32.totalorder %s97, 3
      %p795 = por %p793, %p794
      %p797 = scmp.ne.s32.totalorder %s782, %s796
      %p798 = scmp.eq.s32.totalorder %s97, 0
      %p799 = por %p797, %p798
      %s801 = sadd.s32 %s800, 1
      %p804 = scmp.eq.s32.totalorder %s91, 3
      %p805 = scmp.ne.s32.totalorder %s800, %s802
      %p806 = scmp.eq.s32.totalorder %s91, 0
      %p807 = por %p805, %p806
      %p808 = scmp.ne.s32.totalorder %s800, %s802
      %p809 = scmp.eq.s32.totalorder %s96, 3
      %p810 = por %p808, %p809
      %p811 = scmp.ne.s32.totalorder %s802, %s803
      %p812 = scmp.eq.s32.totalorder %s96, 0
      %p813 = por %p811, %p812
      %p814 = scmp.ne.s32.totalorder %s802, %s803
      %p815 = scmp.eq.s32.totalorder %s97, 3
      %p816 = por %p814, %p815
      %p818 = scmp.ne.s32.totalorder %s803, %s817
      %p819 = scmp.eq.s32.totalorder %s97, 0
      %p820 = por %p818, %p819
      %s822 = sadd.s32 %s821, 1
      %p825 = scmp.eq.s32.totalorder %s91, 3
      %p826 = scmp.ne.s32.totalorder %s821, %s823
      %p827 = scmp.eq.s32.totalorder %s91, 0
      %p828 = por %p826, %p827
      %p829 = scmp.ne.s32.totalorder %s821, %s823
      %p830 = scmp.eq.s32.totalorder %s96, 3
      %p831 = por %p829, %p830
      %p832 = scmp.ne.s32.totalorder %s823, %s824
      %p833 = scmp.eq.s32.totalorder %s96, 0
      %p834 = por %p832, %p833
      %p835 = scmp.ne.s32.totalorder %s823, %s824
      %p836 = scmp.eq.s32.totalorder %s97, 3
      %p837 = por %p835, %p836
      %p839 = scmp.ne.s32.totalorder %s824, %s838
      %p840 = scmp.eq.s32.totalorder %s97, 0
      %p841 = por %p839, %p840
      %s843 = sadd.s32 %s842, 1
      %p846 = scmp.eq.s32.totalorder %s91, 3
      %p847 = scmp.ne.s32.totalorder %s842, %s844
      %p848 = scmp.eq.s32.totalorder %s91, 0
      %p849 = por %p847, %p848
      %p850 = scmp.ne.s32.totalorder %s842, %s844
      %p851 = scmp.eq.s32.totalorder %s96, 3
      %p852 = por %p850, %p851
      %p853 = scmp.ne.s32.totalorder %s844, %s845
      %p854 = scmp.eq.s32.totalorder %s96, 0
      %p855 = por %p853, %p854
      %p856 = scmp.ne.s32.totalorder %s844, %s845
      %p857 = scmp.eq.s32.totalorder %s97, 3
      %p858 = por %p856, %p857
      %p860 = scmp.ne.s32.totalorder %s845, %s859
      %p861 = scmp.eq.s32.totalorder %s97, 0
      %p862 = por %p860, %p861
      %s863 = ssub.s32 %s98, %s110
      %p864 = scmp.eq.s32.totalorder %s863, 0
      %s866 = sadd.s32 %s865, 1
      %s867 = scalar_select %p864, %s865, %s866
      %p870 = pneg %p864
      %p871 = scmp.eq.s32.totalorder %s91, 3
      %p872 = por %p870, %p871
      %p873 = scmp.ne.s32.totalorder %s865, %s868
      %p874 = scmp.eq.s32.totalorder %s91, 0
      %p875 = por %p873, %p874
      %p876 = scmp.ne.s32.totalorder %s865, %s868
      %p877 = scmp.eq.s32.totalorder %s96, 3
      %p878 = por %p876, %p877
      %p879 = scmp.ne.s32.totalorder %s868, %s869
      %p880 = scmp.eq.s32.totalorder %s96, 0
      %p881 = por %p879, %p880
      %p882 = scmp.ne.s32.totalorder %s868, %s869
      %p883 = scmp.eq.s32.totalorder %s97, 3
      %p884 = por %p882, %p883
      %p886 = scmp.ne.s32.totalorder %s869, %s885
      %p887 = scmp.eq.s32.totalorder %s97, 0
      %p888 = por %p886, %p887
      %s889 = ssub.s32 %s98, %s110
      %p890 = scmp.eq.s32.totalorder %s889, 0
      %s892 = sadd.s32 %s891, 1
      %s893 = scalar_select %p890, %s891, %s892
      %p896 = pneg %p890
      %p897 = scmp.eq.s32.totalorder %s91, 3
      %p898 = por %p896, %p897
      %p899 = scmp.ne.s32.totalorder %s891, %s894
      %p900 = scmp.eq.s32.totalorder %s91, 0
      %p901 = por %p899, %p900
      %p902 = scmp.ne.s32.totalorder %s891, %s894
      %p903 = scmp.eq.s32.totalorder %s96, 3
      %p904 = por %p902, %p903
      %p905 = scmp.ne.s32.totalorder %s894, %s895
      %p906 = scmp.eq.s32.totalorder %s96, 0
      %p907 = por %p905, %p906
      %p908 = scmp.ne.s32.totalorder %s894, %s895
      %p909 = scmp.eq.s32.totalorder %s97, 3
      %p910 = por %p908, %p909
      %p912 = scmp.ne.s32.totalorder %s895, %s911
      %p913 = scmp.eq.s32.totalorder %s97, 0
      %p914 = por %p912, %p913
      %p915 = scmp.le.s32.totalorder 1, %s91
      %p916 = scmp.lt.s32.totalorder %s91, 5
      %p917 = pnand %p915, %p916
      %p918 = pneg %p917
      // Predicated region
      $region9: #{deco_plus_decoder_forward.2} parent=5 // pred_check
        _
      $region10: #{deco_plus_decoder_forward.2} parent=5 // pred_check_branch
        %920 = sbr.rel (%p917) target = $region12
      $region11: #{deco_plus_decoder_forward.2} parent=5 // pred_region
        %s921 = ssub.s32 %s91, 1
        // Predicated region
        $region13: #{deco_plus_decoder_forward.2} parent=11 // pred_check
          %p922 = pneg %p204
        $region14: #{deco_plus_decoder_forward.2} parent=11 // pred_check_branch
          %924 = sbr.rel (%p922) target = $region16
        $region15: #{deco_plus_decoder_forward.2} parent=11 // pred_region
          _
        $region16: #{deco_plus_decoder_forward.2} parent=11 // pred_fallthru
          _
        // Predicated region
        $region17: #{deco_plus_decoder_forward.2} parent=11 // pred_check
          %p925 = pneg %p225
        $region18: #{deco_plus_decoder_forward.2} parent=11 // pred_check_branch
          %927 = sbr.rel (%p925) target = $region20
        $region19: #{deco_plus_decoder_forward.2} parent=11 // pred_region
          _
        $region20: #{deco_plus_decoder_forward.2} parent=11 // pred_fallthru
          _
        // Predicated region
        $region21: #{deco_plus_decoder_forward.2} parent=11 // pred_check
          %p928 = pneg %p246
        $region22: #{deco_plus_decoder_forward.2} parent=11 // pred_check_branch
          %930 = sbr.rel (%p928) target = $region24
        $region23: #{deco_plus_decoder_forward.2} parent=11 // pred_region
          _
        $region24: #{deco_plus_decoder_forward.2} parent=11 // pred_fallthru
          _
        // Predicated region
        $region25: #{deco_plus_decoder_forward.2} parent=11 // pred_check
          %p931 = pneg %p267
        $region26: #{deco_plus_decoder_forward.2} parent=11 // pred_check_branch
          %933 = sbr.rel (%p931) target = $region28
        $region27: #{deco_plus_decoder_forward.2} parent=11 // pred_region
          _
        $region28: #{deco_plus_decoder_forward.2} parent=11 // pred_fallthru
          _
        // Predicated region
        $region29: #{deco_plus_decoder_forward.2} parent=11 // pred_check
          %p934 = pneg %p288
        $region30: #{deco_plus_decoder_forward.2} parent=11 // pred_check_branch
          %936 = sbr.rel (%p934) target = $region32
        $region31: #{deco_plus_decoder_forward.2} parent=11 // pred_region
          _
        $region32: #{deco_plus_decoder_forward.2} parent=11 // pred_fallthru
          _
        // Predicated region
        $region33: #{deco_plus_decoder_forward.2} parent=11 // pred_check
          %p937 = pneg %p309
        $region34: #{deco_plus_decoder_forward.2} parent=11 // pred_check_branch
          %939 = sbr.rel (%p937) target = $region36
        $region35: #{deco_plus_decoder_forward.2} parent=11 // pred_region
          _
        $region36: #{deco_plus_decoder_forward.2} parent=11 // pred_fallthru
          _
        // Predicated region
        $region37: #{deco_plus_decoder_forward.2} parent=11 // pred_check
          %p940 = pneg %p330
        $region38: #{deco_plus_decoder_forward.2} parent=11 // pred_check_branch
          %942 = sbr.rel (%p940) target = $region40
        $region39: #{deco_plus_decoder_forward.2} parent=11 // pred_region
          _
        $region40: #{deco_plus_decoder_forward.2} parent=11 // pred_fallthru
          _
        // Predicated region
        $region41: #{deco_plus_decoder_forward.2} parent=11 // pred_check
          %p943 = pneg %p351
        $region42: #{deco_plus_decoder_forward.2} parent=11 // pred_check_branch
          %945 = sbr.rel (%p943) target = $region44
        $region43: #{deco_plus_decoder_forward.2} parent=11 // pred_region
          _
        $region44: #{deco_plus_decoder_forward.2} parent=11 // pred_fallthru
          _
        // Predicated region
        $region45: #{deco_plus_decoder_forward.2} parent=11 // pred_check
          %p946 = pneg %p372
        $region46: #{deco_plus_decoder_forward.2} parent=11 // pred_check_branch
          %948 = sbr.rel (%p946) target = $region48
        $region47: #{deco_plus_decoder_forward.2} parent=11 // pred_region
          _
        $region48: #{deco_plus_decoder_forward.2} parent=11 // pred_fallthru
          _
        // Predicated region
        $region49: #{deco_plus_decoder_forward.2} parent=11 // pred_check
          %p949 = pneg %p393
        $region50: #{deco_plus_decoder_forward.2} parent=11 // pred_check_branch
          %951 = sbr.rel (%p949) target = $region52
        $region51: #{deco_plus_decoder_forward.2} parent=11 // pred_region
          %953 = vsyncadd [#allocation10], 0
          %s955 = sshll.u32 %s25, 4
          %s956 = int_to_ptr.hbm [resolvable:$true] %s955
          %s957 = sshll.u32 [#allocation9], 4
          %s958 = int_to_ptr.vmem [resolvable:$true] %s957
          %960 = dma.hbm_to_vmem [thread:$0]  %s956, 16, %s958, [#allocation10]
        $region52: #{deco_plus_decoder_forward.2} parent=11 // pred_fallthru
          _
        // Predicated region
        $region53: #{deco_plus_decoder_forward.2} parent=11 // pred_check
          %p961 = pneg %p414
        $region54: #{deco_plus_decoder_forward.2} parent=11 // pred_check_branch
          %963 = sbr.rel (%p961) target = $region56
        $region55: #{deco_plus_decoder_forward.2} parent=11 // pred_region
          %965 = vsyncadd [#allocation10], 0
          %s967 = sshll.u32 %s27, 4
          %s968 = int_to_ptr.hbm [resolvable:$true] %s967
          %s969 = sshll.u32 [#allocation11], 4
          %s970 = int_to_ptr.vmem [resolvable:$true] %s969
          %972 = dma.hbm_to_vmem [thread:$0]  %s968, 16, %s970, [#allocation10]
        $region56: #{deco_plus_decoder_forward.2} parent=11 // pred_fallthru
          _
        // Predicated region
        $region57: #{deco_plus_decoder_forward.2} parent=11 // pred_check
          %p973 = pneg %p435
        $region58: #{deco_plus_decoder_forward.2} parent=11 // pred_check_branch
          %975 = sbr.rel (%p973) target = $region60
        $region59: #{deco_plus_decoder_forward.2} parent=11 // pred_region
          %977 = vsyncadd [#allocation13], 0
          %s979 = sshll.u32 %s29, 4
          %s980 = int_to_ptr.hbm [resolvable:$true] %s979
          %s981 = sshll.u32 [#allocation12], 4
          %s982 = int_to_ptr.vmem [resolvable:$true] %s981
          %984 = dma.hbm_to_vmem [thread:$0]  %s980, 16, %s982, [#allocation13]
        $region60: #{deco_plus_decoder_forward.2} parent=11 // pred_fallthru
          _
        // Predicated region
        $region61: #{deco_plus_decoder_forward.2} parent=11 // pred_check
          %p985 = pneg %p456
        $region62: #{deco_plus_decoder_forward.2} parent=11 // pred_check_branch
          %987 = sbr.rel (%p985) target = $region64
        $region63: #{deco_plus_decoder_forward.2} parent=11 // pred_region
          _
        $region64: #{deco_plus_decoder_forward.2} parent=11 // pred_fallthru
          _
        // Predicated region
        $region65: #{deco_plus_decoder_forward.2} parent=11 // pred_check
          %p988 = pneg %p477
        $region66: #{deco_plus_decoder_forward.2} parent=11 // pred_check_branch
          %990 = sbr.rel (%p988) target = $region68
        $region67: #{deco_plus_decoder_forward.2} parent=11 // pred_region
          %992 = vsyncadd [#allocation13], 0
          %s994 = sshll.u32 %s33, 4
          %s995 = int_to_ptr.hbm [resolvable:$true] %s994
          %s996 = sshll.u32 [#allocation14], 4
          %s997 = int_to_ptr.vmem [resolvable:$true] %s996
          %999 = dma.hbm_to_vmem [thread:$0]  %s995, 16, %s997, [#allocation13]
        $region68: #{deco_plus_decoder_forward.2} parent=11 // pred_fallthru
          _
        // Predicated region
        $region69: #{deco_plus_decoder_forward.2} parent=11 // pred_check
          %p1000 = pneg %p498
        $region70: #{deco_plus_decoder_forward.2} parent=11 // pred_check_branch
          %1002 = sbr.rel (%p1000) target = $region72
        $region71: #{deco_plus_decoder_forward.2} parent=11 // pred_region
          _
        $region72: #{deco_plus_decoder_forward.2} parent=11 // pred_fallthru
          _
        // Predicated region
        $region73: #{deco_plus_decoder_forward.2} parent=11 // pred_check
          %p1003 = pneg %p519
        $region74: #{deco_plus_decoder_forward.2} parent=11 // pred_check_branch
          %1005 = sbr.rel (%p1003) target = $region76
        $region75: #{deco_plus_decoder_forward.2} parent=11 // pred_region
          %1007 = vsyncadd [#allocation16], 0
          %s1009 = sshll.u32 %s37, 4
          %s1010 = int_to_ptr.hbm [resolvable:$true] %s1009
          %s1011 = sshll.u32 [#allocation15], 4
          %s1012 = int_to_ptr.vmem [resolvable:$true] %s1011
          %1014 = dma.hbm_to_vmem [thread:$0]  %s1010, 16, %s1012, [#allocation16]
        $region76: #{deco_plus_decoder_forward.2} parent=11 // pred_fallthru
          _
        // Predicated region
        $region77: #{deco_plus_decoder_forward.2} parent=11 // pred_check
          %p1015 = pneg %p540
        $region78: #{deco_plus_decoder_forward.2} parent=11 // pred_check_branch
          %1017 = sbr.rel (%p1015) target = $region80
        $region79: #{deco_plus_decoder_forward.2} parent=11 // pred_region
          _
        $region80: #{deco_plus_decoder_forward.2} parent=11 // pred_fallthru
          _
        // Predicated region
        $region81: #{deco_plus_decoder_forward.2} parent=11 // pred_check
          %p1018 = pneg %p561
        $region82: #{deco_plus_decoder_forward.2} parent=11 // pred_check_branch
          %1020 = sbr.rel (%p1018) target = $region84
        $region83: #{deco_plus_decoder_forward.2} parent=11 // pred_region
          %1022 = vsyncadd [#allocation16], 0
          %s1024 = sshll.u32 %s41, 4
          %s1025 = int_to_ptr.hbm [resolvable:$true] %s1024
          %s1026 = sshll.u32 [#allocation17], 4
          %s1027 = int_to_ptr.vmem [resolvable:$true] %s1026
          %1029 = dma.hbm_to_vmem [thread:$0]  %s1025, 16, %s1027, [#allocation16]
        $region84: #{deco_plus_decoder_forward.2} parent=11 // pred_fallthru
          _
        // Predicated region
        $region85: #{deco_plus_decoder_forward.2} parent=11 // pred_check
          %p1030 = pneg %p582
        $region86: #{deco_plus_decoder_forward.2} parent=11 // pred_check_branch
          %1032 = sbr.rel (%p1030) target = $region88
        $region87: #{deco_plus_decoder_forward.2} parent=11 // pred_region
          %1034 = vsyncadd [#allocation19], 0
          %s1036 = sshll.u32 %s43, 4
          %s1037 = int_to_ptr.hbm [resolvable:$true] %s1036
          %s1038 = sshll.u32 [#allocation18], 4
          %s1039 = int_to_ptr.vmem [resolvable:$true] %s1038
          %1041 = dma.hbm_to_vmem [thread:$0]  %s1037, 16, %s1039, [#allocation19]
        $region88: #{deco_plus_decoder_forward.2} parent=11 // pred_fallthru
          _
        // Predicated region
        $region89: #{deco_plus_decoder_forward.2} parent=11 // pred_check
          %p1042 = pneg %p603
        $region90: #{deco_plus_decoder_forward.2} parent=11 // pred_check_branch
          %1044 = sbr.rel (%p1042) target = $region92
        $region91: #{deco_plus_decoder_forward.2} parent=11 // pred_region
          %1046 = vsyncadd [#allocation19], 0
          %s1048 = sshll.u32 %s45, 4
          %s1049 = int_to_ptr.hbm [resolvable:$true] %s1048
          %s1050 = sshll.u32 [#allocation20], 4
          %s1051 = int_to_ptr.vmem [resolvable:$true] %s1050
          %1053 = dma.hbm_to_vmem [thread:$0]  %s1049, 16, %s1051, [#allocation19]
        $region92: #{deco_plus_decoder_forward.2} parent=11 // pred_fallthru
          _
        // Predicated region
        $region93: #{deco_plus_decoder_forward.2} parent=11 // pred_check
          %p1054 = pneg %p624
        $region94: #{deco_plus_decoder_forward.2} parent=11 // pred_check_branch
          %1056 = sbr.rel (%p1054) target = $region96
        $region95: #{deco_plus_decoder_forward.2} parent=11 // pred_region
          _
        $region96: #{deco_plus_decoder_forward.2} parent=11 // pred_fallthru
          _
        // Predicated region
        $region97: #{deco_plus_decoder_forward.2} parent=11 // pred_check
          %p1057 = pneg %p645
        $region98: #{deco_plus_decoder_forward.2} parent=11 // pred_check_branch
          %1059 = sbr.rel (%p1057) target = $region100
        $region99: #{deco_plus_decoder_forward.2} parent=11 // pred_region
          %1061 = vsyncadd [#allocation22], 0
          %s1063 = sshll.u32 %s49, 4
          %s1064 = int_to_ptr.hbm [resolvable:$true] %s1063
          %s1065 = sshll.u32 [#allocation21], 4
          %s1066 = int_to_ptr.vmem [resolvable:$true] %s1065
          %1068 = dma.hbm_to_vmem [thread:$0]  %s1064, 16, %s1066, [#allocation22]
        $region100: #{deco_plus_decoder_forward.2} parent=11 // pred_fallthru
          _
        // Predicated region
        $region101: #{deco_plus_decoder_forward.2} parent=11 // pred_check
          %p1069 = pneg %p666
        $region102: #{deco_plus_decoder_forward.2} parent=11 // pred_check_branch
          %1071 = sbr.rel (%p1069) target = $region104
        $region103: #{deco_plus_decoder_forward.2} parent=11 // pred_region
          _
        $region104: #{deco_plus_decoder_forward.2} parent=11 // pred_fallthru
          _
        // Predicated region
        $region105: #{deco_plus_decoder_forward.2} parent=11 // pred_check
          %p1072 = pneg %p687
        $region106: #{deco_plus_decoder_forward.2} parent=11 // pred_check_branch
          %1074 = sbr.rel (%p1072) target = $region108
        $region107: #{deco_plus_decoder_forward.2} parent=11 // pred_region
          %1076 = vsyncadd [#allocation22], 0
          %s1078 = sshll.u32 %s53, 4
          %s1079 = int_to_ptr.hbm [resolvable:$true] %s1078
          %s1080 = sshll.u32 [#allocation23], 4
          %s1081 = int_to_ptr.vmem [resolvable:$true] %s1080
          %1083 = dma.hbm_to_vmem [thread:$0]  %s1079, 16, %s1081, [#allocation22]
        $region108: #{deco_plus_decoder_forward.2} parent=11 // pred_fallthru
          _
        // Predicated region
        $region109: #{deco_plus_decoder_forward.2} parent=11 // pred_check
          %p1084 = pneg %p708
        $region110: #{deco_plus_decoder_forward.2} parent=11 // pred_check_branch
          %1086 = sbr.rel (%p1084) target = $region112
        $region111: #{deco_plus_decoder_forward.2} parent=11 // pred_region
          %1088 = vsyncadd [#allocation25], 0
          %s1090 = sshll.u32 %s55, 4
          %s1091 = int_to_ptr.hbm [resolvable:$true] %s1090
          %s1092 = sshll.u32 [#allocation24], 4
          %s1093 = int_to_ptr.vmem [resolvable:$true] %s1092
          %1095 = dma.hbm_to_vmem [thread:$0]  %s1091, 16, %s1093, [#allocation25]
        $region112: #{deco_plus_decoder_forward.2} parent=11 // pred_fallthru
          _
        // Predicated region
        $region113: #{deco_plus_decoder_forward.2} parent=11 // pred_check
          %p1096 = pneg %p729
        $region114: #{deco_plus_decoder_forward.2} parent=11 // pred_check_branch
          %1098 = sbr.rel (%p1096) target = $region116
        $region115: #{deco_plus_decoder_forward.2} parent=11 // pred_region
          %1100 = vsyncadd [#allocation25], 0
          %s1102 = sshll.u32 %s57, 4
          %s1103 = int_to_ptr.hbm [resolvable:$true] %s1102
          %s1104 = sshll.u32 [#allocation26], 4
          %s1105 = int_to_ptr.vmem [resolvable:$true] %s1104
          %1107 = dma.hbm_to_vmem [thread:$0]  %s1103, 16, %s1105, [#allocation25]
        $region116: #{deco_plus_decoder_forward.2} parent=11 // pred_fallthru
          _
        // Predicated region
        $region117: #{deco_plus_decoder_forward.2} parent=11 // pred_check
          %p1108 = pneg %p750
        $region118: #{deco_plus_decoder_forward.2} parent=11 // pred_check_branch
          %1110 = sbr.rel (%p1108) target = $region120
        $region119: #{deco_plus_decoder_forward.2} parent=11 // pred_region
          _
        $region120: #{deco_plus_decoder_forward.2} parent=11 // pred_fallthru
          _
        // Predicated region
        $region121: #{deco_plus_decoder_forward.2} parent=11 // pred_check
          %p1111 = pneg %p771
        $region122: #{deco_plus_decoder_forward.2} parent=11 // pred_check_branch
          %1113 = sbr.rel (%p1111) target = $region124
        $region123: #{deco_plus_decoder_forward.2} parent=11 // pred_region
          %1115 = vsyncadd [#allocation28], 0
          %s1117 = sshll.u32 %s61, 4
          %s1118 = int_to_ptr.hbm [resolvable:$true] %s1117
          %s1119 = sshll.u32 [#allocation27], 4
          %s1120 = int_to_ptr.vmem [resolvable:$true] %s1119
          %1122 = dma.hbm_to_vmem [thread:$0]  %s1118, 16, %s1120, [#allocation28]
        $region124: #{deco_plus_decoder_forward.2} parent=11 // pred_fallthru
          _
        // Predicated region
        $region125: #{deco_plus_decoder_forward.2} parent=11 // pred_check
          %p1123 = pneg %p792
        $region126: #{deco_plus_decoder_forward.2} parent=11 // pred_check_branch
          %1125 = sbr.rel (%p1123) target = $region128
        $region127: #{deco_plus_decoder_forward.2} parent=11 // pred_region
          _
        $region128: #{deco_plus_decoder_forward.2} parent=11 // pred_fallthru
          _
        // Predicated region
        $region129: #{deco_plus_decoder_forward.2} parent=11 // pred_check
          %p1126 = pneg %p813
        $region130: #{deco_plus_decoder_forward.2} parent=11 // pred_check_branch
          %1128 = sbr.rel (%p1126) target = $region132
        $region131: #{deco_plus_decoder_forward.2} parent=11 // pred_region
          %1130 = vsyncadd [#allocation28], 0
          %s1132 = sshll.u32 %s65, 4
          %s1133 = int_to_ptr.hbm [resolvable:$true] %s1132
          %s1134 = sshll.u32 [#allocation29], 4
          %s1135 = int_to_ptr.vmem [resolvable:$true] %s1134
          %1137 = dma.hbm_to_vmem [thread:$0]  %s1133, 16, %s1135, [#allocation28]
        $region132: #{deco_plus_decoder_forward.2} parent=11 // pred_fallthru
          _
        // Predicated region
        $region133: #{deco_plus_decoder_forward.2} parent=11 // pred_check
          %p1138 = pneg %p834
        $region134: #{deco_plus_decoder_forward.2} parent=11 // pred_check_branch
          %1140 = sbr.rel (%p1138) target = $region136
        $region135: #{deco_plus_decoder_forward.2} parent=11 // pred_region
          _
        $region136: #{deco_plus_decoder_forward.2} parent=11 // pred_fallthru
          _
        // Predicated region
        $region137: #{deco_plus_decoder_forward.2} parent=11 // pred_check
          %p1141 = pneg %p855
        $region138: #{deco_plus_decoder_forward.2} parent=11 // pred_check_branch
          %1143 = sbr.rel (%p1141) target = $region140
        $region139: #{deco_plus_decoder_forward.2} parent=11 // pred_region
          %1145 = vsyncadd [#allocation31], 0
          %s1147 = sshll.u32 %s69, 4
          %s1148 = int_to_ptr.hbm [resolvable:$true] %s1147
          %s1149 = sshll.u32 [#allocation30], 4
          %s1150 = int_to_ptr.vmem [resolvable:$true] %s1149
          %1152 = dma.hbm_to_vmem [thread:$0]  %s1148, 16, %s1150, [#allocation31]
        $region140: #{deco_plus_decoder_forward.2} parent=11 // pred_fallthru
          _
      $region12: #{deco_plus_decoder_forward.2} parent=5 // pred_fallthru
        _
      %p1153 = scmp.lt.s32.totalorder %s91, 4
      // Predicated region
      $region141: #{deco_plus_decoder_forward.2} parent=5 // pred_check
        %p1154 = pneg %p1153
      $region142: #{deco_plus_decoder_forward.2} parent=5 // pred_check_branch
        %1156 = sbr.rel (%p1154) target = $region144
      $region143: #{deco_plus_decoder_forward.2} parent=5 // pred_region
        // Predicated region
        $region145: #{deco_plus_decoder_forward.2} parent=143 // pred_check
          %p1157 = pneg %p123
        $region146: #{deco_plus_decoder_forward.2} parent=143 // pred_check_branch
          %1159 = sbr.rel (%p1157) target = $region148
        $region147: #{deco_plus_decoder_forward.2} parent=143 // pred_region
          %s1160 = sand.u32 %s113, 1
          %s1161 = scalar_lea.sflag [#allocation8], %s1160
          %s1162 = sand.u32 %s113, 1
          %s1163 = smul.addr %s1162, 8
          %s1164 = scalar_lea.vmem [#allocation7], %s1163
          %1166 = vsyncadd %s1161, 0
          %s1167 = smul.addr %s98, 8
          %s1168 = scalar_lea.hbm %s1, %s1167
          %s1170 = sshll.u32 %s1168, 4
          %s1171 = int_to_ptr.hbm [resolvable:$true] %s1170
          %s1172 = sshll.u32 %s1164, 4
          %s1173 = int_to_ptr.vmem [resolvable:$true] %s1172
          %1175 = dma.hbm_to_vmem [thread:$0]  %s1171, 128, %s1173, %s1161
        $region148: #{deco_plus_decoder_forward.2} parent=143 // pred_fallthru
          _
        // Predicated region
        $region149: #{deco_plus_decoder_forward.2} parent=143 // pred_check
          %p1176 = pneg %p151
        $region150: #{deco_plus_decoder_forward.2} parent=143 // pred_check_branch
          %1178 = sbr.rel (%p1176) target = $region152
        $region151: #{deco_plus_decoder_forward.2} parent=143 // pred_region
          %p1179 = scmp.lt.s32.totalorder %s98, 1
          %s1180 = scalar_select %p1179, %s98, 1
          %p1181 = scmp.lt.s32.totalorder %s99, 1
          %s1182 = scalar_select %p1181, %s99, 1
          %s1183 = smul.addr %s1180, 2
          %s1184 = sadd.s32 %s1182, %s1183
          %s1185 = smul.addr %s1184, 4
          %s1186 = scalar_lea.vmem %s3, %s1185
        $region152: #{deco_plus_decoder_forward.2} parent=143 // pred_fallthru
          _
        // Predicated region
        $region153: #{deco_plus_decoder_forward.2} parent=143 // pred_check
          %p1187 = pneg %p177
        $region154: #{deco_plus_decoder_forward.2} parent=143 // pred_check_branch
          %1189 = sbr.rel (%p1187) target = $region156
        $region155: #{deco_plus_decoder_forward.2} parent=143 // pred_region
          %p1190 = scmp.lt.s32.totalorder %s98, 1
          %s1191 = scalar_select %p1190, %s98, 1
          %s1192 = smul.addr %s1191, 8
          %s1193 = scalar_lea.vmem %s5, %s1192
        $region156: #{deco_plus_decoder_forward.2} parent=143 // pred_fallthru
          _
      $region144: #{deco_plus_decoder_forward.2} parent=5 // pred_fallthru
        _
      %p1194 = scmp.le.s32.totalorder 1, %s91
      %p1195 = scmp.lt.s32.totalorder %s91, 5
      %p1196 = pnand %p1194, %p1195
      %p1197 = pneg %p1196
      // Predicated region
      $region157: #{deco_plus_decoder_forward.2} parent=5 // pred_check
        _
      $region158: #{deco_plus_decoder_forward.2} parent=5 // pred_check_branch
        %1199 = sbr.rel (%p1196) target = $region160
      $region159: #{deco_plus_decoder_forward.2} parent=5 // pred_region
        %s1200 = ssub.s32 %s91, 1
        %s1201 = sand.u32 %s116, 1
        %s1202 = scalar_lea.sflag [#allocation8], %s1201
        %s1203 = sand.u32 %s116, 1
        %s1204 = smul.addr %s1203, 8
        %s1205 = scalar_lea.vmem [#allocation7], %s1204
        // Predicated region
        $region161: #{deco_plus_decoder_forward.2} parent=159 // pred_check
          %p1206 = pneg %p129
        $region162: #{deco_plus_decoder_forward.2} parent=159 // pred_check_branch
          %1208 = sbr.rel (%p1206) target = $region164
        $region163: #{deco_plus_decoder_forward.2} parent=159 // pred_region
          %1210 = dma.done %s1202, 128
        $region164: #{deco_plus_decoder_forward.2} parent=159 // pred_fallthru
          _
        // Predicated region
        $region165: #{deco_plus_decoder_forward.2} parent=159 // pred_check
          %p1211 = pneg %p393
        $region166: #{deco_plus_decoder_forward.2} parent=159 // pred_check_branch
          %1213 = sbr.rel (%p1211) target = $region168
        $region167: #{deco_plus_decoder_forward.2} parent=159 // pred_region
          %1215 = dma.done [#allocation10], 16
        $region168: #{deco_plus_decoder_forward.2} parent=159 // pred_fallthru
          _
        // Predicated region
        $region169: #{deco_plus_decoder_forward.2} parent=159 // pred_check
          %p1216 = pneg %p414
        $region170: #{deco_plus_decoder_forward.2} parent=159 // pred_check_branch
          %1218 = sbr.rel (%p1216) target = $region172
        $region171: #{deco_plus_decoder_forward.2} parent=159 // pred_region
          %1220 = dma.done [#allocation10], 16
        $region172: #{deco_plus_decoder_forward.2} parent=159 // pred_fallthru
          _
        // Predicated region
        $region173: #{deco_plus_decoder_forward.2} parent=159 // pred_check
          %p1221 = pneg %p435
        $region174: #{deco_plus_decoder_forward.2} parent=159 // pred_check_branch
          %1223 = sbr.rel (%p1221) target = $region176
        $region175: #{deco_plus_decoder_forward.2} parent=159 // pred_region
          %1225 = dma.done [#allocation13], 16
        $region176: #{deco_plus_decoder_forward.2} parent=159 // pred_fallthru
          _
        // Predicated region
        $region177: #{deco_plus_decoder_forward.2} parent=159 // pred_check
          %p1226 = pneg %p477
        $region178: #{deco_plus_decoder_forward.2} parent=159 // pred_check_branch
          %1228 = sbr.rel (%p1226) target = $region180
        $region179: #{deco_plus_decoder_forward.2} parent=159 // pred_region
          %1230 = dma.done [#allocation13], 16
        $region180: #{deco_plus_decoder_forward.2} parent=159 // pred_fallthru
          _
        // Predicated region
        $region181: #{deco_plus_decoder_forward.2} parent=159 // pred_check
          %p1231 = pneg %p519
        $region182: #{deco_plus_decoder_forward.2} parent=159 // pred_check_branch
          %1233 = sbr.rel (%p1231) target = $region184
        $region183: #{deco_plus_decoder_forward.2} parent=159 // pred_region
          %1235 = dma.done [#allocation16], 16
        $region184: #{deco_plus_decoder_forward.2} parent=159 // pred_fallthru
          _
        // Predicated region
        $region185: #{deco_plus_decoder_forward.2} parent=159 // pred_check
          %p1236 = pneg %p561
        $region186: #{deco_plus_decoder_forward.2} parent=159 // pred_check_branch
          %1238 = sbr.rel (%p1236) target = $region188
        $region187: #{deco_plus_decoder_forward.2} parent=159 // pred_region
          %1240 = dma.done [#allocation16], 16
        $region188: #{deco_plus_decoder_forward.2} parent=159 // pred_fallthru
          _
        // Predicated region
        $region189: #{deco_plus_decoder_forward.2} parent=159 // pred_check
          %p1241 = pneg %p582
        $region190: #{deco_plus_decoder_forward.2} parent=159 // pred_check_branch
          %1243 = sbr.rel (%p1241) target = $region192
        $region191: #{deco_plus_decoder_forward.2} parent=159 // pred_region
          %1245 = dma.done [#allocation19], 16
        $region192: #{deco_plus_decoder_forward.2} parent=159 // pred_fallthru
          _
        // Predicated region
        $region193: #{deco_plus_decoder_forward.2} parent=159 // pred_check
          %p1246 = pneg %p603
        $region194: #{deco_plus_decoder_forward.2} parent=159 // pred_check_branch
          %1248 = sbr.rel (%p1246) target = $region196
        $region195: #{deco_plus_decoder_forward.2} parent=159 // pred_region
          %1250 = dma.done [#allocation19], 16
        $region196: #{deco_plus_decoder_forward.2} parent=159 // pred_fallthru
          _
        // Predicated region
        $region197: #{deco_plus_decoder_forward.2} parent=159 // pred_check
          %p1251 = pneg %p645
        $region198: #{deco_plus_decoder_forward.2} parent=159 // pred_check_branch
          %1253 = sbr.rel (%p1251) target = $region200
        $region199: #{deco_plus_decoder_forward.2} parent=159 // pred_region
          %1255 = dma.done [#allocation22], 16
        $region200: #{deco_plus_decoder_forward.2} parent=159 // pred_fallthru
          _
        // Predicated region
        $region201: #{deco_plus_decoder_forward.2} parent=159 // pred_check
          %p1256 = pneg %p687
        $region202: #{deco_plus_decoder_forward.2} parent=159 // pred_check_branch
          %1258 = sbr.rel (%p1256) target = $region204
        $region203: #{deco_plus_decoder_forward.2} parent=159 // pred_region
          %1260 = dma.done [#allocation22], 16
        $region204: #{deco_plus_decoder_forward.2} parent=159 // pred_fallthru
          _
        // Predicated region
        $region205: #{deco_plus_decoder_forward.2} parent=159 // pred_check
          %p1261 = pneg %p708
        $region206: #{deco_plus_decoder_forward.2} parent=159 // pred_check_branch
          %1263 = sbr.rel (%p1261) target = $region208
        $region207: #{deco_plus_decoder_forward.2} parent=159 // pred_region
          %1265 = dma.done [#allocation25], 16
        $region208: #{deco_plus_decoder_forward.2} parent=159 // pred_fallthru
          _
        // Predicated region
        $region209: #{deco_plus_decoder_forward.2} parent=159 // pred_check
          %p1266 = pneg %p729
        $region210: #{deco_plus_decoder_forward.2} parent=159 // pred_check_branch
          %1268 = sbr.rel (%p1266) target = $region212
        $region211: #{deco_plus_decoder_forward.2} parent=159 // pred_region
          %1270 = dma.done [#allocation25], 16
        $region212: #{deco_plus_decoder_forward.2} parent=159 // pred_fallthru
          _
        // Predicated region
        $region213: #{deco_plus_decoder_forward.2} parent=159 // pred_check
          %p1271 = pneg %p771
        $region214: #{deco_plus_decoder_forward.2} parent=159 // pred_check_branch
          %1273 = sbr.rel (%p1271) target = $region216
        $region215: #{deco_plus_decoder_forward.2} parent=159 // pred_region
          %1275 = dma.done [#allocation28], 16
        $region216: #{deco_plus_decoder_forward.2} parent=159 // pred_fallthru
          _
        // Predicated region
        $region217: #{deco_plus_decoder_forward.2} parent=159 // pred_check
          %p1276 = pneg %p813
        $region218: #{deco_plus_decoder_forward.2} parent=159 // pred_check_branch
          %1278 = sbr.rel (%p1276) target = $region220
        $region219: #{deco_plus_decoder_forward.2} parent=159 // pred_region
          %1280 = dma.done [#allocation28], 16
        $region220: #{deco_plus_decoder_forward.2} parent=159 // pred_fallthru
          _
        // Predicated region
        $region221: #{deco_plus_decoder_forward.2} parent=159 // pred_check
          %p1281 = pneg %p855
        $region222: #{deco_plus_decoder_forward.2} parent=159 // pred_check_branch
          %1283 = sbr.rel (%p1281) target = $region224
        $region223: #{deco_plus_decoder_forward.2} parent=159 // pred_region
          %1285 = dma.done [#allocation31], 16
        $region224: #{deco_plus_decoder_forward.2} parent=159 // pred_fallthru
          _
        %s1286 = sand.u32 %s116, 1
        %s1287 = scalar_lea.sflag [#allocation8], %s1286
        %s1288 = sand.u32 %s116, 1
        %s1289 = smul.addr %s1288, 8
        %s1290 = scalar_lea.vmem [#allocation7], %s1289
        %p1291 = pneg %p129
        %p1292 = pneg %p126
        %p1293 = scmp.lt.s32.totalorder %s100, 1
        %s1294 = scalar_select %p1293, %s100, 1
        %p1295 = scmp.lt.s32.totalorder %s101, 1
        %s1296 = scalar_select %p1295, %s101, 1
        %s1297 = smul.addr %s1294, 2
        %s1298 = sadd.s32 %s1296, %s1297
        %s1299 = smul.addr %s1298, 4
        %s1300 = scalar_lea.vmem %s3, %s1299
        %p1301 = pneg %p157
        %p1302 = pneg %p154
        %p1303 = scmp.lt.s32.totalorder %s100, 1
        %s1304 = scalar_select %p1303, %s100, 1
        %s1305 = smul.addr %s1304, 8
        %s1306 = scalar_lea.vmem %s5, %s1305
        %p1307 = pneg %p183
        %p1308 = pneg %p180
        %p1309 = pneg %p204
        %p1310 = pneg %p201
        %p1311 = pneg %p225
        %p1312 = pneg %p222
        %p1313 = pneg %p246
        %p1314 = pneg %p243
        %p1315 = pneg %p267
        %p1316 = pneg %p264
        %p1317 = pneg %p288
        %p1318 = pneg %p285
        %p1319 = pneg %p309
        %p1320 = pneg %p306
        %p1321 = pneg %p330
        %p1322 = pneg %p327
        %p1323 = pneg %p351
        %p1324 = pneg %p348
        %p1325 = pneg %p372
        %p1326 = pneg %p369
        %p1327 = pneg %p393
        %p1328 = pneg %p390
        %p1329 = pneg %p414
        %p1330 = pneg %p411
        %p1331 = pneg %p435
        %p1332 = pneg %p432
        %p1333 = pneg %p456
        %p1334 = pneg %p453
        %p1335 = pneg %p477
        %p1336 = pneg %p474
        %p1337 = pneg %p498
        %p1338 = pneg %p495
        %p1339 = pneg %p519
        %p1340 = pneg %p516
        %p1341 = pneg %p540
        %p1342 = pneg %p537
        %p1343 = pneg %p561
        %p1344 = pneg %p558
        %p1345 = pneg %p582
        %p1346 = pneg %p579
        %p1347 = pneg %p603
        %p1348 = pneg %p600
        %p1349 = pneg %p624
        %p1350 = pneg %p621
        %p1351 = pneg %p645
        %p1352 = pneg %p642
        %p1353 = pneg %p666
        %p1354 = pneg %p663
        %p1355 = pneg %p687
        %p1356 = pneg %p684
        %p1357 = pneg %p708
        %p1358 = pneg %p705
        %p1359 = pneg %p729
        %p1360 = pneg %p726
        %p1361 = pneg %p750
        %p1362 = pneg %p747
        %p1363 = pneg %p771
        %p1364 = pneg %p768
        %p1365 = pneg %p792
        %p1366 = pneg %p789
        %p1367 = pneg %p813
        %p1368 = pneg %p810
        %p1369 = pneg %p834
        %p1370 = pneg %p831
        %p1371 = pneg %p855
        %p1372 = pneg %p852
        %p1373 = pneg %p881
        %p1374 = pneg %p878
        %p1375 = scmp.lt.s32.totalorder %s100, 1
        %s1376 = scalar_select %p1375, %s100, 1
        %s1377 = smul.addr %s1376, 8
        %s1378 = scalar_lea.vmem %s71, %s1377
        %p1379 = pneg %p907
        %p1380 = pneg %p904
        %p1381 = scmp.lt.s32.totalorder %s100, 1
        %s1382 = scalar_select %p1381, %s100, 1
        %s1383 = smul.addr %s1382, 8
        %s1384 = scalar_lea.vmem %s73, %s1383
        %p1385 = scmp.lt.s32.totalorder %s100, 1
        %s1386 = scalar_select %p1385, %s100, 1
        %p1387 = scmp.lt.s32.totalorder %s101, 1
        %s1388 = scalar_select %p1387, %s101, 1
        %s1389 = smul.addr %s1386, 2
        %s1390 = sadd.s32 %s1388, %s1389
        %s1391 = smul.addr %s1390, 4
        %s1392 = scalar_lea.vmem %s3, %s1391
        %p1393 = scmp.lt.s32.totalorder %s100, 1
        %s1394 = scalar_select %p1393, %s100, 1
        %s1395 = smul.addr %s1394, 8
        %s1396 = scalar_lea.vmem %s5, %s1395
        %p1397 = scmp.lt.s32.totalorder %s100, 1
        %s1398 = scalar_select %p1397, %s100, 1
        %s1399 = smul.addr %s1398, 8
        %s1400 = scalar_lea.vmem %s71, %s1399
        %p1401 = scmp.lt.s32.totalorder %s100, 1
        %s1402 = scalar_select %p1401, %s100, 1
        %s1403 = smul.addr %s1402, 8
        %s1404 = scalar_lea.vmem %s73, %s1403
        %p1406 = scmp.eq.s32.totalorder %s101, 0
        // Predicated region
        $region225: #{deco_plus_decoder_forward.2} parent=159 // pred_check
          %p1407 = pneg %p1406
        $region226: #{deco_plus_decoder_forward.2} parent=159 // pred_check_branch
          %1409 = sbr.rel (%p1407) target = $region228
        $region227: #{deco_plus_decoder_forward.2} parent=159 // pred_region
          %v1410 = vld [vmem:[%s1205] sm:$0xff]
          %v1411 = vld [vmem:[%s1396] sm:$0xff]
          %v1412 = vld [vmem:[%s7] sm:$0xf]
          %v1413 = vld [vmem:[%s9] sm:$0x1]
          %1415 = vset.pattern.permute.xlu0 0
          %1416 = vperm.xlu0 %1415, %v1411
          %v1417 = vpop.permute.xlu0 %1416
          %v1419 = vperm.slane %v1412, 0
          %v1420 = vmul.f32 %v1417, %v1419
          %v1422 = vperm.slane %v1413, 0
          %v1424 = vadd.f32 %v1422, %v1420
          %1425 = vset.pattern.permute.xlu0 1
          %1426 = vperm.xlu0 %1425, %v1411
          %v1427 = vpop.permute.xlu0 %1426
          %v1429 = vperm.slane %v1412, 1
          %v1430 = vmul.f32 %v1427, %v1429
          %v1431 = vadd.f32 %v1424, %v1430
          %1432 = vset.pattern.permute.xlu0 2
          %1433 = vperm.xlu0 %1432, %v1411
          %v1434 = vpop.permute.xlu0 %1433
          %v1436 = vperm.slane %v1412, 2
          %v1437 = vmul.f32 %v1434, %v1436
          %v1438 = vadd.f32 %v1431, %v1437
          %1439 = vset.pattern.permute.xlu0 3
          %1440 = vperm.xlu0 %1439, %v1411
          %v1441 = vpop.permute.xlu0 %1440
          %v1443 = vperm.slane %v1412, 3
          %v1444 = vmul.f32 %v1441, %v1443
          %v1445 = vadd.f32 %v1438, %v1444
          %v1446 = vmax.f32 %v1445, 0.0
          %v1447 = vld [vmem:[%s11] sm:$0xff]
          %v1448 = vld [vmem:[%s11 + $0x8] sm:$0xff]
          %v1449 = vld [vmem:[%s11 + $0x10] sm:$0xff]
          %v1450 = vld [vmem:[%s11 + $0x18] sm:$0xff]
          %v1451 = vld [vmem:[%s11 + $0x20] sm:$0xff]
          %v1452 = vld [vmem:[%s11 + $0x28] sm:$0xff]
          %v1453 = vld [vmem:[%s11 + $0x30] sm:$0xff]
          %v1454 = vld [vmem:[%s11 + $0x38] sm:$0xff]
          %v1455 = vld [vmem:[%s13] sm:$0x1]
          %v1457 = vperm.slane %v1455, 0
          %vm1459 = vcmask 523264
          %v1461 = vsel %vm1459, %v1446, 0
          %1463 = vmatpush.msra.mxu0 0.0
          %1464 = vmatpush.msra.mxu0 0.0
          %1465 = vmatpush.msra.mxu0 0.0
          %1466 = vmatpush.msra.mxu0 0.0
          %1467 = vmatpush.msra.mxu0 0.0
          %1468 = vmatpush.msra.mxu0 0.0
          %1469 = vmatpush.msra.mxu0 0.0
          %1470 = vmatpush.msra.mxu0 0.0
          %1471 = vmatpush.msra.mxu0 %v1454
          %1472 = vmatpush.msra.mxu0 %v1453
          %1473 = vmatpush.msra.mxu0 %v1452
          %1474 = vmatpush.msra.mxu0 %v1451
          %1475 = vmatpush.msra.mxu0 %v1450
          %1476 = vmatpush.msra.mxu0 %v1449
          %1477 = vmatpush.msra.mxu0 %v1448
          %1478 = vmatpush.msra.mxu0 %v1447
          %1479 = vmatmul.f32.gmra.mxu0 %v1461
          %v1480 = vpop.f32.mrf.mxu0
          %v1481 = vadd.f32 %v1457, %v1480
          %1482 = vdwg.mxu0
          %v1483 = vadd.f32 %v1410, %v1481
          %v1484 = vld [vmem:[%s15] sm:$0xff]
          %v1485 = vld [vmem:[%s15 + $0x8] sm:$0xff]
          %v1486 = vld [vmem:[%s15 + $0x10] sm:$0xff]
          %v1487 = vld [vmem:[%s15 + $0x18] sm:$0xff]
          %v1488 = vpack.c.bf16 %v1483, %v1483
          %v1489 = vpack.c.bf16 %v1485, %v1484
          %v1490 = vpack.c.bf16 %v1487, %v1486
          %v1491 = vld [vmem:[%s17] sm:$0x1]
          %v1493 = vperm.slane %v1491, 0
          %vm1495 = vcmask 261120
          %v1497 = vsel %vm1495, %v1488, 0
          %1499 = vmatpush.bf16.msra.mxu0 0
          %1500 = vmatpush.bf16.msra.mxu0 0
          %1501 = vmatpush.bf16.msra.mxu0 0
          %1502 = vmatpush.bf16.msra.mxu0 0
          %1503 = vmatpush.bf16.msra.mxu0 0
          %1504 = vmatpush.bf16.msra.mxu0 0
          %1505 = vmatpush.bf16.msra.mxu0 %v1490
          %1506 = vmatpush.bf16.msra.mxu0 %v1489
          %1507 = vmatmul.bf16.gmra.mxu0 %v1497
          %v1508 = vpop.f32.mrf.mxu0
          %v1509 = vadd.f32 %v1493, %v1508
          %v1510 = vpop.f32.mrf.mxu0
          %1511 = vdwg.mxu0
          %v1512 = vld [vmem:[%s19] sm:$0xff]
          %v1513 = vld [vmem:[%s19 + $0x8] sm:$0xff]
          %v1514 = vld [vmem:[%s19 + $0x10] sm:$0xff]
          %v1515 = vld [vmem:[%s19 + $0x18] sm:$0xff]
          %v1516 = vpack.c.bf16 %v1410, %v1410
          %v1517 = vpack.c.bf16 %v1513, %v1512
          %v1518 = vpack.c.bf16 %v1515, %v1514
          %v1519 = vld [vmem:[%s21] sm:$0x1]
          %v1521 = vperm.slane %v1519, 0
          %v1524 = vsel %vm1495, %v1516, 0
          %1526 = vmatpush.bf16.msra.mxu0 0
          %1527 = vmatpush.bf16.msra.mxu0 0
          %1528 = vmatpush.bf16.msra.mxu0 0
          %1529 = vmatpush.bf16.msra.mxu0 0
          %1530 = vmatpush.bf16.msra.mxu0 0
          %1531 = vmatpush.bf16.msra.mxu0 0
          %1532 = vmatpush.bf16.msra.mxu0 %v1518
          %1533 = vmatpush.bf16.msra.mxu0 %v1517
          %1534 = vmatmul.bf16.gmra.mxu0 %v1524
          %v1535 = vpop.f32.mrf.mxu0
          %v1536 = vadd.f32 %v1521, %v1535
          %v1537 = vpop.f32.mrf.mxu0
          %1538 = vdwg.mxu0
          %v1539 = vmul.f32 %v1509, 0.35355338
          %v1540 = vpack.c.bf16 %v1539, %v1539
          %v1541 = vpack.c.bf16 %v1509, %v1509
          %v1542 = vpack.c.bf16 %v1536, %v1536
          %v1544 = vunpack.c.l.b16 %v1541
          %v1545 = vpack.c.b16 %v1544, %v1544
          %1546 = vrot.lane.b32.xlu0 %v1545, 96
          %v1547 = vpop.permute.xlu0 %1546
          %vm1548 = vcmask 64512
          %v1550 = vsel %vm1548, %v1540, 0
          %v1553 = vsel %vm1548, %v1547, 0
          %1555 = vmatpush.bf16.xpose.msra.mxu0 0
          %1556 = vmatpush.bf16.xpose.msra.mxu0 0
          %1557 = vmatpush.bf16.xpose.msra.mxu0 0
          %1558 = vmatpush.bf16.xpose.msra.mxu0 0
          %1559 = vmatpush.bf16.xpose.msra.mxu0 0
          %1560 = vmatpush.bf16.xpose.msra.mxu0 0
          %1561 = vmatpush.bf16.xpose.msra.mxu0 0
          %1562 = vmatpush.bf16.xpose.msra.mxu0 %v1553
          %1563 = vmatmul.bf16.gmra.mxu0 %v1550
          %v1564 = vpop.f32.mrf.mxu0
          %v1565 = vadd.f32 0.0, %v1564
          %v1566 = vpop.f32.mrf.mxu0
          %1567 = vdwg.mxu0
          %v1568 = vsel %vm1548, %v1565, -inf
          %1569 = vmax.xlane.f32.xlu0 %v1568
          %v1570 = vpop.xlane.xlu0 %1569
          %v1571 = vsub.f32 %v1565, %v1570
          %v1572 = vmul.f32 %v1571, 1.442695
          %v1573 = vpow.pop %v1572
          %v1574 = vsel %vm1548, %v1573, 0.0
          %1575 = vadd.xlane.f32.xlu0 %v1574
          %v1576 = vpop.xlane.xlu0 %1575
          %v1577 = vrcp.pop %v1576
          %v1578 = vmul.f32 %v1573, %v1577
          %v1579 = vpack.c.bf16 %v1578, %v1578
          %v1581 = vsel %vm1548, %v1579, 0
          %vm1583 = vcmask 1043456
          %v1585 = vsel %vm1583, %v1542, 0
          %1587 = vmatpush.bf16.msra.mxu0 0
          %1588 = vmatpush.bf16.msra.mxu0 0
          %1589 = vmatpush.bf16.msra.mxu0 0
          %1590 = vmatpush.bf16.msra.mxu0 0
          %1591 = vmatpush.bf16.msra.mxu0 0
          %1592 = vmatpush.bf16.msra.mxu0 0
          %1593 = vmatpush.bf16.msra.mxu0 0
          %1594 = vmatpush.bf16.msra.mxu0 %v1585
          %1595 = vmatmul.bf16.gmra.mxu0 %v1581
          %v1596 = vpop.f32.mrf.mxu0
          %v1597 = vadd.f32 0.0, %v1596
          %v1598 = vpop.f32.mrf.mxu0
          %1599 = vdwg.mxu0
          %v1601 = vunpack.c.l.b16 %v1540
          %v1602 = vpack.c.b16 %v1601, %v1601
          %1603 = vrot.lane.b32.xlu0 %v1602, 120
          %v1604 = vpop.permute.xlu0 %1603
          %1605 = vrot.lane.b32.xlu0 %v1545, 88
          %v1606 = vpop.permute.xlu0 %1605
          %v1608 = vsel %vm1548, %v1604, 0
          %v1611 = vsel %vm1548, %v1606, 0
          %1613 = vmatpush.bf16.xpose.msra.mxu0 0
          %1614 = vmatpush.bf16.xpose.msra.mxu0 0
          %1615 = vmatpush.bf16.xpose.msra.mxu0 0
          %1616 = vmatpush.bf16.xpose.msra.mxu0 0
          %1617 = vmatpush.bf16.xpose.msra.mxu0 0
          %1618 = vmatpush.bf16.xpose.msra.mxu0 0
          %1619 = vmatpush.bf16.xpose.msra.mxu0 0
          %1620 = vmatpush.bf16.xpose.msra.mxu0 %v1611
          %1621 = vmatmul.bf16.gmra.mxu0 %v1608
          %v1622 = vpop.f32.mrf.mxu0
          %v1623 = vadd.f32 0.0, %v1622
          %v1624 = vpop.f32.mrf.mxu0
          %1625 = vdwg.mxu0
          %v1626 = vsel %vm1548, %v1623, -inf
          %1627 = vmax.xlane.f32.xlu0 %v1626
          %v1628 = vpop.xlane.xlu0 %1627
          %v1629 = vsub.f32 %v1623, %v1628
          %v1630 = vmul.f32 %v1629, 1.442695
          %v1631 = vpow.pop %v1630
          %v1632 = vsel %vm1548, %v1631, 0.0
          %1633 = vadd.xlane.f32.xlu0 %v1632
          %v1634 = vpop.xlane.xlu0 %1633
          %v1635 = vrcp.pop %v1634
          %v1636 = vmul.f32 %v1631, %v1635
          %v1637 = vpack.c.bf16 %v1636, %v1636
          %v1639 = vunpack.c.l.b16 %v1542
          %v1640 = vpack.c.b16 %v1639, %v1639
          %1641 = vrot.lane.b32.xlu0 %v1640, 120
          %v1642 = vpop.permute.xlu0 %1641
          %v1644 = vsel %vm1548, %v1637, 0
          %v1647 = vsel %vm1583, %v1642, 0
          %1649 = vmatpush.bf16.msra.mxu0 0
          %1650 = vmatpush.bf16.msra.mxu0 0
          %1651 = vmatpush.bf16.msra.mxu0 0
          %1652 = vmatpush.bf16.msra.mxu0 0
          %1653 = vmatpush.bf16.msra.mxu0 0
          %1654 = vmatpush.bf16.msra.mxu0 0
          %1655 = vmatpush.bf16.msra.mxu0 0
          %1656 = vmatpush.bf16.msra.mxu0 %v1647
          %1657 = vmatmul.bf16.gmra.mxu0 %v1644
          %v1658 = vpop.f32.mrf.mxu0
          %v1659 = vadd.f32 0.0, %v1658
          %v1660 = vpop.f32.mrf.mxu0
          %1661 = vdwg.mxu0
          %1662 = vrot.lane.b32.xlu0 %v1602, 112
          %v1663 = vpop.permute.xlu0 %1662
          %1664 = vrot.lane.b32.xlu0 %v1545, 80
          %v1665 = vpop.permute.xlu0 %1664
          %v1667 = vsel %vm1548, %v1663, 0
          %v1670 = vsel %vm1548, %v1665, 0
          %1672 = vmatpush.bf16.xpose.msra.mxu0 0
          %1673 = vmatpush.bf16.xpose.msra.mxu0 0
          %1674 = vmatpush.bf16.xpose.msra.mxu0 0
          %1675 = vmatpush.bf16.xpose.msra.mxu0 0
          %1676 = vmatpush.bf16.xpose.msra.mxu0 0
          %1677 = vmatpush.bf16.xpose.msra.mxu0 0
          %1678 = vmatpush.bf16.xpose.msra.mxu0 0
          %1679 = vmatpush.bf16.xpose.msra.mxu0 %v1670
          %1680 = vmatmul.bf16.gmra.mxu0 %v1667
          %v1681 = vpop.f32.mrf.mxu0
          %v1682 = vadd.f32 0.0, %v1681
          %v1683 = vpop.f32.mrf.mxu0
          %1684 = vdwg.mxu0
          %v1685 = vsel %vm1548, %v1682, -inf
          %1686 = vmax.xlane.f32.xlu0 %v1685
          %v1687 = vpop.xlane.xlu0 %1686
          %v1688 = vsub.f32 %v1682, %v1687
          %v1689 = vmul.f32 %v1688, 1.442695
          %v1690 = vpow.pop %v1689
          %v1691 = vsel %vm1548, %v1690, 0.0
          %1692 = vadd.xlane.f32.xlu0 %v1691
          %v1693 = vpop.xlane.xlu0 %1692
          %v1694 = vrcp.pop %v1693
          %v1695 = vmul.f32 %v1690, %v1694
          %v1696 = vpack.c.bf16 %v1695, %v1695
          %1697 = vrot.lane.b32.xlu0 %v1640, 112
          %v1698 = vpop.permute.xlu0 %1697
          %v1700 = vsel %vm1548, %v1696, 0
          %v1703 = vsel %vm1583, %v1698, 0
          %1705 = vmatpush.bf16.msra.mxu0 0
          %1706 = vmatpush.bf16.msra.mxu0 0
          %1707 = vmatpush.bf16.msra.mxu0 0
          %1708 = vmatpush.bf16.msra.mxu0 0
          %1709 = vmatpush.bf16.msra.mxu0 0
          %1710 = vmatpush.bf16.msra.mxu0 0
          %1711 = vmatpush.bf16.msra.mxu0 0
          %1712 = vmatpush.bf16.msra.mxu0 %v1703
          %1713 = vmatmul.bf16.gmra.mxu0 %v1700
          %v1714 = vpop.f32.mrf.mxu0
          %v1715 = vadd.f32 0.0, %v1714
          %v1716 = vpop.f32.mrf.mxu0
          %1717 = vdwg.mxu0
          %1718 = vrot.lane.b32.xlu0 %v1602, 104
          %v1719 = vpop.permute.xlu0 %1718
          %1720 = vrot.lane.b32.xlu0 %v1545, 72
          %v1721 = vpop.permute.xlu0 %1720
          %v1723 = vsel %vm1548, %v1719, 0
          %v1726 = vsel %vm1548, %v1721, 0
          %1728 = vmatpush.bf16.xpose.msra.mxu0 0
          %1729 = vmatpush.bf16.xpose.msra.mxu0 0
          %1730 = vmatpush.bf16.xpose.msra.mxu0 0
          %1731 = vmatpush.bf16.xpose.msra.mxu0 0
          %1732 = vmatpush.bf16.xpose.msra.mxu0 0
          %1733 = vmatpush.bf16.xpose.msra.mxu0 0
          %1734 = vmatpush.bf16.xpose.msra.mxu0 0
          %1735 = vmatpush.bf16.xpose.msra.mxu0 %v1726
          %1736 = vmatmul.bf16.gmra.mxu0 %v1723
          %v1737 = vpop.f32.mrf.mxu0
          %v1738 = vadd.f32 0.0, %v1737
          %v1739 = vpop.f32.mrf.mxu0
          %1740 = vdwg.mxu0
          %v1741 = vsel %vm1548, %v1738, -inf
          %1742 = vmax.xlane.f32.xlu0 %v1741
          %v1743 = vpop.xlane.xlu0 %1742
          %v1744 = vsub.f32 %v1738, %v1743
          %v1745 = vmul.f32 %v1744, 1.442695
          %v1746 = vpow.pop %v1745
          %v1747 = vsel %vm1548, %v1746, 0.0
          %1748 = vadd.xlane.f32.xlu0 %v1747
          %v1749 = vpop.xlane.xlu0 %1748
          %v1750 = vrcp.pop %v1749
          %v1751 = vmul.f32 %v1746, %v1750
          %v1752 = vpack.c.bf16 %v1751, %v1751
          %1753 = vrot.lane.b32.xlu0 %v1640, 104
          %v1754 = vpop.permute.xlu0 %1753
          %v1756 = vsel %vm1548, %v1752, 0
          %v1759 = vsel %vm1583, %v1754, 0
          %1761 = vmatpush.bf16.msra.mxu0 0
          %1762 = vmatpush.bf16.msra.mxu0 0
          %1763 = vmatpush.bf16.msra.mxu0 0
          %1764 = vmatpush.bf16.msra.mxu0 0
          %1765 = vmatpush.bf16.msra.mxu0 0
          %1766 = vmatpush.bf16.msra.mxu0 0
          %1767 = vmatpush.bf16.msra.mxu0 0
          %1768 = vmatpush.bf16.msra.mxu0 %v1759
          %1769 = vmatmul.bf16.gmra.mxu0 %v1756
          %v1770 = vpop.f32.mrf.mxu0
          %v1771 = vadd.f32 0.0, %v1770
          %v1772 = vpop.f32.mrf.mxu0
          %1773 = vdwg.mxu0
          %1775 = vrot.lane.b32.xlu0 %v1659, 8
          %v1776 = vpop.permute.xlu0 %1775
          %1779 = vrot.lane.b32.xlu0 %v1715, 16
          %v1780 = vpop.permute.xlu0 %1779
          %1783 = vrot.lane.b32.xlu0 %v1771, 24
          %v1784 = vpop.permute.xlu0 %1783
          %v1786 = vsel %vm1548, %v1597, %v1776
          %vm1787 = vcmask 130048
          %v1788 = vsel %vm1787, %v1786, %v1780
          %vm1789 = vcmask 195584
          %v1790 = vsel %vm1789, %v1788, %v1784
          %v1791 = vld [vmem:[%s23] sm:$0xff]
          %v1792 = vld [vmem:[%s23 + $0x8] sm:$0xff]
          %v1793 = vld [vmem:[%s23 + $0x10] sm:$0xff]
          %v1794 = vld [vmem:[%s23 + $0x18] sm:$0xff]
          %v1795 = vpack.c.bf16 %v1790, %v1790
          %v1796 = vpack.c.bf16 %v1792, %v1791
          %v1797 = vpack.c.bf16 %v1794, %v1793
          %v1798 = vld [vmem:[#allocation9] sm:$0x1]
          %v1800 = vperm.slane %v1798, 0
          %v1803 = vsel %vm1495, %v1795, 0
          %1805 = vmatpush.bf16.msra.mxu0 0
          %1806 = vmatpush.bf16.msra.mxu0 0
          %1807 = vmatpush.bf16.msra.mxu0 0
          %1808 = vmatpush.bf16.msra.mxu0 0
          %1809 = vmatpush.bf16.msra.mxu0 0
          %1810 = vmatpush.bf16.msra.mxu0 0
          %1811 = vmatpush.bf16.msra.mxu0 %v1797
          %1812 = vmatpush.bf16.msra.mxu0 %v1796
          %1813 = vmatmul.bf16.gmra.mxu0 %v1803
          %v1814 = vpop.f32.mrf.mxu0
          %v1815 = vadd.f32 %v1800, %v1814
          %v1816 = vpop.f32.mrf.mxu0
          %1817 = vdwg.mxu0
          %v1818 = vadd.f32 %v1410, %v1815
          %v1819 = vsel %vm1495, %v1818, 0.0
          %1820 = vadd.xlane.f32.xlu0 %v1819
          %v1821 = vpop.xlane.xlu0 %1820
          %v1822 = vrcp.pop 32.0
          %v1823 = vmul.f32 32.0, %v1822
          %v1824 = vsub.f32 1.0, %v1823
          %v1825 = vmul.f32 %v1822, %v1824
          %v1826 = vadd.f32 %v1822, %v1825
          %vm1827 = vweird.f32 %v1822
          %v1828 = vsel %vm1827, %v1822, %v1826
          %v1829 = vmul.f32 %v1821, %v1828
          %v1830 = vsub.f32 %v1818, %v1829
          %v1831 = vmul.f32 %v1830, %v1830
          %v1832 = vsel %vm1495, %v1831, 0.0
          %1833 = vadd.xlane.f32.xlu0 %v1832
          %v1834 = vpop.xlane.xlu0 %1833
          %v1835 = vmul.f32 %v1834, %v1828
          %v1836 = vadd.f32 %v1835, 1e-05
          %v1837 = vrsqrt.pop %v1836
          %v1838 = vmul.f32 %v1837, %v1836
          %v1839 = vmul.f32 %v1838, %v1837
          %v1840 = vmul.f32 0.5, %v1839
          %v1841 = vsub.f32 1.5, %v1840
          %v1842 = vmul.f32 %v1837, %v1841
          %vm1843 = vweird.f32 %v1836
          %vm1844 = vweird.f32 %v1837
          %vm1845 = vmor %vm1843, %vm1844
          %v1846 = vsel %vm1845, %v1837, %v1842
          %v1847 = vmul.f32 %v1830, %v1846
          %v1848 = vld [vmem:[#allocation11] sm:$0x1]
          %v1850 = vperm.slane %v1848, 0
          %v1852 = vmul.f32 %v1847, %v1850
          %v1853 = vld [vmem:[#allocation12] sm:$0x1]
          %v1855 = vperm.slane %v1853, 0
          %v1857 = vadd.f32 %v1852, %v1855
          %1858 = vst.msk [vmem:[#allocation2] sm:$0xff] %vm1495, %v1857
          %v1859 = vld [vmem:[#allocation2] sm:$0xff]
          %v1860 = vadd.f32 %v1859, %v1481
          %v1861 = vld [vmem:[%s31] sm:$0xff]
          %v1862 = vld [vmem:[%s31 + $0x8] sm:$0xff]
          %v1863 = vld [vmem:[%s31 + $0x10] sm:$0xff]
          %v1864 = vld [vmem:[%s31 + $0x18] sm:$0xff]
          %v1865 = vpack.c.bf16 %v1860, %v1860
          %v1866 = vpack.c.bf16 %v1862, %v1861
          %v1867 = vpack.c.bf16 %v1864, %v1863
          %v1868 = vld [vmem:[#allocation14] sm:$0x1]
          %v1870 = vperm.slane %v1868, 0
          %v1873 = vsel %vm1495, %v1865, 0
          %1875 = vmatpush.bf16.msra.mxu0 0
          %1876 = vmatpush.bf16.msra.mxu0 0
          %1877 = vmatpush.bf16.msra.mxu0 0
          %1878 = vmatpush.bf16.msra.mxu0 0
          %1879 = vmatpush.bf16.msra.mxu0 0
          %1880 = vmatpush.bf16.msra.mxu0 0
          %1881 = vmatpush.bf16.msra.mxu0 %v1867
          %1882 = vmatpush.bf16.msra.mxu0 %v1866
          %1883 = vmatmul.bf16.gmra.mxu0 %v1873
          %v1884 = vpop.f32.mrf.mxu0
          %v1885 = vadd.f32 %v1870, %v1884
          %v1886 = vpop.f32.mrf.mxu0
          %1887 = vdwg.mxu0
          %v1888 = vmul.f32 %v1885, 0.35355338
          %1889 = vst.msk [vmem:[#allocation3] sm:$0xff] %vm1495, %v1888
          %vm1890 = vcmask 7168
          %1891 = vst.msk [vmem:[#allocation4] sm:$0xff] %vm1890, -1e+30
          %1892 = vst.msk [vmem:[#allocation4 + $0x8] sm:$0xff] %vm1890, -1e+30
          %1893 = vst.msk [vmem:[#allocation4 + $0x10] sm:$0xff] %vm1890, -1e+30
          %1894 = vst.msk [vmem:[#allocation4 + $0x18] sm:$0xff] %vm1890, -1e+30
          %1895 = vst.msk [vmem:[#allocation5] sm:$0xff] %vm1890, 0.0
          %1896 = vst.msk [vmem:[#allocation5 + $0x8] sm:$0xff] %vm1890, 0.0
          %1897 = vst.msk [vmem:[#allocation5 + $0x10] sm:$0xff] %vm1890, 0.0
          %1898 = vst.msk [vmem:[#allocation5 + $0x18] sm:$0xff] %vm1890, 0.0
          %1899 = vst.msk [vmem:[#allocation6] sm:$0xff] %vm1495, 0.0
        $region228: #{deco_plus_decoder_forward.2} parent=159 // pred_fallthru
          _
        %v1900 = vld [vmem:[%s1392] sm:$0xf]
        %v1901 = vld [vmem:[%s35] sm:$0xff]
        %v1902 = vld [vmem:[%s35 + $0x8] sm:$0xff]
        %v1903 = vld [vmem:[%s35 + $0x10] sm:$0xff]
        %v1904 = vld [vmem:[%s35 + $0x18] sm:$0xff]
        %v1905 = vpack.c.bf16 %v1902, %v1901
        %v1906 = vpack.c.bf16 %v1904, %v1903
        %v1907 = vld [vmem:[#allocation15] sm:$0x1]
        %v1909 = vperm.slane %v1907, 0
        %vm1911 = vcmask 261120
        %v1913 = vsel %vm1911, %v1900, 0
        %1915 = vmatpush.bf16.msra.mxu0 0
        %1916 = vmatpush.bf16.msra.mxu0 0
        %1917 = vmatpush.bf16.msra.mxu0 0
        %1918 = vmatpush.bf16.msra.mxu0 0
        %1919 = vmatpush.bf16.msra.mxu0 0
        %1920 = vmatpush.bf16.msra.mxu0 0
        %1921 = vmatpush.bf16.msra.mxu0 %v1906
        %1922 = vmatpush.bf16.msra.mxu0 %v1905
        %1923 = vmatmul.bf16.gmra.mxu0 %v1913
        %v1924 = vpop.f32.mrf.mxu0
        %v1925 = vadd.f32 %v1909, %v1924
        %v1926 = vpop.f32.mrf.mxu0
        %1927 = vdwg.mxu0
        %v1928 = vpack.c.bf16 %v1925, %v1925
        %v1929 = vld [vmem:[#allocation3] sm:$0xff]
        %v1930 = vpack.c.bf16 %v1929, %v1929
        %v1931 = vld [vmem:[#allocation6] sm:$0xff]
        %vm1932 = vcmask 64512
        %v1934 = vsel %vm1932, %v1930, 0
        %v1937 = vsel %vm1932, %v1928, 0
        %1939 = vmatpush.bf16.xpose.msra.mxu0 0
        %1940 = vmatpush.bf16.xpose.msra.mxu0 0
        %1941 = vmatpush.bf16.xpose.msra.mxu0 0
        %1942 = vmatpush.bf16.xpose.msra.mxu0 0
        %1943 = vmatpush.bf16.xpose.msra.mxu0 0
        %1944 = vmatpush.bf16.xpose.msra.mxu0 0
        %1945 = vmatpush.bf16.xpose.msra.mxu0 0
        %1946 = vmatpush.bf16.xpose.msra.mxu0 %v1937
        %1947 = vmatmul.bf16.gmra.mxu0 %v1934
        %v1948 = vpop.f32.mrf.mxu0
        %v1949 = vadd.f32 0.0, %v1948
        %v1950 = vpop.f32.mrf.mxu0
        %1951 = vdwg.mxu0
        %v1952 = vld [vmem:[#allocation4] sm:$0xff]
        %v1953 = vsel %vm1932, %v1949, -inf
        %1954 = vmax.xlane.f32.xlu0 %v1953
        %v1955 = vpop.xlane.xlu0 %1954
        %v1956 = vmax.f32 %v1952, %v1955
        %v1957 = vsub.f32 %v1952, %v1956
        %v1958 = vmul.f32 %v1957, 1.442695
        %v1959 = vpow.pop %v1958
        %1961 = vset.pattern.permute.xlu0 0
        %1962 = vperm.xlu0 %1961, %v1956
        %v1963 = vpop.permute.xlu0 %1962
        %v1965 = vsub.f32 %v1949, %v1963
        %v1966 = vmul.f32 %v1965, 1.442695
        %v1967 = vpow.pop %v1966
        %vm1968 = vcmask 7168
        %1969 = vst.msk [vmem:[#allocation4] sm:$0xff] %vm1968, %v1956
        %v1970 = vld [vmem:[#allocation5] sm:$0xff]
        %v1971 = vmul.f32 %v1959, %v1970
        %v1972 = vsel %vm1932, %v1967, 0.0
        %1973 = vadd.xlane.f32.xlu0 %v1972
        %v1974 = vpop.xlane.xlu0 %1973
        %v1975 = vadd.f32 %v1971, %v1974
        %1976 = vst.msk [vmem:[#allocation5] sm:$0xff] %vm1968, %v1975
        %v1977 = vpack.c.bf16 %v1967, %v1967
        %v1979 = vunpack.c.l.b16 %v1928
        %v1980 = vpack.c.b16 %v1979, %v1979
        %1981 = vrot.lane.b32.xlu0 %v1980, 96
        %v1982 = vpop.permute.xlu0 %1981
        %v1984 = vsel %vm1932, %v1977, 0
        %vm1986 = vcmask 1043456
        %v1988 = vsel %vm1986, %v1982, 0
        %1990 = vmatpush.bf16.msra.mxu0 0
        %1991 = vmatpush.bf16.msra.mxu0 0
        %1992 = vmatpush.bf16.msra.mxu0 0
        %1993 = vmatpush.bf16.msra.mxu0 0
        %1994 = vmatpush.bf16.msra.mxu0 0
        %1995 = vmatpush.bf16.msra.mxu0 0
        %1996 = vmatpush.bf16.msra.mxu0 0
        %1997 = vmatpush.bf16.msra.mxu0 %v1988
        %1998 = vmatmul.bf16.gmra.mxu0 %v1984
        %v1999 = vpop.f32.mrf.mxu0
        %v2000 = vadd.f32 0.0, %v1999
        %v2001 = vpop.f32.mrf.mxu0
        %2002 = vdwg.mxu0
        %2004 = vset.pattern.permute.xlu0 0
        %2005 = vperm.xlu0 %2004, %v1959
        %v2006 = vpop.permute.xlu0 %2005
        %v2008 = vmul.f32 %v2006, %v1931
        %v2009 = vadd.f32 %v2008, %v2000
        %v2011 = vunpack.c.l.b16 %v1930
        %v2012 = vpack.c.b16 %v2011, %v2011
        %2013 = vrot.lane.b32.xlu0 %v2012, 120
        %v2014 = vpop.permute.xlu0 %2013
        %2015 = vrot.lane.b32.xlu0 %v1980, 120
        %v2016 = vpop.permute.xlu0 %2015
        %v2018 = vsel %vm1932, %v2014, 0
        %v2021 = vsel %vm1932, %v2016, 0
        %2023 = vmatpush.bf16.xpose.msra.mxu0 0
        %2024 = vmatpush.bf16.xpose.msra.mxu0 0
        %2025 = vmatpush.bf16.xpose.msra.mxu0 0
        %2026 = vmatpush.bf16.xpose.msra.mxu0 0
        %2027 = vmatpush.bf16.xpose.msra.mxu0 0
        %2028 = vmatpush.bf16.xpose.msra.mxu0 0
        %2029 = vmatpush.bf16.xpose.msra.mxu0 0
        %2030 = vmatpush.bf16.xpose.msra.mxu0 %v2021
        %2031 = vmatmul.bf16.gmra.mxu0 %v2018
        %v2032 = vpop.f32.mrf.mxu0
        %v2033 = vadd.f32 0.0, %v2032
        %v2034 = vpop.f32.mrf.mxu0
        %2035 = vdwg.mxu0
        %s2036 = scalar_lea.vmem [#allocation4], 8
        %v2037 = vld [vmem:[%s2036] sm:$0xff]
        %v2038 = vsel %vm1932, %v2033, -inf
        %2039 = vmax.xlane.f32.xlu0 %v2038
        %v2040 = vpop.xlane.xlu0 %2039
        %v2041 = vmax.f32 %v2037, %v2040
        %v2042 = vsub.f32 %v2037, %v2041
        %v2043 = vmul.f32 %v2042, 1.442695
        %v2044 = vpow.pop %v2043
        %2046 = vset.pattern.permute.xlu0 0
        %2047 = vperm.xlu0 %2046, %v2041
        %v2048 = vpop.permute.xlu0 %2047
        %v2050 = vsub.f32 %v2033, %v2048
        %v2051 = vmul.f32 %v2050, 1.442695
        %v2052 = vpow.pop %v2051
        %2053 = vst.msk [vmem:[%s2036] sm:$0xff] %vm1968, %v2041
        %s2054 = scalar_lea.vmem [#allocation5], 8
        %v2055 = vld [vmem:[%s2054] sm:$0xff]
        %v2056 = vmul.f32 %v2044, %v2055
        %v2057 = vsel %vm1932, %v2052, 0.0
        %2058 = vadd.xlane.f32.xlu0 %v2057
        %v2059 = vpop.xlane.xlu0 %2058
        %v2060 = vadd.f32 %v2056, %v2059
        %2061 = vst.msk [vmem:[%s2054] sm:$0xff] %vm1968, %v2060
        %v2062 = vpack.c.bf16 %v2052, %v2052
        %2063 = vrot.lane.b32.xlu0 %v1980, 88
        %v2064 = vpop.permute.xlu0 %2063
        %v2066 = vsel %vm1932, %v2062, 0
        %v2069 = vsel %vm1986, %v2064, 0
        %2071 = vmatpush.bf16.msra.mxu0 0
        %2072 = vmatpush.bf16.msra.mxu0 0
        %2073 = vmatpush.bf16.msra.mxu0 0
        %2074 = vmatpush.bf16.msra.mxu0 0
        %2075 = vmatpush.bf16.msra.mxu0 0
        %2076 = vmatpush.bf16.msra.mxu0 0
        %2077 = vmatpush.bf16.msra.mxu0 0
        %2078 = vmatpush.bf16.msra.mxu0 %v2069
        %2079 = vmatmul.bf16.gmra.mxu0 %v2066
        %v2080 = vpop.f32.mrf.mxu0
        %v2081 = vadd.f32 0.0, %v2080
        %v2082 = vpop.f32.mrf.mxu0
        %2083 = vdwg.mxu0
        %2085 = vset.pattern.permute.xlu0 0
        %2086 = vperm.xlu0 %2085, %v2044
        %v2087 = vpop.permute.xlu0 %2086
        %v2089 = vmul.f32 %v2087, %v1931
        %2091 = vrot.lane.b32.xlu0 %v2081, 8
        %v2092 = vpop.permute.xlu0 %2091
        %v2094 = vadd.f32 %v2089, %v2092
        %2095 = vrot.lane.b32.xlu0 %v2012, 112
        %v2096 = vpop.permute.xlu0 %2095
        %2097 = vrot.lane.b32.xlu0 %v1980, 112
        %v2098 = vpop.permute.xlu0 %2097
        %v2100 = vsel %vm1932, %v2096, 0
        %v2103 = vsel %vm1932, %v2098, 0
        %2105 = vmatpush.bf16.xpose.msra.mxu0 0
        %2106 = vmatpush.bf16.xpose.msra.mxu0 0
        %2107 = vmatpush.bf16.xpose.msra.mxu0 0
        %2108 = vmatpush.bf16.xpose.msra.mxu0 0
        %2109 = vmatpush.bf16.xpose.msra.mxu0 0
        %2110 = vmatpush.bf16.xpose.msra.mxu0 0
        %2111 = vmatpush.bf16.xpose.msra.mxu0 0
        %2112 = vmatpush.bf16.xpose.msra.mxu0 %v2103
        %2113 = vmatmul.bf16.gmra.mxu0 %v2100
        %v2114 = vpop.f32.mrf.mxu0
        %v2115 = vadd.f32 0.0, %v2114
        %v2116 = vpop.f32.mrf.mxu0
        %2117 = vdwg.mxu0
        %s2118 = scalar_lea.vmem [#allocation4], 16
        %v2119 = vld [vmem:[%s2118] sm:$0xff]
        %v2120 = vsel %vm1932, %v2115, -inf
        %2121 = vmax.xlane.f32.xlu0 %v2120
        %v2122 = vpop.xlane.xlu0 %2121
        %v2123 = vmax.f32 %v2119, %v2122
        %v2124 = vsub.f32 %v2119, %v2123
        %v2125 = vmul.f32 %v2124, 1.442695
        %v2126 = vpow.pop %v2125
        %2128 = vset.pattern.permute.xlu0 0
        %2129 = vperm.xlu0 %2128, %v2123
        %v2130 = vpop.permute.xlu0 %2129
        %v2132 = vsub.f32 %v2115, %v2130
        %v2133 = vmul.f32 %v2132, 1.442695
        %v2134 = vpow.pop %v2133
        %2135 = vst.msk [vmem:[%s2118] sm:$0xff] %vm1968, %v2123
        %s2136 = scalar_lea.vmem [#allocation5], 16
        %v2137 = vld [vmem:[%s2136] sm:$0xff]
        %v2138 = vmul.f32 %v2126, %v2137
        %v2139 = vsel %vm1932, %v2134, 0.0
        %2140 = vadd.xlane.f32.xlu0 %v2139
        %v2141 = vpop.xlane.xlu0 %2140
        %v2142 = vadd.f32 %v2138, %v2141
        %2143 = vst.msk [vmem:[%s2136] sm:$0xff] %vm1968, %v2142
        %v2144 = vpack.c.bf16 %v2134, %v2134
        %2145 = vrot.lane.b32.xlu0 %v1980, 80
        %v2146 = vpop.permute.xlu0 %2145
        %v2148 = vsel %vm1932, %v2144, 0
        %v2151 = vsel %vm1986, %v2146, 0
        %2153 = vmatpush.bf16.msra.mxu0 0
        %2154 = vmatpush.bf16.msra.mxu0 0
        %2155 = vmatpush.bf16.msra.mxu0 0
        %2156 = vmatpush.bf16.msra.mxu0 0
        %2157 = vmatpush.bf16.msra.mxu0 0
        %2158 = vmatpush.bf16.msra.mxu0 0
        %2159 = vmatpush.bf16.msra.mxu0 0
        %2160 = vmatpush.bf16.msra.mxu0 %v2151
        %2161 = vmatmul.bf16.gmra.mxu0 %v2148
        %v2162 = vpop.f32.mrf.mxu0
        %v2163 = vadd.f32 0.0, %v2162
        %v2164 = vpop.f32.mrf.mxu0
        %2165 = vdwg.mxu0
        %2167 = vset.pattern.permute.xlu0 0
        %2168 = vperm.xlu0 %2167, %v2126
        %v2169 = vpop.permute.xlu0 %2168
        %v2171 = vmul.f32 %v2169, %v1931
        %2173 = vrot.lane.b32.xlu0 %v2163, 16
        %v2174 = vpop.permute.xlu0 %2173
        %v2176 = vadd.f32 %v2171, %v2174
        %2177 = vrot.lane.b32.xlu0 %v2012, 104
        %v2178 = vpop.permute.xlu0 %2177
        %2179 = vrot.lane.b32.xlu0 %v1980, 104
        %v2180 = vpop.permute.xlu0 %2179
        %v2182 = vsel %vm1932, %v2178, 0
        %v2185 = vsel %vm1932, %v2180, 0
        %2187 = vmatpush.bf16.xpose.msra.mxu0 0
        %2188 = vmatpush.bf16.xpose.msra.mxu0 0
        %2189 = vmatpush.bf16.xpose.msra.mxu0 0
        %2190 = vmatpush.bf16.xpose.msra.mxu0 0
        %2191 = vmatpush.bf16.xpose.msra.mxu0 0
        %2192 = vmatpush.bf16.xpose.msra.mxu0 0
        %2193 = vmatpush.bf16.xpose.msra.mxu0 0
        %2194 = vmatpush.bf16.xpose.msra.mxu0 %v2185
        %2195 = vmatmul.bf16.gmra.mxu0 %v2182
        %v2196 = vpop.f32.mrf.mxu0
        %v2197 = vadd.f32 0.0, %v2196
        %v2198 = vpop.f32.mrf.mxu0
        %2199 = vdwg.mxu0
        %s2200 = scalar_lea.vmem [#allocation4], 24
        %v2201 = vld [vmem:[%s2200] sm:$0xff]
        %v2202 = vsel %vm1932, %v2197, -inf
        %2203 = vmax.xlane.f32.xlu0 %v2202
        %v2204 = vpop.xlane.xlu0 %2203
        %v2205 = vmax.f32 %v2201, %v2204
        %v2206 = vsub.f32 %v2201, %v2205
        %v2207 = vmul.f32 %v2206, 1.442695
        %v2208 = vpow.pop %v2207
        %2210 = vset.pattern.permute.xlu0 0
        %2211 = vperm.xlu0 %2210, %v2205
        %v2212 = vpop.permute.xlu0 %2211
        %v2214 = vsub.f32 %v2197, %v2212
        %v2215 = vmul.f32 %v2214, 1.442695
        %v2216 = vpow.pop %v2215
        %2217 = vst.msk [vmem:[%s2200] sm:$0xff] %vm1968, %v2205
        %s2218 = scalar_lea.vmem [#allocation5], 24
        %v2219 = vld [vmem:[%s2218] sm:$0xff]
        %v2220 = vmul.f32 %v2208, %v2219
        %v2221 = vsel %vm1932, %v2216, 0.0
        %2222 = vadd.xlane.f32.xlu0 %v2221
        %v2223 = vpop.xlane.xlu0 %2222
        %v2224 = vadd.f32 %v2220, %v2223
        %2225 = vst.msk [vmem:[%s2218] sm:$0xff] %vm1968, %v2224
        %v2226 = vpack.c.bf16 %v2216, %v2216
        %2227 = vrot.lane.b32.xlu0 %v1980, 72
        %v2228 = vpop.permute.xlu0 %2227
        %v2230 = vsel %vm1932, %v2226, 0
        %v2233 = vsel %vm1986, %v2228, 0
        %2235 = vmatpush.bf16.msra.mxu0 0
        %2236 = vmatpush.bf16.msra.mxu0 0
        %2237 = vmatpush.bf16.msra.mxu0 0
        %2238 = vmatpush.bf16.msra.mxu0 0
        %2239 = vmatpush.bf16.msra.mxu0 0
        %2240 = vmatpush.bf16.msra.mxu0 0
        %2241 = vmatpush.bf16.msra.mxu0 0
        %2242 = vmatpush.bf16.msra.mxu0 %v2233
        %2243 = vmatmul.bf16.gmra.mxu0 %v2230
        %v2244 = vpop.f32.mrf.mxu0
        %v2245 = vadd.f32 0.0, %v2244
        %v2246 = vpop.f32.mrf.mxu0
        %2247 = vdwg.mxu0
        %2249 = vset.pattern.permute.xlu0 0
        %2250 = vperm.xlu0 %2249, %v2208
        %v2251 = vpop.permute.xlu0 %2250
        %v2253 = vmul.f32 %v2251, %v1931
        %2255 = vrot.lane.b32.xlu0 %v2245, 24
        %v2256 = vpop.permute.xlu0 %2255
        %v2258 = vadd.f32 %v2253, %v2256
        %v2259 = vsel %vm1932, %v2009, %v2094
        %vm2260 = vcmask 130048
        %v2261 = vsel %vm2260, %v2259, %v2176
        %vm2262 = vcmask 195584
        %v2263 = vsel %vm2262, %v2261, %v2258
        %2264 = vst.msk [vmem:[#allocation6] sm:$0xff] %vm1911, %v2263
        %p2265 = scmp.eq.s32.totalorder %s101, 1
        // Predicated region
        $region229: #{deco_plus_decoder_forward.2} parent=159 // pred_check
          %p2266 = pneg %p2265
        $region230: #{deco_plus_decoder_forward.2} parent=159 // pred_check_branch
          %2268 = sbr.rel (%p2266) target = $region232
        $region231: #{deco_plus_decoder_forward.2} parent=159 // pred_region
          %v2269 = vld [vmem:[#allocation2] sm:$0xff]
          %v2270 = vld [vmem:[#allocation6] sm:$0xff]
          %v2271 = vld [vmem:[#allocation5] sm:$0xff]
          %v2272 = vrcp.pop %v2271
          %2274 = vset.pattern.permute.xlu0 0
          %2275 = vperm.xlu0 %2274, %v2272
          %v2276 = vpop.permute.xlu0 %2275
          %v2278 = vmul.f32 %v2270, %v2276
          %v2279 = vld [vmem:[%s2054] sm:$0xff]
          %v2280 = vrcp.pop %v2279
          %2282 = vset.pattern.permute.xlu0 0
          %2283 = vperm.xlu0 %2282, %v2280
          %v2284 = vpop.permute.xlu0 %2283
          %v2286 = vmul.f32 %v2270, %v2284
          %v2287 = vld [vmem:[%s2136] sm:$0xff]
          %v2288 = vrcp.pop %v2287
          %2290 = vset.pattern.permute.xlu0 0
          %2291 = vperm.xlu0 %2290, %v2288
          %v2292 = vpop.permute.xlu0 %2291
          %v2294 = vmul.f32 %v2270, %v2292
          %v2295 = vld [vmem:[%s2218] sm:$0xff]
          %v2296 = vrcp.pop %v2295
          %2298 = vset.pattern.permute.xlu0 0
          %2299 = vperm.xlu0 %2298, %v2296
          %v2300 = vpop.permute.xlu0 %2299
          %v2302 = vmul.f32 %v2270, %v2300
          %v2303 = vsel %vm1932, %v2278, %v2286
          %v2304 = vsel %vm2260, %v2303, %v2294
          %v2305 = vsel %vm2262, %v2304, %v2302
          %v2306 = vld [vmem:[%s39] sm:$0xff]
          %v2307 = vld [vmem:[%s39 + $0x8] sm:$0xff]
          %v2308 = vld [vmem:[%s39 + $0x10] sm:$0xff]
          %v2309 = vld [vmem:[%s39 + $0x18] sm:$0xff]
          %v2310 = vpack.c.bf16 %v2305, %v2305
          %v2311 = vpack.c.bf16 %v2307, %v2306
          %v2312 = vpack.c.bf16 %v2309, %v2308
          %v2313 = vld [vmem:[#allocation17] sm:$0x1]
          %v2315 = vperm.slane %v2313, 0
          %v2318 = vsel %vm1911, %v2310, 0
          %2320 = vmatpush.bf16.msra.mxu0 0
          %2321 = vmatpush.bf16.msra.mxu0 0
          %2322 = vmatpush.bf16.msra.mxu0 0
          %2323 = vmatpush.bf16.msra.mxu0 0
          %2324 = vmatpush.bf16.msra.mxu0 0
          %2325 = vmatpush.bf16.msra.mxu0 0
          %2326 = vmatpush.bf16.msra.mxu0 %v2312
          %2327 = vmatpush.bf16.msra.mxu0 %v2311
          %2328 = vmatmul.bf16.gmra.mxu0 %v2318
          %v2329 = vpop.f32.mrf.mxu0
          %v2330 = vadd.f32 %v2315, %v2329
          %v2331 = vpop.f32.mrf.mxu0
          %2332 = vdwg.mxu0
          %v2333 = vadd.f32 %v2269, %v2330
          %v2334 = vsel %vm1911, %v2333, 0.0
          %2335 = vadd.xlane.f32.xlu0 %v2334
          %v2336 = vpop.xlane.xlu0 %2335
          %v2337 = vrcp.pop 32.0
          %v2338 = vmul.f32 32.0, %v2337
          %v2339 = vsub.f32 1.0, %v2338
          %v2340 = vmul.f32 %v2337, %v2339
          %v2341 = vadd.f32 %v2337, %v2340
          %vm2342 = vweird.f32 %v2337
          %v2343 = vsel %vm2342, %v2337, %v2341
          %v2344 = vmul.f32 %v2336, %v2343
          %v2345 = vsub.f32 %v2333, %v2344
          %v2346 = vmul.f32 %v2345, %v2345
          %v2347 = vsel %vm1911, %v2346, 0.0
          %2348 = vadd.xlane.f32.xlu0 %v2347
          %v2349 = vpop.xlane.xlu0 %2348
          %v2350 = vmul.f32 %v2349, %v2343
          %v2351 = vadd.f32 %v2350, 1e-05
          %v2352 = vrsqrt.pop %v2351
          %v2353 = vmul.f32 %v2352, %v2351
          %v2354 = vmul.f32 %v2353, %v2352
          %v2355 = vmul.f32 0.5, %v2354
          %v2356 = vsub.f32 1.5, %v2355
          %v2357 = vmul.f32 %v2352, %v2356
          %vm2358 = vweird.f32 %v2351
          %vm2359 = vweird.f32 %v2352
          %vm2360 = vmor %vm2358, %vm2359
          %v2361 = vsel %vm2360, %v2352, %v2357
          %v2362 = vmul.f32 %v2345, %v2361
          %v2363 = vld [vmem:[#allocation18] sm:$0x1]
          %v2365 = vperm.slane %v2363, 0
          %v2367 = vmul.f32 %v2362, %v2365
          %v2368 = vld [vmem:[#allocation20] sm:$0x1]
          %v2370 = vperm.slane %v2368, 0
          %v2372 = vadd.f32 %v2367, %v2370
          %v2373 = vld [vmem:[%s47] sm:$0xff]
          %v2374 = vld [vmem:[%s47 + $0x8] sm:$0xff]
          %v2375 = vld [vmem:[%s47 + $0x10] sm:$0xff]
          %v2376 = vld [vmem:[%s47 + $0x18] sm:$0xff]
          %v2377 = vpack.c.bf16 %v2372, %v2372
          %v2378 = vpack.c.bf16 %v2374, %v2373
          %v2379 = vpack.c.bf16 %v2376, %v2375
          %v2380 = vld [vmem:[#allocation21] sm:$0x1]
          %v2382 = vperm.slane %v2380, 0
          %v2385 = vsel %vm1911, %v2377, 0
          %2387 = vmatpush.bf16.msra.mxu0 0
          %2388 = vmatpush.bf16.msra.mxu0 0
          %2389 = vmatpush.bf16.msra.mxu0 0
          %2390 = vmatpush.bf16.msra.mxu0 0
          %2391 = vmatpush.bf16.msra.mxu0 0
          %2392 = vmatpush.bf16.msra.mxu0 0
          %2393 = vmatpush.bf16.msra.mxu0 %v2379
          %2394 = vmatpush.bf16.msra.mxu0 %v2378
          %2395 = vmatmul.bf16.gmra.mxu0 %v2385
          %v2396 = vpop.f32.mrf.mxu0
          %v2397 = vadd.f32 %v2382, %v2396
          %v2398 = vpop.f32.mrf.mxu0
          %2399 = vdwg.mxu0
          %v2400 = vmax.f32 %v2397, 0.0
          %v2401 = vld [vmem:[%s51] sm:$0xff]
          %v2402 = vld [vmem:[%s51 + $0x8] sm:$0xff]
          %v2403 = vld [vmem:[%s51 + $0x10] sm:$0xff]
          %v2404 = vld [vmem:[%s51 + $0x18] sm:$0xff]
          %v2405 = vld [vmem:[%s51 + $0x20] sm:$0xff]
          %v2406 = vld [vmem:[%s51 + $0x28] sm:$0xff]
          %v2407 = vld [vmem:[%s51 + $0x30] sm:$0xff]
          %v2408 = vld [vmem:[%s51 + $0x38] sm:$0xff]
          %v2409 = vpack.c.bf16 %v2400, %v2400
          %v2410 = vpack.c.bf16 %v2402, %v2401
          %v2411 = vpack.c.bf16 %v2404, %v2403
          %v2412 = vpack.c.bf16 %v2406, %v2405
          %v2413 = vpack.c.bf16 %v2408, %v2407
          %v2414 = vld [vmem:[#allocation23] sm:$0x1]
          %v2416 = vperm.slane %v2414, 0
          %vm2418 = vcmask 523264
          %v2420 = vsel %vm2418, %v2409, 0
          %2422 = vmatpush.bf16.msra.mxu0 0
          %2423 = vmatpush.bf16.msra.mxu0 0
          %2424 = vmatpush.bf16.msra.mxu0 0
          %2425 = vmatpush.bf16.msra.mxu0 0
          %2426 = vmatpush.bf16.msra.mxu0 %v2413
          %2427 = vmatpush.bf16.msra.mxu0 %v2412
          %2428 = vmatpush.bf16.msra.mxu0 %v2411
          %2429 = vmatpush.bf16.msra.mxu0 %v2410
          %2430 = vmatmul.bf16.gmra.mxu0 %v2420
          %v2431 = vpop.f32.mrf.mxu0
          %v2432 = vadd.f32 %v2416, %v2431
          %v2433 = vpop.f32.mrf.mxu0
          %2434 = vdwg.mxu0
          %v2435 = vadd.f32 %v2372, %v2432
          %v2436 = vsel %vm1911, %v2435, 0.0
          %2437 = vadd.xlane.f32.xlu0 %v2436
          %v2438 = vpop.xlane.xlu0 %2437
          %v2439 = vmul.f32 %v2438, %v2343
          %v2440 = vsub.f32 %v2435, %v2439
          %v2441 = vmul.f32 %v2440, %v2440
          %v2442 = vsel %vm1911, %v2441, 0.0
          %2443 = vadd.xlane.f32.xlu0 %v2442
          %v2444 = vpop.xlane.xlu0 %2443
          %v2445 = vmul.f32 %v2444, %v2343
          %v2446 = vadd.f32 %v2445, 1e-05
          %v2447 = vrsqrt.pop %v2446
          %v2448 = vmul.f32 %v2447, %v2446
          %v2449 = vmul.f32 %v2448, %v2447
          %v2450 = vmul.f32 0.5, %v2449
          %v2451 = vsub.f32 1.5, %v2450
          %v2452 = vmul.f32 %v2447, %v2451
          %vm2453 = vweird.f32 %v2446
          %vm2454 = vweird.f32 %v2447
          %vm2455 = vmor %vm2453, %vm2454
          %v2456 = vsel %vm2455, %v2447, %v2452
          %v2457 = vmul.f32 %v2440, %v2456
          %v2458 = vld [vmem:[#allocation24] sm:$0x1]
          %v2460 = vperm.slane %v2458, 0
          %v2462 = vmul.f32 %v2457, %v2460
          %v2463 = vld [vmem:[#allocation26] sm:$0x1]
          %v2465 = vperm.slane %v2463, 0
          %v2467 = vadd.f32 %v2462, %v2465
          %v2468 = vld [vmem:[%s59] sm:$0xff]
          %v2469 = vld [vmem:[%s59 + $0x8] sm:$0xff]
          %v2470 = vld [vmem:[%s59 + $0x10] sm:$0xff]
          %v2471 = vld [vmem:[%s59 + $0x18] sm:$0xff]
          %v2472 = vpack.c.bf16 %v2467, %v2467
          %v2473 = vpack.c.bf16 %v2469, %v2468
          %v2474 = vpack.c.bf16 %v2471, %v2470
          %v2475 = vld [vmem:[#allocation27] sm:$0x1]
          %v2477 = vperm.slane %v2475, 0
          %v2480 = vsel %vm1911, %v2472, 0
          %2482 = vmatpush.bf16.msra.mxu0 0
          %2483 = vmatpush.bf16.msra.mxu0 0
          %2484 = vmatpush.bf16.msra.mxu0 0
          %2485 = vmatpush.bf16.msra.mxu0 0
          %2486 = vmatpush.bf16.msra.mxu0 0
          %2487 = vmatpush.bf16.msra.mxu0 0
          %2488 = vmatpush.bf16.msra.mxu0 %v2474
          %2489 = vmatpush.bf16.msra.mxu0 %v2473
          %2490 = vmatmul.bf16.gmra.mxu0 %v2480
          %v2491 = vpop.f32.mrf.mxu0
          %v2492 = vadd.f32 %v2477, %v2491
          %v2493 = vpop.f32.mrf.mxu0
          %2494 = vdwg.mxu0
          %v2495 = vmax.f32 %v2492, 0.0
          %v2496 = vld [vmem:[%s63] sm:$0xff]
          %v2497 = vld [vmem:[%s63 + $0x8] sm:$0xff]
          %v2498 = vld [vmem:[%s63 + $0x10] sm:$0xff]
          %v2499 = vld [vmem:[%s63 + $0x18] sm:$0xff]
          %v2500 = vpack.c.bf16 %v2495, %v2495
          %v2501 = vpack.c.bf16 %v2497, %v2496
          %v2502 = vpack.c.bf16 %v2499, %v2498
          %v2503 = vld [vmem:[#allocation29] sm:$0x1]
          %v2505 = vperm.slane %v2503, 0
          %v2508 = vsel %vm1911, %v2500, 0
          %2510 = vmatpush.bf16.msra.mxu0 0
          %2511 = vmatpush.bf16.msra.mxu0 0
          %2512 = vmatpush.bf16.msra.mxu0 0
          %2513 = vmatpush.bf16.msra.mxu0 0
          %2514 = vmatpush.bf16.msra.mxu0 0
          %2515 = vmatpush.bf16.msra.mxu0 0
          %2516 = vmatpush.bf16.msra.mxu0 %v2502
          %2517 = vmatpush.bf16.msra.mxu0 %v2501
          %2518 = vmatmul.bf16.gmra.mxu0 %v2508
          %v2519 = vpop.f32.mrf.mxu0
          %v2520 = vadd.f32 %v2505, %v2519
          %v2521 = vpop.f32.mrf.mxu0
          %2522 = vdwg.mxu0
          %v2523 = vmax.f32 %v2520, 0.0
          %v2524 = vld [vmem:[%s67] sm:$0xff]
          %v2525 = vld [vmem:[%s67 + $0x8] sm:$0xff]
          %v2526 = vld [vmem:[%s67 + $0x10] sm:$0xff]
          %v2527 = vld [vmem:[%s67 + $0x18] sm:$0xff]
          %v2528 = vld [vmem:[#allocation30] sm:$0x1]
          %v2530 = vperm.slane %v2528, 0
          %v2533 = vsel %vm1911, %v2523, 0
          %2535 = vmatpush.msra.mxu0 0.0
          %2536 = vmatpush.msra.mxu0 0.0
          %2537 = vmatpush.msra.mxu0 0.0
          %2538 = vmatpush.msra.mxu0 0.0
          %2539 = vmatpush.msra.mxu0 0.0
          %2540 = vmatpush.msra.mxu0 0.0
          %2541 = vmatpush.msra.mxu0 0.0
          %2542 = vmatpush.msra.mxu0 0.0
          %2543 = vmatpush.msra.mxu0 0.0
          %2544 = vmatpush.msra.mxu0 0.0
          %2545 = vmatpush.msra.mxu0 0.0
          %2546 = vmatpush.msra.mxu0 0.0
          %2547 = vmatpush.msra.mxu0 %v2527
          %2548 = vmatpush.msra.mxu0 %v2526
          %2549 = vmatpush.msra.mxu0 %v2525
          %2550 = vmatpush.msra.mxu0 %v2524
          %2551 = vmatmul.f32.gmra.mxu0 %v2533
          %v2552 = vpop.f32.mrf.mxu0
          %v2553 = vadd.f32 %v2530, %v2552
          %2554 = vdwg.mxu0
          %v2555 = vld [vmem:[%s1396] sm:$0xff]
          %v2556 = vmax.f32 %v2555, 0.0
          %v2557 = vmin.f32 %v2556, 1.0
          %v2558 = vmax.f32 %v2557, 1e-05
          %v2559 = vlog2.pop %v2558
          %v2560 = vmul.f32 %v2559, 0.6931472
          %v2561 = vsub.f32 1.0, %v2557
          %v2562 = vmax.f32 %v2561, 1e-05
          %v2563 = vlog2.pop %v2562
          %v2564 = vmul.f32 %v2563, 0.6931472
          %v2565 = vsub.f32 %v2560, %v2564
          %v2566 = vadd.f32 %v2553, %v2565
          %v2567 = vsub.f32 0.0, %v2566
          %v2568 = vmul.f32 %v2567, 1.442695
          %v2569 = vpow.pop %v2568
          %v2570 = vadd.f32 %v2569, 1.0
          %v2571 = vrcp.pop %v2570
          %v2572 = vmul.f32 %v2570, %v2571
          %v2573 = vsub.f32 1.0, %v2572
          %v2574 = vmul.f32 %v2571, %v2573
          %v2575 = vadd.f32 %v2571, %v2574
          %vm2576 = vweird.f32 %v2570
          %vm2577 = vweird.f32 %v2571
          %vm2578 = vmor %vm2576, %vm2577
          %v2579 = vsel %vm2578, %v2571, %v2575
          %v2580 = vand.u32 2147483647, %v2570
          %vm2581 = vcmp.eq.f32.partialorder %v2580, 8.507059e+37
          %v2582 = vand.u32 %v2570, 2147483648
          %v2583 = vor.u32 1.1754944e-38, %v2582
          %v2584 = vsel %vm2581, %v2583, %v2579
          %v2585 = vmul.f32 1.0, %v2584
          %vm2586 = vcmask 31744
          %2587 = vst.msk [vmem:[%s1404] sm:$0xff] %vm2586, %v2585
          %2588 = vst.msk [vmem:[%s1400] sm:$0xff] %vm1911, %v2467
        $region232: #{deco_plus_decoder_forward.2} parent=159 // pred_fallthru
          _
        %p2589 = scmp.lt.s32.totalorder %s100, 1
        %s2590 = scalar_select %p2589, %s100, 1
        %s2591 = smul.addr %s2590, 8
        %s2592 = scalar_lea.vmem %s71, %s2591
        %p2593 = scmp.lt.s32.totalorder %s100, 1
        %s2594 = scalar_select %p2593, %s100, 1
        %s2595 = smul.addr %s2594, 8
        %s2596 = scalar_lea.vmem %s73, %s2595
        // Predicated region
        $region233: #{deco_plus_decoder_forward.2} parent=159 // pred_check
          %p2597 = pneg %p878
        $region234: #{deco_plus_decoder_forward.2} parent=159 // pred_check_branch
          %2599 = sbr.rel (%p2597) target = $region236
        $region235: #{deco_plus_decoder_forward.2} parent=159 // pred_region
          _
        $region236: #{deco_plus_decoder_forward.2} parent=159 // pred_fallthru
          _
        // Predicated region
        $region237: #{deco_plus_decoder_forward.2} parent=159 // pred_check
          %p2600 = pneg %p904
        $region238: #{deco_plus_decoder_forward.2} parent=159 // pred_check_branch
          %2602 = sbr.rel (%p2600) target = $region240
        $region239: #{deco_plus_decoder_forward.2} parent=159 // pred_region
          _
        $region240: #{deco_plus_decoder_forward.2} parent=159 // pred_fallthru
          _
      $region160: #{deco_plus_decoder_forward.2} parent=5 // pred_fallthru
        _
      %p2603 = scmp.le.s32.totalorder 2, %s91
      // Predicated region
      $region241: #{deco_plus_decoder_forward.2} parent=5 // pred_check
        %p2604 = pneg %p2603
      $region242: #{deco_plus_decoder_forward.2} parent=5 // pred_check_branch
        %2606 = sbr.rel (%p2604) target = $region244
      $region243: #{deco_plus_decoder_forward.2} parent=5 // pred_region
        %s2607 = ssub.s32 %s91, 2
        // Predicated region
        $region245: #{deco_plus_decoder_forward.2} parent=243 // pred_check
          %p2608 = pneg %p884
        $region246: #{deco_plus_decoder_forward.2} parent=243 // pred_check_branch
          %2610 = sbr.rel (%p2608) target = $region248
        $region247: #{deco_plus_decoder_forward.2} parent=243 // pred_region
          %p2611 = scmp.lt.s32.totalorder %s102, 1
          %s2612 = scalar_select %p2611, %s102, 1
          %s2613 = smul.addr %s2612, 8
          %s2614 = scalar_lea.vmem %s71, %s2613
        $region248: #{deco_plus_decoder_forward.2} parent=243 // pred_fallthru
          _
        // Predicated region
        $region249: #{deco_plus_decoder_forward.2} parent=243 // pred_check
          %p2615 = pneg %p910
        $region250: #{deco_plus_decoder_forward.2} parent=243 // pred_check_branch
          %2617 = sbr.rel (%p2615) target = $region252
        $region251: #{deco_plus_decoder_forward.2} parent=243 // pred_region
          %p2618 = scmp.lt.s32.totalorder %s102, 1
          %s2619 = scalar_select %p2618, %s102, 1
          %s2620 = smul.addr %s2619, 8
          %s2621 = scalar_lea.vmem %s73, %s2620
        $region252: #{deco_plus_decoder_forward.2} parent=243 // pred_fallthru
          _
      $region244: #{deco_plus_decoder_forward.2} parent=5 // pred_fallthru
        _
    $region6: #{deco_plus_decoder_forward.2} parent=1 // loop_footer
      %s95 = sadd.s32 1, %s91
    $region7: #{deco_plus_decoder_forward.2} parent=1 // loop_footer_branch
      %90 = sbr.rel target = $region3
    $region8: #{deco_plus_decoder_forward.2} parent=1 // loop_exit
      _
    %2622 = vsyncpa [#allocation8], 1
    %s2623 = scalar_lea.sflag [#allocation8], 1
    %2624 = vsyncpa %s2623, 1
    %2625 = vsyncpa [#allocation10], 1
    %2626 = vsyncpa [#allocation13], 1
    %2627 = vsyncpa [#allocation16], 1
    %2628 = vsyncpa [#allocation19], 1
    %2629 = vsyncpa [#allocation22], 1
    %2630 = vsyncpa [#allocation25], 1
    %2631 = vsyncpa [#allocation28], 1
    %2632 = vsyncpa [#allocation31], 1

</llo_original>
